<compile_context>
chip_gen: v5e
topology: v5e:2x2
jax: 0.10.0
libtpu: 0.0.40
codegen_flags: <defaults>
</compile_context>

<pallas_src>
from functools import partial

import jax
import jax.numpy as jnp
import numpy as np
from jax.experimental import pallas as pl
from jax.experimental.pallas import tpu as pltpu

K = 4          # kernel_size
STRIDE = 2
PAD = 1
EPS = 1e-5     # BatchNorm2d default eps
LANE = 128

_PHASES = ((0, 0), (0, 1), (1, 0), (1, 1))   # (py, px) output parities
_TAPS = ((0, 0), (0, 1), (1, 0), (1, 1))     # (a, b)  2x2 stride-1 taps per phase


def _phase_conv_acc(xw, wv, p, py, px, H, W):
    """f32 (H*W, Cpad) accumulator for one output parity: 4 accumulating K=Cin matmuls.

    ConvT(k=4, s=2, p=1) phase decomposition:
      out[2m+py, 2l+px] = sum_{a,b in {0,1}} xp[m+py+a, l+px+b] @ wf[2a+py, 2b+px]
    with xp the 1-padded NHWC input and wf the spatially-flipped (in,out)-swapped kernel.
    """
    Cin = xw.shape[-1]
    acc = None
    for t, (a, b) in enumerate(_TAPS):
        tap = xw[py + a:py + a + H, px + b:px + b + W, :].reshape(H * W, Cin)
        c = jnp.dot(tap, wv[p, t], preferred_element_type=jnp.float32)
        acc = c if acc is None else acc + c
    return acc


def convt_stats_kernel(xp_ref, w_ref, stat_ref):
    """Per batch element: recompute the 4-phase transposed conv, emit channel stats only.

    xp_ref  : (1, H+2, W+2, Cin) bf16   padded NHWC input block
    w_ref   : (4, 4, Cin, Cpad)  bf16   [phase, tap] weight slabs (Cout zero-padded to 128)
    stat_ref: (1, 2, Cpad)       f32    row0 = channel sum, row1 = centered sum-of-squares
    """
    H = xp_ref.shape[1] - 2
    W = xp_ref.shape[2] - 2
    hw = H * W
    cpad = w_ref.shape[3]

    xw = xp_ref[0]                 # (H+2, W+2, Cin) bf16
    wv = w_ref[...]                # (4, 4, Cin, Cpad) bf16

    sums, mus, m2s = [], [], []
    for p, (py, px) in enumerate(_PHASES):
        acc = _phase_conv_acc(xw, wv, p, py, px, H, W)        # (hw, Cpad) f32
        s = jnp.sum(acc, axis=0, keepdims=True)               # (1, Cpad)
        mu = s * (1.0 / hw)
        d = acc - mu
        m2 = jnp.sum(d * d, axis=0, keepdims=True)            # centered: no cancellation
        sums.append(s)
        mus.append(mu)
        m2s.append(m2)

    step_sum = sums[0] + sums[1] + sums[2] + sums[3]
    step_mean = step_sum * (1.0 / (4 * hw))
    step_m2 = m2s[0] + m2s[1] + m2s[2] + m2s[3]
    for mu in mus:                                            # Chan combine of the 4 phases
        dmu = mu - step_mean
        step_m2 = step_m2 + hw * dmu * dmu

    stat_ref[...] = jnp.concatenate([step_sum, step_m2], axis=0).reshape(1, 2, cpad)


def convt_bn_kernel(xp_ref, w_ref, scale_ref, shift_ref, out_ref):
    """Per batch element: recompute conv, apply y*scale+shift, store with the phase
    de-interleave fused into the output layout (1, H, 2, W, 2*Cpad)."""
    H = xp_ref.shape[1] - 2
    W = xp_ref.shape[2] - 2
    cpad = w_ref.shape[3]

    xw = xp_ref[0]
    wv = w_ref[...]
    scale = scale_ref[...]         # (1, Cpad) f32
    shift = shift_ref[...]         # (1, Cpad) f32

    for p, (py, px) in enumerate(_PHASES):
        acc = _phase_conv_acc(xw, wv, p, py, px, H, W)        # (H*W, Cpad) f32
        y = acc * scale + shift
        # lane-aligned (multiple-of-128) rectangular window store; py/px/cpad are static.
        out_ref[0:1, :, py:py + 1, :, px * cpad:(px + 1) * cpad] = (
            y.astype(out_ref.dtype).reshape(1, H, 1, W, cpad))


@partial(jax.jit, static_argnames=("out_dtype",))
def conv_t_batch_forward(x_nchw, w, b, gamma, beta, *, out_dtype=jnp.float32):
    """Forward of ConvTBatch. x_nchw: (N, C, H, W); w: (C, C//2, K, K).

    NOTE: conv bias `b` is intentionally unused — under training-mode BatchNorm it cancels
    exactly.  `out_dtype=jnp.bfloat16` halves the final HBM write if the consumer allows it.
    """
    N, Cin, H, W = x_nchw.shape
    Cout = Cin // 2
    Ho, Wo = STRIDE * H, STRIDE * W
    Cpad = ((Cout + LANE - 1) // LANE) * LANE

    # Padded NHWC bf16 input (the only XLA-materialized intermediate; ~input volume).
    x = jnp.transpose(x_nchw, (0, 2, 3, 1)).astype(jnp.bfloat16)
    xp = jnp.pad(x, ((0, 0), (1, 1), (1, 1), (0, 0)))            # (N, H+2, W+2, Cin)

    # wf: spatially flipped, (in,out)-swapped kernel; tap slabs per phase.
    wf = jnp.transpose(w[:, :, ::-1, ::-1], (2, 3, 0, 1)).astype(jnp.float32)  # (K,K,Cin,Cout)
    slabs = []
    for py, px in _PHASES:
        for a, bb in _TAPS:
            slabs.append(wf[2 * a + py, 2 * bb + px])            # (Cin, Cout)
    wtap = jnp.stack(slabs, axis=0).reshape(4, 4, Cin, Cout)
    wtap = jnp.pad(wtap, ((0, 0), (0, 0), (0, 0), (0, Cpad - Cout))).astype(jnp.bfloat16)

    xp_spec = pl.BlockSpec((1, H + 2, W + 2, Cin), lambda n: (n, 0, 0, 0))
    w_spec = pl.BlockSpec((4, 4, Cin, Cpad), lambda n: (0, 0, 0, 0))
    cparams = pltpu.CompilerParams(dimension_semantics=("parallel",),
                                   vmem_limit_bytes=32 * 1024 * 1024)

    # Pass 1: stats only (no conv intermediate written to HBM).
    stats = pl.pallas_call(
        convt_stats_kernel,
        out_shape=jax.ShapeDtypeStruct((N, 2, Cpad), jnp.float32),
        grid=(N,),
        in_specs=[xp_spec, w_spec],
        out_specs=pl.BlockSpec((1, 2, Cpad), lambda n: (n, 0, 0)),
        compiler_params=cparams,
    )(xp, wtap)

    # BatchNorm2d training-mode statistics via Chan/Welford combine of per-step partials.
    cnt = jnp.float32(4 * H * W)                 # rows per batch element (= Ho*Wo)
    total = jnp.float32(N * 4 * H * W)           # = N*Ho*Wo
    sums = stats[:, 0, :]                        # (N, Cpad)
    m2s = stats[:, 1, :]                         # (N, Cpad)
    mean = jnp.sum(sums, axis=0) / total
    step_means = sums / cnt
    m2 = jnp.sum(m2s, axis=0) + cnt * jnp.sum((step_means - mean) ** 2, axis=0)
    var = m2 / total                             # biased variance (training-mode BN)

    g = jnp.pad(gamma.astype(jnp.float32), (0, Cpad - Cout))
    bt = jnp.pad(beta.astype(jnp.float32), (0, Cpad - Cout))
    inv = g / jnp.sqrt(var + EPS)
    scale = inv.reshape(1, Cpad)
    shift = (bt - mean * inv).reshape(1, Cpad)

    # Pass 2: recompute conv + fused BN apply + fused phase de-interleave on store.
    out5 = pl.pallas_call(
        convt_bn_kernel,
        out_shape=jax.ShapeDtypeStruct((N, H, 2, W, 2 * Cpad), out_dtype),
        grid=(N,),
        in_specs=[xp_spec, w_spec,
                  pl.BlockSpec((1, Cpad), lambda n: (0, 0)),
                  pl.BlockSpec((1, Cpad), lambda n: (0, 0))],
        out_specs=pl.BlockSpec((1, H, 2, W, 2 * Cpad), lambda n: (n, 0, 0, 0, 0)),
        compiler_params=cparams,
    )(xp, wtap, scale, shift)

    # (N, H, 2, W, 2*Cpad) -> (N, Ho, Wo, Cpad) is a pure reshape (free): [n,h,py,w,px*Cpad+c]
    # == out[n, 2h+py, 2w+px, c].  Then drop channel padding and return NCHW.
    out = out5.reshape(N, Ho, W, 2, Cpad).reshape(N, Ho, Wo, Cpad)
    out = out[..., :Cout]
    return jnp.transpose(out, (0, 3, 1, 2))


def reference(x_nchw, w, b, gamma, beta):
    """Pure-JAX reference: lax dilated conv (with bias) + batch-norm (training stats)."""
    N, Cin, H, W = x_nchw.shape
    Cout = Cin // 2
    x = jnp.transpose(x_nchw, (0, 2, 3, 1)).astype(jnp.float32)
    wf = jnp.transpose(w[:, :, ::-1, ::-1], (2, 3, 0, 1)).astype(jnp.float32)
    y = jax.lax.conv_general_dilated(
        x, wf, window_strides=(1, 1),
        padding=[(K - 1 - PAD, K - 1 - PAD)] * 2,
        lhs_dilation=(STRIDE, STRIDE),
        dimension_numbers=("NHWC", "HWIO", "NHWC"),
        precision=jax.lax.Precision.HIGHEST)
    y = y + b.reshape(1, 1, 1, Cout)
    mean = jnp.mean(y, axis=(0, 1, 2))
    var = jnp.var(y, axis=(0, 1, 2))
    yn = (y - mean) / jnp.sqrt(var + EPS)
    yn = yn * gamma.reshape(1, 1, 1, Cout) + beta.reshape(1, 1, 1, Cout)
    return jnp.transpose(yn, (0, 3, 1, 2))


if __name__ == "__main__":
    key = jax.random.PRNGKey(0)
    N, C, H, W = 2, 4, 16, 16                    # c=4 -> out channels = 2
    k1, k2, k3, k4, k5 = jax.random.split(key, 5)
    x = jax.random.normal(k1, (N, C, H, W), jnp.float32)
    w = jax.random.normal(k2, (C, C // 2, K, K), jnp.float32) * 0.1   # (Cin, Cout, K, K)
    b = jax.random.normal(k3, (C // 2,), jnp.float32) * 0.1
    gamma = 1.0 + 0.1 * jax.random.normal(k4, (C // 2,), jnp.float32)
    beta = 0.1 * jax.random.normal(k5, (C // 2,), jnp.float32)

    out = conv_t_batch_forward(x, w, b, gamma, beta)
    jax.block_until_ready(out)

    ref = reference(x, w, b, gamma, beta)
    # bf16 GEMM inputs -> slightly looser tolerance than pure f32.
    np.testing.assert_allclose(np.asarray(out), np.asarray(ref),
                               rtol=3e-2, atol=3e-2)
    print("KERNEL_OK")
</pallas_src>

<mosaic_0001>
module attributes {stable_mosaic.version = 11 : i64} {
  func.func @convt_stats_kernel(%arg0: i32, %arg1: memref<1x18x18x4xbf16, #tpu.memory_space<vmem>>, %arg2: memref<4x4x4x128xbf16, #tpu.memory_space<vmem>>, %arg3: memref<1x2x128xf32, #tpu.memory_space<vmem>>) attributes {dimension_semantics = [#tpu.dimension_semantics<parallel>], iteration_bounds = array<i64: 2>, scalar_prefetch = 0 : i64, scratch_operands = 0 : i64, tpu.core_type = #tpu.core_type<tc>, window_params = [{transform_indices = @transform_0, window_bounds = array<i64: 1, 18, 18, 4>}, {pipeline_mode = #tpu.pipeline_mode<synchronous>, transform_indices = @transform_1, window_bounds = array<i64: 4, 4, 4, 128>}, {transform_indices = @transform_2, window_bounds = array<i64: 1, 2, 128>}]} {
    %c0 = arith.constant 0 : index
    %c0_0 = arith.constant 0 : index
    %c0_1 = arith.constant 0 : index
    %c0_2 = arith.constant 0 : index
    %0 = vector.load %arg1[%c0, %c0_0, %c0_1, %c0_2] : memref<1x18x18x4xbf16, #tpu.memory_space<vmem>>, vector<1x18x18x4xbf16>
    %1 = vector.shape_cast %0 : vector<1x18x18x4xbf16> to vector<18x18x4xbf16>
    %c0_3 = arith.constant 0 : index
    %c0_4 = arith.constant 0 : index
    %c0_5 = arith.constant 0 : index
    %c0_6 = arith.constant 0 : index
    %2 = vector.load %arg2[%c0_3, %c0_4, %c0_5, %c0_6] : memref<4x4x4x128xbf16, #tpu.memory_space<vmem>>, vector<4x4x4x128xbf16>
    %3 = vector.extract_strided_slice %1 {offsets = [0, 0, 0], sizes = [16, 16, 4], strides = [1, 1, 1]} : vector<18x18x4xbf16> to vector<16x16x4xbf16>
    %4 = vector.shape_cast %3 : vector<16x16x4xbf16> to vector<256x4xbf16>
    %5 = vector.extract_strided_slice %2 {offsets = [0, 0, 0, 0], sizes = [1, 1, 4, 128], strides = [1, 1, 1, 1]} : vector<4x4x4x128xbf16> to vector<1x1x4x128xbf16>
    %6 = vector.shape_cast %5 : vector<1x1x4x128xbf16> to vector<4x128xbf16>
    %cst = arith.constant dense<0.000000e+00> : vector<256x128xf32>
    %7 = tpu.matmul %4, %6, %cst {dimension_numbers = #tpu.dot_dimension_numbers<[1], [0], [0], [1], [0, 0, 1, 1], [], []>} : vector<256x4xbf16>, vector<4x128xbf16>, vector<256x128xf32> -> vector<256x128xf32>
    %8 = vector.extract_strided_slice %1 {offsets = [0, 1, 0], sizes = [16, 16, 4], strides = [1, 1, 1]} : vector<18x18x4xbf16> to vector<16x16x4xbf16>
    %9 = vector.shape_cast %8 : vector<16x16x4xbf16> to vector<256x4xbf16>
    %10 = vector.extract_strided_slice %2 {offsets = [0, 1, 0, 0], sizes = [1, 1, 4, 128], strides = [1, 1, 1, 1]} : vector<4x4x4x128xbf16> to vector<1x1x4x128xbf16>
    %11 = vector.shape_cast %10 : vector<1x1x4x128xbf16> to vector<4x128xbf16>
    %cst_7 = arith.constant dense<0.000000e+00> : vector<256x128xf32>
    %12 = tpu.matmul %9, %11, %cst_7 {dimension_numbers = #tpu.dot_dimension_numbers<[1], [0], [0], [1], [0, 0, 1, 1], [], []>} : vector<256x4xbf16>, vector<4x128xbf16>, vector<256x128xf32> -> vector<256x128xf32>
    %13 = arith.addf %7, %12 : vector<256x128xf32>
    %14 = vector.extract_strided_slice %1 {offsets = [1, 0, 0], sizes = [16, 16, 4], strides = [1, 1, 1]} : vector<18x18x4xbf16> to vector<16x16x4xbf16>
    %15 = vector.shape_cast %14 : vector<16x16x4xbf16> to vector<256x4xbf16>
    %16 = vector.extract_strided_slice %2 {offsets = [0, 2, 0, 0], sizes = [1, 1, 4, 128], strides = [1, 1, 1, 1]} : vector<4x4x4x128xbf16> to vector<1x1x4x128xbf16>
    %17 = vector.shape_cast %16 : vector<1x1x4x128xbf16> to vector<4x128xbf16>
    %cst_8 = arith.constant dense<0.000000e+00> : vector<256x128xf32>
    %18 = tpu.matmul %15, %17, %cst_8 {dimension_numbers = #tpu.dot_dimension_numbers<[1], [0], [0], [1], [0, 0, 1, 1], [], []>} : vector<256x4xbf16>, vector<4x128xbf16>, vector<256x128xf32> -> vector<256x128xf32>
    %19 = arith.addf %13, %18 : vector<256x128xf32>
    %20 = vector.extract_strided_slice %1 {offsets = [1, 1, 0], sizes = [16, 16, 4], strides = [1, 1, 1]} : vector<18x18x4xbf16> to vector<16x16x4xbf16>
    %21 = vector.shape_cast %20 : vector<16x16x4xbf16> to vector<256x4xbf16>
    %22 = vector.extract_strided_slice %2 {offsets = [0, 3, 0, 0], sizes = [1, 1, 4, 128], strides = [1, 1, 1, 1]} : vector<4x4x4x128xbf16> to vector<1x1x4x128xbf16>
    %23 = vector.shape_cast %22 : vector<1x1x4x128xbf16> to vector<4x128xbf16>
    %cst_9 = arith.constant dense<0.000000e+00> : vector<256x128xf32>
    %24 = tpu.matmul %21, %23, %cst_9 {dimension_numbers = #tpu.dot_dimension_numbers<[1], [0], [0], [1], [0, 0, 1, 1], [], []>} : vector<256x4xbf16>, vector<4x128xbf16>, vector<256x128xf32> -> vector<256x128xf32>
    %25 = arith.addf %19, %24 : vector<256x128xf32>
    %cst_10 = arith.constant dense<0.000000e+00> : vector<128xf32>
    %26 = vector.multi_reduction <add>, %25, %cst_10 [0] : vector<256x128xf32> to vector<128xf32>
    %27 = vector.shape_cast %26 : vector<128xf32> to vector<1x128xf32>
    %cst_11 = arith.constant 3.906250e-03 : f32
    %28 = vector.broadcast %cst_11 : f32 to vector<1x128xf32>
    %29 = arith.mulf %27, %28 : vector<1x128xf32>
    %30 = vector.broadcast %29 : vector<1x128xf32> to vector<256x128xf32>
    %31 = arith.subf %25, %30 : vector<256x128xf32>
    %32 = arith.mulf %31, %31 : vector<256x128xf32>
    %cst_12 = arith.constant dense<0.000000e+00> : vector<128xf32>
    %33 = vector.multi_reduction <add>, %32, %cst_12 [0] : vector<256x128xf32> to vector<128xf32>
    %34 = vector.shape_cast %33 : vector<128xf32> to vector<1x128xf32>
    %35 = vector.extract_strided_slice %1 {offsets = [0, 1, 0], sizes = [16, 16, 4], strides = [1, 1, 1]} : vector<18x18x4xbf16> to vector<16x16x4xbf16>
    %36 = vector.shape_cast %35 : vector<16x16x4xbf16> to vector<256x4xbf16>
    %37 = vector.extract_strided_slice %2 {offsets = [1, 0, 0, 0], sizes = [1, 1, 4, 128], strides = [1, 1, 1, 1]} : vector<4x4x4x128xbf16> to vector<1x1x4x128xbf16>
    %38 = vector.shape_cast %37 : vector<1x1x4x128xbf16> to vector<4x128xbf16>
    %cst_13 = arith.constant dense<0.000000e+00> : vector<256x128xf32>
    %39 = tpu.matmul %36, %38, %cst_13 {dimension_numbers = #tpu.dot_dimension_numbers<[1], [0], [0], [1], [0, 0, 1, 1], [], []>} : vector<256x4xbf16>, vector<4x128xbf16>, vector<256x128xf32> -> vector<256x128xf32>
    %40 = vector.extract_strided_slice %1 {offsets = [0, 2, 0], sizes = [16, 16, 4], strides = [1, 1, 1]} : vector<18x18x4xbf16> to vector<16x16x4xbf16>
    %41 = vector.shape_cast %40 : vector<16x16x4xbf16> to vector<256x4xbf16>
    %42 = vector.extract_strided_slice %2 {offsets = [1, 1, 0, 0], sizes = [1, 1, 4, 128], strides = [1, 1, 1, 1]} : vector<4x4x4x128xbf16> to vector<1x1x4x128xbf16>
    %43 = vector.shape_cast %42 : vector<1x1x4x128xbf16> to vector<4x128xbf16>
    %cst_14 = arith.constant dense<0.000000e+00> : vector<256x128xf32>
    %44 = tpu.matmul %41, %43, %cst_14 {dimension_numbers = #tpu.dot_dimension_numbers<[1], [0], [0], [1], [0, 0, 1, 1], [], []>} : vector<256x4xbf16>, vector<4x128xbf16>, vector<256x128xf32> -> vector<256x128xf32>
    %45 = arith.addf %39, %44 : vector<256x128xf32>
    %46 = vector.extract_strided_slice %1 {offsets = [1, 1, 0], sizes = [16, 16, 4], strides = [1, 1, 1]} : vector<18x18x4xbf16> to vector<16x16x4xbf16>
    %47 = vector.shape_cast %46 : vector<16x16x4xbf16> to vector<256x4xbf16>
    %48 = vector.extract_strided_slice %2 {offsets = [1, 2, 0, 0], sizes = [1, 1, 4, 128], strides = [1, 1, 1, 1]} : vector<4x4x4x128xbf16> to vector<1x1x4x128xbf16>
    %49 = vector.shape_cast %48 : vector<1x1x4x128xbf16> to vector<4x128xbf16>
    %cst_15 = arith.constant dense<0.000000e+00> : vector<256x128xf32>
    %50 = tpu.matmul %47, %49, %cst_15 {dimension_numbers = #tpu.dot_dimension_numbers<[1], [0], [0], [1], [0, 0, 1, 1], [], []>} : vector<256x4xbf16>, vector<4x128xbf16>, vector<256x128xf32> -> vector<256x128xf32>
    %51 = arith.addf %45, %50 : vector<256x128xf32>
    %52 = vector.extract_strided_slice %1 {offsets = [1, 2, 0], sizes = [16, 16, 4], strides = [1, 1, 1]} : vector<18x18x4xbf16> to vector<16x16x4xbf16>
    %53 = vector.shape_cast %52 : vector<16x16x4xbf16> to vector<256x4xbf16>
    %54 = vector.extract_strided_slice %2 {offsets = [1, 3, 0, 0], sizes = [1, 1, 4, 128], strides = [1, 1, 1, 1]} : vector<4x4x4x128xbf16> to vector<1x1x4x128xbf16>
    %55 = vector.shape_cast %54 : vector<1x1x4x128xbf16> to vector<4x128xbf16>
    %cst_16 = arith.constant dense<0.000000e+00> : vector<256x128xf32>
    %56 = tpu.matmul %53, %55, %cst_16 {dimension_numbers = #tpu.dot_dimension_numbers<[1], [0], [0], [1], [0, 0, 1, 1], [], []>} : vector<256x4xbf16>, vector<4x128xbf16>, vector<256x128xf32> -> vector<256x128xf32>
    %57 = arith.addf %51, %56 : vector<256x128xf32>
    %cst_17 = arith.constant dense<0.000000e+00> : vector<128xf32>
    %58 = vector.multi_reduction <add>, %57, %cst_17 [0] : vector<256x128xf32> to vector<128xf32>
    %59 = vector.shape_cast %58 : vector<128xf32> to vector<1x128xf32>
    %cst_18 = arith.constant 3.906250e-03 : f32
    %60 = vector.broadcast %cst_18 : f32 to vector<1x128xf32>
    %61 = arith.mulf %59, %60 : vector<1x128xf32>
    %62 = vector.broadcast %61 : vector<1x128xf32> to vector<256x128xf32>
    %63 = arith.subf %57, %62 : vector<256x128xf32>
    %64 = arith.mulf %63, %63 : vector<256x128xf32>
    %cst_19 = arith.constant dense<0.000000e+00> : vector<128xf32>
    %65 = vector.multi_reduction <add>, %64, %cst_19 [0] : vector<256x128xf32> to vector<128xf32>
    %66 = vector.shape_cast %65 : vector<128xf32> to vector<1x128xf32>
    %67 = vector.extract_strided_slice %1 {offsets = [1, 0, 0], sizes = [16, 16, 4], strides = [1, 1, 1]} : vector<18x18x4xbf16> to vector<16x16x4xbf16>
    %68 = vector.shape_cast %67 : vector<16x16x4xbf16> to vector<256x4xbf16>
    %69 = vector.extract_strided_slice %2 {offsets = [2, 0, 0, 0], sizes = [1, 1, 4, 128], strides = [1, 1, 1, 1]} : vector<4x4x4x128xbf16> to vector<1x1x4x128xbf16>
    %70 = vector.shape_cast %69 : vector<1x1x4x128xbf16> to vector<4x128xbf16>
    %cst_20 = arith.constant dense<0.000000e+00> : vector<256x128xf32>
    %71 = tpu.matmul %68, %70, %cst_20 {dimension_numbers = #tpu.dot_dimension_numbers<[1], [0], [0], [1], [0, 0, 1, 1], [], []>} : vector<256x4xbf16>, vector<4x128xbf16>, vector<256x128xf32> -> vector<256x128xf32>
    %72 = vector.extract_strided_slice %1 {offsets = [1, 1, 0], sizes = [16, 16, 4], strides = [1, 1, 1]} : vector<18x18x4xbf16> to vector<16x16x4xbf16>
    %73 = vector.shape_cast %72 : vector<16x16x4xbf16> to vector<256x4xbf16>
    %74 = vector.extract_strided_slice %2 {offsets = [2, 1, 0, 0], sizes = [1, 1, 4, 128], strides = [1, 1, 1, 1]} : vector<4x4x4x128xbf16> to vector<1x1x4x128xbf16>
    %75 = vector.shape_cast %74 : vector<1x1x4x128xbf16> to vector<4x128xbf16>
    %cst_21 = arith.constant dense<0.000000e+00> : vector<256x128xf32>
    %76 = tpu.matmul %73, %75, %cst_21 {dimension_numbers = #tpu.dot_dimension_numbers<[1], [0], [0], [1], [0, 0, 1, 1], [], []>} : vector<256x4xbf16>, vector<4x128xbf16>, vector<256x128xf32> -> vector<256x128xf32>
    %77 = arith.addf %71, %76 : vector<256x128xf32>
    %78 = vector.extract_strided_slice %1 {offsets = [2, 0, 0], sizes = [16, 16, 4], strides = [1, 1, 1]} : vector<18x18x4xbf16> to vector<16x16x4xbf16>
    %79 = vector.shape_cast %78 : vector<16x16x4xbf16> to vector<256x4xbf16>
    %80 = vector.extract_strided_slice %2 {offsets = [2, 2, 0, 0], sizes = [1, 1, 4, 128], strides = [1, 1, 1, 1]} : vector<4x4x4x128xbf16> to vector<1x1x4x128xbf16>
    %81 = vector.shape_cast %80 : vector<1x1x4x128xbf16> to vector<4x128xbf16>
    %cst_22 = arith.constant dense<0.000000e+00> : vector<256x128xf32>
    %82 = tpu.matmul %79, %81, %cst_22 {dimension_numbers = #tpu.dot_dimension_numbers<[1], [0], [0], [1], [0, 0, 1, 1], [], []>} : vector<256x4xbf16>, vector<4x128xbf16>, vector<256x128xf32> -> vector<256x128xf32>
    %83 = arith.addf %77, %82 : vector<256x128xf32>
    %84 = vector.extract_strided_slice %1 {offsets = [2, 1, 0], sizes = [16, 16, 4], strides = [1, 1, 1]} : vector<18x18x4xbf16> to vector<16x16x4xbf16>
    %85 = vector.shape_cast %84 : vector<16x16x4xbf16> to vector<256x4xbf16>
    %86 = vector.extract_strided_slice %2 {offsets = [2, 3, 0, 0], sizes = [1, 1, 4, 128], strides = [1, 1, 1, 1]} : vector<4x4x4x128xbf16> to vector<1x1x4x128xbf16>
    %87 = vector.shape_cast %86 : vector<1x1x4x128xbf16> to vector<4x128xbf16>
    %cst_23 = arith.constant dense<0.000000e+00> : vector<256x128xf32>
    %88 = tpu.matmul %85, %87, %cst_23 {dimension_numbers = #tpu.dot_dimension_numbers<[1], [0], [0], [1], [0, 0, 1, 1], [], []>} : vector<256x4xbf16>, vector<4x128xbf16>, vector<256x128xf32> -> vector<256x128xf32>
    %89 = arith.addf %83, %88 : vector<256x128xf32>
    %cst_24 = arith.constant dense<0.000000e+00> : vector<128xf32>
    %90 = vector.multi_reduction <add>, %89, %cst_24 [0] : vector<256x128xf32> to vector<128xf32>
    %91 = vector.shape_cast %90 : vector<128xf32> to vector<1x128xf32>
    %cst_25 = arith.constant 3.906250e-03 : f32
    %92 = vector.broadcast %cst_25 : f32 to vector<1x128xf32>
    %93 = arith.mulf %91, %92 : vector<1x128xf32>
    %94 = vector.broadcast %93 : vector<1x128xf32> to vector<256x128xf32>
    %95 = arith.subf %89, %94 : vector<256x128xf32>
    %96 = arith.mulf %95, %95 : vector<256x128xf32>
    %cst_26 = arith.constant dense<0.000000e+00> : vector<128xf32>
    %97 = vector.multi_reduction <add>, %96, %cst_26 [0] : vector<256x128xf32> to vector<128xf32>
    %98 = vector.shape_cast %97 : vector<128xf32> to vector<1x128xf32>
    %99 = vector.extract_strided_slice %1 {offsets = [1, 1, 0], sizes = [16, 16, 4], strides = [1, 1, 1]} : vector<18x18x4xbf16> to vector<16x16x4xbf16>
    %100 = vector.shape_cast %99 : vector<16x16x4xbf16> to vector<256x4xbf16>
    %101 = vector.extract_strided_slice %2 {offsets = [3, 0, 0, 0], sizes = [1, 1, 4, 128], strides = [1, 1, 1, 1]} : vector<4x4x4x128xbf16> to vector<1x1x4x128xbf16>
    %102 = vector.shape_cast %101 : vector<1x1x4x128xbf16> to vector<4x128xbf16>
    %cst_27 = arith.constant dense<0.000000e+00> : vector<256x128xf32>
    %103 = tpu.matmul %100, %102, %cst_27 {dimension_numbers = #tpu.dot_dimension_numbers<[1], [0], [0], [1], [0, 0, 1, 1], [], []>} : vector<256x4xbf16>, vector<4x128xbf16>, vector<256x128xf32> -> vector<256x128xf32>
    %104 = vector.extract_strided_slice %1 {offsets = [1, 2, 0], sizes = [16, 16, 4], strides = [1, 1, 1]} : vector<18x18x4xbf16> to vector<16x16x4xbf16>
    %105 = vector.shape_cast %104 : vector<16x16x4xbf16> to vector<256x4xbf16>
    %106 = vector.extract_strided_slice %2 {offsets = [3, 1, 0, 0], sizes = [1, 1, 4, 128], strides = [1, 1, 1, 1]} : vector<4x4x4x128xbf16> to vector<1x1x4x128xbf16>
    %107 = vector.shape_cast %106 : vector<1x1x4x128xbf16> to vector<4x128xbf16>
    %cst_28 = arith.constant dense<0.000000e+00> : vector<256x128xf32>
    %108 = tpu.matmul %105, %107, %cst_28 {dimension_numbers = #tpu.dot_dimension_numbers<[1], [0], [0], [1], [0, 0, 1, 1], [], []>} : vector<256x4xbf16>, vector<4x128xbf16>, vector<256x128xf32> -> vector<256x128xf32>
    %109 = arith.addf %103, %108 : vector<256x128xf32>
    %110 = vector.extract_strided_slice %1 {offsets = [2, 1, 0], sizes = [16, 16, 4], strides = [1, 1, 1]} : vector<18x18x4xbf16> to vector<16x16x4xbf16>
    %111 = vector.shape_cast %110 : vector<16x16x4xbf16> to vector<256x4xbf16>
    %112 = vector.extract_strided_slice %2 {offsets = [3, 2, 0, 0], sizes = [1, 1, 4, 128], strides = [1, 1, 1, 1]} : vector<4x4x4x128xbf16> to vector<1x1x4x128xbf16>
    %113 = vector.shape_cast %112 : vector<1x1x4x128xbf16> to vector<4x128xbf16>
    %cst_29 = arith.constant dense<0.000000e+00> : vector<256x128xf32>
    %114 = tpu.matmul %111, %113, %cst_29 {dimension_numbers = #tpu.dot_dimension_numbers<[1], [0], [0], [1], [0, 0, 1, 1], [], []>} : vector<256x4xbf16>, vector<4x128xbf16>, vector<256x128xf32> -> vector<256x128xf32>
    %115 = arith.addf %109, %114 : vector<256x128xf32>
    %116 = vector.extract_strided_slice %1 {offsets = [2, 2, 0], sizes = [16, 16, 4], strides = [1, 1, 1]} : vector<18x18x4xbf16> to vector<16x16x4xbf16>
    %117 = vector.shape_cast %116 : vector<16x16x4xbf16> to vector<256x4xbf16>
    %118 = vector.extract_strided_slice %2 {offsets = [3, 3, 0, 0], sizes = [1, 1, 4, 128], strides = [1, 1, 1, 1]} : vector<4x4x4x128xbf16> to vector<1x1x4x128xbf16>
    %119 = vector.shape_cast %118 : vector<1x1x4x128xbf16> to vector<4x128xbf16>
    %cst_30 = arith.constant dense<0.000000e+00> : vector<256x128xf32>
    %120 = tpu.matmul %117, %119, %cst_30 {dimension_numbers = #tpu.dot_dimension_numbers<[1], [0], [0], [1], [0, 0, 1, 1], [], []>} : vector<256x4xbf16>, vector<4x128xbf16>, vector<256x128xf32> -> vector<256x128xf32>
    %121 = arith.addf %115, %120 : vector<256x128xf32>
    %cst_31 = arith.constant dense<0.000000e+00> : vector<128xf32>
    %122 = vector.multi_reduction <add>, %121, %cst_31 [0] : vector<256x128xf32> to vector<128xf32>
    %123 = vector.shape_cast %122 : vector<128xf32> to vector<1x128xf32>
    %cst_32 = arith.constant 3.906250e-03 : f32
    %124 = vector.broadcast %cst_32 : f32 to vector<1x128xf32>
    %125 = arith.mulf %123, %124 : vector<1x128xf32>
    %126 = vector.broadcast %125 : vector<1x128xf32> to vector<256x128xf32>
    %127 = arith.subf %121, %126 : vector<256x128xf32>
    %128 = arith.mulf %127, %127 : vector<256x128xf32>
    %cst_33 = arith.constant dense<0.000000e+00> : vector<128xf32>
    %129 = vector.multi_reduction <add>, %128, %cst_33 [0] : vector<256x128xf32> to vector<128xf32>
    %130 = vector.shape_cast %129 : vector<128xf32> to vector<1x128xf32>
    %131 = arith.addf %27, %59 : vector<1x128xf32>
    %132 = arith.addf %131, %91 : vector<1x128xf32>
    %133 = arith.addf %132, %123 : vector<1x128xf32>
    %cst_34 = arith.constant 9.765625E-4 : f32
    %134 = vector.broadcast %cst_34 : f32 to vector<1x128xf32>
    %135 = arith.mulf %133, %134 : vector<1x128xf32>
    %136 = arith.addf %34, %66 : vector<1x128xf32>
    %137 = arith.addf %136, %98 : vector<1x128xf32>
    %138 = arith.addf %137, %130 : vector<1x128xf32>
    %139 = arith.subf %29, %135 : vector<1x128xf32>
    %cst_35 = arith.constant 2.560000e+02 : f32
    %140 = vector.broadcast %cst_35 : f32 to vector<1x128xf32>
    %141 = arith.mulf %140, %139 : vector<1x128xf32>
    %142 = arith.mulf %141, %139 : vector<1x128xf32>
    %143 = arith.addf %138, %142 : vector<1x128xf32>
    %144 = arith.subf %61, %135 : vector<1x128xf32>
    %cst_36 = arith.constant 2.560000e+02 : f32
    %145 = vector.broadcast %cst_36 : f32 to vector<1x128xf32>
    %146 = arith.mulf %145, %144 : vector<1x128xf32>
    %147 = arith.mulf %146, %144 : vector<1x128xf32>
    %148 = arith.addf %143, %147 : vector<1x128xf32>
    %149 = arith.subf %93, %135 : vector<1x128xf32>
    %cst_37 = arith.constant 2.560000e+02 : f32
    %150 = vector.broadcast %cst_37 : f32 to vector<1x128xf32>
    %151 = arith.mulf %150, %149 : vector<1x128xf32>
    %152 = arith.mulf %151, %149 : vector<1x128xf32>
    %153 = arith.addf %148, %152 : vector<1x128xf32>
    %154 = arith.subf %125, %135 : vector<1x128xf32>
    %cst_38 = arith.constant 2.560000e+02 : f32
    %155 = vector.broadcast %cst_38 : f32 to vector<1x128xf32>
    %156 = arith.mulf %155, %154 : vector<1x128xf32>
    %157 = arith.mulf %156, %154 : vector<1x128xf32>
    %158 = arith.addf %153, %157 : vector<1x128xf32>
    %159 = tpu.concatenate %133, %158 in 0 : vector<1x128xf32>, vector<1x128xf32> -> vector<2x128xf32>
    %160 = vector.shape_cast %159 : vector<2x128xf32> to vector<1x2x128xf32>
    %c0_39 = arith.constant 0 : index
    %c0_40 = arith.constant 0 : index
    %c0_41 = arith.constant 0 : index
    %161 = vector.load %arg3[%c0_39, %c0_40, %c0_41] : memref<1x2x128xf32, #tpu.memory_space<vmem>>, vector<1x2x128xf32>
    tpu.vector_store %arg3[%c0_39, %c0_40, %c0_41], %160 {strides = array<i32>} : memref<1x2x128xf32, #tpu.memory_space<vmem>>, vector<1x2x128xf32>,
    return
  }
  func.func @transform_0(%arg0: i32) -> (i32, i32, i32, i32) {
    %c0_i32 = arith.constant 0 : i32
    %c0_i32_0 = arith.constant 0 : i32
    %c0_i32_1 = arith.constant 0 : i32
    %c0_i32_2 = arith.constant 0 : i32
    return %arg0, %c0_i32, %c0_i32_0, %c0_i32_1 : i32, i32, i32, i32
  }
  func.func @transform_1(%arg0: i32) -> (i32, i32, i32, i32) {
    %c0_i32 = arith.constant 0 : i32
    %c0_i32_0 = arith.constant 0 : i32
    %c0_i32_1 = arith.constant 0 : i32
    %c0_i32_2 = arith.constant 0 : i32
    %c0_i32_3 = arith.constant 0 : i32
    return %c0_i32, %c0_i32_0, %c0_i32_1, %c0_i32_2 : i32, i32, i32, i32
  }
  func.func @transform_2(%arg0: i32) -> (i32, i32, i32) {
    %c0_i32 = arith.constant 0 : i32
    %c0_i32_0 = arith.constant 0 : i32
    %c0_i32_1 = arith.constant 0 : i32
    return %arg0, %c0_i32, %c0_i32_0 : i32, i32, i32
  }
}

module attributes {stable_mosaic.version = 11 : i64} {
  func.func @convt_bn_kernel(%arg0: i32, %arg1: memref<1x18x18x4xbf16, #tpu.memory_space<vmem>>, %arg2: memref<4x4x4x128xbf16, #tpu.memory_space<vmem>>, %arg3: memref<1x128xf32, #tpu.memory_space<vmem>>, %arg4: memref<1x128xf32, #tpu.memory_space<vmem>>, %arg5: memref<1x16x2x16x256xf32, #tpu.memory_space<vmem>>) attributes {dimension_semantics = [#tpu.dimension_semantics<parallel>], iteration_bounds = array<i64: 2>, scalar_prefetch = 0 : i64, scratch_operands = 0 : i64, tpu.core_type = #tpu.core_type<tc>, window_params = [{transform_indices = @transform_0, window_bounds = array<i64: 1, 18, 18, 4>}, {pipeline_mode = #tpu.pipeline_mode<synchronous>, transform_indices = @transform_1, window_bounds = array<i64: 4, 4, 4, 128>}, {pipeline_mode = #tpu.pipeline_mode<synchronous>, transform_indices = @transform_2, window_bounds = array<i64: 1, 128>}, {pipeline_mode = #tpu.pipeline_mode<synchronous>, transform_indices = @transform_3, window_bounds = array<i64: 1, 128>}, {transform_indices = @transform_4, window_bounds = array<i64: 1, 16, 2, 16, 256>}]} {
    %c0 = arith.constant 0 : index
    %c0_0 = arith.constant 0 : index
    %c0_1 = arith.constant 0 : index
    %c0_2 = arith.constant 0 : index
    %0 = vector.load %arg1[%c0, %c0_0, %c0_1, %c0_2] : memref<1x18x18x4xbf16, #tpu.memory_space<vmem>>, vector<1x18x18x4xbf16>
    %1 = vector.shape_cast %0 : vector<1x18x18x4xbf16> to vector<18x18x4xbf16>
    %c0_3 = arith.constant 0 : index
    %c0_4 = arith.constant 0 : index
    %c0_5 = arith.constant 0 : index
    %c0_6 = arith.constant 0 : index
    %2 = vector.load %arg2[%c0_3, %c0_4, %c0_5, %c0_6] : memref<4x4x4x128xbf16, #tpu.memory_space<vmem>>, vector<4x4x4x128xbf16>
    %c0_7 = arith.constant 0 : index
    %c0_8 = arith.constant 0 : index
    %3 = vector.load %arg3[%c0_7, %c0_8] : memref<1x128xf32, #tpu.memory_space<vmem>>, vector<1x128xf32>
    %c0_9 = arith.constant 0 : index
    %c0_10 = arith.constant 0 : index
    %4 = vector.load %arg4[%c0_9, %c0_10] : memref<1x128xf32, #tpu.memory_space<vmem>>, vector<1x128xf32>
    %5 = vector.extract_strided_slice %1 {offsets = [0, 0, 0], sizes = [16, 16, 4], strides = [1, 1, 1]} : vector<18x18x4xbf16> to vector<16x16x4xbf16>
    %6 = vector.shape_cast %5 : vector<16x16x4xbf16> to vector<256x4xbf16>
    %7 = vector.extract_strided_slice %2 {offsets = [0, 0, 0, 0], sizes = [1, 1, 4, 128], strides = [1, 1, 1, 1]} : vector<4x4x4x128xbf16> to vector<1x1x4x128xbf16>
    %8 = vector.shape_cast %7 : vector<1x1x4x128xbf16> to vector<4x128xbf16>
    %cst = arith.constant dense<0.000000e+00> : vector<256x128xf32>
    %9 = tpu.matmul %6, %8, %cst {dimension_numbers = #tpu.dot_dimension_numbers<[1], [0], [0], [1], [0, 0, 1, 1], [], []>} : vector<256x4xbf16>, vector<4x128xbf16>, vector<256x128xf32> -> vector<256x128xf32>
    %10 = vector.extract_strided_slice %1 {offsets = [0, 1, 0], sizes = [16, 16, 4], strides = [1, 1, 1]} : vector<18x18x4xbf16> to vector<16x16x4xbf16>
    %11 = vector.shape_cast %10 : vector<16x16x4xbf16> to vector<256x4xbf16>
    %12 = vector.extract_strided_slice %2 {offsets = [0, 1, 0, 0], sizes = [1, 1, 4, 128], strides = [1, 1, 1, 1]} : vector<4x4x4x128xbf16> to vector<1x1x4x128xbf16>
    %13 = vector.shape_cast %12 : vector<1x1x4x128xbf16> to vector<4x128xbf16>
    %cst_11 = arith.constant dense<0.000000e+00> : vector<256x128xf32>
    %14 = tpu.matmul %11, %13, %cst_11 {dimension_numbers = #tpu.dot_dimension_numbers<[1], [0], [0], [1], [0, 0, 1, 1], [], []>} : vector<256x4xbf16>, vector<4x128xbf16>, vector<256x128xf32> -> vector<256x128xf32>
    %15 = arith.addf %9, %14 : vector<256x128xf32>
    %16 = vector.extract_strided_slice %1 {offsets = [1, 0, 0], sizes = [16, 16, 4], strides = [1, 1, 1]} : vector<18x18x4xbf16> to vector<16x16x4xbf16>
    %17 = vector.shape_cast %16 : vector<16x16x4xbf16> to vector<256x4xbf16>
    %18 = vector.extract_strided_slice %2 {offsets = [0, 2, 0, 0], sizes = [1, 1, 4, 128], strides = [1, 1, 1, 1]} : vector<4x4x4x128xbf16> to vector<1x1x4x128xbf16>
    %19 = vector.shape_cast %18 : vector<1x1x4x128xbf16> to vector<4x128xbf16>
    %cst_12 = arith.constant dense<0.000000e+00> : vector<256x128xf32>
    %20 = tpu.matmul %17, %19, %cst_12 {dimension_numbers = #tpu.dot_dimension_numbers<[1], [0], [0], [1], [0, 0, 1, 1], [], []>} : vector<256x4xbf16>, vector<4x128xbf16>, vector<256x128xf32> -> vector<256x128xf32>
    %21 = arith.addf %15, %20 : vector<256x128xf32>
    %22 = vector.extract_strided_slice %1 {offsets = [1, 1, 0], sizes = [16, 16, 4], strides = [1, 1, 1]} : vector<18x18x4xbf16> to vector<16x16x4xbf16>
    %23 = vector.shape_cast %22 : vector<16x16x4xbf16> to vector<256x4xbf16>
    %24 = vector.extract_strided_slice %2 {offsets = [0, 3, 0, 0], sizes = [1, 1, 4, 128], strides = [1, 1, 1, 1]} : vector<4x4x4x128xbf16> to vector<1x1x4x128xbf16>
    %25 = vector.shape_cast %24 : vector<1x1x4x128xbf16> to vector<4x128xbf16>
    %cst_13 = arith.constant dense<0.000000e+00> : vector<256x128xf32>
    %26 = tpu.matmul %23, %25, %cst_13 {dimension_numbers = #tpu.dot_dimension_numbers<[1], [0], [0], [1], [0, 0, 1, 1], [], []>} : vector<256x4xbf16>, vector<4x128xbf16>, vector<256x128xf32> -> vector<256x128xf32>
    %27 = arith.addf %21, %26 : vector<256x128xf32>
    %28 = vector.broadcast %3 : vector<1x128xf32> to vector<256x128xf32>
    %29 = arith.mulf %27, %28 : vector<256x128xf32>
    %30 = vector.broadcast %4 : vector<1x128xf32> to vector<256x128xf32>
    %31 = arith.addf %29, %30 : vector<256x128xf32>
    %32 = vector.shape_cast %31 : vector<256x128xf32> to vector<1x16x1x16x128xf32>
    %c0_14 = arith.constant 0 : index
    %c0_15 = arith.constant 0 : index
    %c0_16 = arith.constant 0 : index
    %c0_17 = arith.constant 0 : index
    %c0_18 = arith.constant 0 : index
    %33 = vector.load %arg5[%c0_14, %c0_15, %c0_16, %c0_17, %c0_18] : memref<1x16x2x16x256xf32, #tpu.memory_space<vmem>>, vector<1x16x1x16x128xf32>
    tpu.vector_store %arg5[%c0_14, %c0_15, %c0_16, %c0_17, %c0_18], %32 {strides = array<i32>} : memref<1x16x2x16x256xf32, #tpu.memory_space<vmem>>, vector<1x16x1x16x128xf32>,
    %34 = vector.extract_strided_slice %1 {offsets = [0, 1, 0], sizes = [16, 16, 4], strides = [1, 1, 1]} : vector<18x18x4xbf16> to vector<16x16x4xbf16>
    %35 = vector.shape_cast %34 : vector<16x16x4xbf16> to vector<256x4xbf16>
    %36 = vector.extract_strided_slice %2 {offsets = [1, 0, 0, 0], sizes = [1, 1, 4, 128], strides = [1, 1, 1, 1]} : vector<4x4x4x128xbf16> to vector<1x1x4x128xbf16>
    %37 = vector.shape_cast %36 : vector<1x1x4x128xbf16> to vector<4x128xbf16>
    %cst_19 = arith.constant dense<0.000000e+00> : vector<256x128xf32>
    %38 = tpu.matmul %35, %37, %cst_19 {dimension_numbers = #tpu.dot_dimension_numbers<[1], [0], [0], [1], [0, 0, 1, 1], [], []>} : vector<256x4xbf16>, vector<4x128xbf16>, vector<256x128xf32> -> vector<256x128xf32>
    %39 = vector.extract_strided_slice %1 {offsets = [0, 2, 0], sizes = [16, 16, 4], strides = [1, 1, 1]} : vector<18x18x4xbf16> to vector<16x16x4xbf16>
    %40 = vector.shape_cast %39 : vector<16x16x4xbf16> to vector<256x4xbf16>
    %41 = vector.extract_strided_slice %2 {offsets = [1, 1, 0, 0], sizes = [1, 1, 4, 128], strides = [1, 1, 1, 1]} : vector<4x4x4x128xbf16> to vector<1x1x4x128xbf16>
    %42 = vector.shape_cast %41 : vector<1x1x4x128xbf16> to vector<4x128xbf16>
    %cst_20 = arith.constant dense<0.000000e+00> : vector<256x128xf32>
    %43 = tpu.matmul %40, %42, %cst_20 {dimension_numbers = #tpu.dot_dimension_numbers<[1], [0], [0], [1], [0, 0, 1, 1], [], []>} : vector<256x4xbf16>, vector<4x128xbf16>, vector<256x128xf32> -> vector<256x128xf32>
    %44 = arith.addf %38, %43 : vector<256x128xf32>
    %45 = vector.extract_strided_slice %1 {offsets = [1, 1, 0], sizes = [16, 16, 4], strides = [1, 1, 1]} : vector<18x18x4xbf16> to vector<16x16x4xbf16>
    %46 = vector.shape_cast %45 : vector<16x16x4xbf16> to vector<256x4xbf16>
    %47 = vector.extract_strided_slice %2 {offsets = [1, 2, 0, 0], sizes = [1, 1, 4, 128], strides = [1, 1, 1, 1]} : vector<4x4x4x128xbf16> to vector<1x1x4x128xbf16>
    %48 = vector.shape_cast %47 : vector<1x1x4x128xbf16> to vector<4x128xbf16>
    %cst_21 = arith.constant dense<0.000000e+00> : vector<256x128xf32>
    %49 = tpu.matmul %46, %48, %cst_21 {dimension_numbers = #tpu.dot_dimension_numbers<[1], [0], [0], [1], [0, 0, 1, 1], [], []>} : vector<256x4xbf16>, vector<4x128xbf16>, vector<256x128xf32> -> vector<256x128xf32>
    %50 = arith.addf %44, %49 : vector<256x128xf32>
    %51 = vector.extract_strided_slice %1 {offsets = [1, 2, 0], sizes = [16, 16, 4], strides = [1, 1, 1]} : vector<18x18x4xbf16> to vector<16x16x4xbf16>
    %52 = vector.shape_cast %51 : vector<16x16x4xbf16> to vector<256x4xbf16>
    %53 = vector.extract_strided_slice %2 {offsets = [1, 3, 0, 0], sizes = [1, 1, 4, 128], strides = [1, 1, 1, 1]} : vector<4x4x4x128xbf16> to vector<1x1x4x128xbf16>
    %54 = vector.shape_cast %53 : vector<1x1x4x128xbf16> to vector<4x128xbf16>
    %cst_22 = arith.constant dense<0.000000e+00> : vector<256x128xf32>
    %55 = tpu.matmul %52, %54, %cst_22 {dimension_numbers = #tpu.dot_dimension_numbers<[1], [0], [0], [1], [0, 0, 1, 1], [], []>} : vector<256x4xbf16>, vector<4x128xbf16>, vector<256x128xf32> -> vector<256x128xf32>
    %56 = arith.addf %50, %55 : vector<256x128xf32>
    %57 = vector.broadcast %3 : vector<1x128xf32> to vector<256x128xf32>
    %58 = arith.mulf %56, %57 : vector<256x128xf32>
    %59 = vector.broadcast %4 : vector<1x128xf32> to vector<256x128xf32>
    %60 = arith.addf %58, %59 : vector<256x128xf32>
    %61 = vector.shape_cast %60 : vector<256x128xf32> to vector<1x16x1x16x128xf32>
    %c0_23 = arith.constant 0 : index
    %c0_24 = arith.constant 0 : index
    %c0_25 = arith.constant 0 : index
    %c0_26 = arith.constant 0 : index
    %c128 = arith.constant 128 : index
    %62 = vector.load %arg5[%c0_23, %c0_24, %c0_25, %c0_26, %c128] : memref<1x16x2x16x256xf32, #tpu.memory_space<vmem>>, vector<1x16x1x16x128xf32>
    tpu.vector_store %arg5[%c0_23, %c0_24, %c0_25, %c0_26, %c128], %61 {strides = array<i32>} : memref<1x16x2x16x256xf32, #tpu.memory_space<vmem>>, vector<1x16x1x16x128xf32>,
    %63 = vector.extract_strided_slice %1 {offsets = [1, 0, 0], sizes = [16, 16, 4], strides = [1, 1, 1]} : vector<18x18x4xbf16> to vector<16x16x4xbf16>
    %64 = vector.shape_cast %63 : vector<16x16x4xbf16> to vector<256x4xbf16>
    %65 = vector.extract_strided_slice %2 {offsets = [2, 0, 0, 0], sizes = [1, 1, 4, 128], strides = [1, 1, 1, 1]} : vector<4x4x4x128xbf16> to vector<1x1x4x128xbf16>
    %66 = vector.shape_cast %65 : vector<1x1x4x128xbf16> to vector<4x128xbf16>
    %cst_27 = arith.constant dense<0.000000e+00> : vector<256x128xf32>
    %67 = tpu.matmul %64, %66, %cst_27 {dimension_numbers = #tpu.dot_dimension_numbers<[1], [0], [0], [1], [0, 0, 1, 1], [], []>} : vector<256x4xbf16>, vector<4x128xbf16>, vector<256x128xf32> -> vector<256x128xf32>
    %68 = vector.extract_strided_slice %1 {offsets = [1, 1, 0], sizes = [16, 16, 4], strides = [1, 1, 1]} : vector<18x18x4xbf16> to vector<16x16x4xbf16>
    %69 = vector.shape_cast %68 : vector<16x16x4xbf16> to vector<256x4xbf16>
    %70 = vector.extract_strided_slice %2 {offsets = [2, 1, 0, 0], sizes = [1, 1, 4, 128], strides = [1, 1, 1, 1]} : vector<4x4x4x128xbf16> to vector<1x1x4x128xbf16>
    %71 = vector.shape_cast %70 : vector<1x1x4x128xbf16> to vector<4x128xbf16>
    %cst_28 = arith.constant dense<0.000000e+00> : vector<256x128xf32>
    %72 = tpu.matmul %69, %71, %cst_28 {dimension_numbers = #tpu.dot_dimension_numbers<[1], [0], [0], [1], [0, 0, 1, 1], [], []>} : vector<256x4xbf16>, vector<4x128xbf16>, vector<256x128xf32> -> vector<256x128xf32>
    %73 = arith.addf %67, %72 : vector<256x128xf32>
    %74 = vector.extract_strided_slice %1 {offsets = [2, 0, 0], sizes = [16, 16, 4], strides = [1, 1, 1]} : vector<18x18x4xbf16> to vector<16x16x4xbf16>
    %75 = vector.shape_cast %74 : vector<16x16x4xbf16> to vector<256x4xbf16>
    %76 = vector.extract_strided_slice %2 {offsets = [2, 2, 0, 0], sizes = [1, 1, 4, 128], strides = [1, 1, 1, 1]} : vector<4x4x4x128xbf16> to vector<1x1x4x128xbf16>
    %77 = vector.shape_cast %76 : vector<1x1x4x128xbf16> to vector<4x128xbf16>
    %cst_29 = arith.constant dense<0.000000e+00> : vector<256x128xf32>
    %78 = tpu.matmul %75, %77, %cst_29 {dimension_numbers = #tpu.dot_dimension_numbers<[1], [0], [0], [1], [0, 0, 1, 1], [], []>} : vector<256x4xbf16>, vector<4x128xbf16>, vector<256x128xf32> -> vector<256x128xf32>
    %79 = arith.addf %73, %78 : vector<256x128xf32>
    %80 = vector.extract_strided_slice %1 {offsets = [2, 1, 0], sizes = [16, 16, 4], strides = [1, 1, 1]} : vector<18x18x4xbf16> to vector<16x16x4xbf16>
    %81 = vector.shape_cast %80 : vector<16x16x4xbf16> to vector<256x4xbf16>
    %82 = vector.extract_strided_slice %2 {offsets = [2, 3, 0, 0], sizes = [1, 1, 4, 128], strides = [1, 1, 1, 1]} : vector<4x4x4x128xbf16> to vector<1x1x4x128xbf16>
    %83 = vector.shape_cast %82 : vector<1x1x4x128xbf16> to vector<4x128xbf16>
    %cst_30 = arith.constant dense<0.000000e+00> : vector<256x128xf32>
    %84 = tpu.matmul %81, %83, %cst_30 {dimension_numbers = #tpu.dot_dimension_numbers<[1], [0], [0], [1], [0, 0, 1, 1], [], []>} : vector<256x4xbf16>, vector<4x128xbf16>, vector<256x128xf32> -> vector<256x128xf32>
    %85 = arith.addf %79, %84 : vector<256x128xf32>
    %86 = vector.broadcast %3 : vector<1x128xf32> to vector<256x128xf32>
    %87 = arith.mulf %85, %86 : vector<256x128xf32>
    %88 = vector.broadcast %4 : vector<1x128xf32> to vector<256x128xf32>
    %89 = arith.addf %87, %88 : vector<256x128xf32>
    %90 = vector.shape_cast %89 : vector<256x128xf32> to vector<1x16x1x16x128xf32>
    %c0_31 = arith.constant 0 : index
    %c0_32 = arith.constant 0 : index
    %c1 = arith.constant 1 : index
    %c0_33 = arith.constant 0 : index
    %c0_34 = arith.constant 0 : index
    %91 = vector.load %arg5[%c0_31, %c0_32, %c1, %c0_33, %c0_34] : memref<1x16x2x16x256xf32, #tpu.memory_space<vmem>>, vector<1x16x1x16x128xf32>
    tpu.vector_store %arg5[%c0_31, %c0_32, %c1, %c0_33, %c0_34], %90 {strides = array<i32>} : memref<1x16x2x16x256xf32, #tpu.memory_space<vmem>>, vector<1x16x1x16x128xf32>,
    %92 = vector.extract_strided_slice %1 {offsets = [1, 1, 0], sizes = [16, 16, 4], strides = [1, 1, 1]} : vector<18x18x4xbf16> to vector<16x16x4xbf16>
    %93 = vector.shape_cast %92 : vector<16x16x4xbf16> to vector<256x4xbf16>
    %94 = vector.extract_strided_slice %2 {offsets = [3, 0, 0, 0], sizes = [1, 1, 4, 128], strides = [1, 1, 1, 1]} : vector<4x4x4x128xbf16> to vector<1x1x4x128xbf16>
    %95 = vector.shape_cast %94 : vector<1x1x4x128xbf16> to vector<4x128xbf16>
    %cst_35 = arith.constant dense<0.000000e+00> : vector<256x128xf32>
    %96 = tpu.matmul %93, %95, %cst_35 {dimension_numbers = #tpu.dot_dimension_numbers<[1], [0], [0], [1], [0, 0, 1, 1], [], []>} : vector<256x4xbf16>, vector<4x128xbf16>, vector<256x128xf32> -> vector<256x128xf32>
    %97 = vector.extract_strided_slice %1 {offsets = [1, 2, 0], sizes = [16, 16, 4], strides = [1, 1, 1]} : vector<18x18x4xbf16> to vector<16x16x4xbf16>
    %98 = vector.shape_cast %97 : vector<16x16x4xbf16> to vector<256x4xbf16>
    %99 = vector.extract_strided_slice %2 {offsets = [3, 1, 0, 0], sizes = [1, 1, 4, 128], strides = [1, 1, 1, 1]} : vector<4x4x4x128xbf16> to vector<1x1x4x128xbf16>
    %100 = vector.shape_cast %99 : vector<1x1x4x128xbf16> to vector<4x128xbf16>
    %cst_36 = arith.constant dense<0.000000e+00> : vector<256x128xf32>
    %101 = tpu.matmul %98, %100, %cst_36 {dimension_numbers = #tpu.dot_dimension_numbers<[1], [0], [0], [1], [0, 0, 1, 1], [], []>} : vector<256x4xbf16>, vector<4x128xbf16>, vector<256x128xf32> -> vector<256x128xf32>
    %102 = arith.addf %96, %101 : vector<256x128xf32>
    %103 = vector.extract_strided_slice %1 {offsets = [2, 1, 0], sizes = [16, 16, 4], strides = [1, 1, 1]} : vector<18x18x4xbf16> to vector<16x16x4xbf16>
    %104 = vector.shape_cast %103 : vector<16x16x4xbf16> to vector<256x4xbf16>
    %105 = vector.extract_strided_slice %2 {offsets = [3, 2, 0, 0], sizes = [1, 1, 4, 128], strides = [1, 1, 1, 1]} : vector<4x4x4x128xbf16> to vector<1x1x4x128xbf16>
    %106 = vector.shape_cast %105 : vector<1x1x4x128xbf16> to vector<4x128xbf16>
    %cst_37 = arith.constant dense<0.000000e+00> : vector<256x128xf32>
    %107 = tpu.matmul %104, %106, %cst_37 {dimension_numbers = #tpu.dot_dimension_numbers<[1], [0], [0], [1], [0, 0, 1, 1], [], []>} : vector<256x4xbf16>, vector<4x128xbf16>, vector<256x128xf32> -> vector<256x128xf32>
    %108 = arith.addf %102, %107 : vector<256x128xf32>
    %109 = vector.extract_strided_slice %1 {offsets = [2, 2, 0], sizes = [16, 16, 4], strides = [1, 1, 1]} : vector<18x18x4xbf16> to vector<16x16x4xbf16>
    %110 = vector.shape_cast %109 : vector<16x16x4xbf16> to vector<256x4xbf16>
    %111 = vector.extract_strided_slice %2 {offsets = [3, 3, 0, 0], sizes = [1, 1, 4, 128], strides = [1, 1, 1, 1]} : vector<4x4x4x128xbf16> to vector<1x1x4x128xbf16>
    %112 = vector.shape_cast %111 : vector<1x1x4x128xbf16> to vector<4x128xbf16>
    %cst_38 = arith.constant dense<0.000000e+00> : vector<256x128xf32>
    %113 = tpu.matmul %110, %112, %cst_38 {dimension_numbers = #tpu.dot_dimension_numbers<[1], [0], [0], [1], [0, 0, 1, 1], [], []>} : vector<256x4xbf16>, vector<4x128xbf16>, vector<256x128xf32> -> vector<256x128xf32>
    %114 = arith.addf %108, %113 : vector<256x128xf32>
    %115 = vector.broadcast %3 : vector<1x128xf32> to vector<256x128xf32>
    %116 = arith.mulf %114, %115 : vector<256x128xf32>
    %117 = vector.broadcast %4 : vector<1x128xf32> to vector<256x128xf32>
    %118 = arith.addf %116, %117 : vector<256x128xf32>
    %119 = vector.shape_cast %118 : vector<256x128xf32> to vector<1x16x1x16x128xf32>
    %c0_39 = arith.constant 0 : index
    %c0_40 = arith.constant 0 : index
    %c1_41 = arith.constant 1 : index
    %c0_42 = arith.constant 0 : index
    %c128_43 = arith.constant 128 : index
    %120 = vector.load %arg5[%c0_39, %c0_40, %c1_41, %c0_42, %c128_43] : memref<1x16x2x16x256xf32, #tpu.memory_space<vmem>>, vector<1x16x1x16x128xf32>
    tpu.vector_store %arg5[%c0_39, %c0_40, %c1_41, %c0_42, %c128_43], %119 {strides = array<i32>} : memref<1x16x2x16x256xf32, #tpu.memory_space<vmem>>, vector<1x16x1x16x128xf32>,
    return
  }
  func.func @transform_0(%arg0: i32) -> (i32, i32, i32, i32) {
    %c0_i32 = arith.constant 0 : i32
    %c0_i32_0 = arith.constant 0 : i32
    %c0_i32_1 = arith.constant 0 : i32
    %c0_i32_2 = arith.constant 0 : i32
    return %arg0, %c0_i32, %c0_i32_0, %c0_i32_1 : i32, i32, i32, i32
  }
  func.func @transform_1(%arg0: i32) -> (i32, i32, i32, i32) {
    %c0_i32 = arith.constant 0 : i32
    %c0_i32_0 = arith.constant 0 : i32
    %c0_i32_1 = arith.constant 0 : i32
    %c0_i32_2 = arith.constant 0 : i32
    %c0_i32_3 = arith.constant 0 : i32
    return %c0_i32, %c0_i32_0, %c0_i32_1, %c0_i32_2 : i32, i32, i32, i32
  }
  func.func @transform_2(%arg0: i32) -> (i32, i32) {
    %c0_i32 = arith.constant 0 : i32
    %c0_i32_0 = arith.constant 0 : i32
    %c0_i32_1 = arith.constant 0 : i32
    return %c0_i32, %c0_i32_0 : i32, i32
  }
  func.func @transform_3(%arg0: i32) -> (i32, i32) {
    %c0_i32 = arith.constant 0 : i32
    %c0_i32_0 = arith.constant 0 : i32
    %c0_i32_1 = arith.constant 0 : i32
    return %c0_i32, %c0_i32_0 : i32, i32
  }
  func.func @transform_4(%arg0: i32) -> (i32, i32, i32, i32, i32) {
    %c0_i32 = arith.constant 0 : i32
    %c0_i32_0 = arith.constant 0 : i32
    %c0_i32_1 = arith.constant 0 : i32
    %c0_i32_2 = arith.constant 0 : i32
    %c0_i32_3 = arith.constant 0 : i32
    return %arg0, %c0_i32, %c0_i32_0, %c0_i32_1, %c0_i32_2 : i32, i32, i32, i32, i32
  }
}

</mosaic_0001>

<llo_original>
// kernel: conv_t_batch_forward.2
$region0: #{conv_t_batch_forward.2}
  #allocation0 [shape = 'u32[]', space=smem, size = 0x4, offset = 0x4, fixed_abs, tag = 'smem constant byte address 0x4 - core index']
  #allocation1 [shape = 'u32[72,128]{1,0:T(1,128)}', space=vmem, size = 0x9000, scoped, tag = 'internal scratch']
  %s0 = inlined_call_operand.vmem [shape: bf16[2,18,18,4], index: 0, kind: input, shape index: {}]
  %s1 = inlined_call_operand.vmem [shape: bf16[4,4,4,128], index: 1, kind: input, shape index: {}]
  %s2 = inlined_call_operand.vmem [shape: f32[2,2,128], index: 2, kind: output, shape index: {}]
  %s3 = sld [smem:[#allocation0]]
  $region41: #{conv_t_batch_forward.2} parent=0
    _
  %s5 = ssub.s32 1, %s3
  %s6 = scalar_select 0, %s5, %s3
  loop: start=0, step=1, limit=4
  $region2: #{conv_t_batch_forward.2} parent=0 // loop_pre_header
    _
  $region3: #{conv_t_batch_forward.2} parent=0 // loop_header
    %s8 = sphi 0, %s12
    %p9 = scmp.ge.s32.totalorder %s8, 4
    %s18 = sphi 0, %s20
    %s21 = sphi 0, %s18
    %s22 = sphi 0, %s21
    %s38 = sphi 0, %s22
    %s42 = sphi 0, %s42
    %s44 = sphi 0, %s42
    %s45 = sphi 0, %s44
    %s59 = sphi 0, %s45
    %s65 = sphi 0, %s67
    %s68 = sphi 0, %s65
    %s69 = sphi 0, %s68
    %s85 = sphi 0, %s69
  $region4: #{conv_t_batch_forward.2} parent=0 // loop_header_branch
    %11 = sbr.rel (%p9) target = $region8
  $region5: #{conv_t_batch_forward.2} parent=0 // loop_body
    %s13 = ssub.s32 %s8, 1
    %s14 = ssub.s32 %s8, 2
    %s15 = sadd.s32 %s8, 1
    %s16 = ssub.s32 %s8, %s15
    %p17 = scmp.eq.s32.totalorder %s16, 0
    %s19 = sadd.s32 %s18, 1
    %s20 = scalar_select %p17, %s18, %s19
    %p23 = pneg %p17
    %p24 = scmp.eq.s32.totalorder %s8, 1
    %p25 = por %p23, %p24
    %p26 = scmp.ne.s32.totalorder %s18, %s21
    %p27 = scmp.eq.s32.totalorder %s8, 0
    %p28 = por %p26, %p27
    %p29 = scmp.ne.s32.totalorder %s18, %s21
    %p30 = scmp.eq.s32.totalorder %s13, 1
    %p31 = por %p29, %p30
    %p32 = scmp.ne.s32.totalorder %s21, %s22
    %p33 = scmp.eq.s32.totalorder %s13, 0
    %p34 = por %p32, %p33
    %p35 = scmp.ne.s32.totalorder %s21, %s22
    %p36 = scmp.eq.s32.totalorder %s14, 1
    %p37 = por %p35, %p36
    %p39 = scmp.ne.s32.totalorder %s22, %s38
    %p40 = scmp.eq.s32.totalorder %s14, 0
    %p41 = por %p39, %p40
    %s43 = sadd.s32 %s42, 1
    %p46 = scmp.eq.s32.totalorder %s8, 1
    %p47 = scmp.ne.s32.totalorder %s42, %s44
    %p48 = scmp.eq.s32.totalorder %s8, 0
    %p49 = por %p47, %p48
    %p50 = scmp.ne.s32.totalorder %s42, %s44
    %p51 = scmp.eq.s32.totalorder %s13, 1
    %p52 = por %p50, %p51
    %p53 = scmp.ne.s32.totalorder %s44, %s45
    %p54 = scmp.eq.s32.totalorder %s13, 0
    %p55 = por %p53, %p54
    %p56 = scmp.ne.s32.totalorder %s44, %s45
    %p57 = scmp.eq.s32.totalorder %s14, 1
    %p58 = por %p56, %p57
    %p60 = scmp.ne.s32.totalorder %s45, %s59
    %p61 = scmp.eq.s32.totalorder %s14, 0
    %p62 = por %p60, %p61
    %s63 = ssub.s32 %s8, %s15
    %p64 = scmp.eq.s32.totalorder %s63, 0
    %s66 = sadd.s32 %s65, 1
    %s67 = scalar_select %p64, %s65, %s66
    %p70 = pneg %p64
    %p71 = scmp.eq.s32.totalorder %s8, 1
    %p72 = por %p70, %p71
    %p73 = scmp.ne.s32.totalorder %s65, %s68
    %p74 = scmp.eq.s32.totalorder %s8, 0
    %p75 = por %p73, %p74
    %p76 = scmp.ne.s32.totalorder %s65, %s68
    %p77 = scmp.eq.s32.totalorder %s13, 1
    %p78 = por %p76, %p77
    %p79 = scmp.ne.s32.totalorder %s68, %s69
    %p80 = scmp.eq.s32.totalorder %s13, 0
    %p81 = por %p79, %p80
    %p82 = scmp.ne.s32.totalorder %s68, %s69
    %p83 = scmp.eq.s32.totalorder %s14, 1
    %p84 = por %p82, %p83
    %p86 = scmp.ne.s32.totalorder %s69, %s85
    %p87 = scmp.eq.s32.totalorder %s14, 0
    %p88 = por %p86, %p87
    %p89 = scmp.le.s32.totalorder 1, %s8
    %p90 = scmp.lt.s32.totalorder %s8, 3
    %p91 = pnand %p89, %p90
    %p92 = pneg %p91
    // Predicated region
    $region9: #{conv_t_batch_forward.2} parent=5 // pred_check
      _
    $region10: #{conv_t_batch_forward.2} parent=5 // pred_check_branch
      %94 = sbr.rel (%p91) target = $region12
    $region11: #{conv_t_batch_forward.2} parent=5 // pred_region
      %s95 = ssub.s32 %s8, 1
      // Predicated region
      $region13: #{conv_t_batch_forward.2} parent=11 // pred_check
        %p96 = pneg %p55
      $region14: #{conv_t_batch_forward.2} parent=11 // pred_check_branch
        %98 = sbr.rel (%p96) target = $region16
      $region15: #{conv_t_batch_forward.2} parent=11 // pred_region
        _
      $region16: #{conv_t_batch_forward.2} parent=11 // pred_fallthru
        _
    $region12: #{conv_t_batch_forward.2} parent=5 // pred_fallthru
      _
    %p99 = scmp.lt.s32.totalorder %s8, 2
    // Predicated region
    $region17: #{conv_t_batch_forward.2} parent=5 // pred_check
      %p100 = pneg %p99
    $region18: #{conv_t_batch_forward.2} parent=5 // pred_check_branch
      %102 = sbr.rel (%p100) target = $region20
    $region19: #{conv_t_batch_forward.2} parent=5 // pred_region
      // Predicated region
      $region21: #{conv_t_batch_forward.2} parent=19 // pred_check
        %p103 = pneg %p28
      $region22: #{conv_t_batch_forward.2} parent=19 // pred_check_branch
        %105 = sbr.rel (%p103) target = $region24
      $region23: #{conv_t_batch_forward.2} parent=19 // pred_region
        %p106 = scmp.lt.s32.totalorder %s8, 1
        %s107 = scalar_select %p106, %s8, 1
        %s108 = smul.addr %s107, 54
        %s109 = smul.addr %s108, 4
        %s110 = scalar_lea.vmem %s0, %s109
      $region24: #{conv_t_batch_forward.2} parent=19 // pred_fallthru
        _
    $region20: #{conv_t_batch_forward.2} parent=5 // pred_fallthru
      _
    %p111 = scmp.le.s32.totalorder 1, %s8
    %p112 = scmp.lt.s32.totalorder %s8, 3
    %p113 = pnand %p111, %p112
    %p114 = pneg %p113
    // Predicated region
    $region25: #{conv_t_batch_forward.2} parent=5 // pred_check
      _
    $region26: #{conv_t_batch_forward.2} parent=5 // pred_check_branch
      %116 = sbr.rel (%p113) target = $region28
    $region27: #{conv_t_batch_forward.2} parent=5 // pred_region
      %s117 = ssub.s32 %s8, 1
      %p118 = scmp.lt.s32.totalorder %s13, 1
      %s119 = scalar_select %p118, %s13, 1
      %s120 = smul.addr %s119, 54
      %s121 = smul.addr %s120, 4
      %s122 = scalar_lea.vmem %s0, %s121
      %p123 = pneg %p34
      %p124 = pneg %p31
      %p125 = pneg %p55
      %p126 = pneg %p52
      %p127 = pneg %p81
      %p128 = pneg %p78
      %p129 = scmp.lt.s32.totalorder %s13, 1
      %s130 = scalar_select %p129, %s13, 1
      %s131 = smul.addr %s130, 2
      %s132 = scalar_lea.vmem %s2, %s131
      %p133 = scmp.lt.s32.totalorder %s13, 1
      %s134 = scalar_select %p133, %s13, 1
      %s135 = smul.addr %s134, 54
      %s136 = smul.addr %s135, 4
      %s137 = scalar_lea.vmem %s0, %s136
      %p138 = scmp.lt.s32.totalorder %s13, 1
      %s139 = scalar_select %p138, %s13, 1
      %s140 = smul.addr %s139, 2
      %s141 = scalar_lea.vmem %s2, %s140
      %v143 = vld [vmem:[%s137] sm:$0xf]
      %v144 = vld [vmem:[%s137 + $0x4] sm:$0xf]
      %v145 = vld [vmem:[%s137 + $0x8] sm:$0x1]
      %v146 = vld [vmem:[%s137 + $0xc] sm:$0xf]
      %v147 = vld [vmem:[%s137 + $0x10] sm:$0xf]
      %v148 = vld [vmem:[%s137 + $0x14] sm:$0x1]
      %v149 = vld [vmem:[%s137 + $0x18] sm:$0xf]
      %v150 = vld [vmem:[%s137 + $0x1c] sm:$0xf]
      %v151 = vld [vmem:[%s137 + $0x20] sm:$0x1]
      %v152 = vld [vmem:[%s137 + $0x24] sm:$0xf]
      %v153 = vld [vmem:[%s137 + $0x28] sm:$0xf]
      %v154 = vld [vmem:[%s137 + $0x2c] sm:$0x1]
      %v155 = vld [vmem:[%s137 + $0x30] sm:$0xf]
      %v156 = vld [vmem:[%s137 + $0x34] sm:$0xf]
      %v157 = vld [vmem:[%s137 + $0x38] sm:$0x1]
      %v158 = vld [vmem:[%s137 + $0x3c] sm:$0xf]
      %v159 = vld [vmem:[%s137 + $0x40] sm:$0xf]
      %v160 = vld [vmem:[%s137 + $0x44] sm:$0x1]
      %v161 = vld [vmem:[%s137 + $0x48] sm:$0xf]
      %v162 = vld [vmem:[%s137 + $0x4c] sm:$0xf]
      %v163 = vld [vmem:[%s137 + $0x50] sm:$0x1]
      %v164 = vld [vmem:[%s137 + $0x54] sm:$0xf]
      %v165 = vld [vmem:[%s137 + $0x58] sm:$0xf]
      %v166 = vld [vmem:[%s137 + $0x5c] sm:$0x1]
      %v167 = vld [vmem:[%s137 + $0x60] sm:$0xf]
      %v168 = vld [vmem:[%s137 + $0x64] sm:$0xf]
      %v169 = vld [vmem:[%s137 + $0x68] sm:$0x1]
      %v170 = vld [vmem:[%s137 + $0x6c] sm:$0xf]
      %v171 = vld [vmem:[%s137 + $0x70] sm:$0xf]
      %v172 = vld [vmem:[%s137 + $0x74] sm:$0x1]
      %v173 = vld [vmem:[%s137 + $0x78] sm:$0xf]
      %v174 = vld [vmem:[%s137 + $0x7c] sm:$0xf]
      %v175 = vld [vmem:[%s137 + $0x80] sm:$0x1]
      %v176 = vld [vmem:[%s137 + $0x84] sm:$0xf]
      %v177 = vld [vmem:[%s137 + $0x88] sm:$0xf]
      %v178 = vld [vmem:[%s137 + $0x8c] sm:$0x1]
      %v179 = vld [vmem:[%s137 + $0x90] sm:$0xf]
      %v180 = vld [vmem:[%s137 + $0x94] sm:$0xf]
      %v181 = vld [vmem:[%s137 + $0x98] sm:$0x1]
      %v182 = vld [vmem:[%s137 + $0x9c] sm:$0xf]
      %v183 = vld [vmem:[%s137 + $0xa0] sm:$0xf]
      %v184 = vld [vmem:[%s137 + $0xa4] sm:$0x1]
      %v185 = vld [vmem:[%s137 + $0xa8] sm:$0xf]
      %v186 = vld [vmem:[%s137 + $0xac] sm:$0xf]
      %v187 = vld [vmem:[%s137 + $0xb0] sm:$0x1]
      %v188 = vld [vmem:[%s137 + $0xb4] sm:$0xf]
      %v189 = vld [vmem:[%s137 + $0xb8] sm:$0xf]
      %v190 = vld [vmem:[%s137 + $0xbc] sm:$0x1]
      %v191 = vld [vmem:[%s137 + $0xc0] sm:$0xf]
      %v192 = vld [vmem:[%s137 + $0xc4] sm:$0xf]
      %v193 = vld [vmem:[%s137 + $0xc8] sm:$0x1]
      %v194 = vld [vmem:[%s137 + $0xcc] sm:$0xf]
      %v195 = vld [vmem:[%s137 + $0xd0] sm:$0xf]
      %v196 = vld [vmem:[%s137 + $0xd4] sm:$0x1]
      %v197 = vld [vmem:[%s1] sm:$0x3]
      %v198 = vld [vmem:[%s1 + $0x2] sm:$0x3]
      %v199 = vld [vmem:[%s1 + $0x4] sm:$0x3]
      %v200 = vld [vmem:[%s1 + $0x6] sm:$0x3]
      %v201 = vld [vmem:[%s1 + $0x8] sm:$0x3]
      %v202 = vld [vmem:[%s1 + $0xa] sm:$0x3]
      %v203 = vld [vmem:[%s1 + $0xc] sm:$0x3]
      %v204 = vld [vmem:[%s1 + $0xe] sm:$0x3]
      %v205 = vld [vmem:[%s1 + $0x10] sm:$0x3]
      %v206 = vld [vmem:[%s1 + $0x12] sm:$0x3]
      %v207 = vld [vmem:[%s1 + $0x14] sm:$0x3]
      %v208 = vld [vmem:[%s1 + $0x16] sm:$0x3]
      %v209 = vld [vmem:[%s1 + $0x18] sm:$0x3]
      %v210 = vld [vmem:[%s1 + $0x1a] sm:$0x3]
      %v211 = vld [vmem:[%s1 + $0x1c] sm:$0x3]
      %v212 = vld [vmem:[%s1 + $0x1e] sm:$0x3]
      %vm213 = vsmask.f32 3328
      %vm214 = vsmask.f32 7440
      %vm215 = vmor %vm213, %vm214
      %v217 = vshrl.u32 %v143, 16
      %v219 = vrot.slane %v217, 4
      %v220 = vshll.u32 %v143, 16
      %v222 = vrot.slane %v220, 5
      %v223 = vor.u32 %v219, %v222
      %v224 = vrot.slane %v223, 4
      %v226 = vshll.u32 %v144, 16
      %v228 = vrot.slane %v226, 5
      %v229 = vsel %vm215, %v224, %v228
      %v230 = vshrl.u32 %v144, 16
      %v232 = vrot.slane %v230, 4
      %v233 = vor.u32 %v232, %v228
      %v234 = vrot.slane %v233, 4
      %v236 = vshll.u32 %v145, 16
      %v238 = vrot.slane %v236, 5
      %v239 = vsel %vm215, %v234, %v238
      %v241 = vshrl.u32 %v146, 16
      %v243 = vrot.slane %v241, 4
      %v244 = vshll.u32 %v146, 16
      %v246 = vrot.slane %v244, 5
      %v247 = vor.u32 %v243, %v246
      %v248 = vrot.slane %v247, 4
      %v250 = vshll.u32 %v147, 16
      %v252 = vrot.slane %v250, 5
      %v253 = vsel %vm215, %v248, %v252
      %v254 = vshrl.u32 %v147, 16
      %v256 = vrot.slane %v254, 4
      %v257 = vor.u32 %v256, %v252
      %v258 = vrot.slane %v257, 4
      %v260 = vshll.u32 %v148, 16
      %v262 = vrot.slane %v260, 5
      %v263 = vsel %vm215, %v258, %v262
      %v265 = vshrl.u32 %v149, 16
      %v267 = vrot.slane %v265, 4
      %v268 = vshll.u32 %v149, 16
      %v270 = vrot.slane %v268, 5
      %v271 = vor.u32 %v267, %v270
      %v272 = vrot.slane %v271, 4
      %v274 = vshll.u32 %v150, 16
      %v276 = vrot.slane %v274, 5
      %v277 = vsel %vm215, %v272, %v276
      %v278 = vshrl.u32 %v150, 16
      %v280 = vrot.slane %v278, 4
      %v281 = vor.u32 %v280, %v276
      %v282 = vrot.slane %v281, 4
      %v284 = vshll.u32 %v151, 16
      %v286 = vrot.slane %v284, 5
      %v287 = vsel %vm215, %v282, %v286
      %v289 = vshrl.u32 %v152, 16
      %v291 = vrot.slane %v289, 4
      %v292 = vshll.u32 %v152, 16
      %v294 = vrot.slane %v292, 5
      %v295 = vor.u32 %v291, %v294
      %v296 = vrot.slane %v295, 4
      %v298 = vshll.u32 %v153, 16
      %v300 = vrot.slane %v298, 5
      %v301 = vsel %vm215, %v296, %v300
      %v302 = vshrl.u32 %v153, 16
      %v304 = vrot.slane %v302, 4
      %v305 = vor.u32 %v304, %v300
      %v306 = vrot.slane %v305, 4
      %v308 = vshll.u32 %v154, 16
      %v310 = vrot.slane %v308, 5
      %v311 = vsel %vm215, %v306, %v310
      %v313 = vshrl.u32 %v155, 16
      %v315 = vrot.slane %v313, 4
      %v316 = vshll.u32 %v155, 16
      %v318 = vrot.slane %v316, 5
      %v319 = vor.u32 %v315, %v318
      %v320 = vrot.slane %v319, 4
      %v322 = vshll.u32 %v156, 16
      %v324 = vrot.slane %v322, 5
      %v325 = vsel %vm215, %v320, %v324
      %v326 = vshrl.u32 %v156, 16
      %v328 = vrot.slane %v326, 4
      %v329 = vor.u32 %v328, %v324
      %v330 = vrot.slane %v329, 4
      %v332 = vshll.u32 %v157, 16
      %v334 = vrot.slane %v332, 5
      %v335 = vsel %vm215, %v330, %v334
      %v337 = vshrl.u32 %v158, 16
      %v339 = vrot.slane %v337, 4
      %v340 = vshll.u32 %v158, 16
      %v342 = vrot.slane %v340, 5
      %v343 = vor.u32 %v339, %v342
      %v344 = vrot.slane %v343, 4
      %v346 = vshll.u32 %v159, 16
      %v348 = vrot.slane %v346, 5
      %v349 = vsel %vm215, %v344, %v348
      %v350 = vshrl.u32 %v159, 16
      %v352 = vrot.slane %v350, 4
      %v353 = vor.u32 %v352, %v348
      %v354 = vrot.slane %v353, 4
      %v356 = vshll.u32 %v160, 16
      %v358 = vrot.slane %v356, 5
      %v359 = vsel %vm215, %v354, %v358
      %v361 = vshrl.u32 %v161, 16
      %v363 = vrot.slane %v361, 4
      %v364 = vshll.u32 %v161, 16
      %v366 = vrot.slane %v364, 5
      %v367 = vor.u32 %v363, %v366
      %v368 = vrot.slane %v367, 4
      %v370 = vshll.u32 %v162, 16
      %v372 = vrot.slane %v370, 5
      %v373 = vsel %vm215, %v368, %v372
      %v374 = vshrl.u32 %v162, 16
      %v376 = vrot.slane %v374, 4
      %v377 = vor.u32 %v376, %v372
      %v378 = vrot.slane %v377, 4
      %v380 = vshll.u32 %v163, 16
      %v382 = vrot.slane %v380, 5
      %v383 = vsel %vm215, %v378, %v382
      %v385 = vshrl.u32 %v164, 16
      %v387 = vrot.slane %v385, 4
      %v388 = vshll.u32 %v164, 16
      %v390 = vrot.slane %v388, 5
      %v391 = vor.u32 %v387, %v390
      %v392 = vrot.slane %v391, 4
      %v394 = vshll.u32 %v165, 16
      %v396 = vrot.slane %v394, 5
      %v397 = vsel %vm215, %v392, %v396
      %v398 = vshrl.u32 %v165, 16
      %v400 = vrot.slane %v398, 4
      %v401 = vor.u32 %v400, %v396
      %v402 = vrot.slane %v401, 4
      %v404 = vshll.u32 %v166, 16
      %v406 = vrot.slane %v404, 5
      %v407 = vsel %vm215, %v402, %v406
      %v409 = vshrl.u32 %v167, 16
      %v411 = vrot.slane %v409, 4
      %v412 = vshll.u32 %v167, 16
      %v414 = vrot.slane %v412, 5
      %v415 = vor.u32 %v411, %v414
      %v416 = vrot.slane %v415, 4
      %v418 = vshll.u32 %v168, 16
      %v420 = vrot.slane %v418, 5
      %v421 = vsel %vm215, %v416, %v420
      %v422 = vshrl.u32 %v168, 16
      %v424 = vrot.slane %v422, 4
      %v425 = vor.u32 %v424, %v420
      %v426 = vrot.slane %v425, 4
      %v428 = vshll.u32 %v169, 16
      %v430 = vrot.slane %v428, 5
      %v431 = vsel %vm215, %v426, %v430
      %v433 = vshrl.u32 %v170, 16
      %v435 = vrot.slane %v433, 4
      %v436 = vshll.u32 %v170, 16
      %v438 = vrot.slane %v436, 5
      %v439 = vor.u32 %v435, %v438
      %v440 = vrot.slane %v439, 4
      %v442 = vshll.u32 %v171, 16
      %v444 = vrot.slane %v442, 5
      %v445 = vsel %vm215, %v440, %v444
      %v446 = vshrl.u32 %v171, 16
      %v448 = vrot.slane %v446, 4
      %v449 = vor.u32 %v448, %v444
      %v450 = vrot.slane %v449, 4
      %v452 = vshll.u32 %v172, 16
      %v454 = vrot.slane %v452, 5
      %v455 = vsel %vm215, %v450, %v454
      %v457 = vshrl.u32 %v173, 16
      %v459 = vrot.slane %v457, 4
      %v460 = vshll.u32 %v173, 16
      %v462 = vrot.slane %v460, 5
      %v463 = vor.u32 %v459, %v462
      %v464 = vrot.slane %v463, 4
      %v466 = vshll.u32 %v174, 16
      %v468 = vrot.slane %v466, 5
      %v469 = vsel %vm215, %v464, %v468
      %v470 = vshrl.u32 %v174, 16
      %v472 = vrot.slane %v470, 4
      %v473 = vor.u32 %v472, %v468
      %v474 = vrot.slane %v473, 4
      %v476 = vshll.u32 %v175, 16
      %v478 = vrot.slane %v476, 5
      %v479 = vsel %vm215, %v474, %v478
      %v481 = vshrl.u32 %v176, 16
      %v483 = vrot.slane %v481, 4
      %v484 = vshll.u32 %v176, 16
      %v486 = vrot.slane %v484, 5
      %v487 = vor.u32 %v483, %v486
      %v488 = vrot.slane %v487, 4
      %v490 = vshll.u32 %v177, 16
      %v492 = vrot.slane %v490, 5
      %v493 = vsel %vm215, %v488, %v492
      %v494 = vshrl.u32 %v177, 16
      %v496 = vrot.slane %v494, 4
      %v497 = vor.u32 %v496, %v492
      %v498 = vrot.slane %v497, 4
      %v500 = vshll.u32 %v178, 16
      %v502 = vrot.slane %v500, 5
      %v503 = vsel %vm215, %v498, %v502
      %v505 = vshrl.u32 %v179, 16
      %v507 = vrot.slane %v505, 4
      %v508 = vshll.u32 %v179, 16
      %v510 = vrot.slane %v508, 5
      %v511 = vor.u32 %v507, %v510
      %v512 = vrot.slane %v511, 4
      %v514 = vshll.u32 %v180, 16
      %v516 = vrot.slane %v514, 5
      %v517 = vsel %vm215, %v512, %v516
      %v518 = vshrl.u32 %v180, 16
      %v520 = vrot.slane %v518, 4
      %v521 = vor.u32 %v520, %v516
      %v522 = vrot.slane %v521, 4
      %v524 = vshll.u32 %v181, 16
      %v526 = vrot.slane %v524, 5
      %v527 = vsel %vm215, %v522, %v526
      %v529 = vshrl.u32 %v182, 16
      %v531 = vrot.slane %v529, 4
      %v532 = vshll.u32 %v182, 16
      %v534 = vrot.slane %v532, 5
      %v535 = vor.u32 %v531, %v534
      %v536 = vrot.slane %v535, 4
      %v538 = vshll.u32 %v183, 16
      %v540 = vrot.slane %v538, 5
      %v541 = vsel %vm215, %v536, %v540
      %v542 = vshrl.u32 %v183, 16
      %v544 = vrot.slane %v542, 4
      %v545 = vor.u32 %v544, %v540
      %v546 = vrot.slane %v545, 4
      %v548 = vshll.u32 %v184, 16
      %v550 = vrot.slane %v548, 5
      %v551 = vsel %vm215, %v546, %v550
      %v553 = vshrl.u32 %v185, 16
      %v555 = vrot.slane %v553, 4
      %v556 = vshll.u32 %v185, 16
      %v558 = vrot.slane %v556, 5
      %v559 = vor.u32 %v555, %v558
      %v560 = vrot.slane %v559, 4
      %v562 = vshll.u32 %v186, 16
      %v564 = vrot.slane %v562, 5
      %v565 = vsel %vm215, %v560, %v564
      %v566 = vshrl.u32 %v186, 16
      %v568 = vrot.slane %v566, 4
      %v569 = vor.u32 %v568, %v564
      %v570 = vrot.slane %v569, 4
      %v572 = vshll.u32 %v187, 16
      %v574 = vrot.slane %v572, 5
      %v575 = vsel %vm215, %v570, %v574
      %v577 = vshrl.u32 %v188, 16
      %v579 = vrot.slane %v577, 4
      %v580 = vshll.u32 %v188, 16
      %v582 = vrot.slane %v580, 5
      %v583 = vor.u32 %v579, %v582
      %v584 = vrot.slane %v583, 4
      %v586 = vshll.u32 %v189, 16
      %v588 = vrot.slane %v586, 5
      %v589 = vsel %vm215, %v584, %v588
      %v590 = vshrl.u32 %v189, 16
      %v592 = vrot.slane %v590, 4
      %v593 = vor.u32 %v592, %v588
      %v594 = vrot.slane %v593, 4
      %v596 = vshll.u32 %v190, 16
      %v598 = vrot.slane %v596, 5
      %v599 = vsel %vm215, %v594, %v598
      %v600 = vunpack.c.l.b16 %v229
      %v601 = vunpack.c.l.b16 %v239
      %v602 = vunpack.c.l.b16 %v253
      %v603 = vunpack.c.l.b16 %v263
      %v604 = vunpack.c.l.b16 %v277
      %v605 = vunpack.c.l.b16 %v287
      %v606 = vunpack.c.l.b16 %v301
      %v607 = vunpack.c.l.b16 %v311
      %v608 = vunpack.c.l.b16 %v325
      %v609 = vunpack.c.l.b16 %v335
      %v610 = vunpack.c.l.b16 %v349
      %v611 = vunpack.c.l.b16 %v359
      %v612 = vunpack.c.l.b16 %v373
      %v613 = vunpack.c.l.b16 %v383
      %v614 = vunpack.c.l.b16 %v397
      %v615 = vunpack.c.l.b16 %v407
      %v616 = vunpack.c.l.b16 %v421
      %v617 = vunpack.c.l.b16 %v431
      %v618 = vunpack.c.l.b16 %v445
      %v619 = vunpack.c.l.b16 %v455
      %v620 = vunpack.c.l.b16 %v469
      %v621 = vunpack.c.l.b16 %v479
      %v622 = vunpack.c.l.b16 %v493
      %v623 = vunpack.c.l.b16 %v503
      %v624 = vunpack.c.l.b16 %v517
      %v625 = vunpack.c.l.b16 %v527
      %v626 = vunpack.c.l.b16 %v541
      %v627 = vunpack.c.l.b16 %v551
      %v628 = vunpack.c.l.b16 %v565
      %v629 = vunpack.c.l.b16 %v575
      %v630 = vunpack.c.l.b16 %v589
      %v631 = vunpack.c.l.b16 %v599
      %v632 = vpack.c.b16 %v601, %v600
      %v633 = vpack.c.b16 %v603, %v602
      %v634 = vpack.c.b16 %v605, %v604
      %v635 = vpack.c.b16 %v607, %v606
      %v636 = vpack.c.b16 %v609, %v608
      %v637 = vpack.c.b16 %v611, %v610
      %v638 = vpack.c.b16 %v613, %v612
      %v639 = vpack.c.b16 %v615, %v614
      %v640 = vpack.c.b16 %v617, %v616
      %v641 = vpack.c.b16 %v619, %v618
      %v642 = vpack.c.b16 %v621, %v620
      %v643 = vpack.c.b16 %v623, %v622
      %v644 = vpack.c.b16 %v625, %v624
      %v645 = vpack.c.b16 %v627, %v626
      %v646 = vpack.c.b16 %v629, %v628
      %v647 = vpack.c.b16 %v631, %v630
      %vm648 = vcmask 31744
      %v650 = vsel %vm648, %v632, 0
      %v653 = vsel %vm648, %v633, 0
      %v656 = vsel %vm648, %v634, 0
      %v659 = vsel %vm648, %v635, 0
      %v662 = vsel %vm648, %v636, 0
      %v665 = vsel %vm648, %v637, 0
      %v668 = vsel %vm648, %v638, 0
      %v671 = vsel %vm648, %v639, 0
      %v674 = vsel %vm648, %v640, 0
      %v677 = vsel %vm648, %v641, 0
      %v680 = vsel %vm648, %v642, 0
      %v683 = vsel %vm648, %v643, 0
      %v686 = vsel %vm648, %v644, 0
      %v689 = vsel %vm648, %v645, 0
      %v692 = vsel %vm648, %v646, 0
      %v695 = vsel %vm648, %v647, 0
      %vm697 = vcmask 1041408
      %v699 = vsel %vm697, %v198, 0
      %701 = vmatpush.bf16.msra.mxu0 0
      %702 = vmatpush.bf16.msra.mxu0 0
      %703 = vmatpush.bf16.msra.mxu0 0
      %704 = vmatpush.bf16.msra.mxu0 0
      %705 = vmatpush.bf16.msra.mxu0 0
      %706 = vmatpush.bf16.msra.mxu0 0
      %707 = vmatpush.bf16.msra.mxu0 0
      %708 = vmatpush.bf16.msra.mxu0 %v699
      %709 = vmatmul.bf16.gmra.mxu0 %v650
      %v710 = vpop.f32.mrf.mxu0
      %v711 = vadd.f32 0.0, %v710
      %v712 = vpop.f32.mrf.mxu0
      %v713 = vadd.f32 0.0, %v712
      %714 = vmatmul.bf16.gmra.mxu0 %v653
      %v715 = vpop.f32.mrf.mxu0
      %v716 = vadd.f32 0.0, %v715
      %v717 = vpop.f32.mrf.mxu0
      %v718 = vadd.f32 0.0, %v717
      %719 = vmatmul.bf16.gmra.mxu0 %v656
      %v720 = vpop.f32.mrf.mxu0
      %v721 = vadd.f32 0.0, %v720
      %v722 = vpop.f32.mrf.mxu0
      %v723 = vadd.f32 0.0, %v722
      %724 = vmatmul.bf16.gmra.mxu0 %v659
      %v725 = vpop.f32.mrf.mxu0
      %v726 = vadd.f32 0.0, %v725
      %v727 = vpop.f32.mrf.mxu0
      %v728 = vadd.f32 0.0, %v727
      %729 = vmatmul.bf16.gmra.mxu0 %v662
      %v730 = vpop.f32.mrf.mxu0
      %v731 = vadd.f32 0.0, %v730
      %v732 = vpop.f32.mrf.mxu0
      %v733 = vadd.f32 0.0, %v732
      %734 = vmatmul.bf16.gmra.mxu0 %v665
      %v735 = vpop.f32.mrf.mxu0
      %v736 = vadd.f32 0.0, %v735
      %v737 = vpop.f32.mrf.mxu0
      %v738 = vadd.f32 0.0, %v737
      %739 = vmatmul.bf16.gmra.mxu0 %v668
      %v740 = vpop.f32.mrf.mxu0
      %v741 = vadd.f32 0.0, %v740
      %v742 = vpop.f32.mrf.mxu0
      %v743 = vadd.f32 0.0, %v742
      %744 = vmatmul.bf16.gmra.mxu0 %v671
      %v745 = vpop.f32.mrf.mxu0
      %v746 = vadd.f32 0.0, %v745
      %v747 = vpop.f32.mrf.mxu0
      %v748 = vadd.f32 0.0, %v747
      %749 = vmatmul.bf16.gmra.mxu0 %v674
      %v750 = vpop.f32.mrf.mxu0
      %v751 = vadd.f32 0.0, %v750
      %v752 = vpop.f32.mrf.mxu0
      %v753 = vadd.f32 0.0, %v752
      %754 = vmatmul.bf16.gmra.mxu0 %v677
      %v755 = vpop.f32.mrf.mxu0
      %v756 = vadd.f32 0.0, %v755
      %v757 = vpop.f32.mrf.mxu0
      %v758 = vadd.f32 0.0, %v757
      %759 = vmatmul.bf16.gmra.mxu0 %v680
      %v760 = vpop.f32.mrf.mxu0
      %v761 = vadd.f32 0.0, %v760
      %v762 = vpop.f32.mrf.mxu0
      %v763 = vadd.f32 0.0, %v762
      %764 = vmatmul.bf16.gmra.mxu0 %v683
      %v765 = vpop.f32.mrf.mxu0
      %v766 = vadd.f32 0.0, %v765
      %v767 = vpop.f32.mrf.mxu0
      %v768 = vadd.f32 0.0, %v767
      %769 = vmatmul.bf16.gmra.mxu0 %v686
      %v770 = vpop.f32.mrf.mxu0
      %v771 = vadd.f32 0.0, %v770
      %v772 = vpop.f32.mrf.mxu0
      %v773 = vadd.f32 0.0, %v772
      %774 = vmatmul.bf16.gmra.mxu0 %v689
      %v775 = vpop.f32.mrf.mxu0
      %v776 = vadd.f32 0.0, %v775
      %v777 = vpop.f32.mrf.mxu0
      %v778 = vadd.f32 0.0, %v777
      %779 = vmatmul.bf16.gmra.mxu0 %v692
      %v780 = vpop.f32.mrf.mxu0
      %v781 = vadd.f32 0.0, %v780
      %v782 = vpop.f32.mrf.mxu0
      %v783 = vadd.f32 0.0, %v782
      %784 = vmatmul.bf16.gmra.mxu0 %v695
      %v785 = vpop.f32.mrf.mxu0
      %v786 = vadd.f32 0.0, %v785
      %v787 = vpop.f32.mrf.mxu0
      %v788 = vadd.f32 0.0, %v787
      %789 = vdwg.mxu0
      %v822 = vunpack.c.l.b16 %v143
      %v823 = vunpack.c.l.b16 %v144
      %v824 = vunpack.c.l.b16 %v146
      %v825 = vunpack.c.l.b16 %v147
      %v826 = vunpack.c.l.b16 %v149
      %v827 = vunpack.c.l.b16 %v150
      %v828 = vunpack.c.l.b16 %v152
      %v829 = vunpack.c.l.b16 %v153
      %v830 = vunpack.c.l.b16 %v155
      %v831 = vunpack.c.l.b16 %v156
      %v832 = vunpack.c.l.b16 %v158
      %v833 = vunpack.c.l.b16 %v159
      %v834 = vunpack.c.l.b16 %v161
      %v835 = vunpack.c.l.b16 %v162
      %v836 = vunpack.c.l.b16 %v164
      %v837 = vunpack.c.l.b16 %v165
      %v838 = vunpack.c.l.b16 %v167
      %v839 = vunpack.c.l.b16 %v168
      %v840 = vunpack.c.l.b16 %v170
      %v841 = vunpack.c.l.b16 %v171
      %v842 = vunpack.c.l.b16 %v173
      %v843 = vunpack.c.l.b16 %v174
      %v844 = vunpack.c.l.b16 %v176
      %v845 = vunpack.c.l.b16 %v177
      %v846 = vunpack.c.l.b16 %v179
      %v847 = vunpack.c.l.b16 %v180
      %v848 = vunpack.c.l.b16 %v182
      %v849 = vunpack.c.l.b16 %v183
      %v850 = vunpack.c.l.b16 %v185
      %v851 = vunpack.c.l.b16 %v186
      %v852 = vunpack.c.l.b16 %v188
      %v853 = vunpack.c.l.b16 %v189
      %v854 = vpack.c.b16 %v823, %v822
      %v855 = vpack.c.b16 %v825, %v824
      %v856 = vpack.c.b16 %v827, %v826
      %v857 = vpack.c.b16 %v829, %v828
      %v858 = vpack.c.b16 %v831, %v830
      %v859 = vpack.c.b16 %v833, %v832
      %v860 = vpack.c.b16 %v835, %v834
      %v861 = vpack.c.b16 %v837, %v836
      %v862 = vpack.c.b16 %v839, %v838
      %v863 = vpack.c.b16 %v841, %v840
      %v864 = vpack.c.b16 %v843, %v842
      %v865 = vpack.c.b16 %v845, %v844
      %v866 = vpack.c.b16 %v847, %v846
      %v867 = vpack.c.b16 %v849, %v848
      %v868 = vpack.c.b16 %v851, %v850
      %v869 = vpack.c.b16 %v853, %v852
      %v871 = vsel %vm648, %v854, 0
      %v874 = vsel %vm648, %v855, 0
      %v877 = vsel %vm648, %v856, 0
      %v880 = vsel %vm648, %v857, 0
      %v883 = vsel %vm648, %v858, 0
      %v886 = vsel %vm648, %v859, 0
      %v889 = vsel %vm648, %v860, 0
      %v892 = vsel %vm648, %v861, 0
      %v895 = vsel %vm648, %v862, 0
      %v898 = vsel %vm648, %v863, 0
      %v901 = vsel %vm648, %v864, 0
      %v904 = vsel %vm648, %v865, 0
      %v907 = vsel %vm648, %v866, 0
      %v910 = vsel %vm648, %v867, 0
      %v913 = vsel %vm648, %v868, 0
      %v916 = vsel %vm648, %v869, 0
      %v919 = vsel %vm697, %v197, 0
      %921 = vmatpush.bf16.msra.mxu0 0
      %922 = vmatpush.bf16.msra.mxu0 0
      %923 = vmatpush.bf16.msra.mxu0 0
      %924 = vmatpush.bf16.msra.mxu0 0
      %925 = vmatpush.bf16.msra.mxu0 0
      %926 = vmatpush.bf16.msra.mxu0 0
      %927 = vmatpush.bf16.msra.mxu0 0
      %928 = vmatpush.bf16.msra.mxu0 %v919
      %929 = vmatmul.bf16.gmra.mxu0 %v871
      %v930 = vpop.f32.mrf.mxu0
      %v931 = vadd.f32 %v711, %v930
      %v932 = vpop.f32.mrf.mxu0
      %v933 = vadd.f32 %v713, %v932
      %934 = vmatmul.bf16.gmra.mxu0 %v874
      %v935 = vpop.f32.mrf.mxu0
      %v936 = vadd.f32 %v716, %v935
      %v937 = vpop.f32.mrf.mxu0
      %v938 = vadd.f32 %v718, %v937
      %939 = vmatmul.bf16.gmra.mxu0 %v877
      %v940 = vpop.f32.mrf.mxu0
      %v941 = vadd.f32 %v721, %v940
      %v942 = vpop.f32.mrf.mxu0
      %v943 = vadd.f32 %v723, %v942
      %944 = vmatmul.bf16.gmra.mxu0 %v880
      %v945 = vpop.f32.mrf.mxu0
      %v946 = vadd.f32 %v726, %v945
      %v947 = vpop.f32.mrf.mxu0
      %v948 = vadd.f32 %v728, %v947
      %949 = vmatmul.bf16.gmra.mxu0 %v883
      %v950 = vpop.f32.mrf.mxu0
      %v951 = vadd.f32 %v731, %v950
      %v952 = vpop.f32.mrf.mxu0
      %v953 = vadd.f32 %v733, %v952
      %954 = vmatmul.bf16.gmra.mxu0 %v886
      %v955 = vpop.f32.mrf.mxu0
      %v956 = vadd.f32 %v736, %v955
      %v957 = vpop.f32.mrf.mxu0
      %v958 = vadd.f32 %v738, %v957
      %959 = vmatmul.bf16.gmra.mxu0 %v889
      %v960 = vpop.f32.mrf.mxu0
      %v961 = vadd.f32 %v741, %v960
      %v962 = vpop.f32.mrf.mxu0
      %v963 = vadd.f32 %v743, %v962
      %964 = vmatmul.bf16.gmra.mxu0 %v892
      %v965 = vpop.f32.mrf.mxu0
      %v966 = vadd.f32 %v746, %v965
      %v967 = vpop.f32.mrf.mxu0
      %v968 = vadd.f32 %v748, %v967
      %969 = vmatmul.bf16.gmra.mxu0 %v895
      %v970 = vpop.f32.mrf.mxu0
      %v971 = vadd.f32 %v751, %v970
      %v972 = vpop.f32.mrf.mxu0
      %v973 = vadd.f32 %v753, %v972
      %974 = vmatmul.bf16.gmra.mxu0 %v898
      %v975 = vpop.f32.mrf.mxu0
      %v976 = vadd.f32 %v756, %v975
      %v977 = vpop.f32.mrf.mxu0
      %v978 = vadd.f32 %v758, %v977
      %979 = vmatmul.bf16.gmra.mxu0 %v901
      %v980 = vpop.f32.mrf.mxu0
      %v981 = vadd.f32 %v761, %v980
      %v982 = vpop.f32.mrf.mxu0
      %v983 = vadd.f32 %v763, %v982
      %984 = vmatmul.bf16.gmra.mxu0 %v904
      %v985 = vpop.f32.mrf.mxu0
      %v986 = vadd.f32 %v766, %v985
      %v987 = vpop.f32.mrf.mxu0
      %v988 = vadd.f32 %v768, %v987
      %989 = vmatmul.bf16.gmra.mxu0 %v907
      %v990 = vpop.f32.mrf.mxu0
      %v991 = vadd.f32 %v771, %v990
      %v992 = vpop.f32.mrf.mxu0
      %v993 = vadd.f32 %v773, %v992
      %994 = vmatmul.bf16.gmra.mxu0 %v910
      %v995 = vpop.f32.mrf.mxu0
      %v996 = vadd.f32 %v776, %v995
      %v997 = vpop.f32.mrf.mxu0
      %v998 = vadd.f32 %v778, %v997
      %999 = vmatmul.bf16.gmra.mxu0 %v913
      %v1000 = vpop.f32.mrf.mxu0
      %v1001 = vadd.f32 %v781, %v1000
      %v1002 = vpop.f32.mrf.mxu0
      %v1003 = vadd.f32 %v783, %v1002
      %1004 = vmatmul.bf16.gmra.mxu0 %v916
      %v1005 = vpop.f32.mrf.mxu0
      %v1006 = vadd.f32 %v786, %v1005
      %v1007 = vpop.f32.mrf.mxu0
      %v1008 = vadd.f32 %v788, %v1007
      %1009 = vdwg.mxu0
      %v1012 = vunpack.c.l.b16 %v191
      %v1013 = vunpack.c.l.b16 %v192
      %v1014 = vpack.c.b16 %v1013, %v1012
      %v1016 = vsel %vm648, %v1014, 0
      %v1019 = vsel %vm697, %v199, 0
      %1021 = vmatpush.bf16.msra.mxu0 0
      %1022 = vmatpush.bf16.msra.mxu0 0
      %1023 = vmatpush.bf16.msra.mxu0 0
      %1024 = vmatpush.bf16.msra.mxu0 0
      %1025 = vmatpush.bf16.msra.mxu0 0
      %1026 = vmatpush.bf16.msra.mxu0 0
      %1027 = vmatpush.bf16.msra.mxu0 0
      %1028 = vmatpush.bf16.msra.mxu0 %v1019
      %1029 = vmatmul.bf16.gmra.mxu0 %v874
      %v1030 = vpop.f32.mrf.mxu0
      %v1031 = vadd.f32 0.0, %v1030
      %v1032 = vpop.f32.mrf.mxu0
      %v1033 = vadd.f32 0.0, %v1032
      %1034 = vmatmul.bf16.gmra.mxu0 %v877
      %v1035 = vpop.f32.mrf.mxu0
      %v1036 = vadd.f32 0.0, %v1035
      %v1037 = vpop.f32.mrf.mxu0
      %v1038 = vadd.f32 0.0, %v1037
      %1039 = vmatmul.bf16.gmra.mxu0 %v880
      %v1040 = vpop.f32.mrf.mxu0
      %v1041 = vadd.f32 0.0, %v1040
      %v1042 = vpop.f32.mrf.mxu0
      %v1043 = vadd.f32 0.0, %v1042
      %1044 = vmatmul.bf16.gmra.mxu0 %v883
      %v1045 = vpop.f32.mrf.mxu0
      %v1046 = vadd.f32 0.0, %v1045
      %v1047 = vpop.f32.mrf.mxu0
      %v1048 = vadd.f32 0.0, %v1047
      %1049 = vmatmul.bf16.gmra.mxu0 %v886
      %v1050 = vpop.f32.mrf.mxu0
      %v1051 = vadd.f32 0.0, %v1050
      %v1052 = vpop.f32.mrf.mxu0
      %v1053 = vadd.f32 0.0, %v1052
      %1054 = vmatmul.bf16.gmra.mxu0 %v889
      %v1055 = vpop.f32.mrf.mxu0
      %v1056 = vadd.f32 0.0, %v1055
      %v1057 = vpop.f32.mrf.mxu0
      %v1058 = vadd.f32 0.0, %v1057
      %1059 = vmatmul.bf16.gmra.mxu0 %v892
      %v1060 = vpop.f32.mrf.mxu0
      %v1061 = vadd.f32 0.0, %v1060
      %v1062 = vpop.f32.mrf.mxu0
      %v1063 = vadd.f32 0.0, %v1062
      %1064 = vmatmul.bf16.gmra.mxu0 %v895
      %v1065 = vpop.f32.mrf.mxu0
      %v1066 = vadd.f32 0.0, %v1065
      %v1067 = vpop.f32.mrf.mxu0
      %v1068 = vadd.f32 0.0, %v1067
      %1069 = vmatmul.bf16.gmra.mxu0 %v898
      %v1070 = vpop.f32.mrf.mxu0
      %v1071 = vadd.f32 0.0, %v1070
      %v1072 = vpop.f32.mrf.mxu0
      %v1073 = vadd.f32 0.0, %v1072
      %1074 = vmatmul.bf16.gmra.mxu0 %v901
      %v1075 = vpop.f32.mrf.mxu0
      %v1076 = vadd.f32 0.0, %v1075
      %v1077 = vpop.f32.mrf.mxu0
      %v1078 = vadd.f32 0.0, %v1077
      %1079 = vmatmul.bf16.gmra.mxu0 %v904
      %v1080 = vpop.f32.mrf.mxu0
      %v1081 = vadd.f32 0.0, %v1080
      %v1082 = vpop.f32.mrf.mxu0
      %v1083 = vadd.f32 0.0, %v1082
      %1084 = vmatmul.bf16.gmra.mxu0 %v907
      %v1085 = vpop.f32.mrf.mxu0
      %v1086 = vadd.f32 0.0, %v1085
      %v1087 = vpop.f32.mrf.mxu0
      %v1088 = vadd.f32 0.0, %v1087
      %1089 = vmatmul.bf16.gmra.mxu0 %v910
      %v1090 = vpop.f32.mrf.mxu0
      %v1091 = vadd.f32 0.0, %v1090
      %v1092 = vpop.f32.mrf.mxu0
      %v1093 = vadd.f32 0.0, %v1092
      %1094 = vmatmul.bf16.gmra.mxu0 %v913
      %v1095 = vpop.f32.mrf.mxu0
      %v1096 = vadd.f32 0.0, %v1095
      %v1097 = vpop.f32.mrf.mxu0
      %v1098 = vadd.f32 0.0, %v1097
      %1099 = vmatmul.bf16.gmra.mxu0 %v916
      %v1100 = vpop.f32.mrf.mxu0
      %v1101 = vadd.f32 0.0, %v1100
      %v1102 = vpop.f32.mrf.mxu0
      %v1103 = vadd.f32 0.0, %v1102
      %1104 = vmatmul.bf16.gmra.mxu0 %v1016
      %v1105 = vpop.f32.mrf.mxu0
      %v1106 = vadd.f32 0.0, %v1105
      %v1107 = vpop.f32.mrf.mxu0
      %v1108 = vadd.f32 0.0, %v1107
      %1109 = vdwg.mxu0
      %v1110 = vadd.f32 %v931, %v1031
      %v1111 = vadd.f32 %v933, %v1033
      %v1112 = vadd.f32 %v936, %v1036
      %v1113 = vadd.f32 %v938, %v1038
      %v1114 = vadd.f32 %v941, %v1041
      %v1115 = vadd.f32 %v943, %v1043
      %v1116 = vadd.f32 %v946, %v1046
      %v1117 = vadd.f32 %v948, %v1048
      %v1118 = vadd.f32 %v951, %v1051
      %v1119 = vadd.f32 %v953, %v1053
      %v1120 = vadd.f32 %v956, %v1056
      %v1121 = vadd.f32 %v958, %v1058
      %v1122 = vadd.f32 %v961, %v1061
      %v1123 = vadd.f32 %v963, %v1063
      %v1124 = vadd.f32 %v966, %v1066
      %v1125 = vadd.f32 %v968, %v1068
      %v1126 = vadd.f32 %v971, %v1071
      %v1127 = vadd.f32 %v973, %v1073
      %v1128 = vadd.f32 %v976, %v1076
      %v1129 = vadd.f32 %v978, %v1078
      %v1130 = vadd.f32 %v981, %v1081
      %v1131 = vadd.f32 %v983, %v1083
      %v1132 = vadd.f32 %v986, %v1086
      %v1133 = vadd.f32 %v988, %v1088
      %v1134 = vadd.f32 %v991, %v1091
      %v1135 = vadd.f32 %v993, %v1093
      %v1136 = vadd.f32 %v996, %v1096
      %v1137 = vadd.f32 %v998, %v1098
      %v1138 = vadd.f32 %v1001, %v1101
      %v1139 = vadd.f32 %v1003, %v1103
      %v1140 = vadd.f32 %v1006, %v1106
      %v1141 = vadd.f32 %v1008, %v1108
      %v1143 = vshrl.u32 %v191, 16
      %v1145 = vrot.slane %v1143, 4
      %v1146 = vshll.u32 %v191, 16
      %v1148 = vrot.slane %v1146, 5
      %v1149 = vor.u32 %v1145, %v1148
      %v1150 = vrot.slane %v1149, 4
      %v1152 = vshll.u32 %v192, 16
      %v1154 = vrot.slane %v1152, 5
      %v1155 = vsel %vm215, %v1150, %v1154
      %v1156 = vshrl.u32 %v192, 16
      %v1158 = vrot.slane %v1156, 4
      %v1159 = vor.u32 %v1158, %v1154
      %v1160 = vrot.slane %v1159, 4
      %v1162 = vshll.u32 %v193, 16
      %v1164 = vrot.slane %v1162, 5
      %v1165 = vsel %vm215, %v1160, %v1164
      %v1166 = vunpack.c.l.b16 %v1155
      %v1167 = vunpack.c.l.b16 %v1165
      %v1168 = vpack.c.b16 %v1167, %v1166
      %v1170 = vsel %vm648, %v1168, 0
      %v1173 = vsel %vm697, %v200, 0
      %1175 = vmatpush.bf16.msra.mxu0 0
      %1176 = vmatpush.bf16.msra.mxu0 0
      %1177 = vmatpush.bf16.msra.mxu0 0
      %1178 = vmatpush.bf16.msra.mxu0 0
      %1179 = vmatpush.bf16.msra.mxu0 0
      %1180 = vmatpush.bf16.msra.mxu0 0
      %1181 = vmatpush.bf16.msra.mxu0 0
      %1182 = vmatpush.bf16.msra.mxu0 %v1173
      %1183 = vmatmul.bf16.gmra.mxu0 %v653
      %v1184 = vpop.f32.mrf.mxu0
      %v1185 = vadd.f32 0.0, %v1184
      %v1186 = vpop.f32.mrf.mxu0
      %v1187 = vadd.f32 0.0, %v1186
      %1188 = vmatmul.bf16.gmra.mxu0 %v656
      %v1189 = vpop.f32.mrf.mxu0
      %v1190 = vadd.f32 0.0, %v1189
      %v1191 = vpop.f32.mrf.mxu0
      %v1192 = vadd.f32 0.0, %v1191
      %1193 = vmatmul.bf16.gmra.mxu0 %v659
      %v1194 = vpop.f32.mrf.mxu0
      %v1195 = vadd.f32 0.0, %v1194
      %v1196 = vpop.f32.mrf.mxu0
      %v1197 = vadd.f32 0.0, %v1196
      %1198 = vmatmul.bf16.gmra.mxu0 %v662
      %v1199 = vpop.f32.mrf.mxu0
      %v1200 = vadd.f32 0.0, %v1199
      %v1201 = vpop.f32.mrf.mxu0
      %v1202 = vadd.f32 0.0, %v1201
      %1203 = vmatmul.bf16.gmra.mxu0 %v665
      %v1204 = vpop.f32.mrf.mxu0
      %v1205 = vadd.f32 0.0, %v1204
      %v1206 = vpop.f32.mrf.mxu0
      %v1207 = vadd.f32 0.0, %v1206
      %1208 = vmatmul.bf16.gmra.mxu0 %v668
      %v1209 = vpop.f32.mrf.mxu0
      %v1210 = vadd.f32 0.0, %v1209
      %v1211 = vpop.f32.mrf.mxu0
      %v1212 = vadd.f32 0.0, %v1211
      %1213 = vmatmul.bf16.gmra.mxu0 %v671
      %v1214 = vpop.f32.mrf.mxu0
      %v1215 = vadd.f32 0.0, %v1214
      %v1216 = vpop.f32.mrf.mxu0
      %v1217 = vadd.f32 0.0, %v1216
      %1218 = vmatmul.bf16.gmra.mxu0 %v674
      %v1219 = vpop.f32.mrf.mxu0
      %v1220 = vadd.f32 0.0, %v1219
      %v1221 = vpop.f32.mrf.mxu0
      %v1222 = vadd.f32 0.0, %v1221
      %1223 = vmatmul.bf16.gmra.mxu0 %v677
      %v1224 = vpop.f32.mrf.mxu0
      %v1225 = vadd.f32 0.0, %v1224
      %v1226 = vpop.f32.mrf.mxu0
      %v1227 = vadd.f32 0.0, %v1226
      %1228 = vmatmul.bf16.gmra.mxu0 %v680
      %v1229 = vpop.f32.mrf.mxu0
      %v1230 = vadd.f32 0.0, %v1229
      %v1231 = vpop.f32.mrf.mxu0
      %v1232 = vadd.f32 0.0, %v1231
      %1233 = vmatmul.bf16.gmra.mxu0 %v683
      %v1234 = vpop.f32.mrf.mxu0
      %v1235 = vadd.f32 0.0, %v1234
      %v1236 = vpop.f32.mrf.mxu0
      %v1237 = vadd.f32 0.0, %v1236
      %1238 = vmatmul.bf16.gmra.mxu0 %v686
      %v1239 = vpop.f32.mrf.mxu0
      %v1240 = vadd.f32 0.0, %v1239
      %v1241 = vpop.f32.mrf.mxu0
      %v1242 = vadd.f32 0.0, %v1241
      %1243 = vmatmul.bf16.gmra.mxu0 %v689
      %v1244 = vpop.f32.mrf.mxu0
      %v1245 = vadd.f32 0.0, %v1244
      %v1246 = vpop.f32.mrf.mxu0
      %v1247 = vadd.f32 0.0, %v1246
      %1248 = vmatmul.bf16.gmra.mxu0 %v692
      %v1249 = vpop.f32.mrf.mxu0
      %v1250 = vadd.f32 0.0, %v1249
      %v1251 = vpop.f32.mrf.mxu0
      %v1252 = vadd.f32 0.0, %v1251
      %1253 = vmatmul.bf16.gmra.mxu0 %v695
      %v1254 = vpop.f32.mrf.mxu0
      %v1255 = vadd.f32 0.0, %v1254
      %v1256 = vpop.f32.mrf.mxu0
      %v1257 = vadd.f32 0.0, %v1256
      %1258 = vmatmul.bf16.gmra.mxu0 %v1170
      %v1259 = vpop.f32.mrf.mxu0
      %v1260 = vadd.f32 0.0, %v1259
      %v1261 = vpop.f32.mrf.mxu0
      %v1262 = vadd.f32 0.0, %v1261
      %1263 = vdwg.mxu0
      %v1264 = vadd.f32 %v1110, %v1185
      %v1265 = vadd.f32 %v1111, %v1187
      %v1266 = vadd.f32 %v1112, %v1190
      %v1267 = vadd.f32 %v1113, %v1192
      %v1268 = vadd.f32 %v1114, %v1195
      %v1269 = vadd.f32 %v1115, %v1197
      %v1270 = vadd.f32 %v1116, %v1200
      %v1271 = vadd.f32 %v1117, %v1202
      %v1272 = vadd.f32 %v1118, %v1205
      %v1273 = vadd.f32 %v1119, %v1207
      %v1274 = vadd.f32 %v1120, %v1210
      %v1275 = vadd.f32 %v1121, %v1212
      %v1276 = vadd.f32 %v1122, %v1215
      %v1277 = vadd.f32 %v1123, %v1217
      %v1278 = vadd.f32 %v1124, %v1220
      %v1279 = vadd.f32 %v1125, %v1222
      %v1280 = vadd.f32 %v1126, %v1225
      %v1281 = vadd.f32 %v1127, %v1227
      %v1282 = vadd.f32 %v1128, %v1230
      %v1283 = vadd.f32 %v1129, %v1232
      %v1284 = vadd.f32 %v1130, %v1235
      %v1285 = vadd.f32 %v1131, %v1237
      %v1286 = vadd.f32 %v1132, %v1240
      %v1287 = vadd.f32 %v1133, %v1242
      %v1288 = vadd.f32 %v1134, %v1245
      %v1289 = vadd.f32 %v1135, %v1247
      %v1290 = vadd.f32 %v1136, %v1250
      %v1291 = vadd.f32 %v1137, %v1252
      %v1292 = vadd.f32 %v1138, %v1255
      %v1293 = vadd.f32 %v1139, %v1257
      %v1294 = vadd.f32 %v1140, %v1260
      %v1295 = vadd.f32 %v1141, %v1262
      %v1296 = vadd.f32 %v1264, %v1265
      %v1297 = vadd.f32 %v1296, %v1266
      %v1298 = vadd.f32 %v1297, %v1267
      %v1299 = vadd.f32 %v1298, %v1268
      %v1300 = vadd.f32 %v1299, %v1269
      %v1301 = vadd.f32 %v1300, %v1270
      %v1302 = vadd.f32 %v1301, %v1271
      %v1303 = vadd.f32 %v1302, %v1272
      %v1304 = vadd.f32 %v1303, %v1273
      %v1305 = vadd.f32 %v1304, %v1274
      %v1306 = vadd.f32 %v1305, %v1275
      %v1307 = vadd.f32 %v1306, %v1276
      %v1308 = vadd.f32 %v1307, %v1277
      %v1309 = vadd.f32 %v1308, %v1278
      %v1310 = vadd.f32 %v1309, %v1279
      %v1311 = vadd.f32 %v1310, %v1280
      %v1312 = vadd.f32 %v1311, %v1281
      %v1313 = vadd.f32 %v1312, %v1282
      %v1314 = vadd.f32 %v1313, %v1283
      %v1315 = vadd.f32 %v1314, %v1284
      %v1316 = vadd.f32 %v1315, %v1285
      %v1317 = vadd.f32 %v1316, %v1286
      %v1318 = vadd.f32 %v1317, %v1287
      %v1319 = vadd.f32 %v1318, %v1288
      %v1320 = vadd.f32 %v1319, %v1289
      %v1321 = vadd.f32 %v1320, %v1290
      %v1322 = vadd.f32 %v1321, %v1291
      %v1323 = vadd.f32 %v1322, %v1292
      %v1324 = vadd.f32 %v1323, %v1293
      %v1325 = vadd.f32 %v1324, %v1294
      %v1326 = vadd.f32 %v1325, %v1295
      %v1327 = vrot.slane %v1326, 4
      %v1328 = vadd.f32 %v1326, %v1327
      %v1329 = vrot.slane %v1328, 2
      %v1330 = vadd.f32 %v1328, %v1329
      %v1331 = vrot.slane %v1330, 1
      %v1332 = vadd.f32 %v1330, %v1331
      %v1333 = vmul.f32 %v1332, 0.00390625
      %v1334 = vsub.f32 %v1264, %v1333
      %v1335 = vsub.f32 %v1265, %v1333
      %v1336 = vsub.f32 %v1266, %v1333
      %v1337 = vsub.f32 %v1267, %v1333
      %v1338 = vsub.f32 %v1268, %v1333
      %v1339 = vsub.f32 %v1269, %v1333
      %v1340 = vsub.f32 %v1270, %v1333
      %v1341 = vsub.f32 %v1271, %v1333
      %v1342 = vsub.f32 %v1272, %v1333
      %v1343 = vsub.f32 %v1273, %v1333
      %v1344 = vsub.f32 %v1274, %v1333
      %v1345 = vsub.f32 %v1275, %v1333
      %v1346 = vsub.f32 %v1276, %v1333
      %v1347 = vsub.f32 %v1277, %v1333
      %v1348 = vsub.f32 %v1278, %v1333
      %v1349 = vsub.f32 %v1279, %v1333
      %v1350 = vsub.f32 %v1280, %v1333
      %v1351 = vsub.f32 %v1281, %v1333
      %v1352 = vsub.f32 %v1282, %v1333
      %v1353 = vsub.f32 %v1283, %v1333
      %v1354 = vsub.f32 %v1284, %v1333
      %v1355 = vsub.f32 %v1285, %v1333
      %v1356 = vsub.f32 %v1286, %v1333
      %v1357 = vsub.f32 %v1287, %v1333
      %v1358 = vsub.f32 %v1288, %v1333
      %v1359 = vsub.f32 %v1289, %v1333
      %v1360 = vsub.f32 %v1290, %v1333
      %v1361 = vsub.f32 %v1291, %v1333
      %v1362 = vsub.f32 %v1292, %v1333
      %v1363 = vsub.f32 %v1293, %v1333
      %v1364 = vsub.f32 %v1294, %v1333
      %v1365 = vsub.f32 %v1295, %v1333
      %v1366 = vmul.f32 %v1334, %v1334
      %v1367 = vmul.f32 %v1335, %v1335
      %v1368 = vmul.f32 %v1336, %v1336
      %v1369 = vmul.f32 %v1337, %v1337
      %v1370 = vmul.f32 %v1338, %v1338
      %v1371 = vmul.f32 %v1339, %v1339
      %v1372 = vmul.f32 %v1340, %v1340
      %v1373 = vmul.f32 %v1341, %v1341
      %v1374 = vmul.f32 %v1342, %v1342
      %v1375 = vmul.f32 %v1343, %v1343
      %v1376 = vmul.f32 %v1344, %v1344
      %v1377 = vmul.f32 %v1345, %v1345
      %v1378 = vmul.f32 %v1346, %v1346
      %v1379 = vmul.f32 %v1347, %v1347
      %v1380 = vmul.f32 %v1348, %v1348
      %v1381 = vmul.f32 %v1349, %v1349
      %v1382 = vmul.f32 %v1350, %v1350
      %v1383 = vmul.f32 %v1351, %v1351
      %v1384 = vmul.f32 %v1352, %v1352
      %v1385 = vmul.f32 %v1353, %v1353
      %v1386 = vmul.f32 %v1354, %v1354
      %v1387 = vmul.f32 %v1355, %v1355
      %v1388 = vmul.f32 %v1356, %v1356
      %v1389 = vmul.f32 %v1357, %v1357
      %v1390 = vmul.f32 %v1358, %v1358
      %v1391 = vmul.f32 %v1359, %v1359
      %v1392 = vmul.f32 %v1360, %v1360
      %v1393 = vmul.f32 %v1361, %v1361
      %v1394 = vmul.f32 %v1362, %v1362
      %v1395 = vmul.f32 %v1363, %v1363
      %v1396 = vmul.f32 %v1364, %v1364
      %v1397 = vmul.f32 %v1365, %v1365
      %v1398 = vadd.f32 %v1366, %v1367
      %v1399 = vadd.f32 %v1398, %v1368
      %v1400 = vadd.f32 %v1399, %v1369
      %v1401 = vadd.f32 %v1400, %v1370
      %v1402 = vadd.f32 %v1401, %v1371
      %v1403 = vadd.f32 %v1402, %v1372
      %v1404 = vadd.f32 %v1403, %v1373
      %v1405 = vadd.f32 %v1404, %v1374
      %v1406 = vadd.f32 %v1405, %v1375
      %v1407 = vadd.f32 %v1406, %v1376
      %v1408 = vadd.f32 %v1407, %v1377
      %v1409 = vadd.f32 %v1408, %v1378
      %v1410 = vadd.f32 %v1409, %v1379
      %v1411 = vadd.f32 %v1410, %v1380
      %v1412 = vadd.f32 %v1411, %v1381
      %v1413 = vadd.f32 %v1412, %v1382
      %v1414 = vadd.f32 %v1413, %v1383
      %v1415 = vadd.f32 %v1414, %v1384
      %v1416 = vadd.f32 %v1415, %v1385
      %v1417 = vadd.f32 %v1416, %v1386
      %v1418 = vadd.f32 %v1417, %v1387
      %v1419 = vadd.f32 %v1418, %v1388
      %v1420 = vadd.f32 %v1419, %v1389
      %v1421 = vadd.f32 %v1420, %v1390
      %v1422 = vadd.f32 %v1421, %v1391
      %v1423 = vadd.f32 %v1422, %v1392
      %v1424 = vadd.f32 %v1423, %v1393
      %v1425 = vadd.f32 %v1424, %v1394
      %v1426 = vadd.f32 %v1425, %v1395
      %v1427 = vadd.f32 %v1426, %v1396
      %v1428 = vadd.f32 %v1427, %v1397
      %v1429 = vrot.slane %v1428, 4
      %v1430 = vadd.f32 %v1428, %v1429
      %v1431 = vrot.slane %v1430, 2
      %v1432 = vadd.f32 %v1430, %v1431
      %v1433 = vrot.slane %v1432, 1
      %v1434 = vadd.f32 %v1432, %v1433
      %vm1451 = vcmask 1042432
      %vm1452 = vcmask 1046532
      %vm1453 = vmor %vm1451, %vm1452
      %v1454 = vrot.slane %v143, 5
      %v1455 = vrot.slane %v1454, 4
      %v1456 = vrot.slane %v144, 5
      %v1457 = vsel %vm1453, %v1455, %v1456
      %v1458 = vrot.slane %v1456, 4
      %v1459 = vrot.slane %v145, 5
      %v1460 = vsel %vm1453, %v1458, %v1459
      %v1461 = vrot.slane %v146, 5
      %v1462 = vrot.slane %v1461, 4
      %v1463 = vrot.slane %v147, 5
      %v1464 = vsel %vm1453, %v1462, %v1463
      %v1465 = vrot.slane %v1463, 4
      %v1466 = vrot.slane %v148, 5
      %v1467 = vsel %vm1453, %v1465, %v1466
      %v1468 = vrot.slane %v149, 5
      %v1469 = vrot.slane %v1468, 4
      %v1470 = vrot.slane %v150, 5
      %v1471 = vsel %vm1453, %v1469, %v1470
      %v1472 = vrot.slane %v1470, 4
      %v1473 = vrot.slane %v151, 5
      %v1474 = vsel %vm1453, %v1472, %v1473
      %v1475 = vrot.slane %v152, 5
      %v1476 = vrot.slane %v1475, 4
      %v1477 = vrot.slane %v153, 5
      %v1478 = vsel %vm1453, %v1476, %v1477
      %v1479 = vrot.slane %v1477, 4
      %v1480 = vrot.slane %v154, 5
      %v1481 = vsel %vm1453, %v1479, %v1480
      %v1482 = vrot.slane %v155, 5
      %v1483 = vrot.slane %v1482, 4
      %v1484 = vrot.slane %v156, 5
      %v1485 = vsel %vm1453, %v1483, %v1484
      %v1486 = vrot.slane %v1484, 4
      %v1487 = vrot.slane %v157, 5
      %v1488 = vsel %vm1453, %v1486, %v1487
      %v1489 = vrot.slane %v158, 5
      %v1490 = vrot.slane %v1489, 4
      %v1491 = vrot.slane %v159, 5
      %v1492 = vsel %vm1453, %v1490, %v1491
      %v1493 = vrot.slane %v1491, 4
      %v1494 = vrot.slane %v160, 5
      %v1495 = vsel %vm1453, %v1493, %v1494
      %v1496 = vrot.slane %v161, 5
      %v1497 = vrot.slane %v1496, 4
      %v1498 = vrot.slane %v162, 5
      %v1499 = vsel %vm1453, %v1497, %v1498
      %v1500 = vrot.slane %v1498, 4
      %v1501 = vrot.slane %v163, 5
      %v1502 = vsel %vm1453, %v1500, %v1501
      %v1503 = vrot.slane %v164, 5
      %v1504 = vrot.slane %v1503, 4
      %v1505 = vrot.slane %v165, 5
      %v1506 = vsel %vm1453, %v1504, %v1505
      %v1507 = vrot.slane %v1505, 4
      %v1508 = vrot.slane %v166, 5
      %v1509 = vsel %vm1453, %v1507, %v1508
      %v1510 = vrot.slane %v167, 5
      %v1511 = vrot.slane %v1510, 4
      %v1512 = vrot.slane %v168, 5
      %v1513 = vsel %vm1453, %v1511, %v1512
      %v1514 = vrot.slane %v1512, 4
      %v1515 = vrot.slane %v169, 5
      %v1516 = vsel %vm1453, %v1514, %v1515
      %v1517 = vrot.slane %v170, 5
      %v1518 = vrot.slane %v1517, 4
      %v1519 = vrot.slane %v171, 5
      %v1520 = vsel %vm1453, %v1518, %v1519
      %v1521 = vrot.slane %v1519, 4
      %v1522 = vrot.slane %v172, 5
      %v1523 = vsel %vm1453, %v1521, %v1522
      %v1524 = vrot.slane %v173, 5
      %v1525 = vrot.slane %v1524, 4
      %v1526 = vrot.slane %v174, 5
      %v1527 = vsel %vm1453, %v1525, %v1526
      %v1528 = vrot.slane %v1526, 4
      %v1529 = vrot.slane %v175, 5
      %v1530 = vsel %vm1453, %v1528, %v1529
      %v1531 = vrot.slane %v176, 5
      %v1532 = vrot.slane %v1531, 4
      %v1533 = vrot.slane %v177, 5
      %v1534 = vsel %vm1453, %v1532, %v1533
      %v1535 = vrot.slane %v1533, 4
      %v1536 = vrot.slane %v178, 5
      %v1537 = vsel %vm1453, %v1535, %v1536
      %v1538 = vrot.slane %v179, 5
      %v1539 = vrot.slane %v1538, 4
      %v1540 = vrot.slane %v180, 5
      %v1541 = vsel %vm1453, %v1539, %v1540
      %v1542 = vrot.slane %v1540, 4
      %v1543 = vrot.slane %v181, 5
      %v1544 = vsel %vm1453, %v1542, %v1543
      %v1545 = vrot.slane %v182, 5
      %v1546 = vrot.slane %v1545, 4
      %v1547 = vrot.slane %v183, 5
      %v1548 = vsel %vm1453, %v1546, %v1547
      %v1549 = vrot.slane %v1547, 4
      %v1550 = vrot.slane %v184, 5
      %v1551 = vsel %vm1453, %v1549, %v1550
      %v1552 = vrot.slane %v185, 5
      %v1553 = vrot.slane %v1552, 4
      %v1554 = vrot.slane %v186, 5
      %v1555 = vsel %vm1453, %v1553, %v1554
      %v1556 = vrot.slane %v1554, 4
      %v1557 = vrot.slane %v187, 5
      %v1558 = vsel %vm1453, %v1556, %v1557
      %v1559 = vrot.slane %v188, 5
      %v1560 = vrot.slane %v1559, 4
      %v1561 = vrot.slane %v189, 5
      %v1562 = vsel %vm1453, %v1560, %v1561
      %v1563 = vrot.slane %v1561, 4
      %v1564 = vrot.slane %v190, 5
      %v1565 = vsel %vm1453, %v1563, %v1564
      %v1566 = vunpack.c.l.b16 %v1457
      %v1567 = vunpack.c.l.b16 %v1460
      %v1568 = vunpack.c.l.b16 %v1464
      %v1569 = vunpack.c.l.b16 %v1467
      %v1570 = vunpack.c.l.b16 %v1471
      %v1571 = vunpack.c.l.b16 %v1474
      %v1572 = vunpack.c.l.b16 %v1478
      %v1573 = vunpack.c.l.b16 %v1481
      %v1574 = vunpack.c.l.b16 %v1485
      %v1575 = vunpack.c.l.b16 %v1488
      %v1576 = vunpack.c.l.b16 %v1492
      %v1577 = vunpack.c.l.b16 %v1495
      %v1578 = vunpack.c.l.b16 %v1499
      %v1579 = vunpack.c.l.b16 %v1502
      %v1580 = vunpack.c.l.b16 %v1506
      %v1581 = vunpack.c.l.b16 %v1509
      %v1582 = vunpack.c.l.b16 %v1513
      %v1583 = vunpack.c.l.b16 %v1516
      %v1584 = vunpack.c.l.b16 %v1520
      %v1585 = vunpack.c.l.b16 %v1523
      %v1586 = vunpack.c.l.b16 %v1527
      %v1587 = vunpack.c.l.b16 %v1530
      %v1588 = vunpack.c.l.b16 %v1534
      %v1589 = vunpack.c.l.b16 %v1537
      %v1590 = vunpack.c.l.b16 %v1541
      %v1591 = vunpack.c.l.b16 %v1544
      %v1592 = vunpack.c.l.b16 %v1548
      %v1593 = vunpack.c.l.b16 %v1551
      %v1594 = vunpack.c.l.b16 %v1555
      %v1595 = vunpack.c.l.b16 %v1558
      %v1596 = vunpack.c.l.b16 %v1562
      %v1597 = vunpack.c.l.b16 %v1565
      %v1598 = vpack.c.b16 %v1567, %v1566
      %v1599 = vpack.c.b16 %v1569, %v1568
      %v1600 = vpack.c.b16 %v1571, %v1570
      %v1601 = vpack.c.b16 %v1573, %v1572
      %v1602 = vpack.c.b16 %v1575, %v1574
      %v1603 = vpack.c.b16 %v1577, %v1576
      %v1604 = vpack.c.b16 %v1579, %v1578
      %v1605 = vpack.c.b16 %v1581, %v1580
      %v1606 = vpack.c.b16 %v1583, %v1582
      %v1607 = vpack.c.b16 %v1585, %v1584
      %v1608 = vpack.c.b16 %v1587, %v1586
      %v1609 = vpack.c.b16 %v1589, %v1588
      %v1610 = vpack.c.b16 %v1591, %v1590
      %v1611 = vpack.c.b16 %v1593, %v1592
      %v1612 = vpack.c.b16 %v1595, %v1594
      %v1613 = vpack.c.b16 %v1597, %v1596
      %v1615 = vsel %vm648, %v1598, 0
      %v1618 = vsel %vm648, %v1599, 0
      %v1621 = vsel %vm648, %v1600, 0
      %v1624 = vsel %vm648, %v1601, 0
      %v1627 = vsel %vm648, %v1602, 0
      %v1630 = vsel %vm648, %v1603, 0
      %v1633 = vsel %vm648, %v1604, 0
      %v1636 = vsel %vm648, %v1605, 0
      %v1639 = vsel %vm648, %v1606, 0
      %v1642 = vsel %vm648, %v1607, 0
      %v1645 = vsel %vm648, %v1608, 0
      %v1648 = vsel %vm648, %v1609, 0
      %v1651 = vsel %vm648, %v1610, 0
      %v1654 = vsel %vm648, %v1611, 0
      %v1657 = vsel %vm648, %v1612, 0
      %v1660 = vsel %vm648, %v1613, 0
      %v1663 = vsel %vm697, %v202, 0
      %1665 = vmatpush.bf16.msra.mxu0 0
      %1666 = vmatpush.bf16.msra.mxu0 0
      %1667 = vmatpush.bf16.msra.mxu0 0
      %1668 = vmatpush.bf16.msra.mxu0 0
      %1669 = vmatpush.bf16.msra.mxu0 0
      %1670 = vmatpush.bf16.msra.mxu0 0
      %1671 = vmatpush.bf16.msra.mxu0 0
      %1672 = vmatpush.bf16.msra.mxu0 %v1663
      %1673 = vmatmul.bf16.gmra.mxu0 %v1615
      %v1674 = vpop.f32.mrf.mxu0
      %v1675 = vadd.f32 0.0, %v1674
      %v1676 = vpop.f32.mrf.mxu0
      %v1677 = vadd.f32 0.0, %v1676
      %1678 = vmatmul.bf16.gmra.mxu0 %v1618
      %v1679 = vpop.f32.mrf.mxu0
      %v1680 = vadd.f32 0.0, %v1679
      %v1681 = vpop.f32.mrf.mxu0
      %v1682 = vadd.f32 0.0, %v1681
      %1683 = vmatmul.bf16.gmra.mxu0 %v1621
      %v1684 = vpop.f32.mrf.mxu0
      %v1685 = vadd.f32 0.0, %v1684
      %v1686 = vpop.f32.mrf.mxu0
      %v1687 = vadd.f32 0.0, %v1686
      %1688 = vmatmul.bf16.gmra.mxu0 %v1624
      %v1689 = vpop.f32.mrf.mxu0
      %v1690 = vadd.f32 0.0, %v1689
      %v1691 = vpop.f32.mrf.mxu0
      %v1692 = vadd.f32 0.0, %v1691
      %1693 = vmatmul.bf16.gmra.mxu0 %v1627
      %v1694 = vpop.f32.mrf.mxu0
      %v1695 = vadd.f32 0.0, %v1694
      %v1696 = vpop.f32.mrf.mxu0
      %v1697 = vadd.f32 0.0, %v1696
      %1698 = vmatmul.bf16.gmra.mxu0 %v1630
      %v1699 = vpop.f32.mrf.mxu0
      %v1700 = vadd.f32 0.0, %v1699
      %v1701 = vpop.f32.mrf.mxu0
      %v1702 = vadd.f32 0.0, %v1701
      %1703 = vmatmul.bf16.gmra.mxu0 %v1633
      %v1704 = vpop.f32.mrf.mxu0
      %v1705 = vadd.f32 0.0, %v1704
      %v1706 = vpop.f32.mrf.mxu0
      %v1707 = vadd.f32 0.0, %v1706
      %1708 = vmatmul.bf16.gmra.mxu0 %v1636
      %v1709 = vpop.f32.mrf.mxu0
      %v1710 = vadd.f32 0.0, %v1709
      %v1711 = vpop.f32.mrf.mxu0
      %v1712 = vadd.f32 0.0, %v1711
      %1713 = vmatmul.bf16.gmra.mxu0 %v1639
      %v1714 = vpop.f32.mrf.mxu0
      %v1715 = vadd.f32 0.0, %v1714
      %v1716 = vpop.f32.mrf.mxu0
      %v1717 = vadd.f32 0.0, %v1716
      %1718 = vmatmul.bf16.gmra.mxu0 %v1642
      %v1719 = vpop.f32.mrf.mxu0
      %v1720 = vadd.f32 0.0, %v1719
      %v1721 = vpop.f32.mrf.mxu0
      %v1722 = vadd.f32 0.0, %v1721
      %1723 = vmatmul.bf16.gmra.mxu0 %v1645
      %v1724 = vpop.f32.mrf.mxu0
      %v1725 = vadd.f32 0.0, %v1724
      %v1726 = vpop.f32.mrf.mxu0
      %v1727 = vadd.f32 0.0, %v1726
      %1728 = vmatmul.bf16.gmra.mxu0 %v1648
      %v1729 = vpop.f32.mrf.mxu0
      %v1730 = vadd.f32 0.0, %v1729
      %v1731 = vpop.f32.mrf.mxu0
      %v1732 = vadd.f32 0.0, %v1731
      %1733 = vmatmul.bf16.gmra.mxu0 %v1651
      %v1734 = vpop.f32.mrf.mxu0
      %v1735 = vadd.f32 0.0, %v1734
      %v1736 = vpop.f32.mrf.mxu0
      %v1737 = vadd.f32 0.0, %v1736
      %1738 = vmatmul.bf16.gmra.mxu0 %v1654
      %v1739 = vpop.f32.mrf.mxu0
      %v1740 = vadd.f32 0.0, %v1739
      %v1741 = vpop.f32.mrf.mxu0
      %v1742 = vadd.f32 0.0, %v1741
      %1743 = vmatmul.bf16.gmra.mxu0 %v1657
      %v1744 = vpop.f32.mrf.mxu0
      %v1745 = vadd.f32 0.0, %v1744
      %v1746 = vpop.f32.mrf.mxu0
      %v1747 = vadd.f32 0.0, %v1746
      %1748 = vmatmul.bf16.gmra.mxu0 %v1660
      %v1749 = vpop.f32.mrf.mxu0
      %v1750 = vadd.f32 0.0, %v1749
      %v1751 = vpop.f32.mrf.mxu0
      %v1752 = vadd.f32 0.0, %v1751
      %1753 = vdwg.mxu0
      %v1755 = vsel %vm697, %v201, 0
      %1757 = vmatpush.bf16.msra.mxu0 0
      %1758 = vmatpush.bf16.msra.mxu0 0
      %1759 = vmatpush.bf16.msra.mxu0 0
      %1760 = vmatpush.bf16.msra.mxu0 0
      %1761 = vmatpush.bf16.msra.mxu0 0
      %1762 = vmatpush.bf16.msra.mxu0 0
      %1763 = vmatpush.bf16.msra.mxu0 0
      %1764 = vmatpush.bf16.msra.mxu0 %v1755
      %1765 = vmatmul.bf16.gmra.mxu0 %v650
      %v1766 = vpop.f32.mrf.mxu0
      %v1767 = vadd.f32 %v1675, %v1766
      %v1768 = vpop.f32.mrf.mxu0
      %v1769 = vadd.f32 %v1677, %v1768
      %1770 = vmatmul.bf16.gmra.mxu0 %v653
      %v1771 = vpop.f32.mrf.mxu0
      %v1772 = vadd.f32 %v1680, %v1771
      %v1773 = vpop.f32.mrf.mxu0
      %v1774 = vadd.f32 %v1682, %v1773
      %1775 = vmatmul.bf16.gmra.mxu0 %v656
      %v1776 = vpop.f32.mrf.mxu0
      %v1777 = vadd.f32 %v1685, %v1776
      %v1778 = vpop.f32.mrf.mxu0
      %v1779 = vadd.f32 %v1687, %v1778
      %1780 = vmatmul.bf16.gmra.mxu0 %v659
      %v1781 = vpop.f32.mrf.mxu0
      %v1782 = vadd.f32 %v1690, %v1781
      %v1783 = vpop.f32.mrf.mxu0
      %v1784 = vadd.f32 %v1692, %v1783
      %1785 = vmatmul.bf16.gmra.mxu0 %v662
      %v1786 = vpop.f32.mrf.mxu0
      %v1787 = vadd.f32 %v1695, %v1786
      %v1788 = vpop.f32.mrf.mxu0
      %v1789 = vadd.f32 %v1697, %v1788
      %1790 = vmatmul.bf16.gmra.mxu0 %v665
      %v1791 = vpop.f32.mrf.mxu0
      %v1792 = vadd.f32 %v1700, %v1791
      %v1793 = vpop.f32.mrf.mxu0
      %v1794 = vadd.f32 %v1702, %v1793
      %1795 = vmatmul.bf16.gmra.mxu0 %v668
      %v1796 = vpop.f32.mrf.mxu0
      %v1797 = vadd.f32 %v1705, %v1796
      %v1798 = vpop.f32.mrf.mxu0
      %v1799 = vadd.f32 %v1707, %v1798
      %1800 = vmatmul.bf16.gmra.mxu0 %v671
      %v1801 = vpop.f32.mrf.mxu0
      %v1802 = vadd.f32 %v1710, %v1801
      %v1803 = vpop.f32.mrf.mxu0
      %v1804 = vadd.f32 %v1712, %v1803
      %1805 = vmatmul.bf16.gmra.mxu0 %v674
      %v1806 = vpop.f32.mrf.mxu0
      %v1807 = vadd.f32 %v1715, %v1806
      %v1808 = vpop.f32.mrf.mxu0
      %v1809 = vadd.f32 %v1717, %v1808
      %1810 = vmatmul.bf16.gmra.mxu0 %v677
      %v1811 = vpop.f32.mrf.mxu0
      %v1812 = vadd.f32 %v1720, %v1811
      %v1813 = vpop.f32.mrf.mxu0
      %v1814 = vadd.f32 %v1722, %v1813
      %1815 = vmatmul.bf16.gmra.mxu0 %v680
      %v1816 = vpop.f32.mrf.mxu0
      %v1817 = vadd.f32 %v1725, %v1816
      %v1818 = vpop.f32.mrf.mxu0
      %v1819 = vadd.f32 %v1727, %v1818
      %1820 = vmatmul.bf16.gmra.mxu0 %v683
      %v1821 = vpop.f32.mrf.mxu0
      %v1822 = vadd.f32 %v1730, %v1821
      %v1823 = vpop.f32.mrf.mxu0
      %v1824 = vadd.f32 %v1732, %v1823
      %1825 = vmatmul.bf16.gmra.mxu0 %v686
      %v1826 = vpop.f32.mrf.mxu0
      %v1827 = vadd.f32 %v1735, %v1826
      %v1828 = vpop.f32.mrf.mxu0
      %v1829 = vadd.f32 %v1737, %v1828
      %1830 = vmatmul.bf16.gmra.mxu0 %v689
      %v1831 = vpop.f32.mrf.mxu0
      %v1832 = vadd.f32 %v1740, %v1831
      %v1833 = vpop.f32.mrf.mxu0
      %v1834 = vadd.f32 %v1742, %v1833
      %1835 = vmatmul.bf16.gmra.mxu0 %v692
      %v1836 = vpop.f32.mrf.mxu0
      %v1837 = vadd.f32 %v1745, %v1836
      %v1838 = vpop.f32.mrf.mxu0
      %v1839 = vadd.f32 %v1747, %v1838
      %1840 = vmatmul.bf16.gmra.mxu0 %v695
      %v1841 = vpop.f32.mrf.mxu0
      %v1842 = vadd.f32 %v1750, %v1841
      %v1843 = vpop.f32.mrf.mxu0
      %v1844 = vadd.f32 %v1752, %v1843
      %1845 = vdwg.mxu0
      %v1847 = vsel %vm697, %v203, 0
      %1849 = vmatpush.bf16.msra.mxu0 0
      %1850 = vmatpush.bf16.msra.mxu0 0
      %1851 = vmatpush.bf16.msra.mxu0 0
      %1852 = vmatpush.bf16.msra.mxu0 0
      %1853 = vmatpush.bf16.msra.mxu0 0
      %1854 = vmatpush.bf16.msra.mxu0 0
      %1855 = vmatpush.bf16.msra.mxu0 0
      %1856 = vmatpush.bf16.msra.mxu0 %v1847
      %1857 = vmatmul.bf16.gmra.mxu0 %v653
      %v1858 = vpop.f32.mrf.mxu0
      %v1859 = vadd.f32 0.0, %v1858
      %v1860 = vpop.f32.mrf.mxu0
      %v1861 = vadd.f32 0.0, %v1860
      %1862 = vmatmul.bf16.gmra.mxu0 %v656
      %v1863 = vpop.f32.mrf.mxu0
      %v1864 = vadd.f32 0.0, %v1863
      %v1865 = vpop.f32.mrf.mxu0
      %v1866 = vadd.f32 0.0, %v1865
      %1867 = vmatmul.bf16.gmra.mxu0 %v659
      %v1868 = vpop.f32.mrf.mxu0
      %v1869 = vadd.f32 0.0, %v1868
      %v1870 = vpop.f32.mrf.mxu0
      %v1871 = vadd.f32 0.0, %v1870
      %1872 = vmatmul.bf16.gmra.mxu0 %v662
      %v1873 = vpop.f32.mrf.mxu0
      %v1874 = vadd.f32 0.0, %v1873
      %v1875 = vpop.f32.mrf.mxu0
      %v1876 = vadd.f32 0.0, %v1875
      %1877 = vmatmul.bf16.gmra.mxu0 %v665
      %v1878 = vpop.f32.mrf.mxu0
      %v1879 = vadd.f32 0.0, %v1878
      %v1880 = vpop.f32.mrf.mxu0
      %v1881 = vadd.f32 0.0, %v1880
      %1882 = vmatmul.bf16.gmra.mxu0 %v668
      %v1883 = vpop.f32.mrf.mxu0
      %v1884 = vadd.f32 0.0, %v1883
      %v1885 = vpop.f32.mrf.mxu0
      %v1886 = vadd.f32 0.0, %v1885
      %1887 = vmatmul.bf16.gmra.mxu0 %v671
      %v1888 = vpop.f32.mrf.mxu0
      %v1889 = vadd.f32 0.0, %v1888
      %v1890 = vpop.f32.mrf.mxu0
      %v1891 = vadd.f32 0.0, %v1890
      %1892 = vmatmul.bf16.gmra.mxu0 %v674
      %v1893 = vpop.f32.mrf.mxu0
      %v1894 = vadd.f32 0.0, %v1893
      %v1895 = vpop.f32.mrf.mxu0
      %v1896 = vadd.f32 0.0, %v1895
      %1897 = vmatmul.bf16.gmra.mxu0 %v677
      %v1898 = vpop.f32.mrf.mxu0
      %v1899 = vadd.f32 0.0, %v1898
      %v1900 = vpop.f32.mrf.mxu0
      %v1901 = vadd.f32 0.0, %v1900
      %1902 = vmatmul.bf16.gmra.mxu0 %v680
      %v1903 = vpop.f32.mrf.mxu0
      %v1904 = vadd.f32 0.0, %v1903
      %v1905 = vpop.f32.mrf.mxu0
      %v1906 = vadd.f32 0.0, %v1905
      %1907 = vmatmul.bf16.gmra.mxu0 %v683
      %v1908 = vpop.f32.mrf.mxu0
      %v1909 = vadd.f32 0.0, %v1908
      %v1910 = vpop.f32.mrf.mxu0
      %v1911 = vadd.f32 0.0, %v1910
      %1912 = vmatmul.bf16.gmra.mxu0 %v686
      %v1913 = vpop.f32.mrf.mxu0
      %v1914 = vadd.f32 0.0, %v1913
      %v1915 = vpop.f32.mrf.mxu0
      %v1916 = vadd.f32 0.0, %v1915
      %1917 = vmatmul.bf16.gmra.mxu0 %v689
      %v1918 = vpop.f32.mrf.mxu0
      %v1919 = vadd.f32 0.0, %v1918
      %v1920 = vpop.f32.mrf.mxu0
      %v1921 = vadd.f32 0.0, %v1920
      %1922 = vmatmul.bf16.gmra.mxu0 %v692
      %v1923 = vpop.f32.mrf.mxu0
      %v1924 = vadd.f32 0.0, %v1923
      %v1925 = vpop.f32.mrf.mxu0
      %v1926 = vadd.f32 0.0, %v1925
      %1927 = vmatmul.bf16.gmra.mxu0 %v695
      %v1928 = vpop.f32.mrf.mxu0
      %v1929 = vadd.f32 0.0, %v1928
      %v1930 = vpop.f32.mrf.mxu0
      %v1931 = vadd.f32 0.0, %v1930
      %1932 = vmatmul.bf16.gmra.mxu0 %v1170
      %v1933 = vpop.f32.mrf.mxu0
      %v1934 = vadd.f32 0.0, %v1933
      %v1935 = vpop.f32.mrf.mxu0
      %v1936 = vadd.f32 0.0, %v1935
      %1937 = vdwg.mxu0
      %v1938 = vadd.f32 %v1767, %v1859
      %v1939 = vadd.f32 %v1769, %v1861
      %v1940 = vadd.f32 %v1772, %v1864
      %v1941 = vadd.f32 %v1774, %v1866
      %v1942 = vadd.f32 %v1777, %v1869
      %v1943 = vadd.f32 %v1779, %v1871
      %v1944 = vadd.f32 %v1782, %v1874
      %v1945 = vadd.f32 %v1784, %v1876
      %v1946 = vadd.f32 %v1787, %v1879
      %v1947 = vadd.f32 %v1789, %v1881
      %v1948 = vadd.f32 %v1792, %v1884
      %v1949 = vadd.f32 %v1794, %v1886
      %v1950 = vadd.f32 %v1797, %v1889
      %v1951 = vadd.f32 %v1799, %v1891
      %v1952 = vadd.f32 %v1802, %v1894
      %v1953 = vadd.f32 %v1804, %v1896
      %v1954 = vadd.f32 %v1807, %v1899
      %v1955 = vadd.f32 %v1809, %v1901
      %v1956 = vadd.f32 %v1812, %v1904
      %v1957 = vadd.f32 %v1814, %v1906
      %v1958 = vadd.f32 %v1817, %v1909
      %v1959 = vadd.f32 %v1819, %v1911
      %v1960 = vadd.f32 %v1822, %v1914
      %v1961 = vadd.f32 %v1824, %v1916
      %v1962 = vadd.f32 %v1827, %v1919
      %v1963 = vadd.f32 %v1829, %v1921
      %v1964 = vadd.f32 %v1832, %v1924
      %v1965 = vadd.f32 %v1834, %v1926
      %v1966 = vadd.f32 %v1837, %v1929
      %v1967 = vadd.f32 %v1839, %v1931
      %v1968 = vadd.f32 %v1842, %v1934
      %v1969 = vadd.f32 %v1844, %v1936
      %v1971 = vrot.slane %v191, 5
      %v1972 = vrot.slane %v1971, 4
      %v1973 = vrot.slane %v192, 5
      %v1974 = vsel %vm1453, %v1972, %v1973
      %v1975 = vrot.slane %v1973, 4
      %v1976 = vrot.slane %v193, 5
      %v1977 = vsel %vm1453, %v1975, %v1976
      %v1978 = vunpack.c.l.b16 %v1974
      %v1979 = vunpack.c.l.b16 %v1977
      %v1980 = vpack.c.b16 %v1979, %v1978
      %v1982 = vsel %vm648, %v1980, 0
      %v1985 = vsel %vm697, %v204, 0
      %1987 = vmatpush.bf16.msra.mxu0 0
      %1988 = vmatpush.bf16.msra.mxu0 0
      %1989 = vmatpush.bf16.msra.mxu0 0
      %1990 = vmatpush.bf16.msra.mxu0 0
      %1991 = vmatpush.bf16.msra.mxu0 0
      %1992 = vmatpush.bf16.msra.mxu0 0
      %1993 = vmatpush.bf16.msra.mxu0 0
      %1994 = vmatpush.bf16.msra.mxu0 %v1985
      %1995 = vmatmul.bf16.gmra.mxu0 %v1618
      %v1996 = vpop.f32.mrf.mxu0
      %v1997 = vadd.f32 0.0, %v1996
      %v1998 = vpop.f32.mrf.mxu0
      %v1999 = vadd.f32 0.0, %v1998
      %2000 = vmatmul.bf16.gmra.mxu0 %v1621
      %v2001 = vpop.f32.mrf.mxu0
      %v2002 = vadd.f32 0.0, %v2001
      %v2003 = vpop.f32.mrf.mxu0
      %v2004 = vadd.f32 0.0, %v2003
      %2005 = vmatmul.bf16.gmra.mxu0 %v1624
      %v2006 = vpop.f32.mrf.mxu0
      %v2007 = vadd.f32 0.0, %v2006
      %v2008 = vpop.f32.mrf.mxu0
      %v2009 = vadd.f32 0.0, %v2008
      %2010 = vmatmul.bf16.gmra.mxu0 %v1627
      %v2011 = vpop.f32.mrf.mxu0
      %v2012 = vadd.f32 0.0, %v2011
      %v2013 = vpop.f32.mrf.mxu0
      %v2014 = vadd.f32 0.0, %v2013
      %2015 = vmatmul.bf16.gmra.mxu0 %v1630
      %v2016 = vpop.f32.mrf.mxu0
      %v2017 = vadd.f32 0.0, %v2016
      %v2018 = vpop.f32.mrf.mxu0
      %v2019 = vadd.f32 0.0, %v2018
      %2020 = vmatmul.bf16.gmra.mxu0 %v1633
      %v2021 = vpop.f32.mrf.mxu0
      %v2022 = vadd.f32 0.0, %v2021
      %v2023 = vpop.f32.mrf.mxu0
      %v2024 = vadd.f32 0.0, %v2023
      %2025 = vmatmul.bf16.gmra.mxu0 %v1636
      %v2026 = vpop.f32.mrf.mxu0
      %v2027 = vadd.f32 0.0, %v2026
      %v2028 = vpop.f32.mrf.mxu0
      %v2029 = vadd.f32 0.0, %v2028
      %2030 = vmatmul.bf16.gmra.mxu0 %v1639
      %v2031 = vpop.f32.mrf.mxu0
      %v2032 = vadd.f32 0.0, %v2031
      %v2033 = vpop.f32.mrf.mxu0
      %v2034 = vadd.f32 0.0, %v2033
      %2035 = vmatmul.bf16.gmra.mxu0 %v1642
      %v2036 = vpop.f32.mrf.mxu0
      %v2037 = vadd.f32 0.0, %v2036
      %v2038 = vpop.f32.mrf.mxu0
      %v2039 = vadd.f32 0.0, %v2038
      %2040 = vmatmul.bf16.gmra.mxu0 %v1645
      %v2041 = vpop.f32.mrf.mxu0
      %v2042 = vadd.f32 0.0, %v2041
      %v2043 = vpop.f32.mrf.mxu0
      %v2044 = vadd.f32 0.0, %v2043
      %2045 = vmatmul.bf16.gmra.mxu0 %v1648
      %v2046 = vpop.f32.mrf.mxu0
      %v2047 = vadd.f32 0.0, %v2046
      %v2048 = vpop.f32.mrf.mxu0
      %v2049 = vadd.f32 0.0, %v2048
      %2050 = vmatmul.bf16.gmra.mxu0 %v1651
      %v2051 = vpop.f32.mrf.mxu0
      %v2052 = vadd.f32 0.0, %v2051
      %v2053 = vpop.f32.mrf.mxu0
      %v2054 = vadd.f32 0.0, %v2053
      %2055 = vmatmul.bf16.gmra.mxu0 %v1654
      %v2056 = vpop.f32.mrf.mxu0
      %v2057 = vadd.f32 0.0, %v2056
      %v2058 = vpop.f32.mrf.mxu0
      %v2059 = vadd.f32 0.0, %v2058
      %2060 = vmatmul.bf16.gmra.mxu0 %v1657
      %v2061 = vpop.f32.mrf.mxu0
      %v2062 = vadd.f32 0.0, %v2061
      %v2063 = vpop.f32.mrf.mxu0
      %v2064 = vadd.f32 0.0, %v2063
      %2065 = vmatmul.bf16.gmra.mxu0 %v1660
      %v2066 = vpop.f32.mrf.mxu0
      %v2067 = vadd.f32 0.0, %v2066
      %v2068 = vpop.f32.mrf.mxu0
      %v2069 = vadd.f32 0.0, %v2068
      %2070 = vmatmul.bf16.gmra.mxu0 %v1982
      %v2071 = vpop.f32.mrf.mxu0
      %v2072 = vadd.f32 0.0, %v2071
      %v2073 = vpop.f32.mrf.mxu0
      %v2074 = vadd.f32 0.0, %v2073
      %2075 = vdwg.mxu0
      %v2076 = vadd.f32 %v1938, %v1997
      %v2077 = vadd.f32 %v1939, %v1999
      %v2078 = vadd.f32 %v1940, %v2002
      %v2079 = vadd.f32 %v1941, %v2004
      %v2080 = vadd.f32 %v1942, %v2007
      %v2081 = vadd.f32 %v1943, %v2009
      %v2082 = vadd.f32 %v1944, %v2012
      %v2083 = vadd.f32 %v1945, %v2014
      %v2084 = vadd.f32 %v1946, %v2017
      %v2085 = vadd.f32 %v1947, %v2019
      %v2086 = vadd.f32 %v1948, %v2022
      %v2087 = vadd.f32 %v1949, %v2024
      %v2088 = vadd.f32 %v1950, %v2027
      %v2089 = vadd.f32 %v1951, %v2029
      %v2090 = vadd.f32 %v1952, %v2032
      %v2091 = vadd.f32 %v1953, %v2034
      %v2092 = vadd.f32 %v1954, %v2037
      %v2093 = vadd.f32 %v1955, %v2039
      %v2094 = vadd.f32 %v1956, %v2042
      %v2095 = vadd.f32 %v1957, %v2044
      %v2096 = vadd.f32 %v1958, %v2047
      %v2097 = vadd.f32 %v1959, %v2049
      %v2098 = vadd.f32 %v1960, %v2052
      %v2099 = vadd.f32 %v1961, %v2054
      %v2100 = vadd.f32 %v1962, %v2057
      %v2101 = vadd.f32 %v1963, %v2059
      %v2102 = vadd.f32 %v1964, %v2062
      %v2103 = vadd.f32 %v1965, %v2064
      %v2104 = vadd.f32 %v1966, %v2067
      %v2105 = vadd.f32 %v1967, %v2069
      %v2106 = vadd.f32 %v1968, %v2072
      %v2107 = vadd.f32 %v1969, %v2074
      %v2108 = vadd.f32 %v2076, %v2077
      %v2109 = vadd.f32 %v2108, %v2078
      %v2110 = vadd.f32 %v2109, %v2079
      %v2111 = vadd.f32 %v2110, %v2080
      %v2112 = vadd.f32 %v2111, %v2081
      %v2113 = vadd.f32 %v2112, %v2082
      %v2114 = vadd.f32 %v2113, %v2083
      %v2115 = vadd.f32 %v2114, %v2084
      %v2116 = vadd.f32 %v2115, %v2085
      %v2117 = vadd.f32 %v2116, %v2086
      %v2118 = vadd.f32 %v2117, %v2087
      %v2119 = vadd.f32 %v2118, %v2088
      %v2120 = vadd.f32 %v2119, %v2089
      %v2121 = vadd.f32 %v2120, %v2090
      %v2122 = vadd.f32 %v2121, %v2091
      %v2123 = vadd.f32 %v2122, %v2092
      %v2124 = vadd.f32 %v2123, %v2093
      %v2125 = vadd.f32 %v2124, %v2094
      %v2126 = vadd.f32 %v2125, %v2095
      %v2127 = vadd.f32 %v2126, %v2096
      %v2128 = vadd.f32 %v2127, %v2097
      %v2129 = vadd.f32 %v2128, %v2098
      %v2130 = vadd.f32 %v2129, %v2099
      %v2131 = vadd.f32 %v2130, %v2100
      %v2132 = vadd.f32 %v2131, %v2101
      %v2133 = vadd.f32 %v2132, %v2102
      %v2134 = vadd.f32 %v2133, %v2103
      %v2135 = vadd.f32 %v2134, %v2104
      %v2136 = vadd.f32 %v2135, %v2105
      %v2137 = vadd.f32 %v2136, %v2106
      %v2138 = vadd.f32 %v2137, %v2107
      %v2139 = vrot.slane %v2138, 4
      %v2140 = vadd.f32 %v2138, %v2139
      %v2141 = vrot.slane %v2140, 2
      %v2142 = vadd.f32 %v2140, %v2141
      %v2143 = vrot.slane %v2142, 1
      %v2144 = vadd.f32 %v2142, %v2143
      %v2145 = vmul.f32 %v2144, 0.00390625
      %v2146 = vsub.f32 %v2076, %v2145
      %v2147 = vsub.f32 %v2077, %v2145
      %v2148 = vsub.f32 %v2078, %v2145
      %v2149 = vsub.f32 %v2079, %v2145
      %v2150 = vsub.f32 %v2080, %v2145
      %v2151 = vsub.f32 %v2081, %v2145
      %v2152 = vsub.f32 %v2082, %v2145
      %v2153 = vsub.f32 %v2083, %v2145
      %v2154 = vsub.f32 %v2084, %v2145
      %v2155 = vsub.f32 %v2085, %v2145
      %v2156 = vsub.f32 %v2086, %v2145
      %v2157 = vsub.f32 %v2087, %v2145
      %v2158 = vsub.f32 %v2088, %v2145
      %v2159 = vsub.f32 %v2089, %v2145
      %v2160 = vsub.f32 %v2090, %v2145
      %v2161 = vsub.f32 %v2091, %v2145
      %v2162 = vsub.f32 %v2092, %v2145
      %v2163 = vsub.f32 %v2093, %v2145
      %v2164 = vsub.f32 %v2094, %v2145
      %v2165 = vsub.f32 %v2095, %v2145
      %v2166 = vsub.f32 %v2096, %v2145
      %v2167 = vsub.f32 %v2097, %v2145
      %v2168 = vsub.f32 %v2098, %v2145
      %v2169 = vsub.f32 %v2099, %v2145
      %v2170 = vsub.f32 %v2100, %v2145
      %v2171 = vsub.f32 %v2101, %v2145
      %v2172 = vsub.f32 %v2102, %v2145
      %v2173 = vsub.f32 %v2103, %v2145
      %v2174 = vsub.f32 %v2104, %v2145
      %v2175 = vsub.f32 %v2105, %v2145
      %v2176 = vsub.f32 %v2106, %v2145
      %v2177 = vsub.f32 %v2107, %v2145
      %v2178 = vmul.f32 %v2146, %v2146
      %v2179 = vmul.f32 %v2147, %v2147
      %v2180 = vmul.f32 %v2148, %v2148
      %v2181 = vmul.f32 %v2149, %v2149
      %v2182 = vmul.f32 %v2150, %v2150
      %v2183 = vmul.f32 %v2151, %v2151
      %v2184 = vmul.f32 %v2152, %v2152
      %v2185 = vmul.f32 %v2153, %v2153
      %v2186 = vmul.f32 %v2154, %v2154
      %v2187 = vmul.f32 %v2155, %v2155
      %v2188 = vmul.f32 %v2156, %v2156
      %v2189 = vmul.f32 %v2157, %v2157
      %v2190 = vmul.f32 %v2158, %v2158
      %v2191 = vmul.f32 %v2159, %v2159
      %v2192 = vmul.f32 %v2160, %v2160
      %v2193 = vmul.f32 %v2161, %v2161
      %v2194 = vmul.f32 %v2162, %v2162
      %v2195 = vmul.f32 %v2163, %v2163
      %v2196 = vmul.f32 %v2164, %v2164
      %v2197 = vmul.f32 %v2165, %v2165
      %v2198 = vmul.f32 %v2166, %v2166
      %v2199 = vmul.f32 %v2167, %v2167
      %v2200 = vmul.f32 %v2168, %v2168
      %v2201 = vmul.f32 %v2169, %v2169
      %v2202 = vmul.f32 %v2170, %v2170
      %v2203 = vmul.f32 %v2171, %v2171
      %v2204 = vmul.f32 %v2172, %v2172
      %v2205 = vmul.f32 %v2173, %v2173
      %v2206 = vmul.f32 %v2174, %v2174
      %v2207 = vmul.f32 %v2175, %v2175
      %v2208 = vmul.f32 %v2176, %v2176
      %v2209 = vmul.f32 %v2177, %v2177
      %v2210 = vadd.f32 %v2178, %v2179
      %v2211 = vadd.f32 %v2210, %v2180
      %v2212 = vadd.f32 %v2211, %v2181
      %v2213 = vadd.f32 %v2212, %v2182
      %v2214 = vadd.f32 %v2213, %v2183
      %v2215 = vadd.f32 %v2214, %v2184
      %v2216 = vadd.f32 %v2215, %v2185
      %v2217 = vadd.f32 %v2216, %v2186
      %v2218 = vadd.f32 %v2217, %v2187
      %v2219 = vadd.f32 %v2218, %v2188
      %v2220 = vadd.f32 %v2219, %v2189
      %v2221 = vadd.f32 %v2220, %v2190
      %v2222 = vadd.f32 %v2221, %v2191
      %v2223 = vadd.f32 %v2222, %v2192
      %v2224 = vadd.f32 %v2223, %v2193
      %v2225 = vadd.f32 %v2224, %v2194
      %v2226 = vadd.f32 %v2225, %v2195
      %v2227 = vadd.f32 %v2226, %v2196
      %v2228 = vadd.f32 %v2227, %v2197
      %v2229 = vadd.f32 %v2228, %v2198
      %v2230 = vadd.f32 %v2229, %v2199
      %v2231 = vadd.f32 %v2230, %v2200
      %v2232 = vadd.f32 %v2231, %v2201
      %v2233 = vadd.f32 %v2232, %v2202
      %v2234 = vadd.f32 %v2233, %v2203
      %v2235 = vadd.f32 %v2234, %v2204
      %v2236 = vadd.f32 %v2235, %v2205
      %v2237 = vadd.f32 %v2236, %v2206
      %v2238 = vadd.f32 %v2237, %v2207
      %v2239 = vadd.f32 %v2238, %v2208
      %v2240 = vadd.f32 %v2239, %v2209
      %v2241 = vrot.slane %v2240, 4
      %v2242 = vadd.f32 %v2240, %v2241
      %v2243 = vrot.slane %v2242, 2
      %v2244 = vadd.f32 %v2242, %v2243
      %v2245 = vrot.slane %v2244, 1
      %v2246 = vadd.f32 %v2244, %v2245
      %v2248 = vsel %vm697, %v206, 0
      %2250 = vmatpush.bf16.msra.mxu0 0
      %2251 = vmatpush.bf16.msra.mxu0 0
      %2252 = vmatpush.bf16.msra.mxu0 0
      %2253 = vmatpush.bf16.msra.mxu0 0
      %2254 = vmatpush.bf16.msra.mxu0 0
      %2255 = vmatpush.bf16.msra.mxu0 0
      %2256 = vmatpush.bf16.msra.mxu0 0
      %2257 = vmatpush.bf16.msra.mxu0 %v2248
      %2258 = vmatmul.bf16.gmra.mxu0 %v653
      %v2259 = vpop.f32.mrf.mxu0
      %v2260 = vadd.f32 0.0, %v2259
      %v2261 = vpop.f32.mrf.mxu0
      %v2262 = vadd.f32 0.0, %v2261
      %2263 = vmatmul.bf16.gmra.mxu0 %v656
      %v2264 = vpop.f32.mrf.mxu0
      %v2265 = vadd.f32 0.0, %v2264
      %v2266 = vpop.f32.mrf.mxu0
      %v2267 = vadd.f32 0.0, %v2266
      %2268 = vmatmul.bf16.gmra.mxu0 %v659
      %v2269 = vpop.f32.mrf.mxu0
      %v2270 = vadd.f32 0.0, %v2269
      %v2271 = vpop.f32.mrf.mxu0
      %v2272 = vadd.f32 0.0, %v2271
      %2273 = vmatmul.bf16.gmra.mxu0 %v662
      %v2274 = vpop.f32.mrf.mxu0
      %v2275 = vadd.f32 0.0, %v2274
      %v2276 = vpop.f32.mrf.mxu0
      %v2277 = vadd.f32 0.0, %v2276
      %2278 = vmatmul.bf16.gmra.mxu0 %v665
      %v2279 = vpop.f32.mrf.mxu0
      %v2280 = vadd.f32 0.0, %v2279
      %v2281 = vpop.f32.mrf.mxu0
      %v2282 = vadd.f32 0.0, %v2281
      %2283 = vmatmul.bf16.gmra.mxu0 %v668
      %v2284 = vpop.f32.mrf.mxu0
      %v2285 = vadd.f32 0.0, %v2284
      %v2286 = vpop.f32.mrf.mxu0
      %v2287 = vadd.f32 0.0, %v2286
      %2288 = vmatmul.bf16.gmra.mxu0 %v671
      %v2289 = vpop.f32.mrf.mxu0
      %v2290 = vadd.f32 0.0, %v2289
      %v2291 = vpop.f32.mrf.mxu0
      %v2292 = vadd.f32 0.0, %v2291
      %2293 = vmatmul.bf16.gmra.mxu0 %v674
      %v2294 = vpop.f32.mrf.mxu0
      %v2295 = vadd.f32 0.0, %v2294
      %v2296 = vpop.f32.mrf.mxu0
      %v2297 = vadd.f32 0.0, %v2296
      %2298 = vmatmul.bf16.gmra.mxu0 %v677
      %v2299 = vpop.f32.mrf.mxu0
      %v2300 = vadd.f32 0.0, %v2299
      %v2301 = vpop.f32.mrf.mxu0
      %v2302 = vadd.f32 0.0, %v2301
      %2303 = vmatmul.bf16.gmra.mxu0 %v680
      %v2304 = vpop.f32.mrf.mxu0
      %v2305 = vadd.f32 0.0, %v2304
      %v2306 = vpop.f32.mrf.mxu0
      %v2307 = vadd.f32 0.0, %v2306
      %2308 = vmatmul.bf16.gmra.mxu0 %v683
      %v2309 = vpop.f32.mrf.mxu0
      %v2310 = vadd.f32 0.0, %v2309
      %v2311 = vpop.f32.mrf.mxu0
      %v2312 = vadd.f32 0.0, %v2311
      %2313 = vmatmul.bf16.gmra.mxu0 %v686
      %v2314 = vpop.f32.mrf.mxu0
      %v2315 = vadd.f32 0.0, %v2314
      %v2316 = vpop.f32.mrf.mxu0
      %v2317 = vadd.f32 0.0, %v2316
      %2318 = vmatmul.bf16.gmra.mxu0 %v689
      %v2319 = vpop.f32.mrf.mxu0
      %v2320 = vadd.f32 0.0, %v2319
      %v2321 = vpop.f32.mrf.mxu0
      %v2322 = vadd.f32 0.0, %v2321
      %2323 = vmatmul.bf16.gmra.mxu0 %v692
      %v2324 = vpop.f32.mrf.mxu0
      %v2325 = vadd.f32 0.0, %v2324
      %v2326 = vpop.f32.mrf.mxu0
      %v2327 = vadd.f32 0.0, %v2326
      %2328 = vmatmul.bf16.gmra.mxu0 %v695
      %v2329 = vpop.f32.mrf.mxu0
      %v2330 = vadd.f32 0.0, %v2329
      %v2331 = vpop.f32.mrf.mxu0
      %v2332 = vadd.f32 0.0, %v2331
      %2333 = vmatmul.bf16.gmra.mxu0 %v1170
      %v2334 = vpop.f32.mrf.mxu0
      %v2335 = vadd.f32 0.0, %v2334
      %v2336 = vpop.f32.mrf.mxu0
      %v2337 = vadd.f32 0.0, %v2336
      %2338 = vdwg.mxu0
      %v2340 = vsel %vm697, %v205, 0
      %2342 = vmatpush.bf16.msra.mxu0 0
      %2343 = vmatpush.bf16.msra.mxu0 0
      %2344 = vmatpush.bf16.msra.mxu0 0
      %2345 = vmatpush.bf16.msra.mxu0 0
      %2346 = vmatpush.bf16.msra.mxu0 0
      %2347 = vmatpush.bf16.msra.mxu0 0
      %2348 = vmatpush.bf16.msra.mxu0 0
      %2349 = vmatpush.bf16.msra.mxu0 %v2340
      %2350 = vmatmul.bf16.gmra.mxu0 %v874
      %v2351 = vpop.f32.mrf.mxu0
      %v2352 = vadd.f32 %v2260, %v2351
      %v2353 = vpop.f32.mrf.mxu0
      %v2354 = vadd.f32 %v2262, %v2353
      %2355 = vmatmul.bf16.gmra.mxu0 %v877
      %v2356 = vpop.f32.mrf.mxu0
      %v2357 = vadd.f32 %v2265, %v2356
      %v2358 = vpop.f32.mrf.mxu0
      %v2359 = vadd.f32 %v2267, %v2358
      %2360 = vmatmul.bf16.gmra.mxu0 %v880
      %v2361 = vpop.f32.mrf.mxu0
      %v2362 = vadd.f32 %v2270, %v2361
      %v2363 = vpop.f32.mrf.mxu0
      %v2364 = vadd.f32 %v2272, %v2363
      %2365 = vmatmul.bf16.gmra.mxu0 %v883
      %v2366 = vpop.f32.mrf.mxu0
      %v2367 = vadd.f32 %v2275, %v2366
      %v2368 = vpop.f32.mrf.mxu0
      %v2369 = vadd.f32 %v2277, %v2368
      %2370 = vmatmul.bf16.gmra.mxu0 %v886
      %v2371 = vpop.f32.mrf.mxu0
      %v2372 = vadd.f32 %v2280, %v2371
      %v2373 = vpop.f32.mrf.mxu0
      %v2374 = vadd.f32 %v2282, %v2373
      %2375 = vmatmul.bf16.gmra.mxu0 %v889
      %v2376 = vpop.f32.mrf.mxu0
      %v2377 = vadd.f32 %v2285, %v2376
      %v2378 = vpop.f32.mrf.mxu0
      %v2379 = vadd.f32 %v2287, %v2378
      %2380 = vmatmul.bf16.gmra.mxu0 %v892
      %v2381 = vpop.f32.mrf.mxu0
      %v2382 = vadd.f32 %v2290, %v2381
      %v2383 = vpop.f32.mrf.mxu0
      %v2384 = vadd.f32 %v2292, %v2383
      %2385 = vmatmul.bf16.gmra.mxu0 %v895
      %v2386 = vpop.f32.mrf.mxu0
      %v2387 = vadd.f32 %v2295, %v2386
      %v2388 = vpop.f32.mrf.mxu0
      %v2389 = vadd.f32 %v2297, %v2388
      %2390 = vmatmul.bf16.gmra.mxu0 %v898
      %v2391 = vpop.f32.mrf.mxu0
      %v2392 = vadd.f32 %v2300, %v2391
      %v2393 = vpop.f32.mrf.mxu0
      %v2394 = vadd.f32 %v2302, %v2393
      %2395 = vmatmul.bf16.gmra.mxu0 %v901
      %v2396 = vpop.f32.mrf.mxu0
      %v2397 = vadd.f32 %v2305, %v2396
      %v2398 = vpop.f32.mrf.mxu0
      %v2399 = vadd.f32 %v2307, %v2398
      %2400 = vmatmul.bf16.gmra.mxu0 %v904
      %v2401 = vpop.f32.mrf.mxu0
      %v2402 = vadd.f32 %v2310, %v2401
      %v2403 = vpop.f32.mrf.mxu0
      %v2404 = vadd.f32 %v2312, %v2403
      %2405 = vmatmul.bf16.gmra.mxu0 %v907
      %v2406 = vpop.f32.mrf.mxu0
      %v2407 = vadd.f32 %v2315, %v2406
      %v2408 = vpop.f32.mrf.mxu0
      %v2409 = vadd.f32 %v2317, %v2408
      %2410 = vmatmul.bf16.gmra.mxu0 %v910
      %v2411 = vpop.f32.mrf.mxu0
      %v2412 = vadd.f32 %v2320, %v2411
      %v2413 = vpop.f32.mrf.mxu0
      %v2414 = vadd.f32 %v2322, %v2413
      %2415 = vmatmul.bf16.gmra.mxu0 %v913
      %v2416 = vpop.f32.mrf.mxu0
      %v2417 = vadd.f32 %v2325, %v2416
      %v2418 = vpop.f32.mrf.mxu0
      %v2419 = vadd.f32 %v2327, %v2418
      %2420 = vmatmul.bf16.gmra.mxu0 %v916
      %v2421 = vpop.f32.mrf.mxu0
      %v2422 = vadd.f32 %v2330, %v2421
      %v2423 = vpop.f32.mrf.mxu0
      %v2424 = vadd.f32 %v2332, %v2423
      %2425 = vmatmul.bf16.gmra.mxu0 %v1016
      %v2426 = vpop.f32.mrf.mxu0
      %v2427 = vadd.f32 %v2335, %v2426
      %v2428 = vpop.f32.mrf.mxu0
      %v2429 = vadd.f32 %v2337, %v2428
      %2430 = vdwg.mxu0
      %v2433 = vunpack.c.l.b16 %v194
      %v2434 = vunpack.c.l.b16 %v195
      %v2435 = vpack.c.b16 %v2434, %v2433
      %v2437 = vsel %vm648, %v2435, 0
      %v2440 = vsel %vm697, %v207, 0
      %2442 = vmatpush.bf16.msra.mxu0 0
      %2443 = vmatpush.bf16.msra.mxu0 0
      %2444 = vmatpush.bf16.msra.mxu0 0
      %2445 = vmatpush.bf16.msra.mxu0 0
      %2446 = vmatpush.bf16.msra.mxu0 0
      %2447 = vmatpush.bf16.msra.mxu0 0
      %2448 = vmatpush.bf16.msra.mxu0 0
      %2449 = vmatpush.bf16.msra.mxu0 %v2440
      %2450 = vmatmul.bf16.gmra.mxu0 %v877
      %v2451 = vpop.f32.mrf.mxu0
      %v2452 = vadd.f32 0.0, %v2451
      %v2453 = vpop.f32.mrf.mxu0
      %v2454 = vadd.f32 0.0, %v2453
      %2455 = vmatmul.bf16.gmra.mxu0 %v880
      %v2456 = vpop.f32.mrf.mxu0
      %v2457 = vadd.f32 0.0, %v2456
      %v2458 = vpop.f32.mrf.mxu0
      %v2459 = vadd.f32 0.0, %v2458
      %2460 = vmatmul.bf16.gmra.mxu0 %v883
      %v2461 = vpop.f32.mrf.mxu0
      %v2462 = vadd.f32 0.0, %v2461
      %v2463 = vpop.f32.mrf.mxu0
      %v2464 = vadd.f32 0.0, %v2463
      %2465 = vmatmul.bf16.gmra.mxu0 %v886
      %v2466 = vpop.f32.mrf.mxu0
      %v2467 = vadd.f32 0.0, %v2466
      %v2468 = vpop.f32.mrf.mxu0
      %v2469 = vadd.f32 0.0, %v2468
      %2470 = vmatmul.bf16.gmra.mxu0 %v889
      %v2471 = vpop.f32.mrf.mxu0
      %v2472 = vadd.f32 0.0, %v2471
      %v2473 = vpop.f32.mrf.mxu0
      %v2474 = vadd.f32 0.0, %v2473
      %2475 = vmatmul.bf16.gmra.mxu0 %v892
      %v2476 = vpop.f32.mrf.mxu0
      %v2477 = vadd.f32 0.0, %v2476
      %v2478 = vpop.f32.mrf.mxu0
      %v2479 = vadd.f32 0.0, %v2478
      %2480 = vmatmul.bf16.gmra.mxu0 %v895
      %v2481 = vpop.f32.mrf.mxu0
      %v2482 = vadd.f32 0.0, %v2481
      %v2483 = vpop.f32.mrf.mxu0
      %v2484 = vadd.f32 0.0, %v2483
      %2485 = vmatmul.bf16.gmra.mxu0 %v898
      %v2486 = vpop.f32.mrf.mxu0
      %v2487 = vadd.f32 0.0, %v2486
      %v2488 = vpop.f32.mrf.mxu0
      %v2489 = vadd.f32 0.0, %v2488
      %2490 = vmatmul.bf16.gmra.mxu0 %v901
      %v2491 = vpop.f32.mrf.mxu0
      %v2492 = vadd.f32 0.0, %v2491
      %v2493 = vpop.f32.mrf.mxu0
      %v2494 = vadd.f32 0.0, %v2493
      %2495 = vmatmul.bf16.gmra.mxu0 %v904
      %v2496 = vpop.f32.mrf.mxu0
      %v2497 = vadd.f32 0.0, %v2496
      %v2498 = vpop.f32.mrf.mxu0
      %v2499 = vadd.f32 0.0, %v2498
      %2500 = vmatmul.bf16.gmra.mxu0 %v907
      %v2501 = vpop.f32.mrf.mxu0
      %v2502 = vadd.f32 0.0, %v2501
      %v2503 = vpop.f32.mrf.mxu0
      %v2504 = vadd.f32 0.0, %v2503
      %2505 = vmatmul.bf16.gmra.mxu0 %v910
      %v2506 = vpop.f32.mrf.mxu0
      %v2507 = vadd.f32 0.0, %v2506
      %v2508 = vpop.f32.mrf.mxu0
      %v2509 = vadd.f32 0.0, %v2508
      %2510 = vmatmul.bf16.gmra.mxu0 %v913
      %v2511 = vpop.f32.mrf.mxu0
      %v2512 = vadd.f32 0.0, %v2511
      %v2513 = vpop.f32.mrf.mxu0
      %v2514 = vadd.f32 0.0, %v2513
      %2515 = vmatmul.bf16.gmra.mxu0 %v916
      %v2516 = vpop.f32.mrf.mxu0
      %v2517 = vadd.f32 0.0, %v2516
      %v2518 = vpop.f32.mrf.mxu0
      %v2519 = vadd.f32 0.0, %v2518
      %2520 = vmatmul.bf16.gmra.mxu0 %v1016
      %v2521 = vpop.f32.mrf.mxu0
      %v2522 = vadd.f32 0.0, %v2521
      %v2523 = vpop.f32.mrf.mxu0
      %v2524 = vadd.f32 0.0, %v2523
      %2525 = vmatmul.bf16.gmra.mxu0 %v2437
      %v2526 = vpop.f32.mrf.mxu0
      %v2527 = vadd.f32 0.0, %v2526
      %v2528 = vpop.f32.mrf.mxu0
      %v2529 = vadd.f32 0.0, %v2528
      %2530 = vdwg.mxu0
      %v2531 = vadd.f32 %v2352, %v2452
      %v2532 = vadd.f32 %v2354, %v2454
      %v2533 = vadd.f32 %v2357, %v2457
      %v2534 = vadd.f32 %v2359, %v2459
      %v2535 = vadd.f32 %v2362, %v2462
      %v2536 = vadd.f32 %v2364, %v2464
      %v2537 = vadd.f32 %v2367, %v2467
      %v2538 = vadd.f32 %v2369, %v2469
      %v2539 = vadd.f32 %v2372, %v2472
      %v2540 = vadd.f32 %v2374, %v2474
      %v2541 = vadd.f32 %v2377, %v2477
      %v2542 = vadd.f32 %v2379, %v2479
      %v2543 = vadd.f32 %v2382, %v2482
      %v2544 = vadd.f32 %v2384, %v2484
      %v2545 = vadd.f32 %v2387, %v2487
      %v2546 = vadd.f32 %v2389, %v2489
      %v2547 = vadd.f32 %v2392, %v2492
      %v2548 = vadd.f32 %v2394, %v2494
      %v2549 = vadd.f32 %v2397, %v2497
      %v2550 = vadd.f32 %v2399, %v2499
      %v2551 = vadd.f32 %v2402, %v2502
      %v2552 = vadd.f32 %v2404, %v2504
      %v2553 = vadd.f32 %v2407, %v2507
      %v2554 = vadd.f32 %v2409, %v2509
      %v2555 = vadd.f32 %v2412, %v2512
      %v2556 = vadd.f32 %v2414, %v2514
      %v2557 = vadd.f32 %v2417, %v2517
      %v2558 = vadd.f32 %v2419, %v2519
      %v2559 = vadd.f32 %v2422, %v2522
      %v2560 = vadd.f32 %v2424, %v2524
      %v2561 = vadd.f32 %v2427, %v2527
      %v2562 = vadd.f32 %v2429, %v2529
      %v2564 = vshrl.u32 %v194, 16
      %v2566 = vrot.slane %v2564, 4
      %v2567 = vshll.u32 %v194, 16
      %v2569 = vrot.slane %v2567, 5
      %v2570 = vor.u32 %v2566, %v2569
      %v2571 = vrot.slane %v2570, 4
      %v2573 = vshll.u32 %v195, 16
      %v2575 = vrot.slane %v2573, 5
      %v2576 = vsel %vm215, %v2571, %v2575
      %v2577 = vshrl.u32 %v195, 16
      %v2579 = vrot.slane %v2577, 4
      %v2580 = vor.u32 %v2579, %v2575
      %v2581 = vrot.slane %v2580, 4
      %v2583 = vshll.u32 %v196, 16
      %v2585 = vrot.slane %v2583, 5
      %v2586 = vsel %vm215, %v2581, %v2585
      %v2587 = vunpack.c.l.b16 %v2576
      %v2588 = vunpack.c.l.b16 %v2586
      %v2589 = vpack.c.b16 %v2588, %v2587
      %v2591 = vsel %vm648, %v2589, 0
      %v2594 = vsel %vm697, %v208, 0
      %2596 = vmatpush.bf16.msra.mxu0 0
      %2597 = vmatpush.bf16.msra.mxu0 0
      %2598 = vmatpush.bf16.msra.mxu0 0
      %2599 = vmatpush.bf16.msra.mxu0 0
      %2600 = vmatpush.bf16.msra.mxu0 0
      %2601 = vmatpush.bf16.msra.mxu0 0
      %2602 = vmatpush.bf16.msra.mxu0 0
      %2603 = vmatpush.bf16.msra.mxu0 %v2594
      %2604 = vmatmul.bf16.gmra.mxu0 %v656
      %v2605 = vpop.f32.mrf.mxu0
      %v2606 = vadd.f32 0.0, %v2605
      %v2607 = vpop.f32.mrf.mxu0
      %v2608 = vadd.f32 0.0, %v2607
      %2609 = vmatmul.bf16.gmra.mxu0 %v659
      %v2610 = vpop.f32.mrf.mxu0
      %v2611 = vadd.f32 0.0, %v2610
      %v2612 = vpop.f32.mrf.mxu0
      %v2613 = vadd.f32 0.0, %v2612
      %2614 = vmatmul.bf16.gmra.mxu0 %v662
      %v2615 = vpop.f32.mrf.mxu0
      %v2616 = vadd.f32 0.0, %v2615
      %v2617 = vpop.f32.mrf.mxu0
      %v2618 = vadd.f32 0.0, %v2617
      %2619 = vmatmul.bf16.gmra.mxu0 %v665
      %v2620 = vpop.f32.mrf.mxu0
      %v2621 = vadd.f32 0.0, %v2620
      %v2622 = vpop.f32.mrf.mxu0
      %v2623 = vadd.f32 0.0, %v2622
      %2624 = vmatmul.bf16.gmra.mxu0 %v668
      %v2625 = vpop.f32.mrf.mxu0
      %v2626 = vadd.f32 0.0, %v2625
      %v2627 = vpop.f32.mrf.mxu0
      %v2628 = vadd.f32 0.0, %v2627
      %2629 = vmatmul.bf16.gmra.mxu0 %v671
      %v2630 = vpop.f32.mrf.mxu0
      %v2631 = vadd.f32 0.0, %v2630
      %v2632 = vpop.f32.mrf.mxu0
      %v2633 = vadd.f32 0.0, %v2632
      %2634 = vmatmul.bf16.gmra.mxu0 %v674
      %v2635 = vpop.f32.mrf.mxu0
      %v2636 = vadd.f32 0.0, %v2635
      %v2637 = vpop.f32.mrf.mxu0
      %v2638 = vadd.f32 0.0, %v2637
      %2639 = vmatmul.bf16.gmra.mxu0 %v677
      %v2640 = vpop.f32.mrf.mxu0
      %v2641 = vadd.f32 0.0, %v2640
      %v2642 = vpop.f32.mrf.mxu0
      %v2643 = vadd.f32 0.0, %v2642
      %2644 = vmatmul.bf16.gmra.mxu0 %v680
      %v2645 = vpop.f32.mrf.mxu0
      %v2646 = vadd.f32 0.0, %v2645
      %v2647 = vpop.f32.mrf.mxu0
      %v2648 = vadd.f32 0.0, %v2647
      %2649 = vmatmul.bf16.gmra.mxu0 %v683
      %v2650 = vpop.f32.mrf.mxu0
      %v2651 = vadd.f32 0.0, %v2650
      %v2652 = vpop.f32.mrf.mxu0
      %v2653 = vadd.f32 0.0, %v2652
      %2654 = vmatmul.bf16.gmra.mxu0 %v686
      %v2655 = vpop.f32.mrf.mxu0
      %v2656 = vadd.f32 0.0, %v2655
      %v2657 = vpop.f32.mrf.mxu0
      %v2658 = vadd.f32 0.0, %v2657
      %2659 = vmatmul.bf16.gmra.mxu0 %v689
      %v2660 = vpop.f32.mrf.mxu0
      %v2661 = vadd.f32 0.0, %v2660
      %v2662 = vpop.f32.mrf.mxu0
      %v2663 = vadd.f32 0.0, %v2662
      %2664 = vmatmul.bf16.gmra.mxu0 %v692
      %v2665 = vpop.f32.mrf.mxu0
      %v2666 = vadd.f32 0.0, %v2665
      %v2667 = vpop.f32.mrf.mxu0
      %v2668 = vadd.f32 0.0, %v2667
      %2669 = vmatmul.bf16.gmra.mxu0 %v695
      %v2670 = vpop.f32.mrf.mxu0
      %v2671 = vadd.f32 0.0, %v2670
      %v2672 = vpop.f32.mrf.mxu0
      %v2673 = vadd.f32 0.0, %v2672
      %2674 = vmatmul.bf16.gmra.mxu0 %v1170
      %v2675 = vpop.f32.mrf.mxu0
      %v2676 = vadd.f32 0.0, %v2675
      %v2677 = vpop.f32.mrf.mxu0
      %v2678 = vadd.f32 0.0, %v2677
      %2679 = vmatmul.bf16.gmra.mxu0 %v2591
      %v2680 = vpop.f32.mrf.mxu0
      %v2681 = vadd.f32 0.0, %v2680
      %v2682 = vpop.f32.mrf.mxu0
      %v2683 = vadd.f32 0.0, %v2682
      %2684 = vdwg.mxu0
      %v2685 = vadd.f32 %v2531, %v2606
      %v2686 = vadd.f32 %v2532, %v2608
      %v2687 = vadd.f32 %v2533, %v2611
      %v2688 = vadd.f32 %v2534, %v2613
      %v2689 = vadd.f32 %v2535, %v2616
      %v2690 = vadd.f32 %v2536, %v2618
      %v2691 = vadd.f32 %v2537, %v2621
      %v2692 = vadd.f32 %v2538, %v2623
      %v2693 = vadd.f32 %v2539, %v2626
      %v2694 = vadd.f32 %v2540, %v2628
      %v2695 = vadd.f32 %v2541, %v2631
      %v2696 = vadd.f32 %v2542, %v2633
      %v2697 = vadd.f32 %v2543, %v2636
      %v2698 = vadd.f32 %v2544, %v2638
      %v2699 = vadd.f32 %v2545, %v2641
      %v2700 = vadd.f32 %v2546, %v2643
      %v2701 = vadd.f32 %v2547, %v2646
      %v2702 = vadd.f32 %v2548, %v2648
      %v2703 = vadd.f32 %v2549, %v2651
      %v2704 = vadd.f32 %v2550, %v2653
      %v2705 = vadd.f32 %v2551, %v2656
      %v2706 = vadd.f32 %v2552, %v2658
      %v2707 = vadd.f32 %v2553, %v2661
      %v2708 = vadd.f32 %v2554, %v2663
      %v2709 = vadd.f32 %v2555, %v2666
      %v2710 = vadd.f32 %v2556, %v2668
      %v2711 = vadd.f32 %v2557, %v2671
      %v2712 = vadd.f32 %v2558, %v2673
      %v2713 = vadd.f32 %v2559, %v2676
      %v2714 = vadd.f32 %v2560, %v2678
      %v2715 = vadd.f32 %v2561, %v2681
      %v2716 = vadd.f32 %v2562, %v2683
      %v2717 = vadd.f32 %v2685, %v2686
      %v2718 = vadd.f32 %v2717, %v2687
      %v2719 = vadd.f32 %v2718, %v2688
      %v2720 = vadd.f32 %v2719, %v2689
      %v2721 = vadd.f32 %v2720, %v2690
      %v2722 = vadd.f32 %v2721, %v2691
      %v2723 = vadd.f32 %v2722, %v2692
      %v2724 = vadd.f32 %v2723, %v2693
      %v2725 = vadd.f32 %v2724, %v2694
      %v2726 = vadd.f32 %v2725, %v2695
      %v2727 = vadd.f32 %v2726, %v2696
      %v2728 = vadd.f32 %v2727, %v2697
      %v2729 = vadd.f32 %v2728, %v2698
      %v2730 = vadd.f32 %v2729, %v2699
      %v2731 = vadd.f32 %v2730, %v2700
      %v2732 = vadd.f32 %v2731, %v2701
      %v2733 = vadd.f32 %v2732, %v2702
      %v2734 = vadd.f32 %v2733, %v2703
      %v2735 = vadd.f32 %v2734, %v2704
      %v2736 = vadd.f32 %v2735, %v2705
      %v2737 = vadd.f32 %v2736, %v2706
      %v2738 = vadd.f32 %v2737, %v2707
      %v2739 = vadd.f32 %v2738, %v2708
      %v2740 = vadd.f32 %v2739, %v2709
      %v2741 = vadd.f32 %v2740, %v2710
      %v2742 = vadd.f32 %v2741, %v2711
      %v2743 = vadd.f32 %v2742, %v2712
      %v2744 = vadd.f32 %v2743, %v2713
      %v2745 = vadd.f32 %v2744, %v2714
      %v2746 = vadd.f32 %v2745, %v2715
      %v2747 = vadd.f32 %v2746, %v2716
      %v2748 = vrot.slane %v2747, 4
      %v2749 = vadd.f32 %v2747, %v2748
      %v2750 = vrot.slane %v2749, 2
      %v2751 = vadd.f32 %v2749, %v2750
      %v2752 = vrot.slane %v2751, 1
      %v2753 = vadd.f32 %v2751, %v2752
      %v2754 = vmul.f32 %v2753, 0.00390625
      %v2755 = vsub.f32 %v2685, %v2754
      %v2756 = vsub.f32 %v2686, %v2754
      %v2757 = vsub.f32 %v2687, %v2754
      %v2758 = vsub.f32 %v2688, %v2754
      %v2759 = vsub.f32 %v2689, %v2754
      %v2760 = vsub.f32 %v2690, %v2754
      %v2761 = vsub.f32 %v2691, %v2754
      %v2762 = vsub.f32 %v2692, %v2754
      %v2763 = vsub.f32 %v2693, %v2754
      %v2764 = vsub.f32 %v2694, %v2754
      %v2765 = vsub.f32 %v2695, %v2754
      %v2766 = vsub.f32 %v2696, %v2754
      %v2767 = vsub.f32 %v2697, %v2754
      %v2768 = vsub.f32 %v2698, %v2754
      %v2769 = vsub.f32 %v2699, %v2754
      %v2770 = vsub.f32 %v2700, %v2754
      %v2771 = vsub.f32 %v2701, %v2754
      %v2772 = vsub.f32 %v2702, %v2754
      %v2773 = vsub.f32 %v2703, %v2754
      %v2774 = vsub.f32 %v2704, %v2754
      %v2775 = vsub.f32 %v2705, %v2754
      %v2776 = vsub.f32 %v2706, %v2754
      %v2777 = vsub.f32 %v2707, %v2754
      %v2778 = vsub.f32 %v2708, %v2754
      %v2779 = vsub.f32 %v2709, %v2754
      %v2780 = vsub.f32 %v2710, %v2754
      %v2781 = vsub.f32 %v2711, %v2754
      %v2782 = vsub.f32 %v2712, %v2754
      %v2783 = vsub.f32 %v2713, %v2754
      %v2784 = vsub.f32 %v2714, %v2754
      %v2785 = vsub.f32 %v2715, %v2754
      %v2786 = vsub.f32 %v2716, %v2754
      %v2787 = vmul.f32 %v2755, %v2755
      %v2788 = vmul.f32 %v2756, %v2756
      %v2789 = vmul.f32 %v2757, %v2757
      %v2790 = vmul.f32 %v2758, %v2758
      %v2791 = vmul.f32 %v2759, %v2759
      %v2792 = vmul.f32 %v2760, %v2760
      %v2793 = vmul.f32 %v2761, %v2761
      %v2794 = vmul.f32 %v2762, %v2762
      %v2795 = vmul.f32 %v2763, %v2763
      %v2796 = vmul.f32 %v2764, %v2764
      %v2797 = vmul.f32 %v2765, %v2765
      %v2798 = vmul.f32 %v2766, %v2766
      %v2799 = vmul.f32 %v2767, %v2767
      %v2800 = vmul.f32 %v2768, %v2768
      %v2801 = vmul.f32 %v2769, %v2769
      %v2802 = vmul.f32 %v2770, %v2770
      %v2803 = vmul.f32 %v2771, %v2771
      %v2804 = vmul.f32 %v2772, %v2772
      %v2805 = vmul.f32 %v2773, %v2773
      %v2806 = vmul.f32 %v2774, %v2774
      %v2807 = vmul.f32 %v2775, %v2775
      %v2808 = vmul.f32 %v2776, %v2776
      %v2809 = vmul.f32 %v2777, %v2777
      %v2810 = vmul.f32 %v2778, %v2778
      %v2811 = vmul.f32 %v2779, %v2779
      %v2812 = vmul.f32 %v2780, %v2780
      %v2813 = vmul.f32 %v2781, %v2781
      %v2814 = vmul.f32 %v2782, %v2782
      %v2815 = vmul.f32 %v2783, %v2783
      %v2816 = vmul.f32 %v2784, %v2784
      %v2817 = vmul.f32 %v2785, %v2785
      %v2818 = vmul.f32 %v2786, %v2786
      %v2819 = vadd.f32 %v2787, %v2788
      %v2820 = vadd.f32 %v2819, %v2789
      %v2821 = vadd.f32 %v2820, %v2790
      %v2822 = vadd.f32 %v2821, %v2791
      %v2823 = vadd.f32 %v2822, %v2792
      %v2824 = vadd.f32 %v2823, %v2793
      %v2825 = vadd.f32 %v2824, %v2794
      %v2826 = vadd.f32 %v2825, %v2795
      %v2827 = vadd.f32 %v2826, %v2796
      %v2828 = vadd.f32 %v2827, %v2797
      %v2829 = vadd.f32 %v2828, %v2798
      %v2830 = vadd.f32 %v2829, %v2799
      %v2831 = vadd.f32 %v2830, %v2800
      %v2832 = vadd.f32 %v2831, %v2801
      %v2833 = vadd.f32 %v2832, %v2802
      %v2834 = vadd.f32 %v2833, %v2803
      %v2835 = vadd.f32 %v2834, %v2804
      %v2836 = vadd.f32 %v2835, %v2805
      %v2837 = vadd.f32 %v2836, %v2806
      %v2838 = vadd.f32 %v2837, %v2807
      %v2839 = vadd.f32 %v2838, %v2808
      %v2840 = vadd.f32 %v2839, %v2809
      %v2841 = vadd.f32 %v2840, %v2810
      %v2842 = vadd.f32 %v2841, %v2811
      %v2843 = vadd.f32 %v2842, %v2812
      %v2844 = vadd.f32 %v2843, %v2813
      %v2845 = vadd.f32 %v2844, %v2814
      %v2846 = vadd.f32 %v2845, %v2815
      %v2847 = vadd.f32 %v2846, %v2816
      %v2848 = vadd.f32 %v2847, %v2817
      %v2849 = vadd.f32 %v2848, %v2818
      %v2850 = vrot.slane %v2849, 4
      %v2851 = vadd.f32 %v2849, %v2850
      %v2852 = vrot.slane %v2851, 2
      %v2853 = vadd.f32 %v2851, %v2852
      %v2854 = vrot.slane %v2853, 1
      %v2855 = vadd.f32 %v2853, %v2854
      %v2857 = vsel %vm697, %v210, 0
      %2859 = vmatpush.bf16.msra.mxu0 0
      %2860 = vmatpush.bf16.msra.mxu0 0
      %2861 = vmatpush.bf16.msra.mxu0 0
      %2862 = vmatpush.bf16.msra.mxu0 0
      %2863 = vmatpush.bf16.msra.mxu0 0
      %2864 = vmatpush.bf16.msra.mxu0 0
      %2865 = vmatpush.bf16.msra.mxu0 0
      %2866 = vmatpush.bf16.msra.mxu0 %v2857
      %2867 = vmatmul.bf16.gmra.mxu0 %v1618
      %v2868 = vpop.f32.mrf.mxu0
      %v2869 = vadd.f32 0.0, %v2868
      %v2870 = vpop.f32.mrf.mxu0
      %v2871 = vadd.f32 0.0, %v2870
      %2872 = vmatmul.bf16.gmra.mxu0 %v1621
      %v2873 = vpop.f32.mrf.mxu0
      %v2874 = vadd.f32 0.0, %v2873
      %v2875 = vpop.f32.mrf.mxu0
      %v2876 = vadd.f32 0.0, %v2875
      %2877 = vmatmul.bf16.gmra.mxu0 %v1624
      %v2878 = vpop.f32.mrf.mxu0
      %v2879 = vadd.f32 0.0, %v2878
      %v2880 = vpop.f32.mrf.mxu0
      %v2881 = vadd.f32 0.0, %v2880
      %2882 = vmatmul.bf16.gmra.mxu0 %v1627
      %v2883 = vpop.f32.mrf.mxu0
      %v2884 = vadd.f32 0.0, %v2883
      %v2885 = vpop.f32.mrf.mxu0
      %v2886 = vadd.f32 0.0, %v2885
      %2887 = vmatmul.bf16.gmra.mxu0 %v1630
      %v2888 = vpop.f32.mrf.mxu0
      %v2889 = vadd.f32 0.0, %v2888
      %v2890 = vpop.f32.mrf.mxu0
      %v2891 = vadd.f32 0.0, %v2890
      %2892 = vmatmul.bf16.gmra.mxu0 %v1633
      %v2893 = vpop.f32.mrf.mxu0
      %v2894 = vadd.f32 0.0, %v2893
      %v2895 = vpop.f32.mrf.mxu0
      %v2896 = vadd.f32 0.0, %v2895
      %2897 = vmatmul.bf16.gmra.mxu0 %v1636
      %v2898 = vpop.f32.mrf.mxu0
      %v2899 = vadd.f32 0.0, %v2898
      %v2900 = vpop.f32.mrf.mxu0
      %v2901 = vadd.f32 0.0, %v2900
      %2902 = vmatmul.bf16.gmra.mxu0 %v1639
      %v2903 = vpop.f32.mrf.mxu0
      %v2904 = vadd.f32 0.0, %v2903
      %v2905 = vpop.f32.mrf.mxu0
      %v2906 = vadd.f32 0.0, %v2905
      %2907 = vmatmul.bf16.gmra.mxu0 %v1642
      %v2908 = vpop.f32.mrf.mxu0
      %v2909 = vadd.f32 0.0, %v2908
      %v2910 = vpop.f32.mrf.mxu0
      %v2911 = vadd.f32 0.0, %v2910
      %2912 = vmatmul.bf16.gmra.mxu0 %v1645
      %v2913 = vpop.f32.mrf.mxu0
      %v2914 = vadd.f32 0.0, %v2913
      %v2915 = vpop.f32.mrf.mxu0
      %v2916 = vadd.f32 0.0, %v2915
      %2917 = vmatmul.bf16.gmra.mxu0 %v1648
      %v2918 = vpop.f32.mrf.mxu0
      %v2919 = vadd.f32 0.0, %v2918
      %v2920 = vpop.f32.mrf.mxu0
      %v2921 = vadd.f32 0.0, %v2920
      %2922 = vmatmul.bf16.gmra.mxu0 %v1651
      %v2923 = vpop.f32.mrf.mxu0
      %v2924 = vadd.f32 0.0, %v2923
      %v2925 = vpop.f32.mrf.mxu0
      %v2926 = vadd.f32 0.0, %v2925
      %2927 = vmatmul.bf16.gmra.mxu0 %v1654
      %v2928 = vpop.f32.mrf.mxu0
      %v2929 = vadd.f32 0.0, %v2928
      %v2930 = vpop.f32.mrf.mxu0
      %v2931 = vadd.f32 0.0, %v2930
      %2932 = vmatmul.bf16.gmra.mxu0 %v1657
      %v2933 = vpop.f32.mrf.mxu0
      %v2934 = vadd.f32 0.0, %v2933
      %v2935 = vpop.f32.mrf.mxu0
      %v2936 = vadd.f32 0.0, %v2935
      %2937 = vmatmul.bf16.gmra.mxu0 %v1660
      %v2938 = vpop.f32.mrf.mxu0
      %v2939 = vadd.f32 0.0, %v2938
      %v2940 = vpop.f32.mrf.mxu0
      %v2941 = vadd.f32 0.0, %v2940
      %2942 = vmatmul.bf16.gmra.mxu0 %v1982
      %v2943 = vpop.f32.mrf.mxu0
      %v2944 = vadd.f32 0.0, %v2943
      %v2945 = vpop.f32.mrf.mxu0
      %v2946 = vadd.f32 0.0, %v2945
      %2947 = vdwg.mxu0
      %v2949 = vsel %vm697, %v209, 0
      %2951 = vmatpush.bf16.msra.mxu0 0
      %2952 = vmatpush.bf16.msra.mxu0 0
      %2953 = vmatpush.bf16.msra.mxu0 0
      %2954 = vmatpush.bf16.msra.mxu0 0
      %2955 = vmatpush.bf16.msra.mxu0 0
      %2956 = vmatpush.bf16.msra.mxu0 0
      %2957 = vmatpush.bf16.msra.mxu0 0
      %2958 = vmatpush.bf16.msra.mxu0 %v2949
      %2959 = vmatmul.bf16.gmra.mxu0 %v653
      %v2960 = vpop.f32.mrf.mxu0
      %v2961 = vadd.f32 %v2869, %v2960
      %v2962 = vpop.f32.mrf.mxu0
      %v2963 = vadd.f32 %v2871, %v2962
      %2964 = vmatmul.bf16.gmra.mxu0 %v656
      %v2965 = vpop.f32.mrf.mxu0
      %v2966 = vadd.f32 %v2874, %v2965
      %v2967 = vpop.f32.mrf.mxu0
      %v2968 = vadd.f32 %v2876, %v2967
      %2969 = vmatmul.bf16.gmra.mxu0 %v659
      %v2970 = vpop.f32.mrf.mxu0
      %v2971 = vadd.f32 %v2879, %v2970
      %v2972 = vpop.f32.mrf.mxu0
      %v2973 = vadd.f32 %v2881, %v2972
      %2974 = vmatmul.bf16.gmra.mxu0 %v662
      %v2975 = vpop.f32.mrf.mxu0
      %v2976 = vadd.f32 %v2884, %v2975
      %v2977 = vpop.f32.mrf.mxu0
      %v2978 = vadd.f32 %v2886, %v2977
      %2979 = vmatmul.bf16.gmra.mxu0 %v665
      %v2980 = vpop.f32.mrf.mxu0
      %v2981 = vadd.f32 %v2889, %v2980
      %v2982 = vpop.f32.mrf.mxu0
      %v2983 = vadd.f32 %v2891, %v2982
      %2984 = vmatmul.bf16.gmra.mxu0 %v668
      %v2985 = vpop.f32.mrf.mxu0
      %v2986 = vadd.f32 %v2894, %v2985
      %v2987 = vpop.f32.mrf.mxu0
      %v2988 = vadd.f32 %v2896, %v2987
      %2989 = vmatmul.bf16.gmra.mxu0 %v671
      %v2990 = vpop.f32.mrf.mxu0
      %v2991 = vadd.f32 %v2899, %v2990
      %v2992 = vpop.f32.mrf.mxu0
      %v2993 = vadd.f32 %v2901, %v2992
      %2994 = vmatmul.bf16.gmra.mxu0 %v674
      %v2995 = vpop.f32.mrf.mxu0
      %v2996 = vadd.f32 %v2904, %v2995
      %v2997 = vpop.f32.mrf.mxu0
      %v2998 = vadd.f32 %v2906, %v2997
      %2999 = vmatmul.bf16.gmra.mxu0 %v677
      %v3000 = vpop.f32.mrf.mxu0
      %v3001 = vadd.f32 %v2909, %v3000
      %v3002 = vpop.f32.mrf.mxu0
      %v3003 = vadd.f32 %v2911, %v3002
      %3004 = vmatmul.bf16.gmra.mxu0 %v680
      %v3005 = vpop.f32.mrf.mxu0
      %v3006 = vadd.f32 %v2914, %v3005
      %v3007 = vpop.f32.mrf.mxu0
      %v3008 = vadd.f32 %v2916, %v3007
      %3009 = vmatmul.bf16.gmra.mxu0 %v683
      %v3010 = vpop.f32.mrf.mxu0
      %v3011 = vadd.f32 %v2919, %v3010
      %v3012 = vpop.f32.mrf.mxu0
      %v3013 = vadd.f32 %v2921, %v3012
      %3014 = vmatmul.bf16.gmra.mxu0 %v686
      %v3015 = vpop.f32.mrf.mxu0
      %v3016 = vadd.f32 %v2924, %v3015
      %v3017 = vpop.f32.mrf.mxu0
      %v3018 = vadd.f32 %v2926, %v3017
      %3019 = vmatmul.bf16.gmra.mxu0 %v689
      %v3020 = vpop.f32.mrf.mxu0
      %v3021 = vadd.f32 %v2929, %v3020
      %v3022 = vpop.f32.mrf.mxu0
      %v3023 = vadd.f32 %v2931, %v3022
      %3024 = vmatmul.bf16.gmra.mxu0 %v692
      %v3025 = vpop.f32.mrf.mxu0
      %v3026 = vadd.f32 %v2934, %v3025
      %v3027 = vpop.f32.mrf.mxu0
      %v3028 = vadd.f32 %v2936, %v3027
      %3029 = vmatmul.bf16.gmra.mxu0 %v695
      %v3030 = vpop.f32.mrf.mxu0
      %v3031 = vadd.f32 %v2939, %v3030
      %v3032 = vpop.f32.mrf.mxu0
      %v3033 = vadd.f32 %v2941, %v3032
      %3034 = vmatmul.bf16.gmra.mxu0 %v1170
      %v3035 = vpop.f32.mrf.mxu0
      %v3036 = vadd.f32 %v2944, %v3035
      %v3037 = vpop.f32.mrf.mxu0
      %v3038 = vadd.f32 %v2946, %v3037
      %3039 = vdwg.mxu0
      %v3041 = vsel %vm697, %v211, 0
      %3043 = vmatpush.bf16.msra.mxu0 0
      %3044 = vmatpush.bf16.msra.mxu0 0
      %3045 = vmatpush.bf16.msra.mxu0 0
      %3046 = vmatpush.bf16.msra.mxu0 0
      %3047 = vmatpush.bf16.msra.mxu0 0
      %3048 = vmatpush.bf16.msra.mxu0 0
      %3049 = vmatpush.bf16.msra.mxu0 0
      %3050 = vmatpush.bf16.msra.mxu0 %v3041
      %3051 = vmatmul.bf16.gmra.mxu0 %v656
      %v3052 = vpop.f32.mrf.mxu0
      %v3053 = vadd.f32 0.0, %v3052
      %v3054 = vpop.f32.mrf.mxu0
      %v3055 = vadd.f32 0.0, %v3054
      %3056 = vmatmul.bf16.gmra.mxu0 %v659
      %v3057 = vpop.f32.mrf.mxu0
      %v3058 = vadd.f32 0.0, %v3057
      %v3059 = vpop.f32.mrf.mxu0
      %v3060 = vadd.f32 0.0, %v3059
      %3061 = vmatmul.bf16.gmra.mxu0 %v662
      %v3062 = vpop.f32.mrf.mxu0
      %v3063 = vadd.f32 0.0, %v3062
      %v3064 = vpop.f32.mrf.mxu0
      %v3065 = vadd.f32 0.0, %v3064
      %3066 = vmatmul.bf16.gmra.mxu0 %v665
      %v3067 = vpop.f32.mrf.mxu0
      %v3068 = vadd.f32 0.0, %v3067
      %v3069 = vpop.f32.mrf.mxu0
      %v3070 = vadd.f32 0.0, %v3069
      %3071 = vmatmul.bf16.gmra.mxu0 %v668
      %v3072 = vpop.f32.mrf.mxu0
      %v3073 = vadd.f32 0.0, %v3072
      %v3074 = vpop.f32.mrf.mxu0
      %v3075 = vadd.f32 0.0, %v3074
      %3076 = vmatmul.bf16.gmra.mxu0 %v671
      %v3077 = vpop.f32.mrf.mxu0
      %v3078 = vadd.f32 0.0, %v3077
      %v3079 = vpop.f32.mrf.mxu0
      %v3080 = vadd.f32 0.0, %v3079
      %3081 = vmatmul.bf16.gmra.mxu0 %v674
      %v3082 = vpop.f32.mrf.mxu0
      %v3083 = vadd.f32 0.0, %v3082
      %v3084 = vpop.f32.mrf.mxu0
      %v3085 = vadd.f32 0.0, %v3084
      %3086 = vmatmul.bf16.gmra.mxu0 %v677
      %v3087 = vpop.f32.mrf.mxu0
      %v3088 = vadd.f32 0.0, %v3087
      %v3089 = vpop.f32.mrf.mxu0
      %v3090 = vadd.f32 0.0, %v3089
      %3091 = vmatmul.bf16.gmra.mxu0 %v680
      %v3092 = vpop.f32.mrf.mxu0
      %v3093 = vadd.f32 0.0, %v3092
      %v3094 = vpop.f32.mrf.mxu0
      %v3095 = vadd.f32 0.0, %v3094
      %3096 = vmatmul.bf16.gmra.mxu0 %v683
      %v3097 = vpop.f32.mrf.mxu0
      %v3098 = vadd.f32 0.0, %v3097
      %v3099 = vpop.f32.mrf.mxu0
      %v3100 = vadd.f32 0.0, %v3099
      %3101 = vmatmul.bf16.gmra.mxu0 %v686
      %v3102 = vpop.f32.mrf.mxu0
      %v3103 = vadd.f32 0.0, %v3102
      %v3104 = vpop.f32.mrf.mxu0
      %v3105 = vadd.f32 0.0, %v3104
      %3106 = vmatmul.bf16.gmra.mxu0 %v689
      %v3107 = vpop.f32.mrf.mxu0
      %v3108 = vadd.f32 0.0, %v3107
      %v3109 = vpop.f32.mrf.mxu0
      %v3110 = vadd.f32 0.0, %v3109
      %3111 = vmatmul.bf16.gmra.mxu0 %v692
      %v3112 = vpop.f32.mrf.mxu0
      %v3113 = vadd.f32 0.0, %v3112
      %v3114 = vpop.f32.mrf.mxu0
      %v3115 = vadd.f32 0.0, %v3114
      %3116 = vmatmul.bf16.gmra.mxu0 %v695
      %v3117 = vpop.f32.mrf.mxu0
      %v3118 = vadd.f32 0.0, %v3117
      %v3119 = vpop.f32.mrf.mxu0
      %v3120 = vadd.f32 0.0, %v3119
      %3121 = vmatmul.bf16.gmra.mxu0 %v1170
      %v3122 = vpop.f32.mrf.mxu0
      %v3123 = vadd.f32 0.0, %v3122
      %v3124 = vpop.f32.mrf.mxu0
      %v3125 = vadd.f32 0.0, %v3124
      %3126 = vmatmul.bf16.gmra.mxu0 %v2591
      %v3127 = vpop.f32.mrf.mxu0
      %v3128 = vadd.f32 0.0, %v3127
      %v3129 = vpop.f32.mrf.mxu0
      %v3130 = vadd.f32 0.0, %v3129
      %3131 = vdwg.mxu0
      %v3132 = vadd.f32 %v2961, %v3053
      %v3133 = vadd.f32 %v2963, %v3055
      %v3134 = vadd.f32 %v2966, %v3058
      %v3135 = vadd.f32 %v2968, %v3060
      %v3136 = vadd.f32 %v2971, %v3063
      %v3137 = vadd.f32 %v2973, %v3065
      %v3138 = vadd.f32 %v2976, %v3068
      %v3139 = vadd.f32 %v2978, %v3070
      %v3140 = vadd.f32 %v2981, %v3073
      %v3141 = vadd.f32 %v2983, %v3075
      %v3142 = vadd.f32 %v2986, %v3078
      %v3143 = vadd.f32 %v2988, %v3080
      %v3144 = vadd.f32 %v2991, %v3083
      %v3145 = vadd.f32 %v2993, %v3085
      %v3146 = vadd.f32 %v2996, %v3088
      %v3147 = vadd.f32 %v2998, %v3090
      %v3148 = vadd.f32 %v3001, %v3093
      %v3149 = vadd.f32 %v3003, %v3095
      %v3150 = vadd.f32 %v3006, %v3098
      %v3151 = vadd.f32 %v3008, %v3100
      %v3152 = vadd.f32 %v3011, %v3103
      %v3153 = vadd.f32 %v3013, %v3105
      %v3154 = vadd.f32 %v3016, %v3108
      %v3155 = vadd.f32 %v3018, %v3110
      %v3156 = vadd.f32 %v3021, %v3113
      %v3157 = vadd.f32 %v3023, %v3115
      %v3158 = vadd.f32 %v3026, %v3118
      %v3159 = vadd.f32 %v3028, %v3120
      %v3160 = vadd.f32 %v3031, %v3123
      %v3161 = vadd.f32 %v3033, %v3125
      %v3162 = vadd.f32 %v3036, %v3128
      %v3163 = vadd.f32 %v3038, %v3130
      %v3165 = vrot.slane %v194, 5
      %v3166 = vrot.slane %v3165, 4
      %v3167 = vrot.slane %v195, 5
      %v3168 = vsel %vm1453, %v3166, %v3167
      %v3169 = vrot.slane %v3167, 4
      %v3170 = vrot.slane %v196, 5
      %v3171 = vsel %vm1453, %v3169, %v3170
      %v3172 = vunpack.c.l.b16 %v3168
      %v3173 = vunpack.c.l.b16 %v3171
      %v3174 = vpack.c.b16 %v3173, %v3172
      %v3176 = vsel %vm648, %v3174, 0
      %v3179 = vsel %vm697, %v212, 0
      %3181 = vmatpush.bf16.msra.mxu0 0
      %3182 = vmatpush.bf16.msra.mxu0 0
      %3183 = vmatpush.bf16.msra.mxu0 0
      %3184 = vmatpush.bf16.msra.mxu0 0
      %3185 = vmatpush.bf16.msra.mxu0 0
      %3186 = vmatpush.bf16.msra.mxu0 0
      %3187 = vmatpush.bf16.msra.mxu0 0
      %3188 = vmatpush.bf16.msra.mxu0 %v3179
      %3189 = vmatmul.bf16.gmra.mxu0 %v1621
      %v3190 = vpop.f32.mrf.mxu0
      %v3191 = vadd.f32 0.0, %v3190
      %v3192 = vpop.f32.mrf.mxu0
      %v3193 = vadd.f32 0.0, %v3192
      %3194 = vmatmul.bf16.gmra.mxu0 %v1624
      %v3195 = vpop.f32.mrf.mxu0
      %v3196 = vadd.f32 0.0, %v3195
      %v3197 = vpop.f32.mrf.mxu0
      %v3198 = vadd.f32 0.0, %v3197
      %3199 = vmatmul.bf16.gmra.mxu0 %v1627
      %v3200 = vpop.f32.mrf.mxu0
      %v3201 = vadd.f32 0.0, %v3200
      %v3202 = vpop.f32.mrf.mxu0
      %v3203 = vadd.f32 0.0, %v3202
      %3204 = vmatmul.bf16.gmra.mxu0 %v1630
      %v3205 = vpop.f32.mrf.mxu0
      %v3206 = vadd.f32 0.0, %v3205
      %v3207 = vpop.f32.mrf.mxu0
      %v3208 = vadd.f32 0.0, %v3207
      %3209 = vmatmul.bf16.gmra.mxu0 %v1633
      %v3210 = vpop.f32.mrf.mxu0
      %v3211 = vadd.f32 0.0, %v3210
      %v3212 = vpop.f32.mrf.mxu0
      %v3213 = vadd.f32 0.0, %v3212
      %3214 = vmatmul.bf16.gmra.mxu0 %v1636
      %v3215 = vpop.f32.mrf.mxu0
      %v3216 = vadd.f32 0.0, %v3215
      %v3217 = vpop.f32.mrf.mxu0
      %v3218 = vadd.f32 0.0, %v3217
      %3219 = vmatmul.bf16.gmra.mxu0 %v1639
      %v3220 = vpop.f32.mrf.mxu0
      %v3221 = vadd.f32 0.0, %v3220
      %v3222 = vpop.f32.mrf.mxu0
      %v3223 = vadd.f32 0.0, %v3222
      %3224 = vmatmul.bf16.gmra.mxu0 %v1642
      %v3225 = vpop.f32.mrf.mxu0
      %v3226 = vadd.f32 0.0, %v3225
      %v3227 = vpop.f32.mrf.mxu0
      %v3228 = vadd.f32 0.0, %v3227
      %3229 = vmatmul.bf16.gmra.mxu0 %v1645
      %v3230 = vpop.f32.mrf.mxu0
      %v3231 = vadd.f32 0.0, %v3230
      %v3232 = vpop.f32.mrf.mxu0
      %v3233 = vadd.f32 0.0, %v3232
      %3234 = vmatmul.bf16.gmra.mxu0 %v1648
      %v3235 = vpop.f32.mrf.mxu0
      %v3236 = vadd.f32 0.0, %v3235
      %v3237 = vpop.f32.mrf.mxu0
      %v3238 = vadd.f32 0.0, %v3237
      %3239 = vmatmul.bf16.gmra.mxu0 %v1651
      %v3240 = vpop.f32.mrf.mxu0
      %v3241 = vadd.f32 0.0, %v3240
      %v3242 = vpop.f32.mrf.mxu0
      %v3243 = vadd.f32 0.0, %v3242
      %3244 = vmatmul.bf16.gmra.mxu0 %v1654
      %v3245 = vpop.f32.mrf.mxu0
      %v3246 = vadd.f32 0.0, %v3245
      %v3247 = vpop.f32.mrf.mxu0
      %v3248 = vadd.f32 0.0, %v3247
      %3249 = vmatmul.bf16.gmra.mxu0 %v1657
      %v3250 = vpop.f32.mrf.mxu0
      %v3251 = vadd.f32 0.0, %v3250
      %v3252 = vpop.f32.mrf.mxu0
      %v3253 = vadd.f32 0.0, %v3252
      %3254 = vmatmul.bf16.gmra.mxu0 %v1660
      %v3255 = vpop.f32.mrf.mxu0
      %v3256 = vadd.f32 0.0, %v3255
      %v3257 = vpop.f32.mrf.mxu0
      %v3258 = vadd.f32 0.0, %v3257
      %3259 = vmatmul.bf16.gmra.mxu0 %v1982
      %v3260 = vpop.f32.mrf.mxu0
      %v3261 = vadd.f32 0.0, %v3260
      %v3262 = vpop.f32.mrf.mxu0
      %v3263 = vadd.f32 0.0, %v3262
      %3264 = vmatmul.bf16.gmra.mxu0 %v3176
      %v3265 = vpop.f32.mrf.mxu0
      %v3266 = vadd.f32 0.0, %v3265
      %v3267 = vpop.f32.mrf.mxu0
      %v3268 = vadd.f32 0.0, %v3267
      %3269 = vdwg.mxu0
      %v3270 = vadd.f32 %v3132, %v3191
      %v3271 = vadd.f32 %v3133, %v3193
      %v3272 = vadd.f32 %v3134, %v3196
      %v3273 = vadd.f32 %v3135, %v3198
      %v3274 = vadd.f32 %v3136, %v3201
      %v3275 = vadd.f32 %v3137, %v3203
      %v3276 = vadd.f32 %v3138, %v3206
      %v3277 = vadd.f32 %v3139, %v3208
      %v3278 = vadd.f32 %v3140, %v3211
      %v3279 = vadd.f32 %v3141, %v3213
      %v3280 = vadd.f32 %v3142, %v3216
      %v3281 = vadd.f32 %v3143, %v3218
      %v3282 = vadd.f32 %v3144, %v3221
      %v3283 = vadd.f32 %v3145, %v3223
      %v3284 = vadd.f32 %v3146, %v3226
      %v3285 = vadd.f32 %v3147, %v3228
      %v3286 = vadd.f32 %v3148, %v3231
      %v3287 = vadd.f32 %v3149, %v3233
      %v3288 = vadd.f32 %v3150, %v3236
      %v3289 = vadd.f32 %v3151, %v3238
      %v3290 = vadd.f32 %v3152, %v3241
      %v3291 = vadd.f32 %v3153, %v3243
      %v3292 = vadd.f32 %v3154, %v3246
      %v3293 = vadd.f32 %v3155, %v3248
      %v3294 = vadd.f32 %v3156, %v3251
      %v3295 = vadd.f32 %v3157, %v3253
      %v3296 = vadd.f32 %v3158, %v3256
      %v3297 = vadd.f32 %v3159, %v3258
      %v3298 = vadd.f32 %v3160, %v3261
      %v3299 = vadd.f32 %v3161, %v3263
      %v3300 = vadd.f32 %v3162, %v3266
      %v3301 = vadd.f32 %v3163, %v3268
      %v3302 = vadd.f32 %v3270, %v3271
      %v3303 = vadd.f32 %v3302, %v3272
      %v3304 = vadd.f32 %v3303, %v3273
      %v3305 = vadd.f32 %v3304, %v3274
      %v3306 = vadd.f32 %v3305, %v3275
      %v3307 = vadd.f32 %v3306, %v3276
      %v3308 = vadd.f32 %v3307, %v3277
      %v3309 = vadd.f32 %v3308, %v3278
      %v3310 = vadd.f32 %v3309, %v3279
      %v3311 = vadd.f32 %v3310, %v3280
      %v3312 = vadd.f32 %v3311, %v3281
      %v3313 = vadd.f32 %v3312, %v3282
      %v3314 = vadd.f32 %v3313, %v3283
      %v3315 = vadd.f32 %v3314, %v3284
      %v3316 = vadd.f32 %v3315, %v3285
      %v3317 = vadd.f32 %v3316, %v3286
      %v3318 = vadd.f32 %v3317, %v3287
      %v3319 = vadd.f32 %v3318, %v3288
      %v3320 = vadd.f32 %v3319, %v3289
      %v3321 = vadd.f32 %v3320, %v3290
      %v3322 = vadd.f32 %v3321, %v3291
      %v3323 = vadd.f32 %v3322, %v3292
      %v3324 = vadd.f32 %v3323, %v3293
      %v3325 = vadd.f32 %v3324, %v3294
      %v3326 = vadd.f32 %v3325, %v3295
      %v3327 = vadd.f32 %v3326, %v3296
      %v3328 = vadd.f32 %v3327, %v3297
      %v3329 = vadd.f32 %v3328, %v3298
      %v3330 = vadd.f32 %v3329, %v3299
      %v3331 = vadd.f32 %v3330, %v3300
      %v3332 = vadd.f32 %v3331, %v3301
      %v3333 = vrot.slane %v3332, 4
      %v3334 = vadd.f32 %v3332, %v3333
      %v3335 = vrot.slane %v3334, 2
      %v3336 = vadd.f32 %v3334, %v3335
      %v3337 = vrot.slane %v3336, 1
      %v3338 = vadd.f32 %v3336, %v3337
      %v3339 = vmul.f32 %v3338, 0.00390625
      %v3340 = vsub.f32 %v3270, %v3339
      %v3341 = vsub.f32 %v3271, %v3339
      %v3342 = vsub.f32 %v3272, %v3339
      %v3343 = vsub.f32 %v3273, %v3339
      %v3344 = vsub.f32 %v3274, %v3339
      %v3345 = vsub.f32 %v3275, %v3339
      %v3346 = vsub.f32 %v3276, %v3339
      %v3347 = vsub.f32 %v3277, %v3339
      %v3348 = vsub.f32 %v3278, %v3339
      %v3349 = vsub.f32 %v3279, %v3339
      %v3350 = vsub.f32 %v3280, %v3339
      %v3351 = vsub.f32 %v3281, %v3339
      %v3352 = vsub.f32 %v3282, %v3339
      %v3353 = vsub.f32 %v3283, %v3339
      %v3354 = vsub.f32 %v3284, %v3339
      %v3355 = vsub.f32 %v3285, %v3339
      %v3356 = vsub.f32 %v3286, %v3339
      %v3357 = vsub.f32 %v3287, %v3339
      %v3358 = vsub.f32 %v3288, %v3339
      %v3359 = vsub.f32 %v3289, %v3339
      %v3360 = vsub.f32 %v3290, %v3339
      %v3361 = vsub.f32 %v3291, %v3339
      %v3362 = vsub.f32 %v3292, %v3339
      %v3363 = vsub.f32 %v3293, %v3339
      %v3364 = vsub.f32 %v3294, %v3339
      %v3365 = vsub.f32 %v3295, %v3339
      %v3366 = vsub.f32 %v3296, %v3339
      %v3367 = vsub.f32 %v3297, %v3339
      %v3368 = vsub.f32 %v3298, %v3339
      %v3369 = vsub.f32 %v3299, %v3339
      %v3370 = vsub.f32 %v3300, %v3339
      %v3371 = vsub.f32 %v3301, %v3339
      %v3372 = vmul.f32 %v3340, %v3340
      %v3373 = vmul.f32 %v3341, %v3341
      %v3374 = vmul.f32 %v3342, %v3342
      %v3375 = vmul.f32 %v3343, %v3343
      %v3376 = vmul.f32 %v3344, %v3344
      %v3377 = vmul.f32 %v3345, %v3345
      %v3378 = vmul.f32 %v3346, %v3346
      %v3379 = vmul.f32 %v3347, %v3347
      %v3380 = vmul.f32 %v3348, %v3348
      %v3381 = vmul.f32 %v3349, %v3349
      %v3382 = vmul.f32 %v3350, %v3350
      %v3383 = vmul.f32 %v3351, %v3351
      %v3384 = vmul.f32 %v3352, %v3352
      %v3385 = vmul.f32 %v3353, %v3353
      %v3386 = vmul.f32 %v3354, %v3354
      %v3387 = vmul.f32 %v3355, %v3355
      %v3388 = vmul.f32 %v3356, %v3356
      %v3389 = vmul.f32 %v3357, %v3357
      %v3390 = vmul.f32 %v3358, %v3358
      %v3391 = vmul.f32 %v3359, %v3359
      %v3392 = vmul.f32 %v3360, %v3360
      %v3393 = vmul.f32 %v3361, %v3361
      %v3394 = vmul.f32 %v3362, %v3362
      %v3395 = vmul.f32 %v3363, %v3363
      %v3396 = vmul.f32 %v3364, %v3364
      %v3397 = vmul.f32 %v3365, %v3365
      %v3398 = vmul.f32 %v3366, %v3366
      %v3399 = vmul.f32 %v3367, %v3367
      %v3400 = vmul.f32 %v3368, %v3368
      %v3401 = vmul.f32 %v3369, %v3369
      %v3402 = vmul.f32 %v3370, %v3370
      %v3403 = vmul.f32 %v3371, %v3371
      %v3404 = vadd.f32 %v3372, %v3373
      %v3405 = vadd.f32 %v3404, %v3374
      %v3406 = vadd.f32 %v3405, %v3375
      %v3407 = vadd.f32 %v3406, %v3376
      %v3408 = vadd.f32 %v3407, %v3377
      %v3409 = vadd.f32 %v3408, %v3378
      %v3410 = vadd.f32 %v3409, %v3379
      %v3411 = vadd.f32 %v3410, %v3380
      %v3412 = vadd.f32 %v3411, %v3381
      %v3413 = vadd.f32 %v3412, %v3382
      %v3414 = vadd.f32 %v3413, %v3383
      %v3415 = vadd.f32 %v3414, %v3384
      %v3416 = vadd.f32 %v3415, %v3385
      %v3417 = vadd.f32 %v3416, %v3386
      %v3418 = vadd.f32 %v3417, %v3387
      %v3419 = vadd.f32 %v3418, %v3388
      %v3420 = vadd.f32 %v3419, %v3389
      %v3421 = vadd.f32 %v3420, %v3390
      %v3422 = vadd.f32 %v3421, %v3391
      %v3423 = vadd.f32 %v3422, %v3392
      %v3424 = vadd.f32 %v3423, %v3393
      %v3425 = vadd.f32 %v3424, %v3394
      %v3426 = vadd.f32 %v3425, %v3395
      %v3427 = vadd.f32 %v3426, %v3396
      %v3428 = vadd.f32 %v3427, %v3397
      %v3429 = vadd.f32 %v3428, %v3398
      %v3430 = vadd.f32 %v3429, %v3399
      %v3431 = vadd.f32 %v3430, %v3400
      %v3432 = vadd.f32 %v3431, %v3401
      %v3433 = vadd.f32 %v3432, %v3402
      %v3434 = vadd.f32 %v3433, %v3403
      %v3435 = vrot.slane %v3434, 4
      %v3436 = vadd.f32 %v3434, %v3435
      %v3437 = vrot.slane %v3436, 2
      %v3438 = vadd.f32 %v3436, %v3437
      %v3439 = vrot.slane %v3438, 1
      %v3440 = vadd.f32 %v3438, %v3439
      %v3441 = vadd.f32 %v1332, %v2144
      %v3442 = vadd.f32 %v3441, %v2753
      %v3443 = vadd.f32 %v3442, %v3338
      %v3444 = vmul.f32 %v3443, 0.0009765625
      %v3445 = vadd.f32 %v1434, %v2246
      %v3446 = vadd.f32 %v3445, %v2855
      %v3447 = vadd.f32 %v3446, %v3440
      %v3448 = vsub.f32 %v1333, %v3444
      %v3449 = vmul.f32 %v3448, 256.0
      %v3450 = vmul.f32 %v3449, %v3448
      %v3451 = vadd.f32 %v3447, %v3450
      %v3452 = vsub.f32 %v2145, %v3444
      %v3453 = vmul.f32 %v3452, 256.0
      %v3454 = vmul.f32 %v3453, %v3452
      %v3455 = vadd.f32 %v3451, %v3454
      %v3456 = vsub.f32 %v2754, %v3444
      %v3457 = vmul.f32 %v3456, 256.0
      %v3458 = vmul.f32 %v3457, %v3456
      %v3459 = vadd.f32 %v3455, %v3458
      %v3460 = vsub.f32 %v3339, %v3444
      %v3461 = vmul.f32 %v3460, 256.0
      %v3462 = vmul.f32 %v3461, %v3460
      %v3463 = vadd.f32 %v3459, %v3462
      %vm3464 = vcmask 1040384
      %v3465 = vsel %vm3464, %v3443, %v3463
      %3466 = vst [vmem:[%s141] sm:$0x3] %v3465
      %p3467 = scmp.lt.s32.totalorder %s13, 1
      %s3468 = scalar_select %p3467, %s13, 1
      %s3469 = smul.addr %s3468, 2
      %s3470 = scalar_lea.vmem %s2, %s3469
      // Predicated region
      $region29: #{conv_t_batch_forward.2} parent=27 // pred_check
        %p3471 = pneg %p78
      $region30: #{conv_t_batch_forward.2} parent=27 // pred_check_branch
        %3473 = sbr.rel (%p3471) target = $region32
      $region31: #{conv_t_batch_forward.2} parent=27 // pred_region
        _
      $region32: #{conv_t_batch_forward.2} parent=27 // pred_fallthru
        _
    $region28: #{conv_t_batch_forward.2} parent=5 // pred_fallthru
      _
    %p3474 = scmp.le.s32.totalorder 2, %s8
    // Predicated region
    $region33: #{conv_t_batch_forward.2} parent=5 // pred_check
      %p3475 = pneg %p3474
    $region34: #{conv_t_batch_forward.2} parent=5 // pred_check_branch
      %3477 = sbr.rel (%p3475) target = $region36
    $region35: #{conv_t_batch_forward.2} parent=5 // pred_region
      %s3478 = ssub.s32 %s8, 2
      // Predicated region
      $region37: #{conv_t_batch_forward.2} parent=35 // pred_check
        %p3479 = pneg %p84
      $region38: #{conv_t_batch_forward.2} parent=35 // pred_check_branch
        %3481 = sbr.rel (%p3479) target = $region40
      $region39: #{conv_t_batch_forward.2} parent=35 // pred_region
        %p3482 = scmp.lt.s32.totalorder %s14, 1
        %s3483 = scalar_select %p3482, %s14, 1
        %s3484 = smul.addr %s3483, 2
        %s3485 = scalar_lea.vmem %s2, %s3484
      $region40: #{conv_t_batch_forward.2} parent=35 // pred_fallthru
        _
    $region36: #{conv_t_batch_forward.2} parent=5 // pred_fallthru
      _
  $region6: #{conv_t_batch_forward.2} parent=0 // loop_footer
    %s12 = sadd.s32 1, %s8
  $region7: #{conv_t_batch_forward.2} parent=0 // loop_footer_branch
    %7 = sbr.rel target = $region3
  $region8: #{conv_t_batch_forward.2} parent=0 // loop_exit
    _

// kernel: conv_t_batch_forward.3
$region0: #{conv_t_batch_forward.3}
  #allocation0 [shape = 'u32[]', space=smem, size = 0x4, offset = 0x4, fixed_abs, tag = 'smem constant byte address 0x4 - core index']
  #allocation1 [shape = 'u32[72,128]{1,0:T(1,128)}', space=vmem, size = 0x9000, scoped, tag = 'internal scratch']
  %s0 = inlined_call_operand.vmem [shape: bf16[2,18,18,4], index: 0, kind: input, shape index: {}]
  %s1 = inlined_call_operand.vmem [shape: bf16[4,4,4,128], index: 1, kind: input, shape index: {}]
  %s2 = inlined_call_operand.vmem [shape: f32[1,128], index: 2, kind: input, shape index: {}]
  %s3 = inlined_call_operand.vmem [shape: f32[1,128], index: 3, kind: input, shape index: {}]
  %s4 = inlined_call_operand.vmem [shape: f32[2,16,2,16,256], index: 4, kind: output, shape index: {}]
  %s5 = sld [smem:[#allocation0]]
  $region49: #{conv_t_batch_forward.3} parent=0
    _
  %s7 = ssub.s32 1, %s5
  %s8 = scalar_select 0, %s7, %s5
  loop: start=0, step=1, limit=4
  $region2: #{conv_t_batch_forward.3} parent=0 // loop_pre_header
    _
  $region3: #{conv_t_batch_forward.3} parent=0 // loop_header
    %s10 = sphi 0, %s14
    %p11 = scmp.ge.s32.totalorder %s10, 4
    %s20 = sphi 0, %s22
    %s23 = sphi 0, %s20
    %s24 = sphi 0, %s23
    %s40 = sphi 0, %s24
    %s44 = sphi 0, %s44
    %s46 = sphi 0, %s44
    %s47 = sphi 0, %s46
    %s61 = sphi 0, %s47
    %s65 = sphi 0, %s65
    %s67 = sphi 0, %s65
    %s68 = sphi 0, %s67
    %s82 = sphi 0, %s68
    %s86 = sphi 0, %s86
    %s88 = sphi 0, %s86
    %s89 = sphi 0, %s88
    %s103 = sphi 0, %s89
    %s109 = sphi 0, %s111
    %s112 = sphi 0, %s109
    %s113 = sphi 0, %s112
    %s129 = sphi 0, %s113
  $region4: #{conv_t_batch_forward.3} parent=0 // loop_header_branch
    %13 = sbr.rel (%p11) target = $region8
  $region5: #{conv_t_batch_forward.3} parent=0 // loop_body
    %s15 = ssub.s32 %s10, 1
    %s16 = ssub.s32 %s10, 2
    %s17 = sadd.s32 %s10, 1
    %s18 = ssub.s32 %s10, %s17
    %p19 = scmp.eq.s32.totalorder %s18, 0
    %s21 = sadd.s32 %s20, 1
    %s22 = scalar_select %p19, %s20, %s21
    %p25 = pneg %p19
    %p26 = scmp.eq.s32.totalorder %s10, 1
    %p27 = por %p25, %p26
    %p28 = scmp.ne.s32.totalorder %s20, %s23
    %p29 = scmp.eq.s32.totalorder %s10, 0
    %p30 = por %p28, %p29
    %p31 = scmp.ne.s32.totalorder %s20, %s23
    %p32 = scmp.eq.s32.totalorder %s15, 1
    %p33 = por %p31, %p32
    %p34 = scmp.ne.s32.totalorder %s23, %s24
    %p35 = scmp.eq.s32.totalorder %s15, 0
    %p36 = por %p34, %p35
    %p37 = scmp.ne.s32.totalorder %s23, %s24
    %p38 = scmp.eq.s32.totalorder %s16, 1
    %p39 = por %p37, %p38
    %p41 = scmp.ne.s32.totalorder %s24, %s40
    %p42 = scmp.eq.s32.totalorder %s16, 0
    %p43 = por %p41, %p42
    %s45 = sadd.s32 %s44, 1
    %p48 = scmp.eq.s32.totalorder %s10, 1
    %p49 = scmp.ne.s32.totalorder %s44, %s46
    %p50 = scmp.eq.s32.totalorder %s10, 0
    %p51 = por %p49, %p50
    %p52 = scmp.ne.s32.totalorder %s44, %s46
    %p53 = scmp.eq.s32.totalorder %s15, 1
    %p54 = por %p52, %p53
    %p55 = scmp.ne.s32.totalorder %s46, %s47
    %p56 = scmp.eq.s32.totalorder %s15, 0
    %p57 = por %p55, %p56
    %p58 = scmp.ne.s32.totalorder %s46, %s47
    %p59 = scmp.eq.s32.totalorder %s16, 1
    %p60 = por %p58, %p59
    %p62 = scmp.ne.s32.totalorder %s47, %s61
    %p63 = scmp.eq.s32.totalorder %s16, 0
    %p64 = por %p62, %p63
    %s66 = sadd.s32 %s65, 1
    %p69 = scmp.eq.s32.totalorder %s10, 1
    %p70 = scmp.ne.s32.totalorder %s65, %s67
    %p71 = scmp.eq.s32.totalorder %s10, 0
    %p72 = por %p70, %p71
    %p73 = scmp.ne.s32.totalorder %s65, %s67
    %p74 = scmp.eq.s32.totalorder %s15, 1
    %p75 = por %p73, %p74
    %p76 = scmp.ne.s32.totalorder %s67, %s68
    %p77 = scmp.eq.s32.totalorder %s15, 0
    %p78 = por %p76, %p77
    %p79 = scmp.ne.s32.totalorder %s67, %s68
    %p80 = scmp.eq.s32.totalorder %s16, 1
    %p81 = por %p79, %p80
    %p83 = scmp.ne.s32.totalorder %s68, %s82
    %p84 = scmp.eq.s32.totalorder %s16, 0
    %p85 = por %p83, %p84
    %s87 = sadd.s32 %s86, 1
    %p90 = scmp.eq.s32.totalorder %s10, 1
    %p91 = scmp.ne.s32.totalorder %s86, %s88
    %p92 = scmp.eq.s32.totalorder %s10, 0
    %p93 = por %p91, %p92
    %p94 = scmp.ne.s32.totalorder %s86, %s88
    %p95 = scmp.eq.s32.totalorder %s15, 1
    %p96 = por %p94, %p95
    %p97 = scmp.ne.s32.totalorder %s88, %s89
    %p98 = scmp.eq.s32.totalorder %s15, 0
    %p99 = por %p97, %p98
    %p100 = scmp.ne.s32.totalorder %s88, %s89
    %p101 = scmp.eq.s32.totalorder %s16, 1
    %p102 = por %p100, %p101
    %p104 = scmp.ne.s32.totalorder %s89, %s103
    %p105 = scmp.eq.s32.totalorder %s16, 0
    %p106 = por %p104, %p105
    %s107 = ssub.s32 %s10, %s17
    %p108 = scmp.eq.s32.totalorder %s107, 0
    %s110 = sadd.s32 %s109, 1
    %s111 = scalar_select %p108, %s109, %s110
    %p114 = pneg %p108
    %p115 = scmp.eq.s32.totalorder %s10, 1
    %p116 = por %p114, %p115
    %p117 = scmp.ne.s32.totalorder %s109, %s112
    %p118 = scmp.eq.s32.totalorder %s10, 0
    %p119 = por %p117, %p118
    %p120 = scmp.ne.s32.totalorder %s109, %s112
    %p121 = scmp.eq.s32.totalorder %s15, 1
    %p122 = por %p120, %p121
    %p123 = scmp.ne.s32.totalorder %s112, %s113
    %p124 = scmp.eq.s32.totalorder %s15, 0
    %p125 = por %p123, %p124
    %p126 = scmp.ne.s32.totalorder %s112, %s113
    %p127 = scmp.eq.s32.totalorder %s16, 1
    %p128 = por %p126, %p127
    %p130 = scmp.ne.s32.totalorder %s113, %s129
    %p131 = scmp.eq.s32.totalorder %s16, 0
    %p132 = por %p130, %p131
    %p133 = scmp.le.s32.totalorder 1, %s10
    %p134 = scmp.lt.s32.totalorder %s10, 3
    %p135 = pnand %p133, %p134
    %p136 = pneg %p135
    // Predicated region
    $region9: #{conv_t_batch_forward.3} parent=5 // pred_check
      _
    $region10: #{conv_t_batch_forward.3} parent=5 // pred_check_branch
      %138 = sbr.rel (%p135) target = $region12
    $region11: #{conv_t_batch_forward.3} parent=5 // pred_region
      %s139 = ssub.s32 %s10, 1
      // Predicated region
      $region13: #{conv_t_batch_forward.3} parent=11 // pred_check
        %p140 = pneg %p57
      $region14: #{conv_t_batch_forward.3} parent=11 // pred_check_branch
        %142 = sbr.rel (%p140) target = $region16
      $region15: #{conv_t_batch_forward.3} parent=11 // pred_region
        _
      $region16: #{conv_t_batch_forward.3} parent=11 // pred_fallthru
        _
      // Predicated region
      $region17: #{conv_t_batch_forward.3} parent=11 // pred_check
        %p143 = pneg %p78
      $region18: #{conv_t_batch_forward.3} parent=11 // pred_check_branch
        %145 = sbr.rel (%p143) target = $region20
      $region19: #{conv_t_batch_forward.3} parent=11 // pred_region
        _
      $region20: #{conv_t_batch_forward.3} parent=11 // pred_fallthru
        _
      // Predicated region
      $region21: #{conv_t_batch_forward.3} parent=11 // pred_check
        %p146 = pneg %p99
      $region22: #{conv_t_batch_forward.3} parent=11 // pred_check_branch
        %148 = sbr.rel (%p146) target = $region24
      $region23: #{conv_t_batch_forward.3} parent=11 // pred_region
        _
      $region24: #{conv_t_batch_forward.3} parent=11 // pred_fallthru
        _
    $region12: #{conv_t_batch_forward.3} parent=5 // pred_fallthru
      _
    %p149 = scmp.lt.s32.totalorder %s10, 2
    // Predicated region
    $region25: #{conv_t_batch_forward.3} parent=5 // pred_check
      %p150 = pneg %p149
    $region26: #{conv_t_batch_forward.3} parent=5 // pred_check_branch
      %152 = sbr.rel (%p150) target = $region28
    $region27: #{conv_t_batch_forward.3} parent=5 // pred_region
      // Predicated region
      $region29: #{conv_t_batch_forward.3} parent=27 // pred_check
        %p153 = pneg %p30
      $region30: #{conv_t_batch_forward.3} parent=27 // pred_check_branch
        %155 = sbr.rel (%p153) target = $region32
      $region31: #{conv_t_batch_forward.3} parent=27 // pred_region
        %p156 = scmp.lt.s32.totalorder %s10, 1
        %s157 = scalar_select %p156, %s10, 1
        %s158 = smul.addr %s157, 54
        %s159 = smul.addr %s158, 4
        %s160 = scalar_lea.vmem %s0, %s159
      $region32: #{conv_t_batch_forward.3} parent=27 // pred_fallthru
        _
    $region28: #{conv_t_batch_forward.3} parent=5 // pred_fallthru
      _
    %p161 = scmp.le.s32.totalorder 1, %s10
    %p162 = scmp.lt.s32.totalorder %s10, 3
    %p163 = pnand %p161, %p162
    %p164 = pneg %p163
    // Predicated region
    $region33: #{conv_t_batch_forward.3} parent=5 // pred_check
      _
    $region34: #{conv_t_batch_forward.3} parent=5 // pred_check_branch
      %166 = sbr.rel (%p163) target = $region36
    $region35: #{conv_t_batch_forward.3} parent=5 // pred_region
      %s167 = ssub.s32 %s10, 1
      %p168 = scmp.lt.s32.totalorder %s15, 1
      %s169 = scalar_select %p168, %s15, 1
      %s170 = smul.addr %s169, 54
      %s171 = smul.addr %s170, 4
      %s172 = scalar_lea.vmem %s0, %s171
      %p173 = pneg %p36
      %p174 = pneg %p33
      %p175 = pneg %p57
      %p176 = pneg %p54
      %p177 = pneg %p78
      %p178 = pneg %p75
      %p179 = pneg %p99
      %p180 = pneg %p96
      %p181 = pneg %p125
      %p182 = pneg %p122
      %p183 = scmp.lt.s32.totalorder %s15, 1
      %s184 = scalar_select %p183, %s15, 1
      %s185 = smul.addr %s184, 128
      %s186 = smul.addr %s185, 8
      %s187 = scalar_lea.vmem %s4, %s186
      %p188 = scmp.lt.s32.totalorder %s15, 1
      %s189 = scalar_select %p188, %s15, 1
      %s190 = smul.addr %s189, 54
      %s191 = smul.addr %s190, 4
      %s192 = scalar_lea.vmem %s0, %s191
      %p193 = scmp.lt.s32.totalorder %s15, 1
      %s194 = scalar_select %p193, %s15, 1
      %s195 = smul.addr %s194, 128
      %s196 = smul.addr %s195, 8
      %s197 = scalar_lea.vmem %s4, %s196
      %v199 = vld [vmem:[%s192] sm:$0xf]
      %v200 = vld [vmem:[%s192 + $0x4] sm:$0xf]
      %v201 = vld [vmem:[%s192 + $0x8] sm:$0x1]
      %v202 = vld [vmem:[%s192 + $0xc] sm:$0xf]
      %v203 = vld [vmem:[%s192 + $0x10] sm:$0xf]
      %v204 = vld [vmem:[%s192 + $0x14] sm:$0x1]
      %v205 = vld [vmem:[%s192 + $0x18] sm:$0xf]
      %v206 = vld [vmem:[%s192 + $0x1c] sm:$0xf]
      %v207 = vld [vmem:[%s192 + $0x20] sm:$0x1]
      %v208 = vld [vmem:[%s192 + $0x24] sm:$0xf]
      %v209 = vld [vmem:[%s192 + $0x28] sm:$0xf]
      %v210 = vld [vmem:[%s192 + $0x2c] sm:$0x1]
      %v211 = vld [vmem:[%s192 + $0x30] sm:$0xf]
      %v212 = vld [vmem:[%s192 + $0x34] sm:$0xf]
      %v213 = vld [vmem:[%s192 + $0x38] sm:$0x1]
      %v214 = vld [vmem:[%s192 + $0x3c] sm:$0xf]
      %v215 = vld [vmem:[%s192 + $0x40] sm:$0xf]
      %v216 = vld [vmem:[%s192 + $0x44] sm:$0x1]
      %v217 = vld [vmem:[%s192 + $0x48] sm:$0xf]
      %v218 = vld [vmem:[%s192 + $0x4c] sm:$0xf]
      %v219 = vld [vmem:[%s192 + $0x50] sm:$0x1]
      %v220 = vld [vmem:[%s192 + $0x54] sm:$0xf]
      %v221 = vld [vmem:[%s192 + $0x58] sm:$0xf]
      %v222 = vld [vmem:[%s192 + $0x5c] sm:$0x1]
      %v223 = vld [vmem:[%s192 + $0x60] sm:$0xf]
      %v224 = vld [vmem:[%s192 + $0x64] sm:$0xf]
      %v225 = vld [vmem:[%s192 + $0x68] sm:$0x1]
      %v226 = vld [vmem:[%s192 + $0x6c] sm:$0xf]
      %v227 = vld [vmem:[%s192 + $0x70] sm:$0xf]
      %v228 = vld [vmem:[%s192 + $0x74] sm:$0x1]
      %v229 = vld [vmem:[%s192 + $0x78] sm:$0xf]
      %v230 = vld [vmem:[%s192 + $0x7c] sm:$0xf]
      %v231 = vld [vmem:[%s192 + $0x80] sm:$0x1]
      %v232 = vld [vmem:[%s192 + $0x84] sm:$0xf]
      %v233 = vld [vmem:[%s192 + $0x88] sm:$0xf]
      %v234 = vld [vmem:[%s192 + $0x8c] sm:$0x1]
      %v235 = vld [vmem:[%s192 + $0x90] sm:$0xf]
      %v236 = vld [vmem:[%s192 + $0x94] sm:$0xf]
      %v237 = vld [vmem:[%s192 + $0x98] sm:$0x1]
      %v238 = vld [vmem:[%s192 + $0x9c] sm:$0xf]
      %v239 = vld [vmem:[%s192 + $0xa0] sm:$0xf]
      %v240 = vld [vmem:[%s192 + $0xa4] sm:$0x1]
      %v241 = vld [vmem:[%s192 + $0xa8] sm:$0xf]
      %v242 = vld [vmem:[%s192 + $0xac] sm:$0xf]
      %v243 = vld [vmem:[%s192 + $0xb0] sm:$0x1]
      %v244 = vld [vmem:[%s192 + $0xb4] sm:$0xf]
      %v245 = vld [vmem:[%s192 + $0xb8] sm:$0xf]
      %v246 = vld [vmem:[%s192 + $0xbc] sm:$0x1]
      %v247 = vld [vmem:[%s192 + $0xc0] sm:$0xf]
      %v248 = vld [vmem:[%s192 + $0xc4] sm:$0xf]
      %v249 = vld [vmem:[%s192 + $0xc8] sm:$0x1]
      %v250 = vld [vmem:[%s192 + $0xcc] sm:$0xf]
      %v251 = vld [vmem:[%s192 + $0xd0] sm:$0xf]
      %v252 = vld [vmem:[%s192 + $0xd4] sm:$0x1]
      %v253 = vld [vmem:[%s1] sm:$0x3]
      %v254 = vld [vmem:[%s1 + $0x2] sm:$0x3]
      %v255 = vld [vmem:[%s1 + $0x4] sm:$0x3]
      %v256 = vld [vmem:[%s1 + $0x6] sm:$0x3]
      %v257 = vld [vmem:[%s1 + $0x8] sm:$0x3]
      %v258 = vld [vmem:[%s1 + $0xa] sm:$0x3]
      %v259 = vld [vmem:[%s1 + $0xc] sm:$0x3]
      %v260 = vld [vmem:[%s1 + $0xe] sm:$0x3]
      %v261 = vld [vmem:[%s1 + $0x10] sm:$0x3]
      %v262 = vld [vmem:[%s1 + $0x12] sm:$0x3]
      %v263 = vld [vmem:[%s1 + $0x14] sm:$0x3]
      %v264 = vld [vmem:[%s1 + $0x16] sm:$0x3]
      %v265 = vld [vmem:[%s1 + $0x18] sm:$0x3]
      %v266 = vld [vmem:[%s1 + $0x1a] sm:$0x3]
      %v267 = vld [vmem:[%s1 + $0x1c] sm:$0x3]
      %v268 = vld [vmem:[%s1 + $0x1e] sm:$0x3]
      %v269 = vld [vmem:[%s2] sm:$0x1]
      %v270 = vld [vmem:[%s3] sm:$0x1]
      %vm271 = vsmask.f32 3328
      %vm272 = vsmask.f32 7440
      %vm273 = vmor %vm271, %vm272
      %v275 = vshrl.u32 %v199, 16
      %v277 = vrot.slane %v275, 4
      %v278 = vshll.u32 %v199, 16
      %v280 = vrot.slane %v278, 5
      %v281 = vor.u32 %v277, %v280
      %v282 = vrot.slane %v281, 4
      %v284 = vshll.u32 %v200, 16
      %v286 = vrot.slane %v284, 5
      %v287 = vsel %vm273, %v282, %v286
      %v288 = vshrl.u32 %v200, 16
      %v290 = vrot.slane %v288, 4
      %v291 = vor.u32 %v290, %v286
      %v292 = vrot.slane %v291, 4
      %v294 = vshll.u32 %v201, 16
      %v296 = vrot.slane %v294, 5
      %v297 = vsel %vm273, %v292, %v296
      %v299 = vshrl.u32 %v202, 16
      %v301 = vrot.slane %v299, 4
      %v302 = vshll.u32 %v202, 16
      %v304 = vrot.slane %v302, 5
      %v305 = vor.u32 %v301, %v304
      %v306 = vrot.slane %v305, 4
      %v308 = vshll.u32 %v203, 16
      %v310 = vrot.slane %v308, 5
      %v311 = vsel %vm273, %v306, %v310
      %v312 = vshrl.u32 %v203, 16
      %v314 = vrot.slane %v312, 4
      %v315 = vor.u32 %v314, %v310
      %v316 = vrot.slane %v315, 4
      %v318 = vshll.u32 %v204, 16
      %v320 = vrot.slane %v318, 5
      %v321 = vsel %vm273, %v316, %v320
      %v323 = vshrl.u32 %v205, 16
      %v325 = vrot.slane %v323, 4
      %v326 = vshll.u32 %v205, 16
      %v328 = vrot.slane %v326, 5
      %v329 = vor.u32 %v325, %v328
      %v330 = vrot.slane %v329, 4
      %v332 = vshll.u32 %v206, 16
      %v334 = vrot.slane %v332, 5
      %v335 = vsel %vm273, %v330, %v334
      %v336 = vshrl.u32 %v206, 16
      %v338 = vrot.slane %v336, 4
      %v339 = vor.u32 %v338, %v334
      %v340 = vrot.slane %v339, 4
      %v342 = vshll.u32 %v207, 16
      %v344 = vrot.slane %v342, 5
      %v345 = vsel %vm273, %v340, %v344
      %v347 = vshrl.u32 %v208, 16
      %v349 = vrot.slane %v347, 4
      %v350 = vshll.u32 %v208, 16
      %v352 = vrot.slane %v350, 5
      %v353 = vor.u32 %v349, %v352
      %v354 = vrot.slane %v353, 4
      %v356 = vshll.u32 %v209, 16
      %v358 = vrot.slane %v356, 5
      %v359 = vsel %vm273, %v354, %v358
      %v360 = vshrl.u32 %v209, 16
      %v362 = vrot.slane %v360, 4
      %v363 = vor.u32 %v362, %v358
      %v364 = vrot.slane %v363, 4
      %v366 = vshll.u32 %v210, 16
      %v368 = vrot.slane %v366, 5
      %v369 = vsel %vm273, %v364, %v368
      %v371 = vshrl.u32 %v211, 16
      %v373 = vrot.slane %v371, 4
      %v374 = vshll.u32 %v211, 16
      %v376 = vrot.slane %v374, 5
      %v377 = vor.u32 %v373, %v376
      %v378 = vrot.slane %v377, 4
      %v380 = vshll.u32 %v212, 16
      %v382 = vrot.slane %v380, 5
      %v383 = vsel %vm273, %v378, %v382
      %v384 = vshrl.u32 %v212, 16
      %v386 = vrot.slane %v384, 4
      %v387 = vor.u32 %v386, %v382
      %v388 = vrot.slane %v387, 4
      %v390 = vshll.u32 %v213, 16
      %v392 = vrot.slane %v390, 5
      %v393 = vsel %vm273, %v388, %v392
      %v395 = vshrl.u32 %v214, 16
      %v397 = vrot.slane %v395, 4
      %v398 = vshll.u32 %v214, 16
      %v400 = vrot.slane %v398, 5
      %v401 = vor.u32 %v397, %v400
      %v402 = vrot.slane %v401, 4
      %v404 = vshll.u32 %v215, 16
      %v406 = vrot.slane %v404, 5
      %v407 = vsel %vm273, %v402, %v406
      %v408 = vshrl.u32 %v215, 16
      %v410 = vrot.slane %v408, 4
      %v411 = vor.u32 %v410, %v406
      %v412 = vrot.slane %v411, 4
      %v414 = vshll.u32 %v216, 16
      %v416 = vrot.slane %v414, 5
      %v417 = vsel %vm273, %v412, %v416
      %v419 = vshrl.u32 %v217, 16
      %v421 = vrot.slane %v419, 4
      %v422 = vshll.u32 %v217, 16
      %v424 = vrot.slane %v422, 5
      %v425 = vor.u32 %v421, %v424
      %v426 = vrot.slane %v425, 4
      %v428 = vshll.u32 %v218, 16
      %v430 = vrot.slane %v428, 5
      %v431 = vsel %vm273, %v426, %v430
      %v432 = vshrl.u32 %v218, 16
      %v434 = vrot.slane %v432, 4
      %v435 = vor.u32 %v434, %v430
      %v436 = vrot.slane %v435, 4
      %v438 = vshll.u32 %v219, 16
      %v440 = vrot.slane %v438, 5
      %v441 = vsel %vm273, %v436, %v440
      %v443 = vshrl.u32 %v220, 16
      %v445 = vrot.slane %v443, 4
      %v446 = vshll.u32 %v220, 16
      %v448 = vrot.slane %v446, 5
      %v449 = vor.u32 %v445, %v448
      %v450 = vrot.slane %v449, 4
      %v452 = vshll.u32 %v221, 16
      %v454 = vrot.slane %v452, 5
      %v455 = vsel %vm273, %v450, %v454
      %v456 = vshrl.u32 %v221, 16
      %v458 = vrot.slane %v456, 4
      %v459 = vor.u32 %v458, %v454
      %v460 = vrot.slane %v459, 4
      %v462 = vshll.u32 %v222, 16
      %v464 = vrot.slane %v462, 5
      %v465 = vsel %vm273, %v460, %v464
      %v467 = vshrl.u32 %v223, 16
      %v469 = vrot.slane %v467, 4
      %v470 = vshll.u32 %v223, 16
      %v472 = vrot.slane %v470, 5
      %v473 = vor.u32 %v469, %v472
      %v474 = vrot.slane %v473, 4
      %v476 = vshll.u32 %v224, 16
      %v478 = vrot.slane %v476, 5
      %v479 = vsel %vm273, %v474, %v478
      %v480 = vshrl.u32 %v224, 16
      %v482 = vrot.slane %v480, 4
      %v483 = vor.u32 %v482, %v478
      %v484 = vrot.slane %v483, 4
      %v486 = vshll.u32 %v225, 16
      %v488 = vrot.slane %v486, 5
      %v489 = vsel %vm273, %v484, %v488
      %v491 = vshrl.u32 %v226, 16
      %v493 = vrot.slane %v491, 4
      %v494 = vshll.u32 %v226, 16
      %v496 = vrot.slane %v494, 5
      %v497 = vor.u32 %v493, %v496
      %v498 = vrot.slane %v497, 4
      %v500 = vshll.u32 %v227, 16
      %v502 = vrot.slane %v500, 5
      %v503 = vsel %vm273, %v498, %v502
      %v504 = vshrl.u32 %v227, 16
      %v506 = vrot.slane %v504, 4
      %v507 = vor.u32 %v506, %v502
      %v508 = vrot.slane %v507, 4
      %v510 = vshll.u32 %v228, 16
      %v512 = vrot.slane %v510, 5
      %v513 = vsel %vm273, %v508, %v512
      %v515 = vshrl.u32 %v229, 16
      %v517 = vrot.slane %v515, 4
      %v518 = vshll.u32 %v229, 16
      %v520 = vrot.slane %v518, 5
      %v521 = vor.u32 %v517, %v520
      %v522 = vrot.slane %v521, 4
      %v524 = vshll.u32 %v230, 16
      %v526 = vrot.slane %v524, 5
      %v527 = vsel %vm273, %v522, %v526
      %v528 = vshrl.u32 %v230, 16
      %v530 = vrot.slane %v528, 4
      %v531 = vor.u32 %v530, %v526
      %v532 = vrot.slane %v531, 4
      %v534 = vshll.u32 %v231, 16
      %v536 = vrot.slane %v534, 5
      %v537 = vsel %vm273, %v532, %v536
      %v539 = vshrl.u32 %v232, 16
      %v541 = vrot.slane %v539, 4
      %v542 = vshll.u32 %v232, 16
      %v544 = vrot.slane %v542, 5
      %v545 = vor.u32 %v541, %v544
      %v546 = vrot.slane %v545, 4
      %v548 = vshll.u32 %v233, 16
      %v550 = vrot.slane %v548, 5
      %v551 = vsel %vm273, %v546, %v550
      %v552 = vshrl.u32 %v233, 16
      %v554 = vrot.slane %v552, 4
      %v555 = vor.u32 %v554, %v550
      %v556 = vrot.slane %v555, 4
      %v558 = vshll.u32 %v234, 16
      %v560 = vrot.slane %v558, 5
      %v561 = vsel %vm273, %v556, %v560
      %v563 = vshrl.u32 %v235, 16
      %v565 = vrot.slane %v563, 4
      %v566 = vshll.u32 %v235, 16
      %v568 = vrot.slane %v566, 5
      %v569 = vor.u32 %v565, %v568
      %v570 = vrot.slane %v569, 4
      %v572 = vshll.u32 %v236, 16
      %v574 = vrot.slane %v572, 5
      %v575 = vsel %vm273, %v570, %v574
      %v576 = vshrl.u32 %v236, 16
      %v578 = vrot.slane %v576, 4
      %v579 = vor.u32 %v578, %v574
      %v580 = vrot.slane %v579, 4
      %v582 = vshll.u32 %v237, 16
      %v584 = vrot.slane %v582, 5
      %v585 = vsel %vm273, %v580, %v584
      %v587 = vshrl.u32 %v238, 16
      %v589 = vrot.slane %v587, 4
      %v590 = vshll.u32 %v238, 16
      %v592 = vrot.slane %v590, 5
      %v593 = vor.u32 %v589, %v592
      %v594 = vrot.slane %v593, 4
      %v596 = vshll.u32 %v239, 16
      %v598 = vrot.slane %v596, 5
      %v599 = vsel %vm273, %v594, %v598
      %v600 = vshrl.u32 %v239, 16
      %v602 = vrot.slane %v600, 4
      %v603 = vor.u32 %v602, %v598
      %v604 = vrot.slane %v603, 4
      %v606 = vshll.u32 %v240, 16
      %v608 = vrot.slane %v606, 5
      %v609 = vsel %vm273, %v604, %v608
      %v611 = vshrl.u32 %v241, 16
      %v613 = vrot.slane %v611, 4
      %v614 = vshll.u32 %v241, 16
      %v616 = vrot.slane %v614, 5
      %v617 = vor.u32 %v613, %v616
      %v618 = vrot.slane %v617, 4
      %v620 = vshll.u32 %v242, 16
      %v622 = vrot.slane %v620, 5
      %v623 = vsel %vm273, %v618, %v622
      %v624 = vshrl.u32 %v242, 16
      %v626 = vrot.slane %v624, 4
      %v627 = vor.u32 %v626, %v622
      %v628 = vrot.slane %v627, 4
      %v630 = vshll.u32 %v243, 16
      %v632 = vrot.slane %v630, 5
      %v633 = vsel %vm273, %v628, %v632
      %v635 = vshrl.u32 %v244, 16
      %v637 = vrot.slane %v635, 4
      %v638 = vshll.u32 %v244, 16
      %v640 = vrot.slane %v638, 5
      %v641 = vor.u32 %v637, %v640
      %v642 = vrot.slane %v641, 4
      %v644 = vshll.u32 %v245, 16
      %v646 = vrot.slane %v644, 5
      %v647 = vsel %vm273, %v642, %v646
      %v648 = vshrl.u32 %v245, 16
      %v650 = vrot.slane %v648, 4
      %v651 = vor.u32 %v650, %v646
      %v652 = vrot.slane %v651, 4
      %v654 = vshll.u32 %v246, 16
      %v656 = vrot.slane %v654, 5
      %v657 = vsel %vm273, %v652, %v656
      %v658 = vunpack.c.l.b16 %v287
      %v659 = vunpack.c.l.b16 %v297
      %v660 = vunpack.c.l.b16 %v311
      %v661 = vunpack.c.l.b16 %v321
      %v662 = vunpack.c.l.b16 %v335
      %v663 = vunpack.c.l.b16 %v345
      %v664 = vunpack.c.l.b16 %v359
      %v665 = vunpack.c.l.b16 %v369
      %v666 = vunpack.c.l.b16 %v383
      %v667 = vunpack.c.l.b16 %v393
      %v668 = vunpack.c.l.b16 %v407
      %v669 = vunpack.c.l.b16 %v417
      %v670 = vunpack.c.l.b16 %v431
      %v671 = vunpack.c.l.b16 %v441
      %v672 = vunpack.c.l.b16 %v455
      %v673 = vunpack.c.l.b16 %v465
      %v674 = vunpack.c.l.b16 %v479
      %v675 = vunpack.c.l.b16 %v489
      %v676 = vunpack.c.l.b16 %v503
      %v677 = vunpack.c.l.b16 %v513
      %v678 = vunpack.c.l.b16 %v527
      %v679 = vunpack.c.l.b16 %v537
      %v680 = vunpack.c.l.b16 %v551
      %v681 = vunpack.c.l.b16 %v561
      %v682 = vunpack.c.l.b16 %v575
      %v683 = vunpack.c.l.b16 %v585
      %v684 = vunpack.c.l.b16 %v599
      %v685 = vunpack.c.l.b16 %v609
      %v686 = vunpack.c.l.b16 %v623
      %v687 = vunpack.c.l.b16 %v633
      %v688 = vunpack.c.l.b16 %v647
      %v689 = vunpack.c.l.b16 %v657
      %v690 = vpack.c.b16 %v659, %v658
      %v691 = vpack.c.b16 %v661, %v660
      %v692 = vpack.c.b16 %v663, %v662
      %v693 = vpack.c.b16 %v665, %v664
      %v694 = vpack.c.b16 %v667, %v666
      %v695 = vpack.c.b16 %v669, %v668
      %v696 = vpack.c.b16 %v671, %v670
      %v697 = vpack.c.b16 %v673, %v672
      %v698 = vpack.c.b16 %v675, %v674
      %v699 = vpack.c.b16 %v677, %v676
      %v700 = vpack.c.b16 %v679, %v678
      %v701 = vpack.c.b16 %v681, %v680
      %v702 = vpack.c.b16 %v683, %v682
      %v703 = vpack.c.b16 %v685, %v684
      %v704 = vpack.c.b16 %v687, %v686
      %v705 = vpack.c.b16 %v689, %v688
      %vm706 = vcmask 31744
      %v708 = vsel %vm706, %v690, 0
      %v711 = vsel %vm706, %v691, 0
      %v714 = vsel %vm706, %v692, 0
      %v717 = vsel %vm706, %v693, 0
      %v720 = vsel %vm706, %v694, 0
      %v723 = vsel %vm706, %v695, 0
      %v726 = vsel %vm706, %v696, 0
      %v729 = vsel %vm706, %v697, 0
      %v732 = vsel %vm706, %v698, 0
      %v735 = vsel %vm706, %v699, 0
      %v738 = vsel %vm706, %v700, 0
      %v741 = vsel %vm706, %v701, 0
      %v744 = vsel %vm706, %v702, 0
      %v747 = vsel %vm706, %v703, 0
      %v750 = vsel %vm706, %v704, 0
      %v753 = vsel %vm706, %v705, 0
      %vm755 = vcmask 1041408
      %v757 = vsel %vm755, %v254, 0
      %759 = vmatpush.bf16.msra.mxu0 0
      %760 = vmatpush.bf16.msra.mxu0 0
      %761 = vmatpush.bf16.msra.mxu0 0
      %762 = vmatpush.bf16.msra.mxu0 0
      %763 = vmatpush.bf16.msra.mxu0 0
      %764 = vmatpush.bf16.msra.mxu0 0
      %765 = vmatpush.bf16.msra.mxu0 0
      %766 = vmatpush.bf16.msra.mxu0 %v757
      %767 = vmatmul.bf16.gmra.mxu0 %v708
      %v768 = vpop.f32.mrf.mxu0
      %v769 = vadd.f32 0.0, %v768
      %v770 = vpop.f32.mrf.mxu0
      %v771 = vadd.f32 0.0, %v770
      %772 = vmatmul.bf16.gmra.mxu0 %v711
      %v773 = vpop.f32.mrf.mxu0
      %v774 = vadd.f32 0.0, %v773
      %v775 = vpop.f32.mrf.mxu0
      %v776 = vadd.f32 0.0, %v775
      %777 = vmatmul.bf16.gmra.mxu0 %v714
      %v778 = vpop.f32.mrf.mxu0
      %v779 = vadd.f32 0.0, %v778
      %v780 = vpop.f32.mrf.mxu0
      %v781 = vadd.f32 0.0, %v780
      %782 = vmatmul.bf16.gmra.mxu0 %v717
      %v783 = vpop.f32.mrf.mxu0
      %v784 = vadd.f32 0.0, %v783
      %v785 = vpop.f32.mrf.mxu0
      %v786 = vadd.f32 0.0, %v785
      %787 = vmatmul.bf16.gmra.mxu0 %v720
      %v788 = vpop.f32.mrf.mxu0
      %v789 = vadd.f32 0.0, %v788
      %v790 = vpop.f32.mrf.mxu0
      %v791 = vadd.f32 0.0, %v790
      %792 = vmatmul.bf16.gmra.mxu0 %v723
      %v793 = vpop.f32.mrf.mxu0
      %v794 = vadd.f32 0.0, %v793
      %v795 = vpop.f32.mrf.mxu0
      %v796 = vadd.f32 0.0, %v795
      %797 = vmatmul.bf16.gmra.mxu0 %v726
      %v798 = vpop.f32.mrf.mxu0
      %v799 = vadd.f32 0.0, %v798
      %v800 = vpop.f32.mrf.mxu0
      %v801 = vadd.f32 0.0, %v800
      %802 = vmatmul.bf16.gmra.mxu0 %v729
      %v803 = vpop.f32.mrf.mxu0
      %v804 = vadd.f32 0.0, %v803
      %v805 = vpop.f32.mrf.mxu0
      %v806 = vadd.f32 0.0, %v805
      %807 = vmatmul.bf16.gmra.mxu0 %v732
      %v808 = vpop.f32.mrf.mxu0
      %v809 = vadd.f32 0.0, %v808
      %v810 = vpop.f32.mrf.mxu0
      %v811 = vadd.f32 0.0, %v810
      %812 = vmatmul.bf16.gmra.mxu0 %v735
      %v813 = vpop.f32.mrf.mxu0
      %v814 = vadd.f32 0.0, %v813
      %v815 = vpop.f32.mrf.mxu0
      %v816 = vadd.f32 0.0, %v815
      %817 = vmatmul.bf16.gmra.mxu0 %v738
      %v818 = vpop.f32.mrf.mxu0
      %v819 = vadd.f32 0.0, %v818
      %v820 = vpop.f32.mrf.mxu0
      %v821 = vadd.f32 0.0, %v820
      %822 = vmatmul.bf16.gmra.mxu0 %v741
      %v823 = vpop.f32.mrf.mxu0
      %v824 = vadd.f32 0.0, %v823
      %v825 = vpop.f32.mrf.mxu0
      %v826 = vadd.f32 0.0, %v825
      %827 = vmatmul.bf16.gmra.mxu0 %v744
      %v828 = vpop.f32.mrf.mxu0
      %v829 = vadd.f32 0.0, %v828
      %v830 = vpop.f32.mrf.mxu0
      %v831 = vadd.f32 0.0, %v830
      %832 = vmatmul.bf16.gmra.mxu0 %v747
      %v833 = vpop.f32.mrf.mxu0
      %v834 = vadd.f32 0.0, %v833
      %v835 = vpop.f32.mrf.mxu0
      %v836 = vadd.f32 0.0, %v835
      %837 = vmatmul.bf16.gmra.mxu0 %v750
      %v838 = vpop.f32.mrf.mxu0
      %v839 = vadd.f32 0.0, %v838
      %v840 = vpop.f32.mrf.mxu0
      %v841 = vadd.f32 0.0, %v840
      %842 = vmatmul.bf16.gmra.mxu0 %v753
      %v843 = vpop.f32.mrf.mxu0
      %v844 = vadd.f32 0.0, %v843
      %v845 = vpop.f32.mrf.mxu0
      %v846 = vadd.f32 0.0, %v845
      %847 = vdwg.mxu0
      %v880 = vunpack.c.l.b16 %v199
      %v881 = vunpack.c.l.b16 %v200
      %v882 = vunpack.c.l.b16 %v202
      %v883 = vunpack.c.l.b16 %v203
      %v884 = vunpack.c.l.b16 %v205
      %v885 = vunpack.c.l.b16 %v206
      %v886 = vunpack.c.l.b16 %v208
      %v887 = vunpack.c.l.b16 %v209
      %v888 = vunpack.c.l.b16 %v211
      %v889 = vunpack.c.l.b16 %v212
      %v890 = vunpack.c.l.b16 %v214
      %v891 = vunpack.c.l.b16 %v215
      %v892 = vunpack.c.l.b16 %v217
      %v893 = vunpack.c.l.b16 %v218
      %v894 = vunpack.c.l.b16 %v220
      %v895 = vunpack.c.l.b16 %v221
      %v896 = vunpack.c.l.b16 %v223
      %v897 = vunpack.c.l.b16 %v224
      %v898 = vunpack.c.l.b16 %v226
      %v899 = vunpack.c.l.b16 %v227
      %v900 = vunpack.c.l.b16 %v229
      %v901 = vunpack.c.l.b16 %v230
      %v902 = vunpack.c.l.b16 %v232
      %v903 = vunpack.c.l.b16 %v233
      %v904 = vunpack.c.l.b16 %v235
      %v905 = vunpack.c.l.b16 %v236
      %v906 = vunpack.c.l.b16 %v238
      %v907 = vunpack.c.l.b16 %v239
      %v908 = vunpack.c.l.b16 %v241
      %v909 = vunpack.c.l.b16 %v242
      %v910 = vunpack.c.l.b16 %v244
      %v911 = vunpack.c.l.b16 %v245
      %v912 = vpack.c.b16 %v881, %v880
      %v913 = vpack.c.b16 %v883, %v882
      %v914 = vpack.c.b16 %v885, %v884
      %v915 = vpack.c.b16 %v887, %v886
      %v916 = vpack.c.b16 %v889, %v888
      %v917 = vpack.c.b16 %v891, %v890
      %v918 = vpack.c.b16 %v893, %v892
      %v919 = vpack.c.b16 %v895, %v894
      %v920 = vpack.c.b16 %v897, %v896
      %v921 = vpack.c.b16 %v899, %v898
      %v922 = vpack.c.b16 %v901, %v900
      %v923 = vpack.c.b16 %v903, %v902
      %v924 = vpack.c.b16 %v905, %v904
      %v925 = vpack.c.b16 %v907, %v906
      %v926 = vpack.c.b16 %v909, %v908
      %v927 = vpack.c.b16 %v911, %v910
      %v929 = vsel %vm706, %v912, 0
      %v932 = vsel %vm706, %v913, 0
      %v935 = vsel %vm706, %v914, 0
      %v938 = vsel %vm706, %v915, 0
      %v941 = vsel %vm706, %v916, 0
      %v944 = vsel %vm706, %v917, 0
      %v947 = vsel %vm706, %v918, 0
      %v950 = vsel %vm706, %v919, 0
      %v953 = vsel %vm706, %v920, 0
      %v956 = vsel %vm706, %v921, 0
      %v959 = vsel %vm706, %v922, 0
      %v962 = vsel %vm706, %v923, 0
      %v965 = vsel %vm706, %v924, 0
      %v968 = vsel %vm706, %v925, 0
      %v971 = vsel %vm706, %v926, 0
      %v974 = vsel %vm706, %v927, 0
      %v977 = vsel %vm755, %v253, 0
      %979 = vmatpush.bf16.msra.mxu0 0
      %980 = vmatpush.bf16.msra.mxu0 0
      %981 = vmatpush.bf16.msra.mxu0 0
      %982 = vmatpush.bf16.msra.mxu0 0
      %983 = vmatpush.bf16.msra.mxu0 0
      %984 = vmatpush.bf16.msra.mxu0 0
      %985 = vmatpush.bf16.msra.mxu0 0
      %986 = vmatpush.bf16.msra.mxu0 %v977
      %987 = vmatmul.bf16.gmra.mxu0 %v929
      %v988 = vpop.f32.mrf.mxu0
      %v989 = vadd.f32 %v769, %v988
      %v990 = vpop.f32.mrf.mxu0
      %v991 = vadd.f32 %v771, %v990
      %992 = vmatmul.bf16.gmra.mxu0 %v932
      %v993 = vpop.f32.mrf.mxu0
      %v994 = vadd.f32 %v774, %v993
      %v995 = vpop.f32.mrf.mxu0
      %v996 = vadd.f32 %v776, %v995
      %997 = vmatmul.bf16.gmra.mxu0 %v935
      %v998 = vpop.f32.mrf.mxu0
      %v999 = vadd.f32 %v779, %v998
      %v1000 = vpop.f32.mrf.mxu0
      %v1001 = vadd.f32 %v781, %v1000
      %1002 = vmatmul.bf16.gmra.mxu0 %v938
      %v1003 = vpop.f32.mrf.mxu0
      %v1004 = vadd.f32 %v784, %v1003
      %v1005 = vpop.f32.mrf.mxu0
      %v1006 = vadd.f32 %v786, %v1005
      %1007 = vmatmul.bf16.gmra.mxu0 %v941
      %v1008 = vpop.f32.mrf.mxu0
      %v1009 = vadd.f32 %v789, %v1008
      %v1010 = vpop.f32.mrf.mxu0
      %v1011 = vadd.f32 %v791, %v1010
      %1012 = vmatmul.bf16.gmra.mxu0 %v944
      %v1013 = vpop.f32.mrf.mxu0
      %v1014 = vadd.f32 %v794, %v1013
      %v1015 = vpop.f32.mrf.mxu0
      %v1016 = vadd.f32 %v796, %v1015
      %1017 = vmatmul.bf16.gmra.mxu0 %v947
      %v1018 = vpop.f32.mrf.mxu0
      %v1019 = vadd.f32 %v799, %v1018
      %v1020 = vpop.f32.mrf.mxu0
      %v1021 = vadd.f32 %v801, %v1020
      %1022 = vmatmul.bf16.gmra.mxu0 %v950
      %v1023 = vpop.f32.mrf.mxu0
      %v1024 = vadd.f32 %v804, %v1023
      %v1025 = vpop.f32.mrf.mxu0
      %v1026 = vadd.f32 %v806, %v1025
      %1027 = vmatmul.bf16.gmra.mxu0 %v953
      %v1028 = vpop.f32.mrf.mxu0
      %v1029 = vadd.f32 %v809, %v1028
      %v1030 = vpop.f32.mrf.mxu0
      %v1031 = vadd.f32 %v811, %v1030
      %1032 = vmatmul.bf16.gmra.mxu0 %v956
      %v1033 = vpop.f32.mrf.mxu0
      %v1034 = vadd.f32 %v814, %v1033
      %v1035 = vpop.f32.mrf.mxu0
      %v1036 = vadd.f32 %v816, %v1035
      %1037 = vmatmul.bf16.gmra.mxu0 %v959
      %v1038 = vpop.f32.mrf.mxu0
      %v1039 = vadd.f32 %v819, %v1038
      %v1040 = vpop.f32.mrf.mxu0
      %v1041 = vadd.f32 %v821, %v1040
      %1042 = vmatmul.bf16.gmra.mxu0 %v962
      %v1043 = vpop.f32.mrf.mxu0
      %v1044 = vadd.f32 %v824, %v1043
      %v1045 = vpop.f32.mrf.mxu0
      %v1046 = vadd.f32 %v826, %v1045
      %1047 = vmatmul.bf16.gmra.mxu0 %v965
      %v1048 = vpop.f32.mrf.mxu0
      %v1049 = vadd.f32 %v829, %v1048
      %v1050 = vpop.f32.mrf.mxu0
      %v1051 = vadd.f32 %v831, %v1050
      %1052 = vmatmul.bf16.gmra.mxu0 %v968
      %v1053 = vpop.f32.mrf.mxu0
      %v1054 = vadd.f32 %v834, %v1053
      %v1055 = vpop.f32.mrf.mxu0
      %v1056 = vadd.f32 %v836, %v1055
      %1057 = vmatmul.bf16.gmra.mxu0 %v971
      %v1058 = vpop.f32.mrf.mxu0
      %v1059 = vadd.f32 %v839, %v1058
      %v1060 = vpop.f32.mrf.mxu0
      %v1061 = vadd.f32 %v841, %v1060
      %1062 = vmatmul.bf16.gmra.mxu0 %v974
      %v1063 = vpop.f32.mrf.mxu0
      %v1064 = vadd.f32 %v844, %v1063
      %v1065 = vpop.f32.mrf.mxu0
      %v1066 = vadd.f32 %v846, %v1065
      %1067 = vdwg.mxu0
      %v1070 = vunpack.c.l.b16 %v247
      %v1071 = vunpack.c.l.b16 %v248
      %v1072 = vpack.c.b16 %v1071, %v1070
      %v1074 = vsel %vm706, %v1072, 0
      %v1077 = vsel %vm755, %v255, 0
      %1079 = vmatpush.bf16.msra.mxu0 0
      %1080 = vmatpush.bf16.msra.mxu0 0
      %1081 = vmatpush.bf16.msra.mxu0 0
      %1082 = vmatpush.bf16.msra.mxu0 0
      %1083 = vmatpush.bf16.msra.mxu0 0
      %1084 = vmatpush.bf16.msra.mxu0 0
      %1085 = vmatpush.bf16.msra.mxu0 0
      %1086 = vmatpush.bf16.msra.mxu0 %v1077
      %1087 = vmatmul.bf16.gmra.mxu0 %v932
      %v1088 = vpop.f32.mrf.mxu0
      %v1089 = vadd.f32 0.0, %v1088
      %v1090 = vpop.f32.mrf.mxu0
      %v1091 = vadd.f32 0.0, %v1090
      %1092 = vmatmul.bf16.gmra.mxu0 %v935
      %v1093 = vpop.f32.mrf.mxu0
      %v1094 = vadd.f32 0.0, %v1093
      %v1095 = vpop.f32.mrf.mxu0
      %v1096 = vadd.f32 0.0, %v1095
      %1097 = vmatmul.bf16.gmra.mxu0 %v938
      %v1098 = vpop.f32.mrf.mxu0
      %v1099 = vadd.f32 0.0, %v1098
      %v1100 = vpop.f32.mrf.mxu0
      %v1101 = vadd.f32 0.0, %v1100
      %1102 = vmatmul.bf16.gmra.mxu0 %v941
      %v1103 = vpop.f32.mrf.mxu0
      %v1104 = vadd.f32 0.0, %v1103
      %v1105 = vpop.f32.mrf.mxu0
      %v1106 = vadd.f32 0.0, %v1105
      %1107 = vmatmul.bf16.gmra.mxu0 %v944
      %v1108 = vpop.f32.mrf.mxu0
      %v1109 = vadd.f32 0.0, %v1108
      %v1110 = vpop.f32.mrf.mxu0
      %v1111 = vadd.f32 0.0, %v1110
      %1112 = vmatmul.bf16.gmra.mxu0 %v947
      %v1113 = vpop.f32.mrf.mxu0
      %v1114 = vadd.f32 0.0, %v1113
      %v1115 = vpop.f32.mrf.mxu0
      %v1116 = vadd.f32 0.0, %v1115
      %1117 = vmatmul.bf16.gmra.mxu0 %v950
      %v1118 = vpop.f32.mrf.mxu0
      %v1119 = vadd.f32 0.0, %v1118
      %v1120 = vpop.f32.mrf.mxu0
      %v1121 = vadd.f32 0.0, %v1120
      %1122 = vmatmul.bf16.gmra.mxu0 %v953
      %v1123 = vpop.f32.mrf.mxu0
      %v1124 = vadd.f32 0.0, %v1123
      %v1125 = vpop.f32.mrf.mxu0
      %v1126 = vadd.f32 0.0, %v1125
      %1127 = vmatmul.bf16.gmra.mxu0 %v956
      %v1128 = vpop.f32.mrf.mxu0
      %v1129 = vadd.f32 0.0, %v1128
      %v1130 = vpop.f32.mrf.mxu0
      %v1131 = vadd.f32 0.0, %v1130
      %1132 = vmatmul.bf16.gmra.mxu0 %v959
      %v1133 = vpop.f32.mrf.mxu0
      %v1134 = vadd.f32 0.0, %v1133
      %v1135 = vpop.f32.mrf.mxu0
      %v1136 = vadd.f32 0.0, %v1135
      %1137 = vmatmul.bf16.gmra.mxu0 %v962
      %v1138 = vpop.f32.mrf.mxu0
      %v1139 = vadd.f32 0.0, %v1138
      %v1140 = vpop.f32.mrf.mxu0
      %v1141 = vadd.f32 0.0, %v1140
      %1142 = vmatmul.bf16.gmra.mxu0 %v965
      %v1143 = vpop.f32.mrf.mxu0
      %v1144 = vadd.f32 0.0, %v1143
      %v1145 = vpop.f32.mrf.mxu0
      %v1146 = vadd.f32 0.0, %v1145
      %1147 = vmatmul.bf16.gmra.mxu0 %v968
      %v1148 = vpop.f32.mrf.mxu0
      %v1149 = vadd.f32 0.0, %v1148
      %v1150 = vpop.f32.mrf.mxu0
      %v1151 = vadd.f32 0.0, %v1150
      %1152 = vmatmul.bf16.gmra.mxu0 %v971
      %v1153 = vpop.f32.mrf.mxu0
      %v1154 = vadd.f32 0.0, %v1153
      %v1155 = vpop.f32.mrf.mxu0
      %v1156 = vadd.f32 0.0, %v1155
      %1157 = vmatmul.bf16.gmra.mxu0 %v974
      %v1158 = vpop.f32.mrf.mxu0
      %v1159 = vadd.f32 0.0, %v1158
      %v1160 = vpop.f32.mrf.mxu0
      %v1161 = vadd.f32 0.0, %v1160
      %1162 = vmatmul.bf16.gmra.mxu0 %v1074
      %v1163 = vpop.f32.mrf.mxu0
      %v1164 = vadd.f32 0.0, %v1163
      %v1165 = vpop.f32.mrf.mxu0
      %v1166 = vadd.f32 0.0, %v1165
      %1167 = vdwg.mxu0
      %v1168 = vadd.f32 %v989, %v1089
      %v1169 = vadd.f32 %v991, %v1091
      %v1170 = vadd.f32 %v994, %v1094
      %v1171 = vadd.f32 %v996, %v1096
      %v1172 = vadd.f32 %v999, %v1099
      %v1173 = vadd.f32 %v1001, %v1101
      %v1174 = vadd.f32 %v1004, %v1104
      %v1175 = vadd.f32 %v1006, %v1106
      %v1176 = vadd.f32 %v1009, %v1109
      %v1177 = vadd.f32 %v1011, %v1111
      %v1178 = vadd.f32 %v1014, %v1114
      %v1179 = vadd.f32 %v1016, %v1116
      %v1180 = vadd.f32 %v1019, %v1119
      %v1181 = vadd.f32 %v1021, %v1121
      %v1182 = vadd.f32 %v1024, %v1124
      %v1183 = vadd.f32 %v1026, %v1126
      %v1184 = vadd.f32 %v1029, %v1129
      %v1185 = vadd.f32 %v1031, %v1131
      %v1186 = vadd.f32 %v1034, %v1134
      %v1187 = vadd.f32 %v1036, %v1136
      %v1188 = vadd.f32 %v1039, %v1139
      %v1189 = vadd.f32 %v1041, %v1141
      %v1190 = vadd.f32 %v1044, %v1144
      %v1191 = vadd.f32 %v1046, %v1146
      %v1192 = vadd.f32 %v1049, %v1149
      %v1193 = vadd.f32 %v1051, %v1151
      %v1194 = vadd.f32 %v1054, %v1154
      %v1195 = vadd.f32 %v1056, %v1156
      %v1196 = vadd.f32 %v1059, %v1159
      %v1197 = vadd.f32 %v1061, %v1161
      %v1198 = vadd.f32 %v1064, %v1164
      %v1199 = vadd.f32 %v1066, %v1166
      %v1201 = vshrl.u32 %v247, 16
      %v1203 = vrot.slane %v1201, 4
      %v1204 = vshll.u32 %v247, 16
      %v1206 = vrot.slane %v1204, 5
      %v1207 = vor.u32 %v1203, %v1206
      %v1208 = vrot.slane %v1207, 4
      %v1210 = vshll.u32 %v248, 16
      %v1212 = vrot.slane %v1210, 5
      %v1213 = vsel %vm273, %v1208, %v1212
      %v1214 = vshrl.u32 %v248, 16
      %v1216 = vrot.slane %v1214, 4
      %v1217 = vor.u32 %v1216, %v1212
      %v1218 = vrot.slane %v1217, 4
      %v1220 = vshll.u32 %v249, 16
      %v1222 = vrot.slane %v1220, 5
      %v1223 = vsel %vm273, %v1218, %v1222
      %v1224 = vunpack.c.l.b16 %v1213
      %v1225 = vunpack.c.l.b16 %v1223
      %v1226 = vpack.c.b16 %v1225, %v1224
      %v1228 = vsel %vm706, %v1226, 0
      %v1231 = vsel %vm755, %v256, 0
      %1233 = vmatpush.bf16.msra.mxu0 0
      %1234 = vmatpush.bf16.msra.mxu0 0
      %1235 = vmatpush.bf16.msra.mxu0 0
      %1236 = vmatpush.bf16.msra.mxu0 0
      %1237 = vmatpush.bf16.msra.mxu0 0
      %1238 = vmatpush.bf16.msra.mxu0 0
      %1239 = vmatpush.bf16.msra.mxu0 0
      %1240 = vmatpush.bf16.msra.mxu0 %v1231
      %1241 = vmatmul.bf16.gmra.mxu0 %v711
      %v1242 = vpop.f32.mrf.mxu0
      %v1243 = vadd.f32 0.0, %v1242
      %v1244 = vpop.f32.mrf.mxu0
      %v1245 = vadd.f32 0.0, %v1244
      %1246 = vmatmul.bf16.gmra.mxu0 %v714
      %v1247 = vpop.f32.mrf.mxu0
      %v1248 = vadd.f32 0.0, %v1247
      %v1249 = vpop.f32.mrf.mxu0
      %v1250 = vadd.f32 0.0, %v1249
      %1251 = vmatmul.bf16.gmra.mxu0 %v717
      %v1252 = vpop.f32.mrf.mxu0
      %v1253 = vadd.f32 0.0, %v1252
      %v1254 = vpop.f32.mrf.mxu0
      %v1255 = vadd.f32 0.0, %v1254
      %1256 = vmatmul.bf16.gmra.mxu0 %v720
      %v1257 = vpop.f32.mrf.mxu0
      %v1258 = vadd.f32 0.0, %v1257
      %v1259 = vpop.f32.mrf.mxu0
      %v1260 = vadd.f32 0.0, %v1259
      %1261 = vmatmul.bf16.gmra.mxu0 %v723
      %v1262 = vpop.f32.mrf.mxu0
      %v1263 = vadd.f32 0.0, %v1262
      %v1264 = vpop.f32.mrf.mxu0
      %v1265 = vadd.f32 0.0, %v1264
      %1266 = vmatmul.bf16.gmra.mxu0 %v726
      %v1267 = vpop.f32.mrf.mxu0
      %v1268 = vadd.f32 0.0, %v1267
      %v1269 = vpop.f32.mrf.mxu0
      %v1270 = vadd.f32 0.0, %v1269
      %1271 = vmatmul.bf16.gmra.mxu0 %v729
      %v1272 = vpop.f32.mrf.mxu0
      %v1273 = vadd.f32 0.0, %v1272
      %v1274 = vpop.f32.mrf.mxu0
      %v1275 = vadd.f32 0.0, %v1274
      %1276 = vmatmul.bf16.gmra.mxu0 %v732
      %v1277 = vpop.f32.mrf.mxu0
      %v1278 = vadd.f32 0.0, %v1277
      %v1279 = vpop.f32.mrf.mxu0
      %v1280 = vadd.f32 0.0, %v1279
      %1281 = vmatmul.bf16.gmra.mxu0 %v735
      %v1282 = vpop.f32.mrf.mxu0
      %v1283 = vadd.f32 0.0, %v1282
      %v1284 = vpop.f32.mrf.mxu0
      %v1285 = vadd.f32 0.0, %v1284
      %1286 = vmatmul.bf16.gmra.mxu0 %v738
      %v1287 = vpop.f32.mrf.mxu0
      %v1288 = vadd.f32 0.0, %v1287
      %v1289 = vpop.f32.mrf.mxu0
      %v1290 = vadd.f32 0.0, %v1289
      %1291 = vmatmul.bf16.gmra.mxu0 %v741
      %v1292 = vpop.f32.mrf.mxu0
      %v1293 = vadd.f32 0.0, %v1292
      %v1294 = vpop.f32.mrf.mxu0
      %v1295 = vadd.f32 0.0, %v1294
      %1296 = vmatmul.bf16.gmra.mxu0 %v744
      %v1297 = vpop.f32.mrf.mxu0
      %v1298 = vadd.f32 0.0, %v1297
      %v1299 = vpop.f32.mrf.mxu0
      %v1300 = vadd.f32 0.0, %v1299
      %1301 = vmatmul.bf16.gmra.mxu0 %v747
      %v1302 = vpop.f32.mrf.mxu0
      %v1303 = vadd.f32 0.0, %v1302
      %v1304 = vpop.f32.mrf.mxu0
      %v1305 = vadd.f32 0.0, %v1304
      %1306 = vmatmul.bf16.gmra.mxu0 %v750
      %v1307 = vpop.f32.mrf.mxu0
      %v1308 = vadd.f32 0.0, %v1307
      %v1309 = vpop.f32.mrf.mxu0
      %v1310 = vadd.f32 0.0, %v1309
      %1311 = vmatmul.bf16.gmra.mxu0 %v753
      %v1312 = vpop.f32.mrf.mxu0
      %v1313 = vadd.f32 0.0, %v1312
      %v1314 = vpop.f32.mrf.mxu0
      %v1315 = vadd.f32 0.0, %v1314
      %1316 = vmatmul.bf16.gmra.mxu0 %v1228
      %v1317 = vpop.f32.mrf.mxu0
      %v1318 = vadd.f32 0.0, %v1317
      %v1319 = vpop.f32.mrf.mxu0
      %v1320 = vadd.f32 0.0, %v1319
      %1321 = vdwg.mxu0
      %v1322 = vadd.f32 %v1168, %v1243
      %v1323 = vadd.f32 %v1169, %v1245
      %v1324 = vadd.f32 %v1170, %v1248
      %v1325 = vadd.f32 %v1171, %v1250
      %v1326 = vadd.f32 %v1172, %v1253
      %v1327 = vadd.f32 %v1173, %v1255
      %v1328 = vadd.f32 %v1174, %v1258
      %v1329 = vadd.f32 %v1175, %v1260
      %v1330 = vadd.f32 %v1176, %v1263
      %v1331 = vadd.f32 %v1177, %v1265
      %v1332 = vadd.f32 %v1178, %v1268
      %v1333 = vadd.f32 %v1179, %v1270
      %v1334 = vadd.f32 %v1180, %v1273
      %v1335 = vadd.f32 %v1181, %v1275
      %v1336 = vadd.f32 %v1182, %v1278
      %v1337 = vadd.f32 %v1183, %v1280
      %v1338 = vadd.f32 %v1184, %v1283
      %v1339 = vadd.f32 %v1185, %v1285
      %v1340 = vadd.f32 %v1186, %v1288
      %v1341 = vadd.f32 %v1187, %v1290
      %v1342 = vadd.f32 %v1188, %v1293
      %v1343 = vadd.f32 %v1189, %v1295
      %v1344 = vadd.f32 %v1190, %v1298
      %v1345 = vadd.f32 %v1191, %v1300
      %v1346 = vadd.f32 %v1192, %v1303
      %v1347 = vadd.f32 %v1193, %v1305
      %v1348 = vadd.f32 %v1194, %v1308
      %v1349 = vadd.f32 %v1195, %v1310
      %v1350 = vadd.f32 %v1196, %v1313
      %v1351 = vadd.f32 %v1197, %v1315
      %v1352 = vadd.f32 %v1198, %v1318
      %v1353 = vadd.f32 %v1199, %v1320
      %v1355 = vperm.slane %v269, 0
      %v1357 = vmul.f32 %v1322, %v1355
      %v1358 = vmul.f32 %v1323, %v1355
      %v1359 = vmul.f32 %v1324, %v1355
      %v1360 = vmul.f32 %v1325, %v1355
      %v1361 = vmul.f32 %v1326, %v1355
      %v1362 = vmul.f32 %v1327, %v1355
      %v1363 = vmul.f32 %v1328, %v1355
      %v1364 = vmul.f32 %v1329, %v1355
      %v1365 = vmul.f32 %v1330, %v1355
      %v1366 = vmul.f32 %v1331, %v1355
      %v1367 = vmul.f32 %v1332, %v1355
      %v1368 = vmul.f32 %v1333, %v1355
      %v1369 = vmul.f32 %v1334, %v1355
      %v1370 = vmul.f32 %v1335, %v1355
      %v1371 = vmul.f32 %v1336, %v1355
      %v1372 = vmul.f32 %v1337, %v1355
      %v1373 = vmul.f32 %v1338, %v1355
      %v1374 = vmul.f32 %v1339, %v1355
      %v1375 = vmul.f32 %v1340, %v1355
      %v1376 = vmul.f32 %v1341, %v1355
      %v1377 = vmul.f32 %v1342, %v1355
      %v1378 = vmul.f32 %v1343, %v1355
      %v1379 = vmul.f32 %v1344, %v1355
      %v1380 = vmul.f32 %v1345, %v1355
      %v1381 = vmul.f32 %v1346, %v1355
      %v1382 = vmul.f32 %v1347, %v1355
      %v1383 = vmul.f32 %v1348, %v1355
      %v1384 = vmul.f32 %v1349, %v1355
      %v1385 = vmul.f32 %v1350, %v1355
      %v1386 = vmul.f32 %v1351, %v1355
      %v1387 = vmul.f32 %v1352, %v1355
      %v1388 = vmul.f32 %v1353, %v1355
      %v1390 = vperm.slane %v270, 0
      %v1392 = vadd.f32 %v1357, %v1390
      %v1393 = vadd.f32 %v1358, %v1390
      %v1394 = vadd.f32 %v1359, %v1390
      %v1395 = vadd.f32 %v1360, %v1390
      %v1396 = vadd.f32 %v1361, %v1390
      %v1397 = vadd.f32 %v1362, %v1390
      %v1398 = vadd.f32 %v1363, %v1390
      %v1399 = vadd.f32 %v1364, %v1390
      %v1400 = vadd.f32 %v1365, %v1390
      %v1401 = vadd.f32 %v1366, %v1390
      %v1402 = vadd.f32 %v1367, %v1390
      %v1403 = vadd.f32 %v1368, %v1390
      %v1404 = vadd.f32 %v1369, %v1390
      %v1405 = vadd.f32 %v1370, %v1390
      %v1406 = vadd.f32 %v1371, %v1390
      %v1407 = vadd.f32 %v1372, %v1390
      %v1408 = vadd.f32 %v1373, %v1390
      %v1409 = vadd.f32 %v1374, %v1390
      %v1410 = vadd.f32 %v1375, %v1390
      %v1411 = vadd.f32 %v1376, %v1390
      %v1412 = vadd.f32 %v1377, %v1390
      %v1413 = vadd.f32 %v1378, %v1390
      %v1414 = vadd.f32 %v1379, %v1390
      %v1415 = vadd.f32 %v1380, %v1390
      %v1416 = vadd.f32 %v1381, %v1390
      %v1417 = vadd.f32 %v1382, %v1390
      %v1418 = vadd.f32 %v1383, %v1390
      %v1419 = vadd.f32 %v1384, %v1390
      %v1420 = vadd.f32 %v1385, %v1390
      %v1421 = vadd.f32 %v1386, %v1390
      %v1422 = vadd.f32 %v1387, %v1390
      %v1423 = vadd.f32 %v1388, %v1390
      %1424 = vst [vmem:[%s197] sm:$0xff] %v1392
      %1425 = vst [vmem:[%s197 + $0x10] sm:$0xff] %v1393
      %1426 = vst [vmem:[%s197 + $0x40] sm:$0xff] %v1394
      %1427 = vst [vmem:[%s197 + $0x50] sm:$0xff] %v1395
      %1428 = vst [vmem:[%s197 + $0x80] sm:$0xff] %v1396
      %1429 = vst [vmem:[%s197 + $0x90] sm:$0xff] %v1397
      %1430 = vst [vmem:[%s197 + $0xc0] sm:$0xff] %v1398
      %1431 = vst [vmem:[%s197 + $0xd0] sm:$0xff] %v1399
      %1432 = vst [vmem:[%s197 + $0x100] sm:$0xff] %v1400
      %1433 = vst [vmem:[%s197 + $0x110] sm:$0xff] %v1401
      %1434 = vst [vmem:[%s197 + $0x140] sm:$0xff] %v1402
      %1435 = vst [vmem:[%s197 + $0x150] sm:$0xff] %v1403
      %1436 = vst [vmem:[%s197 + $0x180] sm:$0xff] %v1404
      %1437 = vst [vmem:[%s197 + $0x190] sm:$0xff] %v1405
      %1438 = vst [vmem:[%s197 + $0x1c0] sm:$0xff] %v1406
      %1439 = vst [vmem:[%s197 + $0x1d0] sm:$0xff] %v1407
      %1440 = vst [vmem:[%s197 + $0x200] sm:$0xff] %v1408
      %1441 = vst [vmem:[%s197 + $0x210] sm:$0xff] %v1409
      %1442 = vst [vmem:[%s197 + $0x240] sm:$0xff] %v1410
      %1443 = vst [vmem:[%s197 + $0x250] sm:$0xff] %v1411
      %1444 = vst [vmem:[%s197 + $0x280] sm:$0xff] %v1412
      %1445 = vst [vmem:[%s197 + $0x290] sm:$0xff] %v1413
      %1446 = vst [vmem:[%s197 + $0x2c0] sm:$0xff] %v1414
      %1447 = vst [vmem:[%s197 + $0x2d0] sm:$0xff] %v1415
      %1448 = vst [vmem:[%s197 + $0x300] sm:$0xff] %v1416
      %1449 = vst [vmem:[%s197 + $0x310] sm:$0xff] %v1417
      %1450 = vst [vmem:[%s197 + $0x340] sm:$0xff] %v1418
      %1451 = vst [vmem:[%s197 + $0x350] sm:$0xff] %v1419
      %1452 = vst [vmem:[%s197 + $0x380] sm:$0xff] %v1420
      %1453 = vst [vmem:[%s197 + $0x390] sm:$0xff] %v1421
      %1454 = vst [vmem:[%s197 + $0x3c0] sm:$0xff] %v1422
      %1455 = vst [vmem:[%s197 + $0x3d0] sm:$0xff] %v1423
      %vm1472 = vcmask 1042432
      %vm1473 = vcmask 1046532
      %vm1474 = vmor %vm1472, %vm1473
      %v1475 = vrot.slane %v199, 5
      %v1476 = vrot.slane %v1475, 4
      %v1477 = vrot.slane %v200, 5
      %v1478 = vsel %vm1474, %v1476, %v1477
      %v1479 = vrot.slane %v1477, 4
      %v1480 = vrot.slane %v201, 5
      %v1481 = vsel %vm1474, %v1479, %v1480
      %v1482 = vrot.slane %v202, 5
      %v1483 = vrot.slane %v1482, 4
      %v1484 = vrot.slane %v203, 5
      %v1485 = vsel %vm1474, %v1483, %v1484
      %v1486 = vrot.slane %v1484, 4
      %v1487 = vrot.slane %v204, 5
      %v1488 = vsel %vm1474, %v1486, %v1487
      %v1489 = vrot.slane %v205, 5
      %v1490 = vrot.slane %v1489, 4
      %v1491 = vrot.slane %v206, 5
      %v1492 = vsel %vm1474, %v1490, %v1491
      %v1493 = vrot.slane %v1491, 4
      %v1494 = vrot.slane %v207, 5
      %v1495 = vsel %vm1474, %v1493, %v1494
      %v1496 = vrot.slane %v208, 5
      %v1497 = vrot.slane %v1496, 4
      %v1498 = vrot.slane %v209, 5
      %v1499 = vsel %vm1474, %v1497, %v1498
      %v1500 = vrot.slane %v1498, 4
      %v1501 = vrot.slane %v210, 5
      %v1502 = vsel %vm1474, %v1500, %v1501
      %v1503 = vrot.slane %v211, 5
      %v1504 = vrot.slane %v1503, 4
      %v1505 = vrot.slane %v212, 5
      %v1506 = vsel %vm1474, %v1504, %v1505
      %v1507 = vrot.slane %v1505, 4
      %v1508 = vrot.slane %v213, 5
      %v1509 = vsel %vm1474, %v1507, %v1508
      %v1510 = vrot.slane %v214, 5
      %v1511 = vrot.slane %v1510, 4
      %v1512 = vrot.slane %v215, 5
      %v1513 = vsel %vm1474, %v1511, %v1512
      %v1514 = vrot.slane %v1512, 4
      %v1515 = vrot.slane %v216, 5
      %v1516 = vsel %vm1474, %v1514, %v1515
      %v1517 = vrot.slane %v217, 5
      %v1518 = vrot.slane %v1517, 4
      %v1519 = vrot.slane %v218, 5
      %v1520 = vsel %vm1474, %v1518, %v1519
      %v1521 = vrot.slane %v1519, 4
      %v1522 = vrot.slane %v219, 5
      %v1523 = vsel %vm1474, %v1521, %v1522
      %v1524 = vrot.slane %v220, 5
      %v1525 = vrot.slane %v1524, 4
      %v1526 = vrot.slane %v221, 5
      %v1527 = vsel %vm1474, %v1525, %v1526
      %v1528 = vrot.slane %v1526, 4
      %v1529 = vrot.slane %v222, 5
      %v1530 = vsel %vm1474, %v1528, %v1529
      %v1531 = vrot.slane %v223, 5
      %v1532 = vrot.slane %v1531, 4
      %v1533 = vrot.slane %v224, 5
      %v1534 = vsel %vm1474, %v1532, %v1533
      %v1535 = vrot.slane %v1533, 4
      %v1536 = vrot.slane %v225, 5
      %v1537 = vsel %vm1474, %v1535, %v1536
      %v1538 = vrot.slane %v226, 5
      %v1539 = vrot.slane %v1538, 4
      %v1540 = vrot.slane %v227, 5
      %v1541 = vsel %vm1474, %v1539, %v1540
      %v1542 = vrot.slane %v1540, 4
      %v1543 = vrot.slane %v228, 5
      %v1544 = vsel %vm1474, %v1542, %v1543
      %v1545 = vrot.slane %v229, 5
      %v1546 = vrot.slane %v1545, 4
      %v1547 = vrot.slane %v230, 5
      %v1548 = vsel %vm1474, %v1546, %v1547
      %v1549 = vrot.slane %v1547, 4
      %v1550 = vrot.slane %v231, 5
      %v1551 = vsel %vm1474, %v1549, %v1550
      %v1552 = vrot.slane %v232, 5
      %v1553 = vrot.slane %v1552, 4
      %v1554 = vrot.slane %v233, 5
      %v1555 = vsel %vm1474, %v1553, %v1554
      %v1556 = vrot.slane %v1554, 4
      %v1557 = vrot.slane %v234, 5
      %v1558 = vsel %vm1474, %v1556, %v1557
      %v1559 = vrot.slane %v235, 5
      %v1560 = vrot.slane %v1559, 4
      %v1561 = vrot.slane %v236, 5
      %v1562 = vsel %vm1474, %v1560, %v1561
      %v1563 = vrot.slane %v1561, 4
      %v1564 = vrot.slane %v237, 5
      %v1565 = vsel %vm1474, %v1563, %v1564
      %v1566 = vrot.slane %v238, 5
      %v1567 = vrot.slane %v1566, 4
      %v1568 = vrot.slane %v239, 5
      %v1569 = vsel %vm1474, %v1567, %v1568
      %v1570 = vrot.slane %v1568, 4
      %v1571 = vrot.slane %v240, 5
      %v1572 = vsel %vm1474, %v1570, %v1571
      %v1573 = vrot.slane %v241, 5
      %v1574 = vrot.slane %v1573, 4
      %v1575 = vrot.slane %v242, 5
      %v1576 = vsel %vm1474, %v1574, %v1575
      %v1577 = vrot.slane %v1575, 4
      %v1578 = vrot.slane %v243, 5
      %v1579 = vsel %vm1474, %v1577, %v1578
      %v1580 = vrot.slane %v244, 5
      %v1581 = vrot.slane %v1580, 4
      %v1582 = vrot.slane %v245, 5
      %v1583 = vsel %vm1474, %v1581, %v1582
      %v1584 = vrot.slane %v1582, 4
      %v1585 = vrot.slane %v246, 5
      %v1586 = vsel %vm1474, %v1584, %v1585
      %v1587 = vunpack.c.l.b16 %v1478
      %v1588 = vunpack.c.l.b16 %v1481
      %v1589 = vunpack.c.l.b16 %v1485
      %v1590 = vunpack.c.l.b16 %v1488
      %v1591 = vunpack.c.l.b16 %v1492
      %v1592 = vunpack.c.l.b16 %v1495
      %v1593 = vunpack.c.l.b16 %v1499
      %v1594 = vunpack.c.l.b16 %v1502
      %v1595 = vunpack.c.l.b16 %v1506
      %v1596 = vunpack.c.l.b16 %v1509
      %v1597 = vunpack.c.l.b16 %v1513
      %v1598 = vunpack.c.l.b16 %v1516
      %v1599 = vunpack.c.l.b16 %v1520
      %v1600 = vunpack.c.l.b16 %v1523
      %v1601 = vunpack.c.l.b16 %v1527
      %v1602 = vunpack.c.l.b16 %v1530
      %v1603 = vunpack.c.l.b16 %v1534
      %v1604 = vunpack.c.l.b16 %v1537
      %v1605 = vunpack.c.l.b16 %v1541
      %v1606 = vunpack.c.l.b16 %v1544
      %v1607 = vunpack.c.l.b16 %v1548
      %v1608 = vunpack.c.l.b16 %v1551
      %v1609 = vunpack.c.l.b16 %v1555
      %v1610 = vunpack.c.l.b16 %v1558
      %v1611 = vunpack.c.l.b16 %v1562
      %v1612 = vunpack.c.l.b16 %v1565
      %v1613 = vunpack.c.l.b16 %v1569
      %v1614 = vunpack.c.l.b16 %v1572
      %v1615 = vunpack.c.l.b16 %v1576
      %v1616 = vunpack.c.l.b16 %v1579
      %v1617 = vunpack.c.l.b16 %v1583
      %v1618 = vunpack.c.l.b16 %v1586
      %v1619 = vpack.c.b16 %v1588, %v1587
      %v1620 = vpack.c.b16 %v1590, %v1589
      %v1621 = vpack.c.b16 %v1592, %v1591
      %v1622 = vpack.c.b16 %v1594, %v1593
      %v1623 = vpack.c.b16 %v1596, %v1595
      %v1624 = vpack.c.b16 %v1598, %v1597
      %v1625 = vpack.c.b16 %v1600, %v1599
      %v1626 = vpack.c.b16 %v1602, %v1601
      %v1627 = vpack.c.b16 %v1604, %v1603
      %v1628 = vpack.c.b16 %v1606, %v1605
      %v1629 = vpack.c.b16 %v1608, %v1607
      %v1630 = vpack.c.b16 %v1610, %v1609
      %v1631 = vpack.c.b16 %v1612, %v1611
      %v1632 = vpack.c.b16 %v1614, %v1613
      %v1633 = vpack.c.b16 %v1616, %v1615
      %v1634 = vpack.c.b16 %v1618, %v1617
      %v1636 = vsel %vm706, %v1619, 0
      %v1639 = vsel %vm706, %v1620, 0
      %v1642 = vsel %vm706, %v1621, 0
      %v1645 = vsel %vm706, %v1622, 0
      %v1648 = vsel %vm706, %v1623, 0
      %v1651 = vsel %vm706, %v1624, 0
      %v1654 = vsel %vm706, %v1625, 0
      %v1657 = vsel %vm706, %v1626, 0
      %v1660 = vsel %vm706, %v1627, 0
      %v1663 = vsel %vm706, %v1628, 0
      %v1666 = vsel %vm706, %v1629, 0
      %v1669 = vsel %vm706, %v1630, 0
      %v1672 = vsel %vm706, %v1631, 0
      %v1675 = vsel %vm706, %v1632, 0
      %v1678 = vsel %vm706, %v1633, 0
      %v1681 = vsel %vm706, %v1634, 0
      %v1684 = vsel %vm755, %v258, 0
      %1686 = vmatpush.bf16.msra.mxu0 0
      %1687 = vmatpush.bf16.msra.mxu0 0
      %1688 = vmatpush.bf16.msra.mxu0 0
      %1689 = vmatpush.bf16.msra.mxu0 0
      %1690 = vmatpush.bf16.msra.mxu0 0
      %1691 = vmatpush.bf16.msra.mxu0 0
      %1692 = vmatpush.bf16.msra.mxu0 0
      %1693 = vmatpush.bf16.msra.mxu0 %v1684
      %1694 = vmatmul.bf16.gmra.mxu0 %v1636
      %v1695 = vpop.f32.mrf.mxu0
      %v1696 = vadd.f32 0.0, %v1695
      %v1697 = vpop.f32.mrf.mxu0
      %v1698 = vadd.f32 0.0, %v1697
      %1699 = vmatmul.bf16.gmra.mxu0 %v1639
      %v1700 = vpop.f32.mrf.mxu0
      %v1701 = vadd.f32 0.0, %v1700
      %v1702 = vpop.f32.mrf.mxu0
      %v1703 = vadd.f32 0.0, %v1702
      %1704 = vmatmul.bf16.gmra.mxu0 %v1642
      %v1705 = vpop.f32.mrf.mxu0
      %v1706 = vadd.f32 0.0, %v1705
      %v1707 = vpop.f32.mrf.mxu0
      %v1708 = vadd.f32 0.0, %v1707
      %1709 = vmatmul.bf16.gmra.mxu0 %v1645
      %v1710 = vpop.f32.mrf.mxu0
      %v1711 = vadd.f32 0.0, %v1710
      %v1712 = vpop.f32.mrf.mxu0
      %v1713 = vadd.f32 0.0, %v1712
      %1714 = vmatmul.bf16.gmra.mxu0 %v1648
      %v1715 = vpop.f32.mrf.mxu0
      %v1716 = vadd.f32 0.0, %v1715
      %v1717 = vpop.f32.mrf.mxu0
      %v1718 = vadd.f32 0.0, %v1717
      %1719 = vmatmul.bf16.gmra.mxu0 %v1651
      %v1720 = vpop.f32.mrf.mxu0
      %v1721 = vadd.f32 0.0, %v1720
      %v1722 = vpop.f32.mrf.mxu0
      %v1723 = vadd.f32 0.0, %v1722
      %1724 = vmatmul.bf16.gmra.mxu0 %v1654
      %v1725 = vpop.f32.mrf.mxu0
      %v1726 = vadd.f32 0.0, %v1725
      %v1727 = vpop.f32.mrf.mxu0
      %v1728 = vadd.f32 0.0, %v1727
      %1729 = vmatmul.bf16.gmra.mxu0 %v1657
      %v1730 = vpop.f32.mrf.mxu0
      %v1731 = vadd.f32 0.0, %v1730
      %v1732 = vpop.f32.mrf.mxu0
      %v1733 = vadd.f32 0.0, %v1732
      %1734 = vmatmul.bf16.gmra.mxu0 %v1660
      %v1735 = vpop.f32.mrf.mxu0
      %v1736 = vadd.f32 0.0, %v1735
      %v1737 = vpop.f32.mrf.mxu0
      %v1738 = vadd.f32 0.0, %v1737
      %1739 = vmatmul.bf16.gmra.mxu0 %v1663
      %v1740 = vpop.f32.mrf.mxu0
      %v1741 = vadd.f32 0.0, %v1740
      %v1742 = vpop.f32.mrf.mxu0
      %v1743 = vadd.f32 0.0, %v1742
      %1744 = vmatmul.bf16.gmra.mxu0 %v1666
      %v1745 = vpop.f32.mrf.mxu0
      %v1746 = vadd.f32 0.0, %v1745
      %v1747 = vpop.f32.mrf.mxu0
      %v1748 = vadd.f32 0.0, %v1747
      %1749 = vmatmul.bf16.gmra.mxu0 %v1669
      %v1750 = vpop.f32.mrf.mxu0
      %v1751 = vadd.f32 0.0, %v1750
      %v1752 = vpop.f32.mrf.mxu0
      %v1753 = vadd.f32 0.0, %v1752
      %1754 = vmatmul.bf16.gmra.mxu0 %v1672
      %v1755 = vpop.f32.mrf.mxu0
      %v1756 = vadd.f32 0.0, %v1755
      %v1757 = vpop.f32.mrf.mxu0
      %v1758 = vadd.f32 0.0, %v1757
      %1759 = vmatmul.bf16.gmra.mxu0 %v1675
      %v1760 = vpop.f32.mrf.mxu0
      %v1761 = vadd.f32 0.0, %v1760
      %v1762 = vpop.f32.mrf.mxu0
      %v1763 = vadd.f32 0.0, %v1762
      %1764 = vmatmul.bf16.gmra.mxu0 %v1678
      %v1765 = vpop.f32.mrf.mxu0
      %v1766 = vadd.f32 0.0, %v1765
      %v1767 = vpop.f32.mrf.mxu0
      %v1768 = vadd.f32 0.0, %v1767
      %1769 = vmatmul.bf16.gmra.mxu0 %v1681
      %v1770 = vpop.f32.mrf.mxu0
      %v1771 = vadd.f32 0.0, %v1770
      %v1772 = vpop.f32.mrf.mxu0
      %v1773 = vadd.f32 0.0, %v1772
      %1774 = vdwg.mxu0
      %v1776 = vsel %vm755, %v257, 0
      %1778 = vmatpush.bf16.msra.mxu0 0
      %1779 = vmatpush.bf16.msra.mxu0 0
      %1780 = vmatpush.bf16.msra.mxu0 0
      %1781 = vmatpush.bf16.msra.mxu0 0
      %1782 = vmatpush.bf16.msra.mxu0 0
      %1783 = vmatpush.bf16.msra.mxu0 0
      %1784 = vmatpush.bf16.msra.mxu0 0
      %1785 = vmatpush.bf16.msra.mxu0 %v1776
      %1786 = vmatmul.bf16.gmra.mxu0 %v708
      %v1787 = vpop.f32.mrf.mxu0
      %v1788 = vadd.f32 %v1696, %v1787
      %v1789 = vpop.f32.mrf.mxu0
      %v1790 = vadd.f32 %v1698, %v1789
      %1791 = vmatmul.bf16.gmra.mxu0 %v711
      %v1792 = vpop.f32.mrf.mxu0
      %v1793 = vadd.f32 %v1701, %v1792
      %v1794 = vpop.f32.mrf.mxu0
      %v1795 = vadd.f32 %v1703, %v1794
      %1796 = vmatmul.bf16.gmra.mxu0 %v714
      %v1797 = vpop.f32.mrf.mxu0
      %v1798 = vadd.f32 %v1706, %v1797
      %v1799 = vpop.f32.mrf.mxu0
      %v1800 = vadd.f32 %v1708, %v1799
      %1801 = vmatmul.bf16.gmra.mxu0 %v717
      %v1802 = vpop.f32.mrf.mxu0
      %v1803 = vadd.f32 %v1711, %v1802
      %v1804 = vpop.f32.mrf.mxu0
      %v1805 = vadd.f32 %v1713, %v1804
      %1806 = vmatmul.bf16.gmra.mxu0 %v720
      %v1807 = vpop.f32.mrf.mxu0
      %v1808 = vadd.f32 %v1716, %v1807
      %v1809 = vpop.f32.mrf.mxu0
      %v1810 = vadd.f32 %v1718, %v1809
      %1811 = vmatmul.bf16.gmra.mxu0 %v723
      %v1812 = vpop.f32.mrf.mxu0
      %v1813 = vadd.f32 %v1721, %v1812
      %v1814 = vpop.f32.mrf.mxu0
      %v1815 = vadd.f32 %v1723, %v1814
      %1816 = vmatmul.bf16.gmra.mxu0 %v726
      %v1817 = vpop.f32.mrf.mxu0
      %v1818 = vadd.f32 %v1726, %v1817
      %v1819 = vpop.f32.mrf.mxu0
      %v1820 = vadd.f32 %v1728, %v1819
      %1821 = vmatmul.bf16.gmra.mxu0 %v729
      %v1822 = vpop.f32.mrf.mxu0
      %v1823 = vadd.f32 %v1731, %v1822
      %v1824 = vpop.f32.mrf.mxu0
      %v1825 = vadd.f32 %v1733, %v1824
      %1826 = vmatmul.bf16.gmra.mxu0 %v732
      %v1827 = vpop.f32.mrf.mxu0
      %v1828 = vadd.f32 %v1736, %v1827
      %v1829 = vpop.f32.mrf.mxu0
      %v1830 = vadd.f32 %v1738, %v1829
      %1831 = vmatmul.bf16.gmra.mxu0 %v735
      %v1832 = vpop.f32.mrf.mxu0
      %v1833 = vadd.f32 %v1741, %v1832
      %v1834 = vpop.f32.mrf.mxu0
      %v1835 = vadd.f32 %v1743, %v1834
      %1836 = vmatmul.bf16.gmra.mxu0 %v738
      %v1837 = vpop.f32.mrf.mxu0
      %v1838 = vadd.f32 %v1746, %v1837
      %v1839 = vpop.f32.mrf.mxu0
      %v1840 = vadd.f32 %v1748, %v1839
      %1841 = vmatmul.bf16.gmra.mxu0 %v741
      %v1842 = vpop.f32.mrf.mxu0
      %v1843 = vadd.f32 %v1751, %v1842
      %v1844 = vpop.f32.mrf.mxu0
      %v1845 = vadd.f32 %v1753, %v1844
      %1846 = vmatmul.bf16.gmra.mxu0 %v744
      %v1847 = vpop.f32.mrf.mxu0
      %v1848 = vadd.f32 %v1756, %v1847
      %v1849 = vpop.f32.mrf.mxu0
      %v1850 = vadd.f32 %v1758, %v1849
      %1851 = vmatmul.bf16.gmra.mxu0 %v747
      %v1852 = vpop.f32.mrf.mxu0
      %v1853 = vadd.f32 %v1761, %v1852
      %v1854 = vpop.f32.mrf.mxu0
      %v1855 = vadd.f32 %v1763, %v1854
      %1856 = vmatmul.bf16.gmra.mxu0 %v750
      %v1857 = vpop.f32.mrf.mxu0
      %v1858 = vadd.f32 %v1766, %v1857
      %v1859 = vpop.f32.mrf.mxu0
      %v1860 = vadd.f32 %v1768, %v1859
      %1861 = vmatmul.bf16.gmra.mxu0 %v753
      %v1862 = vpop.f32.mrf.mxu0
      %v1863 = vadd.f32 %v1771, %v1862
      %v1864 = vpop.f32.mrf.mxu0
      %v1865 = vadd.f32 %v1773, %v1864
      %1866 = vdwg.mxu0
      %v1868 = vsel %vm755, %v259, 0
      %1870 = vmatpush.bf16.msra.mxu0 0
      %1871 = vmatpush.bf16.msra.mxu0 0
      %1872 = vmatpush.bf16.msra.mxu0 0
      %1873 = vmatpush.bf16.msra.mxu0 0
      %1874 = vmatpush.bf16.msra.mxu0 0
      %1875 = vmatpush.bf16.msra.mxu0 0
      %1876 = vmatpush.bf16.msra.mxu0 0
      %1877 = vmatpush.bf16.msra.mxu0 %v1868
      %1878 = vmatmul.bf16.gmra.mxu0 %v711
      %v1879 = vpop.f32.mrf.mxu0
      %v1880 = vadd.f32 0.0, %v1879
      %v1881 = vpop.f32.mrf.mxu0
      %v1882 = vadd.f32 0.0, %v1881
      %1883 = vmatmul.bf16.gmra.mxu0 %v714
      %v1884 = vpop.f32.mrf.mxu0
      %v1885 = vadd.f32 0.0, %v1884
      %v1886 = vpop.f32.mrf.mxu0
      %v1887 = vadd.f32 0.0, %v1886
      %1888 = vmatmul.bf16.gmra.mxu0 %v717
      %v1889 = vpop.f32.mrf.mxu0
      %v1890 = vadd.f32 0.0, %v1889
      %v1891 = vpop.f32.mrf.mxu0
      %v1892 = vadd.f32 0.0, %v1891
      %1893 = vmatmul.bf16.gmra.mxu0 %v720
      %v1894 = vpop.f32.mrf.mxu0
      %v1895 = vadd.f32 0.0, %v1894
      %v1896 = vpop.f32.mrf.mxu0
      %v1897 = vadd.f32 0.0, %v1896
      %1898 = vmatmul.bf16.gmra.mxu0 %v723
      %v1899 = vpop.f32.mrf.mxu0
      %v1900 = vadd.f32 0.0, %v1899
      %v1901 = vpop.f32.mrf.mxu0
      %v1902 = vadd.f32 0.0, %v1901
      %1903 = vmatmul.bf16.gmra.mxu0 %v726
      %v1904 = vpop.f32.mrf.mxu0
      %v1905 = vadd.f32 0.0, %v1904
      %v1906 = vpop.f32.mrf.mxu0
      %v1907 = vadd.f32 0.0, %v1906
      %1908 = vmatmul.bf16.gmra.mxu0 %v729
      %v1909 = vpop.f32.mrf.mxu0
      %v1910 = vadd.f32 0.0, %v1909
      %v1911 = vpop.f32.mrf.mxu0
      %v1912 = vadd.f32 0.0, %v1911
      %1913 = vmatmul.bf16.gmra.mxu0 %v732
      %v1914 = vpop.f32.mrf.mxu0
      %v1915 = vadd.f32 0.0, %v1914
      %v1916 = vpop.f32.mrf.mxu0
      %v1917 = vadd.f32 0.0, %v1916
      %1918 = vmatmul.bf16.gmra.mxu0 %v735
      %v1919 = vpop.f32.mrf.mxu0
      %v1920 = vadd.f32 0.0, %v1919
      %v1921 = vpop.f32.mrf.mxu0
      %v1922 = vadd.f32 0.0, %v1921
      %1923 = vmatmul.bf16.gmra.mxu0 %v738
      %v1924 = vpop.f32.mrf.mxu0
      %v1925 = vadd.f32 0.0, %v1924
      %v1926 = vpop.f32.mrf.mxu0
      %v1927 = vadd.f32 0.0, %v1926
      %1928 = vmatmul.bf16.gmra.mxu0 %v741
      %v1929 = vpop.f32.mrf.mxu0
      %v1930 = vadd.f32 0.0, %v1929
      %v1931 = vpop.f32.mrf.mxu0
      %v1932 = vadd.f32 0.0, %v1931
      %1933 = vmatmul.bf16.gmra.mxu0 %v744
      %v1934 = vpop.f32.mrf.mxu0
      %v1935 = vadd.f32 0.0, %v1934
      %v1936 = vpop.f32.mrf.mxu0
      %v1937 = vadd.f32 0.0, %v1936
      %1938 = vmatmul.bf16.gmra.mxu0 %v747
      %v1939 = vpop.f32.mrf.mxu0
      %v1940 = vadd.f32 0.0, %v1939
      %v1941 = vpop.f32.mrf.mxu0
      %v1942 = vadd.f32 0.0, %v1941
      %1943 = vmatmul.bf16.gmra.mxu0 %v750
      %v1944 = vpop.f32.mrf.mxu0
      %v1945 = vadd.f32 0.0, %v1944
      %v1946 = vpop.f32.mrf.mxu0
      %v1947 = vadd.f32 0.0, %v1946
      %1948 = vmatmul.bf16.gmra.mxu0 %v753
      %v1949 = vpop.f32.mrf.mxu0
      %v1950 = vadd.f32 0.0, %v1949
      %v1951 = vpop.f32.mrf.mxu0
      %v1952 = vadd.f32 0.0, %v1951
      %1953 = vmatmul.bf16.gmra.mxu0 %v1228
      %v1954 = vpop.f32.mrf.mxu0
      %v1955 = vadd.f32 0.0, %v1954
      %v1956 = vpop.f32.mrf.mxu0
      %v1957 = vadd.f32 0.0, %v1956
      %1958 = vdwg.mxu0
      %v1959 = vadd.f32 %v1788, %v1880
      %v1960 = vadd.f32 %v1790, %v1882
      %v1961 = vadd.f32 %v1793, %v1885
      %v1962 = vadd.f32 %v1795, %v1887
      %v1963 = vadd.f32 %v1798, %v1890
      %v1964 = vadd.f32 %v1800, %v1892
      %v1965 = vadd.f32 %v1803, %v1895
      %v1966 = vadd.f32 %v1805, %v1897
      %v1967 = vadd.f32 %v1808, %v1900
      %v1968 = vadd.f32 %v1810, %v1902
      %v1969 = vadd.f32 %v1813, %v1905
      %v1970 = vadd.f32 %v1815, %v1907
      %v1971 = vadd.f32 %v1818, %v1910
      %v1972 = vadd.f32 %v1820, %v1912
      %v1973 = vadd.f32 %v1823, %v1915
      %v1974 = vadd.f32 %v1825, %v1917
      %v1975 = vadd.f32 %v1828, %v1920
      %v1976 = vadd.f32 %v1830, %v1922
      %v1977 = vadd.f32 %v1833, %v1925
      %v1978 = vadd.f32 %v1835, %v1927
      %v1979 = vadd.f32 %v1838, %v1930
      %v1980 = vadd.f32 %v1840, %v1932
      %v1981 = vadd.f32 %v1843, %v1935
      %v1982 = vadd.f32 %v1845, %v1937
      %v1983 = vadd.f32 %v1848, %v1940
      %v1984 = vadd.f32 %v1850, %v1942
      %v1985 = vadd.f32 %v1853, %v1945
      %v1986 = vadd.f32 %v1855, %v1947
      %v1987 = vadd.f32 %v1858, %v1950
      %v1988 = vadd.f32 %v1860, %v1952
      %v1989 = vadd.f32 %v1863, %v1955
      %v1990 = vadd.f32 %v1865, %v1957
      %v1992 = vrot.slane %v247, 5
      %v1993 = vrot.slane %v1992, 4
      %v1994 = vrot.slane %v248, 5
      %v1995 = vsel %vm1474, %v1993, %v1994
      %v1996 = vrot.slane %v1994, 4
      %v1997 = vrot.slane %v249, 5
      %v1998 = vsel %vm1474, %v1996, %v1997
      %v1999 = vunpack.c.l.b16 %v1995
      %v2000 = vunpack.c.l.b16 %v1998
      %v2001 = vpack.c.b16 %v2000, %v1999
      %v2003 = vsel %vm706, %v2001, 0
      %v2006 = vsel %vm755, %v260, 0
      %2008 = vmatpush.bf16.msra.mxu0 0
      %2009 = vmatpush.bf16.msra.mxu0 0
      %2010 = vmatpush.bf16.msra.mxu0 0
      %2011 = vmatpush.bf16.msra.mxu0 0
      %2012 = vmatpush.bf16.msra.mxu0 0
      %2013 = vmatpush.bf16.msra.mxu0 0
      %2014 = vmatpush.bf16.msra.mxu0 0
      %2015 = vmatpush.bf16.msra.mxu0 %v2006
      %2016 = vmatmul.bf16.gmra.mxu0 %v1639
      %v2017 = vpop.f32.mrf.mxu0
      %v2018 = vadd.f32 0.0, %v2017
      %v2019 = vpop.f32.mrf.mxu0
      %v2020 = vadd.f32 0.0, %v2019
      %2021 = vmatmul.bf16.gmra.mxu0 %v1642
      %v2022 = vpop.f32.mrf.mxu0
      %v2023 = vadd.f32 0.0, %v2022
      %v2024 = vpop.f32.mrf.mxu0
      %v2025 = vadd.f32 0.0, %v2024
      %2026 = vmatmul.bf16.gmra.mxu0 %v1645
      %v2027 = vpop.f32.mrf.mxu0
      %v2028 = vadd.f32 0.0, %v2027
      %v2029 = vpop.f32.mrf.mxu0
      %v2030 = vadd.f32 0.0, %v2029
      %2031 = vmatmul.bf16.gmra.mxu0 %v1648
      %v2032 = vpop.f32.mrf.mxu0
      %v2033 = vadd.f32 0.0, %v2032
      %v2034 = vpop.f32.mrf.mxu0
      %v2035 = vadd.f32 0.0, %v2034
      %2036 = vmatmul.bf16.gmra.mxu0 %v1651
      %v2037 = vpop.f32.mrf.mxu0
      %v2038 = vadd.f32 0.0, %v2037
      %v2039 = vpop.f32.mrf.mxu0
      %v2040 = vadd.f32 0.0, %v2039
      %2041 = vmatmul.bf16.gmra.mxu0 %v1654
      %v2042 = vpop.f32.mrf.mxu0
      %v2043 = vadd.f32 0.0, %v2042
      %v2044 = vpop.f32.mrf.mxu0
      %v2045 = vadd.f32 0.0, %v2044
      %2046 = vmatmul.bf16.gmra.mxu0 %v1657
      %v2047 = vpop.f32.mrf.mxu0
      %v2048 = vadd.f32 0.0, %v2047
      %v2049 = vpop.f32.mrf.mxu0
      %v2050 = vadd.f32 0.0, %v2049
      %2051 = vmatmul.bf16.gmra.mxu0 %v1660
      %v2052 = vpop.f32.mrf.mxu0
      %v2053 = vadd.f32 0.0, %v2052
      %v2054 = vpop.f32.mrf.mxu0
      %v2055 = vadd.f32 0.0, %v2054
      %2056 = vmatmul.bf16.gmra.mxu0 %v1663
      %v2057 = vpop.f32.mrf.mxu0
      %v2058 = vadd.f32 0.0, %v2057
      %v2059 = vpop.f32.mrf.mxu0
      %v2060 = vadd.f32 0.0, %v2059
      %2061 = vmatmul.bf16.gmra.mxu0 %v1666
      %v2062 = vpop.f32.mrf.mxu0
      %v2063 = vadd.f32 0.0, %v2062
      %v2064 = vpop.f32.mrf.mxu0
      %v2065 = vadd.f32 0.0, %v2064
      %2066 = vmatmul.bf16.gmra.mxu0 %v1669
      %v2067 = vpop.f32.mrf.mxu0
      %v2068 = vadd.f32 0.0, %v2067
      %v2069 = vpop.f32.mrf.mxu0
      %v2070 = vadd.f32 0.0, %v2069
      %2071 = vmatmul.bf16.gmra.mxu0 %v1672
      %v2072 = vpop.f32.mrf.mxu0
      %v2073 = vadd.f32 0.0, %v2072
      %v2074 = vpop.f32.mrf.mxu0
      %v2075 = vadd.f32 0.0, %v2074
      %2076 = vmatmul.bf16.gmra.mxu0 %v1675
      %v2077 = vpop.f32.mrf.mxu0
      %v2078 = vadd.f32 0.0, %v2077
      %v2079 = vpop.f32.mrf.mxu0
      %v2080 = vadd.f32 0.0, %v2079
      %2081 = vmatmul.bf16.gmra.mxu0 %v1678
      %v2082 = vpop.f32.mrf.mxu0
      %v2083 = vadd.f32 0.0, %v2082
      %v2084 = vpop.f32.mrf.mxu0
      %v2085 = vadd.f32 0.0, %v2084
      %2086 = vmatmul.bf16.gmra.mxu0 %v1681
      %v2087 = vpop.f32.mrf.mxu0
      %v2088 = vadd.f32 0.0, %v2087
      %v2089 = vpop.f32.mrf.mxu0
      %v2090 = vadd.f32 0.0, %v2089
      %2091 = vmatmul.bf16.gmra.mxu0 %v2003
      %v2092 = vpop.f32.mrf.mxu0
      %v2093 = vadd.f32 0.0, %v2092
      %v2094 = vpop.f32.mrf.mxu0
      %v2095 = vadd.f32 0.0, %v2094
      %2096 = vdwg.mxu0
      %v2097 = vadd.f32 %v1959, %v2018
      %v2098 = vadd.f32 %v1960, %v2020
      %v2099 = vadd.f32 %v1961, %v2023
      %v2100 = vadd.f32 %v1962, %v2025
      %v2101 = vadd.f32 %v1963, %v2028
      %v2102 = vadd.f32 %v1964, %v2030
      %v2103 = vadd.f32 %v1965, %v2033
      %v2104 = vadd.f32 %v1966, %v2035
      %v2105 = vadd.f32 %v1967, %v2038
      %v2106 = vadd.f32 %v1968, %v2040
      %v2107 = vadd.f32 %v1969, %v2043
      %v2108 = vadd.f32 %v1970, %v2045
      %v2109 = vadd.f32 %v1971, %v2048
      %v2110 = vadd.f32 %v1972, %v2050
      %v2111 = vadd.f32 %v1973, %v2053
      %v2112 = vadd.f32 %v1974, %v2055
      %v2113 = vadd.f32 %v1975, %v2058
      %v2114 = vadd.f32 %v1976, %v2060
      %v2115 = vadd.f32 %v1977, %v2063
      %v2116 = vadd.f32 %v1978, %v2065
      %v2117 = vadd.f32 %v1979, %v2068
      %v2118 = vadd.f32 %v1980, %v2070
      %v2119 = vadd.f32 %v1981, %v2073
      %v2120 = vadd.f32 %v1982, %v2075
      %v2121 = vadd.f32 %v1983, %v2078
      %v2122 = vadd.f32 %v1984, %v2080
      %v2123 = vadd.f32 %v1985, %v2083
      %v2124 = vadd.f32 %v1986, %v2085
      %v2125 = vadd.f32 %v1987, %v2088
      %v2126 = vadd.f32 %v1988, %v2090
      %v2127 = vadd.f32 %v1989, %v2093
      %v2128 = vadd.f32 %v1990, %v2095
      %v2129 = vmul.f32 %v2097, %v1355
      %v2130 = vmul.f32 %v2098, %v1355
      %v2131 = vmul.f32 %v2099, %v1355
      %v2132 = vmul.f32 %v2100, %v1355
      %v2133 = vmul.f32 %v2101, %v1355
      %v2134 = vmul.f32 %v2102, %v1355
      %v2135 = vmul.f32 %v2103, %v1355
      %v2136 = vmul.f32 %v2104, %v1355
      %v2137 = vmul.f32 %v2105, %v1355
      %v2138 = vmul.f32 %v2106, %v1355
      %v2139 = vmul.f32 %v2107, %v1355
      %v2140 = vmul.f32 %v2108, %v1355
      %v2141 = vmul.f32 %v2109, %v1355
      %v2142 = vmul.f32 %v2110, %v1355
      %v2143 = vmul.f32 %v2111, %v1355
      %v2144 = vmul.f32 %v2112, %v1355
      %v2145 = vmul.f32 %v2113, %v1355
      %v2146 = vmul.f32 %v2114, %v1355
      %v2147 = vmul.f32 %v2115, %v1355
      %v2148 = vmul.f32 %v2116, %v1355
      %v2149 = vmul.f32 %v2117, %v1355
      %v2150 = vmul.f32 %v2118, %v1355
      %v2151 = vmul.f32 %v2119, %v1355
      %v2152 = vmul.f32 %v2120, %v1355
      %v2153 = vmul.f32 %v2121, %v1355
      %v2154 = vmul.f32 %v2122, %v1355
      %v2155 = vmul.f32 %v2123, %v1355
      %v2156 = vmul.f32 %v2124, %v1355
      %v2157 = vmul.f32 %v2125, %v1355
      %v2158 = vmul.f32 %v2126, %v1355
      %v2159 = vmul.f32 %v2127, %v1355
      %v2160 = vmul.f32 %v2128, %v1355
      %v2161 = vadd.f32 %v2129, %v1390
      %v2162 = vadd.f32 %v2130, %v1390
      %v2163 = vadd.f32 %v2131, %v1390
      %v2164 = vadd.f32 %v2132, %v1390
      %v2165 = vadd.f32 %v2133, %v1390
      %v2166 = vadd.f32 %v2134, %v1390
      %v2167 = vadd.f32 %v2135, %v1390
      %v2168 = vadd.f32 %v2136, %v1390
      %v2169 = vadd.f32 %v2137, %v1390
      %v2170 = vadd.f32 %v2138, %v1390
      %v2171 = vadd.f32 %v2139, %v1390
      %v2172 = vadd.f32 %v2140, %v1390
      %v2173 = vadd.f32 %v2141, %v1390
      %v2174 = vadd.f32 %v2142, %v1390
      %v2175 = vadd.f32 %v2143, %v1390
      %v2176 = vadd.f32 %v2144, %v1390
      %v2177 = vadd.f32 %v2145, %v1390
      %v2178 = vadd.f32 %v2146, %v1390
      %v2179 = vadd.f32 %v2147, %v1390
      %v2180 = vadd.f32 %v2148, %v1390
      %v2181 = vadd.f32 %v2149, %v1390
      %v2182 = vadd.f32 %v2150, %v1390
      %v2183 = vadd.f32 %v2151, %v1390
      %v2184 = vadd.f32 %v2152, %v1390
      %v2185 = vadd.f32 %v2153, %v1390
      %v2186 = vadd.f32 %v2154, %v1390
      %v2187 = vadd.f32 %v2155, %v1390
      %v2188 = vadd.f32 %v2156, %v1390
      %v2189 = vadd.f32 %v2157, %v1390
      %v2190 = vadd.f32 %v2158, %v1390
      %v2191 = vadd.f32 %v2159, %v1390
      %v2192 = vadd.f32 %v2160, %v1390
      %2193 = vst [vmem:[%s197 + $0x8] sm:$0xff] %v2161
      %2194 = vst [vmem:[%s197 + $0x18] sm:$0xff] %v2162
      %2195 = vst [vmem:[%s197 + $0x48] sm:$0xff] %v2163
      %2196 = vst [vmem:[%s197 + $0x58] sm:$0xff] %v2164
      %2197 = vst [vmem:[%s197 + $0x88] sm:$0xff] %v2165
      %2198 = vst [vmem:[%s197 + $0x98] sm:$0xff] %v2166
      %2199 = vst [vmem:[%s197 + $0xc8] sm:$0xff] %v2167
      %2200 = vst [vmem:[%s197 + $0xd8] sm:$0xff] %v2168
      %2201 = vst [vmem:[%s197 + $0x108] sm:$0xff] %v2169
      %2202 = vst [vmem:[%s197 + $0x118] sm:$0xff] %v2170
      %2203 = vst [vmem:[%s197 + $0x148] sm:$0xff] %v2171
      %2204 = vst [vmem:[%s197 + $0x158] sm:$0xff] %v2172
      %2205 = vst [vmem:[%s197 + $0x188] sm:$0xff] %v2173
      %2206 = vst [vmem:[%s197 + $0x198] sm:$0xff] %v2174
      %2207 = vst [vmem:[%s197 + $0x1c8] sm:$0xff] %v2175
      %2208 = vst [vmem:[%s197 + $0x1d8] sm:$0xff] %v2176
      %2209 = vst [vmem:[%s197 + $0x208] sm:$0xff] %v2177
      %2210 = vst [vmem:[%s197 + $0x218] sm:$0xff] %v2178
      %2211 = vst [vmem:[%s197 + $0x248] sm:$0xff] %v2179
      %2212 = vst [vmem:[%s197 + $0x258] sm:$0xff] %v2180
      %2213 = vst [vmem:[%s197 + $0x288] sm:$0xff] %v2181
      %2214 = vst [vmem:[%s197 + $0x298] sm:$0xff] %v2182
      %2215 = vst [vmem:[%s197 + $0x2c8] sm:$0xff] %v2183
      %2216 = vst [vmem:[%s197 + $0x2d8] sm:$0xff] %v2184
      %2217 = vst [vmem:[%s197 + $0x308] sm:$0xff] %v2185
      %2218 = vst [vmem:[%s197 + $0x318] sm:$0xff] %v2186
      %2219 = vst [vmem:[%s197 + $0x348] sm:$0xff] %v2187
      %2220 = vst [vmem:[%s197 + $0x358] sm:$0xff] %v2188
      %2221 = vst [vmem:[%s197 + $0x388] sm:$0xff] %v2189
      %2222 = vst [vmem:[%s197 + $0x398] sm:$0xff] %v2190
      %2223 = vst [vmem:[%s197 + $0x3c8] sm:$0xff] %v2191
      %2224 = vst [vmem:[%s197 + $0x3d8] sm:$0xff] %v2192
      %v2226 = vsel %vm755, %v262, 0
      %2228 = vmatpush.bf16.msra.mxu0 0
      %2229 = vmatpush.bf16.msra.mxu0 0
      %2230 = vmatpush.bf16.msra.mxu0 0
      %2231 = vmatpush.bf16.msra.mxu0 0
      %2232 = vmatpush.bf16.msra.mxu0 0
      %2233 = vmatpush.bf16.msra.mxu0 0
      %2234 = vmatpush.bf16.msra.mxu0 0
      %2235 = vmatpush.bf16.msra.mxu0 %v2226
      %2236 = vmatmul.bf16.gmra.mxu0 %v711
      %v2237 = vpop.f32.mrf.mxu0
      %v2238 = vadd.f32 0.0, %v2237
      %v2239 = vpop.f32.mrf.mxu0
      %v2240 = vadd.f32 0.0, %v2239
      %2241 = vmatmul.bf16.gmra.mxu0 %v714
      %v2242 = vpop.f32.mrf.mxu0
      %v2243 = vadd.f32 0.0, %v2242
      %v2244 = vpop.f32.mrf.mxu0
      %v2245 = vadd.f32 0.0, %v2244
      %2246 = vmatmul.bf16.gmra.mxu0 %v717
      %v2247 = vpop.f32.mrf.mxu0
      %v2248 = vadd.f32 0.0, %v2247
      %v2249 = vpop.f32.mrf.mxu0
      %v2250 = vadd.f32 0.0, %v2249
      %2251 = vmatmul.bf16.gmra.mxu0 %v720
      %v2252 = vpop.f32.mrf.mxu0
      %v2253 = vadd.f32 0.0, %v2252
      %v2254 = vpop.f32.mrf.mxu0
      %v2255 = vadd.f32 0.0, %v2254
      %2256 = vmatmul.bf16.gmra.mxu0 %v723
      %v2257 = vpop.f32.mrf.mxu0
      %v2258 = vadd.f32 0.0, %v2257
      %v2259 = vpop.f32.mrf.mxu0
      %v2260 = vadd.f32 0.0, %v2259
      %2261 = vmatmul.bf16.gmra.mxu0 %v726
      %v2262 = vpop.f32.mrf.mxu0
      %v2263 = vadd.f32 0.0, %v2262
      %v2264 = vpop.f32.mrf.mxu0
      %v2265 = vadd.f32 0.0, %v2264
      %2266 = vmatmul.bf16.gmra.mxu0 %v729
      %v2267 = vpop.f32.mrf.mxu0
      %v2268 = vadd.f32 0.0, %v2267
      %v2269 = vpop.f32.mrf.mxu0
      %v2270 = vadd.f32 0.0, %v2269
      %2271 = vmatmul.bf16.gmra.mxu0 %v732
      %v2272 = vpop.f32.mrf.mxu0
      %v2273 = vadd.f32 0.0, %v2272
      %v2274 = vpop.f32.mrf.mxu0
      %v2275 = vadd.f32 0.0, %v2274
      %2276 = vmatmul.bf16.gmra.mxu0 %v735
      %v2277 = vpop.f32.mrf.mxu0
      %v2278 = vadd.f32 0.0, %v2277
      %v2279 = vpop.f32.mrf.mxu0
      %v2280 = vadd.f32 0.0, %v2279
      %2281 = vmatmul.bf16.gmra.mxu0 %v738
      %v2282 = vpop.f32.mrf.mxu0
      %v2283 = vadd.f32 0.0, %v2282
      %v2284 = vpop.f32.mrf.mxu0
      %v2285 = vadd.f32 0.0, %v2284
      %2286 = vmatmul.bf16.gmra.mxu0 %v741
      %v2287 = vpop.f32.mrf.mxu0
      %v2288 = vadd.f32 0.0, %v2287
      %v2289 = vpop.f32.mrf.mxu0
      %v2290 = vadd.f32 0.0, %v2289
      %2291 = vmatmul.bf16.gmra.mxu0 %v744
      %v2292 = vpop.f32.mrf.mxu0
      %v2293 = vadd.f32 0.0, %v2292
      %v2294 = vpop.f32.mrf.mxu0
      %v2295 = vadd.f32 0.0, %v2294
      %2296 = vmatmul.bf16.gmra.mxu0 %v747
      %v2297 = vpop.f32.mrf.mxu0
      %v2298 = vadd.f32 0.0, %v2297
      %v2299 = vpop.f32.mrf.mxu0
      %v2300 = vadd.f32 0.0, %v2299
      %2301 = vmatmul.bf16.gmra.mxu0 %v750
      %v2302 = vpop.f32.mrf.mxu0
      %v2303 = vadd.f32 0.0, %v2302
      %v2304 = vpop.f32.mrf.mxu0
      %v2305 = vadd.f32 0.0, %v2304
      %2306 = vmatmul.bf16.gmra.mxu0 %v753
      %v2307 = vpop.f32.mrf.mxu0
      %v2308 = vadd.f32 0.0, %v2307
      %v2309 = vpop.f32.mrf.mxu0
      %v2310 = vadd.f32 0.0, %v2309
      %2311 = vmatmul.bf16.gmra.mxu0 %v1228
      %v2312 = vpop.f32.mrf.mxu0
      %v2313 = vadd.f32 0.0, %v2312
      %v2314 = vpop.f32.mrf.mxu0
      %v2315 = vadd.f32 0.0, %v2314
      %2316 = vdwg.mxu0
      %v2318 = vsel %vm755, %v261, 0
      %2320 = vmatpush.bf16.msra.mxu0 0
      %2321 = vmatpush.bf16.msra.mxu0 0
      %2322 = vmatpush.bf16.msra.mxu0 0
      %2323 = vmatpush.bf16.msra.mxu0 0
      %2324 = vmatpush.bf16.msra.mxu0 0
      %2325 = vmatpush.bf16.msra.mxu0 0
      %2326 = vmatpush.bf16.msra.mxu0 0
      %2327 = vmatpush.bf16.msra.mxu0 %v2318
      %2328 = vmatmul.bf16.gmra.mxu0 %v932
      %v2329 = vpop.f32.mrf.mxu0
      %v2330 = vadd.f32 %v2238, %v2329
      %v2331 = vpop.f32.mrf.mxu0
      %v2332 = vadd.f32 %v2240, %v2331
      %2333 = vmatmul.bf16.gmra.mxu0 %v935
      %v2334 = vpop.f32.mrf.mxu0
      %v2335 = vadd.f32 %v2243, %v2334
      %v2336 = vpop.f32.mrf.mxu0
      %v2337 = vadd.f32 %v2245, %v2336
      %2338 = vmatmul.bf16.gmra.mxu0 %v938
      %v2339 = vpop.f32.mrf.mxu0
      %v2340 = vadd.f32 %v2248, %v2339
      %v2341 = vpop.f32.mrf.mxu0
      %v2342 = vadd.f32 %v2250, %v2341
      %2343 = vmatmul.bf16.gmra.mxu0 %v941
      %v2344 = vpop.f32.mrf.mxu0
      %v2345 = vadd.f32 %v2253, %v2344
      %v2346 = vpop.f32.mrf.mxu0
      %v2347 = vadd.f32 %v2255, %v2346
      %2348 = vmatmul.bf16.gmra.mxu0 %v944
      %v2349 = vpop.f32.mrf.mxu0
      %v2350 = vadd.f32 %v2258, %v2349
      %v2351 = vpop.f32.mrf.mxu0
      %v2352 = vadd.f32 %v2260, %v2351
      %2353 = vmatmul.bf16.gmra.mxu0 %v947
      %v2354 = vpop.f32.mrf.mxu0
      %v2355 = vadd.f32 %v2263, %v2354
      %v2356 = vpop.f32.mrf.mxu0
      %v2357 = vadd.f32 %v2265, %v2356
      %2358 = vmatmul.bf16.gmra.mxu0 %v950
      %v2359 = vpop.f32.mrf.mxu0
      %v2360 = vadd.f32 %v2268, %v2359
      %v2361 = vpop.f32.mrf.mxu0
      %v2362 = vadd.f32 %v2270, %v2361
      %2363 = vmatmul.bf16.gmra.mxu0 %v953
      %v2364 = vpop.f32.mrf.mxu0
      %v2365 = vadd.f32 %v2273, %v2364
      %v2366 = vpop.f32.mrf.mxu0
      %v2367 = vadd.f32 %v2275, %v2366
      %2368 = vmatmul.bf16.gmra.mxu0 %v956
      %v2369 = vpop.f32.mrf.mxu0
      %v2370 = vadd.f32 %v2278, %v2369
      %v2371 = vpop.f32.mrf.mxu0
      %v2372 = vadd.f32 %v2280, %v2371
      %2373 = vmatmul.bf16.gmra.mxu0 %v959
      %v2374 = vpop.f32.mrf.mxu0
      %v2375 = vadd.f32 %v2283, %v2374
      %v2376 = vpop.f32.mrf.mxu0
      %v2377 = vadd.f32 %v2285, %v2376
      %2378 = vmatmul.bf16.gmra.mxu0 %v962
      %v2379 = vpop.f32.mrf.mxu0
      %v2380 = vadd.f32 %v2288, %v2379
      %v2381 = vpop.f32.mrf.mxu0
      %v2382 = vadd.f32 %v2290, %v2381
      %2383 = vmatmul.bf16.gmra.mxu0 %v965
      %v2384 = vpop.f32.mrf.mxu0
      %v2385 = vadd.f32 %v2293, %v2384
      %v2386 = vpop.f32.mrf.mxu0
      %v2387 = vadd.f32 %v2295, %v2386
      %2388 = vmatmul.bf16.gmra.mxu0 %v968
      %v2389 = vpop.f32.mrf.mxu0
      %v2390 = vadd.f32 %v2298, %v2389
      %v2391 = vpop.f32.mrf.mxu0
      %v2392 = vadd.f32 %v2300, %v2391
      %2393 = vmatmul.bf16.gmra.mxu0 %v971
      %v2394 = vpop.f32.mrf.mxu0
      %v2395 = vadd.f32 %v2303, %v2394
      %v2396 = vpop.f32.mrf.mxu0
      %v2397 = vadd.f32 %v2305, %v2396
      %2398 = vmatmul.bf16.gmra.mxu0 %v974
      %v2399 = vpop.f32.mrf.mxu0
      %v2400 = vadd.f32 %v2308, %v2399
      %v2401 = vpop.f32.mrf.mxu0
      %v2402 = vadd.f32 %v2310, %v2401
      %2403 = vmatmul.bf16.gmra.mxu0 %v1074
      %v2404 = vpop.f32.mrf.mxu0
      %v2405 = vadd.f32 %v2313, %v2404
      %v2406 = vpop.f32.mrf.mxu0
      %v2407 = vadd.f32 %v2315, %v2406
      %2408 = vdwg.mxu0
      %v2411 = vunpack.c.l.b16 %v250
      %v2412 = vunpack.c.l.b16 %v251
      %v2413 = vpack.c.b16 %v2412, %v2411
      %v2415 = vsel %vm706, %v2413, 0
      %v2418 = vsel %vm755, %v263, 0
      %2420 = vmatpush.bf16.msra.mxu0 0
      %2421 = vmatpush.bf16.msra.mxu0 0
      %2422 = vmatpush.bf16.msra.mxu0 0
      %2423 = vmatpush.bf16.msra.mxu0 0
      %2424 = vmatpush.bf16.msra.mxu0 0
      %2425 = vmatpush.bf16.msra.mxu0 0
      %2426 = vmatpush.bf16.msra.mxu0 0
      %2427 = vmatpush.bf16.msra.mxu0 %v2418
      %2428 = vmatmul.bf16.gmra.mxu0 %v935
      %v2429 = vpop.f32.mrf.mxu0
      %v2430 = vadd.f32 0.0, %v2429
      %v2431 = vpop.f32.mrf.mxu0
      %v2432 = vadd.f32 0.0, %v2431
      %2433 = vmatmul.bf16.gmra.mxu0 %v938
      %v2434 = vpop.f32.mrf.mxu0
      %v2435 = vadd.f32 0.0, %v2434
      %v2436 = vpop.f32.mrf.mxu0
      %v2437 = vadd.f32 0.0, %v2436
      %2438 = vmatmul.bf16.gmra.mxu0 %v941
      %v2439 = vpop.f32.mrf.mxu0
      %v2440 = vadd.f32 0.0, %v2439
      %v2441 = vpop.f32.mrf.mxu0
      %v2442 = vadd.f32 0.0, %v2441
      %2443 = vmatmul.bf16.gmra.mxu0 %v944
      %v2444 = vpop.f32.mrf.mxu0
      %v2445 = vadd.f32 0.0, %v2444
      %v2446 = vpop.f32.mrf.mxu0
      %v2447 = vadd.f32 0.0, %v2446
      %2448 = vmatmul.bf16.gmra.mxu0 %v947
      %v2449 = vpop.f32.mrf.mxu0
      %v2450 = vadd.f32 0.0, %v2449
      %v2451 = vpop.f32.mrf.mxu0
      %v2452 = vadd.f32 0.0, %v2451
      %2453 = vmatmul.bf16.gmra.mxu0 %v950
      %v2454 = vpop.f32.mrf.mxu0
      %v2455 = vadd.f32 0.0, %v2454
      %v2456 = vpop.f32.mrf.mxu0
      %v2457 = vadd.f32 0.0, %v2456
      %2458 = vmatmul.bf16.gmra.mxu0 %v953
      %v2459 = vpop.f32.mrf.mxu0
      %v2460 = vadd.f32 0.0, %v2459
      %v2461 = vpop.f32.mrf.mxu0
      %v2462 = vadd.f32 0.0, %v2461
      %2463 = vmatmul.bf16.gmra.mxu0 %v956
      %v2464 = vpop.f32.mrf.mxu0
      %v2465 = vadd.f32 0.0, %v2464
      %v2466 = vpop.f32.mrf.mxu0
      %v2467 = vadd.f32 0.0, %v2466
      %2468 = vmatmul.bf16.gmra.mxu0 %v959
      %v2469 = vpop.f32.mrf.mxu0
      %v2470 = vadd.f32 0.0, %v2469
      %v2471 = vpop.f32.mrf.mxu0
      %v2472 = vadd.f32 0.0, %v2471
      %2473 = vmatmul.bf16.gmra.mxu0 %v962
      %v2474 = vpop.f32.mrf.mxu0
      %v2475 = vadd.f32 0.0, %v2474
      %v2476 = vpop.f32.mrf.mxu0
      %v2477 = vadd.f32 0.0, %v2476
      %2478 = vmatmul.bf16.gmra.mxu0 %v965
      %v2479 = vpop.f32.mrf.mxu0
      %v2480 = vadd.f32 0.0, %v2479
      %v2481 = vpop.f32.mrf.mxu0
      %v2482 = vadd.f32 0.0, %v2481
      %2483 = vmatmul.bf16.gmra.mxu0 %v968
      %v2484 = vpop.f32.mrf.mxu0
      %v2485 = vadd.f32 0.0, %v2484
      %v2486 = vpop.f32.mrf.mxu0
      %v2487 = vadd.f32 0.0, %v2486
      %2488 = vmatmul.bf16.gmra.mxu0 %v971
      %v2489 = vpop.f32.mrf.mxu0
      %v2490 = vadd.f32 0.0, %v2489
      %v2491 = vpop.f32.mrf.mxu0
      %v2492 = vadd.f32 0.0, %v2491
      %2493 = vmatmul.bf16.gmra.mxu0 %v974
      %v2494 = vpop.f32.mrf.mxu0
      %v2495 = vadd.f32 0.0, %v2494
      %v2496 = vpop.f32.mrf.mxu0
      %v2497 = vadd.f32 0.0, %v2496
      %2498 = vmatmul.bf16.gmra.mxu0 %v1074
      %v2499 = vpop.f32.mrf.mxu0
      %v2500 = vadd.f32 0.0, %v2499
      %v2501 = vpop.f32.mrf.mxu0
      %v2502 = vadd.f32 0.0, %v2501
      %2503 = vmatmul.bf16.gmra.mxu0 %v2415
      %v2504 = vpop.f32.mrf.mxu0
      %v2505 = vadd.f32 0.0, %v2504
      %v2506 = vpop.f32.mrf.mxu0
      %v2507 = vadd.f32 0.0, %v2506
      %2508 = vdwg.mxu0
      %v2509 = vadd.f32 %v2330, %v2430
      %v2510 = vadd.f32 %v2332, %v2432
      %v2511 = vadd.f32 %v2335, %v2435
      %v2512 = vadd.f32 %v2337, %v2437
      %v2513 = vadd.f32 %v2340, %v2440
      %v2514 = vadd.f32 %v2342, %v2442
      %v2515 = vadd.f32 %v2345, %v2445
      %v2516 = vadd.f32 %v2347, %v2447
      %v2517 = vadd.f32 %v2350, %v2450
      %v2518 = vadd.f32 %v2352, %v2452
      %v2519 = vadd.f32 %v2355, %v2455
      %v2520 = vadd.f32 %v2357, %v2457
      %v2521 = vadd.f32 %v2360, %v2460
      %v2522 = vadd.f32 %v2362, %v2462
      %v2523 = vadd.f32 %v2365, %v2465
      %v2524 = vadd.f32 %v2367, %v2467
      %v2525 = vadd.f32 %v2370, %v2470
      %v2526 = vadd.f32 %v2372, %v2472
      %v2527 = vadd.f32 %v2375, %v2475
      %v2528 = vadd.f32 %v2377, %v2477
      %v2529 = vadd.f32 %v2380, %v2480
      %v2530 = vadd.f32 %v2382, %v2482
      %v2531 = vadd.f32 %v2385, %v2485
      %v2532 = vadd.f32 %v2387, %v2487
      %v2533 = vadd.f32 %v2390, %v2490
      %v2534 = vadd.f32 %v2392, %v2492
      %v2535 = vadd.f32 %v2395, %v2495
      %v2536 = vadd.f32 %v2397, %v2497
      %v2537 = vadd.f32 %v2400, %v2500
      %v2538 = vadd.f32 %v2402, %v2502
      %v2539 = vadd.f32 %v2405, %v2505
      %v2540 = vadd.f32 %v2407, %v2507
      %v2542 = vshrl.u32 %v250, 16
      %v2544 = vrot.slane %v2542, 4
      %v2545 = vshll.u32 %v250, 16
      %v2547 = vrot.slane %v2545, 5
      %v2548 = vor.u32 %v2544, %v2547
      %v2549 = vrot.slane %v2548, 4
      %v2551 = vshll.u32 %v251, 16
      %v2553 = vrot.slane %v2551, 5
      %v2554 = vsel %vm273, %v2549, %v2553
      %v2555 = vshrl.u32 %v251, 16
      %v2557 = vrot.slane %v2555, 4
      %v2558 = vor.u32 %v2557, %v2553
      %v2559 = vrot.slane %v2558, 4
      %v2561 = vshll.u32 %v252, 16
      %v2563 = vrot.slane %v2561, 5
      %v2564 = vsel %vm273, %v2559, %v2563
      %v2565 = vunpack.c.l.b16 %v2554
      %v2566 = vunpack.c.l.b16 %v2564
      %v2567 = vpack.c.b16 %v2566, %v2565
      %v2569 = vsel %vm706, %v2567, 0
      %v2572 = vsel %vm755, %v264, 0
      %2574 = vmatpush.bf16.msra.mxu0 0
      %2575 = vmatpush.bf16.msra.mxu0 0
      %2576 = vmatpush.bf16.msra.mxu0 0
      %2577 = vmatpush.bf16.msra.mxu0 0
      %2578 = vmatpush.bf16.msra.mxu0 0
      %2579 = vmatpush.bf16.msra.mxu0 0
      %2580 = vmatpush.bf16.msra.mxu0 0
      %2581 = vmatpush.bf16.msra.mxu0 %v2572
      %2582 = vmatmul.bf16.gmra.mxu0 %v714
      %v2583 = vpop.f32.mrf.mxu0
      %v2584 = vadd.f32 0.0, %v2583
      %v2585 = vpop.f32.mrf.mxu0
      %v2586 = vadd.f32 0.0, %v2585
      %2587 = vmatmul.bf16.gmra.mxu0 %v717
      %v2588 = vpop.f32.mrf.mxu0
      %v2589 = vadd.f32 0.0, %v2588
      %v2590 = vpop.f32.mrf.mxu0
      %v2591 = vadd.f32 0.0, %v2590
      %2592 = vmatmul.bf16.gmra.mxu0 %v720
      %v2593 = vpop.f32.mrf.mxu0
      %v2594 = vadd.f32 0.0, %v2593
      %v2595 = vpop.f32.mrf.mxu0
      %v2596 = vadd.f32 0.0, %v2595
      %2597 = vmatmul.bf16.gmra.mxu0 %v723
      %v2598 = vpop.f32.mrf.mxu0
      %v2599 = vadd.f32 0.0, %v2598
      %v2600 = vpop.f32.mrf.mxu0
      %v2601 = vadd.f32 0.0, %v2600
      %2602 = vmatmul.bf16.gmra.mxu0 %v726
      %v2603 = vpop.f32.mrf.mxu0
      %v2604 = vadd.f32 0.0, %v2603
      %v2605 = vpop.f32.mrf.mxu0
      %v2606 = vadd.f32 0.0, %v2605
      %2607 = vmatmul.bf16.gmra.mxu0 %v729
      %v2608 = vpop.f32.mrf.mxu0
      %v2609 = vadd.f32 0.0, %v2608
      %v2610 = vpop.f32.mrf.mxu0
      %v2611 = vadd.f32 0.0, %v2610
      %2612 = vmatmul.bf16.gmra.mxu0 %v732
      %v2613 = vpop.f32.mrf.mxu0
      %v2614 = vadd.f32 0.0, %v2613
      %v2615 = vpop.f32.mrf.mxu0
      %v2616 = vadd.f32 0.0, %v2615
      %2617 = vmatmul.bf16.gmra.mxu0 %v735
      %v2618 = vpop.f32.mrf.mxu0
      %v2619 = vadd.f32 0.0, %v2618
      %v2620 = vpop.f32.mrf.mxu0
      %v2621 = vadd.f32 0.0, %v2620
      %2622 = vmatmul.bf16.gmra.mxu0 %v738
      %v2623 = vpop.f32.mrf.mxu0
      %v2624 = vadd.f32 0.0, %v2623
      %v2625 = vpop.f32.mrf.mxu0
      %v2626 = vadd.f32 0.0, %v2625
      %2627 = vmatmul.bf16.gmra.mxu0 %v741
      %v2628 = vpop.f32.mrf.mxu0
      %v2629 = vadd.f32 0.0, %v2628
      %v2630 = vpop.f32.mrf.mxu0
      %v2631 = vadd.f32 0.0, %v2630
      %2632 = vmatmul.bf16.gmra.mxu0 %v744
      %v2633 = vpop.f32.mrf.mxu0
      %v2634 = vadd.f32 0.0, %v2633
      %v2635 = vpop.f32.mrf.mxu0
      %v2636 = vadd.f32 0.0, %v2635
      %2637 = vmatmul.bf16.gmra.mxu0 %v747
      %v2638 = vpop.f32.mrf.mxu0
      %v2639 = vadd.f32 0.0, %v2638
      %v2640 = vpop.f32.mrf.mxu0
      %v2641 = vadd.f32 0.0, %v2640
      %2642 = vmatmul.bf16.gmra.mxu0 %v750
      %v2643 = vpop.f32.mrf.mxu0
      %v2644 = vadd.f32 0.0, %v2643
      %v2645 = vpop.f32.mrf.mxu0
      %v2646 = vadd.f32 0.0, %v2645
      %2647 = vmatmul.bf16.gmra.mxu0 %v753
      %v2648 = vpop.f32.mrf.mxu0
      %v2649 = vadd.f32 0.0, %v2648
      %v2650 = vpop.f32.mrf.mxu0
      %v2651 = vadd.f32 0.0, %v2650
      %2652 = vmatmul.bf16.gmra.mxu0 %v1228
      %v2653 = vpop.f32.mrf.mxu0
      %v2654 = vadd.f32 0.0, %v2653
      %v2655 = vpop.f32.mrf.mxu0
      %v2656 = vadd.f32 0.0, %v2655
      %2657 = vmatmul.bf16.gmra.mxu0 %v2569
      %v2658 = vpop.f32.mrf.mxu0
      %v2659 = vadd.f32 0.0, %v2658
      %v2660 = vpop.f32.mrf.mxu0
      %v2661 = vadd.f32 0.0, %v2660
      %2662 = vdwg.mxu0
      %v2663 = vadd.f32 %v2509, %v2584
      %v2664 = vadd.f32 %v2510, %v2586
      %v2665 = vadd.f32 %v2511, %v2589
      %v2666 = vadd.f32 %v2512, %v2591
      %v2667 = vadd.f32 %v2513, %v2594
      %v2668 = vadd.f32 %v2514, %v2596
      %v2669 = vadd.f32 %v2515, %v2599
      %v2670 = vadd.f32 %v2516, %v2601
      %v2671 = vadd.f32 %v2517, %v2604
      %v2672 = vadd.f32 %v2518, %v2606
      %v2673 = vadd.f32 %v2519, %v2609
      %v2674 = vadd.f32 %v2520, %v2611
      %v2675 = vadd.f32 %v2521, %v2614
      %v2676 = vadd.f32 %v2522, %v2616
      %v2677 = vadd.f32 %v2523, %v2619
      %v2678 = vadd.f32 %v2524, %v2621
      %v2679 = vadd.f32 %v2525, %v2624
      %v2680 = vadd.f32 %v2526, %v2626
      %v2681 = vadd.f32 %v2527, %v2629
      %v2682 = vadd.f32 %v2528, %v2631
      %v2683 = vadd.f32 %v2529, %v2634
      %v2684 = vadd.f32 %v2530, %v2636
      %v2685 = vadd.f32 %v2531, %v2639
      %v2686 = vadd.f32 %v2532, %v2641
      %v2687 = vadd.f32 %v2533, %v2644
      %v2688 = vadd.f32 %v2534, %v2646
      %v2689 = vadd.f32 %v2535, %v2649
      %v2690 = vadd.f32 %v2536, %v2651
      %v2691 = vadd.f32 %v2537, %v2654
      %v2692 = vadd.f32 %v2538, %v2656
      %v2693 = vadd.f32 %v2539, %v2659
      %v2694 = vadd.f32 %v2540, %v2661
      %v2695 = vmul.f32 %v2663, %v1355
      %v2696 = vmul.f32 %v2664, %v1355
      %v2697 = vmul.f32 %v2665, %v1355
      %v2698 = vmul.f32 %v2666, %v1355
      %v2699 = vmul.f32 %v2667, %v1355
      %v2700 = vmul.f32 %v2668, %v1355
      %v2701 = vmul.f32 %v2669, %v1355
      %v2702 = vmul.f32 %v2670, %v1355
      %v2703 = vmul.f32 %v2671, %v1355
      %v2704 = vmul.f32 %v2672, %v1355
      %v2705 = vmul.f32 %v2673, %v1355
      %v2706 = vmul.f32 %v2674, %v1355
      %v2707 = vmul.f32 %v2675, %v1355
      %v2708 = vmul.f32 %v2676, %v1355
      %v2709 = vmul.f32 %v2677, %v1355
      %v2710 = vmul.f32 %v2678, %v1355
      %v2711 = vmul.f32 %v2679, %v1355
      %v2712 = vmul.f32 %v2680, %v1355
      %v2713 = vmul.f32 %v2681, %v1355
      %v2714 = vmul.f32 %v2682, %v1355
      %v2715 = vmul.f32 %v2683, %v1355
      %v2716 = vmul.f32 %v2684, %v1355
      %v2717 = vmul.f32 %v2685, %v1355
      %v2718 = vmul.f32 %v2686, %v1355
      %v2719 = vmul.f32 %v2687, %v1355
      %v2720 = vmul.f32 %v2688, %v1355
      %v2721 = vmul.f32 %v2689, %v1355
      %v2722 = vmul.f32 %v2690, %v1355
      %v2723 = vmul.f32 %v2691, %v1355
      %v2724 = vmul.f32 %v2692, %v1355
      %v2725 = vmul.f32 %v2693, %v1355
      %v2726 = vmul.f32 %v2694, %v1355
      %v2727 = vadd.f32 %v2695, %v1390
      %v2728 = vadd.f32 %v2696, %v1390
      %v2729 = vadd.f32 %v2697, %v1390
      %v2730 = vadd.f32 %v2698, %v1390
      %v2731 = vadd.f32 %v2699, %v1390
      %v2732 = vadd.f32 %v2700, %v1390
      %v2733 = vadd.f32 %v2701, %v1390
      %v2734 = vadd.f32 %v2702, %v1390
      %v2735 = vadd.f32 %v2703, %v1390
      %v2736 = vadd.f32 %v2704, %v1390
      %v2737 = vadd.f32 %v2705, %v1390
      %v2738 = vadd.f32 %v2706, %v1390
      %v2739 = vadd.f32 %v2707, %v1390
      %v2740 = vadd.f32 %v2708, %v1390
      %v2741 = vadd.f32 %v2709, %v1390
      %v2742 = vadd.f32 %v2710, %v1390
      %v2743 = vadd.f32 %v2711, %v1390
      %v2744 = vadd.f32 %v2712, %v1390
      %v2745 = vadd.f32 %v2713, %v1390
      %v2746 = vadd.f32 %v2714, %v1390
      %v2747 = vadd.f32 %v2715, %v1390
      %v2748 = vadd.f32 %v2716, %v1390
      %v2749 = vadd.f32 %v2717, %v1390
      %v2750 = vadd.f32 %v2718, %v1390
      %v2751 = vadd.f32 %v2719, %v1390
      %v2752 = vadd.f32 %v2720, %v1390
      %v2753 = vadd.f32 %v2721, %v1390
      %v2754 = vadd.f32 %v2722, %v1390
      %v2755 = vadd.f32 %v2723, %v1390
      %v2756 = vadd.f32 %v2724, %v1390
      %v2757 = vadd.f32 %v2725, %v1390
      %v2758 = vadd.f32 %v2726, %v1390
      %s2759 = scalar_lea.vmem %s197, 32
      %2760 = vst [vmem:[%s2759] sm:$0xff] %v2727
      %2761 = vst [vmem:[%s2759 + $0x10] sm:$0xff] %v2728
      %2762 = vst [vmem:[%s2759 + $0x40] sm:$0xff] %v2729
      %2763 = vst [vmem:[%s2759 + $0x50] sm:$0xff] %v2730
      %2764 = vst [vmem:[%s2759 + $0x80] sm:$0xff] %v2731
      %2765 = vst [vmem:[%s2759 + $0x90] sm:$0xff] %v2732
      %2766 = vst [vmem:[%s2759 + $0xc0] sm:$0xff] %v2733
      %2767 = vst [vmem:[%s2759 + $0xd0] sm:$0xff] %v2734
      %2768 = vst [vmem:[%s2759 + $0x100] sm:$0xff] %v2735
      %2769 = vst [vmem:[%s2759 + $0x110] sm:$0xff] %v2736
      %2770 = vst [vmem:[%s2759 + $0x140] sm:$0xff] %v2737
      %2771 = vst [vmem:[%s2759 + $0x150] sm:$0xff] %v2738
      %2772 = vst [vmem:[%s2759 + $0x180] sm:$0xff] %v2739
      %2773 = vst [vmem:[%s2759 + $0x190] sm:$0xff] %v2740
      %2774 = vst [vmem:[%s2759 + $0x1c0] sm:$0xff] %v2741
      %2775 = vst [vmem:[%s2759 + $0x1d0] sm:$0xff] %v2742
      %2776 = vst [vmem:[%s2759 + $0x200] sm:$0xff] %v2743
      %2777 = vst [vmem:[%s2759 + $0x210] sm:$0xff] %v2744
      %2778 = vst [vmem:[%s2759 + $0x240] sm:$0xff] %v2745
      %2779 = vst [vmem:[%s2759 + $0x250] sm:$0xff] %v2746
      %2780 = vst [vmem:[%s2759 + $0x280] sm:$0xff] %v2747
      %2781 = vst [vmem:[%s2759 + $0x290] sm:$0xff] %v2748
      %2782 = vst [vmem:[%s2759 + $0x2c0] sm:$0xff] %v2749
      %2783 = vst [vmem:[%s2759 + $0x2d0] sm:$0xff] %v2750
      %2784 = vst [vmem:[%s2759 + $0x300] sm:$0xff] %v2751
      %2785 = vst [vmem:[%s2759 + $0x310] sm:$0xff] %v2752
      %2786 = vst [vmem:[%s2759 + $0x340] sm:$0xff] %v2753
      %2787 = vst [vmem:[%s2759 + $0x350] sm:$0xff] %v2754
      %2788 = vst [vmem:[%s2759 + $0x380] sm:$0xff] %v2755
      %2789 = vst [vmem:[%s2759 + $0x390] sm:$0xff] %v2756
      %2790 = vst [vmem:[%s2759 + $0x3c0] sm:$0xff] %v2757
      %2791 = vst [vmem:[%s2759 + $0x3d0] sm:$0xff] %v2758
      %v2793 = vsel %vm755, %v266, 0
      %2795 = vmatpush.bf16.msra.mxu0 0
      %2796 = vmatpush.bf16.msra.mxu0 0
      %2797 = vmatpush.bf16.msra.mxu0 0
      %2798 = vmatpush.bf16.msra.mxu0 0
      %2799 = vmatpush.bf16.msra.mxu0 0
      %2800 = vmatpush.bf16.msra.mxu0 0
      %2801 = vmatpush.bf16.msra.mxu0 0
      %2802 = vmatpush.bf16.msra.mxu0 %v2793
      %2803 = vmatmul.bf16.gmra.mxu0 %v1639
      %v2804 = vpop.f32.mrf.mxu0
      %v2805 = vadd.f32 0.0, %v2804
      %v2806 = vpop.f32.mrf.mxu0
      %v2807 = vadd.f32 0.0, %v2806
      %2808 = vmatmul.bf16.gmra.mxu0 %v1642
      %v2809 = vpop.f32.mrf.mxu0
      %v2810 = vadd.f32 0.0, %v2809
      %v2811 = vpop.f32.mrf.mxu0
      %v2812 = vadd.f32 0.0, %v2811
      %2813 = vmatmul.bf16.gmra.mxu0 %v1645
      %v2814 = vpop.f32.mrf.mxu0
      %v2815 = vadd.f32 0.0, %v2814
      %v2816 = vpop.f32.mrf.mxu0
      %v2817 = vadd.f32 0.0, %v2816
      %2818 = vmatmul.bf16.gmra.mxu0 %v1648
      %v2819 = vpop.f32.mrf.mxu0
      %v2820 = vadd.f32 0.0, %v2819
      %v2821 = vpop.f32.mrf.mxu0
      %v2822 = vadd.f32 0.0, %v2821
      %2823 = vmatmul.bf16.gmra.mxu0 %v1651
      %v2824 = vpop.f32.mrf.mxu0
      %v2825 = vadd.f32 0.0, %v2824
      %v2826 = vpop.f32.mrf.mxu0
      %v2827 = vadd.f32 0.0, %v2826
      %2828 = vmatmul.bf16.gmra.mxu0 %v1654
      %v2829 = vpop.f32.mrf.mxu0
      %v2830 = vadd.f32 0.0, %v2829
      %v2831 = vpop.f32.mrf.mxu0
      %v2832 = vadd.f32 0.0, %v2831
      %2833 = vmatmul.bf16.gmra.mxu0 %v1657
      %v2834 = vpop.f32.mrf.mxu0
      %v2835 = vadd.f32 0.0, %v2834
      %v2836 = vpop.f32.mrf.mxu0
      %v2837 = vadd.f32 0.0, %v2836
      %2838 = vmatmul.bf16.gmra.mxu0 %v1660
      %v2839 = vpop.f32.mrf.mxu0
      %v2840 = vadd.f32 0.0, %v2839
      %v2841 = vpop.f32.mrf.mxu0
      %v2842 = vadd.f32 0.0, %v2841
      %2843 = vmatmul.bf16.gmra.mxu0 %v1663
      %v2844 = vpop.f32.mrf.mxu0
      %v2845 = vadd.f32 0.0, %v2844
      %v2846 = vpop.f32.mrf.mxu0
      %v2847 = vadd.f32 0.0, %v2846
      %2848 = vmatmul.bf16.gmra.mxu0 %v1666
      %v2849 = vpop.f32.mrf.mxu0
      %v2850 = vadd.f32 0.0, %v2849
      %v2851 = vpop.f32.mrf.mxu0
      %v2852 = vadd.f32 0.0, %v2851
      %2853 = vmatmul.bf16.gmra.mxu0 %v1669
      %v2854 = vpop.f32.mrf.mxu0
      %v2855 = vadd.f32 0.0, %v2854
      %v2856 = vpop.f32.mrf.mxu0
      %v2857 = vadd.f32 0.0, %v2856
      %2858 = vmatmul.bf16.gmra.mxu0 %v1672
      %v2859 = vpop.f32.mrf.mxu0
      %v2860 = vadd.f32 0.0, %v2859
      %v2861 = vpop.f32.mrf.mxu0
      %v2862 = vadd.f32 0.0, %v2861
      %2863 = vmatmul.bf16.gmra.mxu0 %v1675
      %v2864 = vpop.f32.mrf.mxu0
      %v2865 = vadd.f32 0.0, %v2864
      %v2866 = vpop.f32.mrf.mxu0
      %v2867 = vadd.f32 0.0, %v2866
      %2868 = vmatmul.bf16.gmra.mxu0 %v1678
      %v2869 = vpop.f32.mrf.mxu0
      %v2870 = vadd.f32 0.0, %v2869
      %v2871 = vpop.f32.mrf.mxu0
      %v2872 = vadd.f32 0.0, %v2871
      %2873 = vmatmul.bf16.gmra.mxu0 %v1681
      %v2874 = vpop.f32.mrf.mxu0
      %v2875 = vadd.f32 0.0, %v2874
      %v2876 = vpop.f32.mrf.mxu0
      %v2877 = vadd.f32 0.0, %v2876
      %2878 = vmatmul.bf16.gmra.mxu0 %v2003
      %v2879 = vpop.f32.mrf.mxu0
      %v2880 = vadd.f32 0.0, %v2879
      %v2881 = vpop.f32.mrf.mxu0
      %v2882 = vadd.f32 0.0, %v2881
      %2883 = vdwg.mxu0
      %v2885 = vsel %vm755, %v265, 0
      %2887 = vmatpush.bf16.msra.mxu0 0
      %2888 = vmatpush.bf16.msra.mxu0 0
      %2889 = vmatpush.bf16.msra.mxu0 0
      %2890 = vmatpush.bf16.msra.mxu0 0
      %2891 = vmatpush.bf16.msra.mxu0 0
      %2892 = vmatpush.bf16.msra.mxu0 0
      %2893 = vmatpush.bf16.msra.mxu0 0
      %2894 = vmatpush.bf16.msra.mxu0 %v2885
      %2895 = vmatmul.bf16.gmra.mxu0 %v711
      %v2896 = vpop.f32.mrf.mxu0
      %v2897 = vadd.f32 %v2805, %v2896
      %v2898 = vpop.f32.mrf.mxu0
      %v2899 = vadd.f32 %v2807, %v2898
      %2900 = vmatmul.bf16.gmra.mxu0 %v714
      %v2901 = vpop.f32.mrf.mxu0
      %v2902 = vadd.f32 %v2810, %v2901
      %v2903 = vpop.f32.mrf.mxu0
      %v2904 = vadd.f32 %v2812, %v2903
      %2905 = vmatmul.bf16.gmra.mxu0 %v717
      %v2906 = vpop.f32.mrf.mxu0
      %v2907 = vadd.f32 %v2815, %v2906
      %v2908 = vpop.f32.mrf.mxu0
      %v2909 = vadd.f32 %v2817, %v2908
      %2910 = vmatmul.bf16.gmra.mxu0 %v720
      %v2911 = vpop.f32.mrf.mxu0
      %v2912 = vadd.f32 %v2820, %v2911
      %v2913 = vpop.f32.mrf.mxu0
      %v2914 = vadd.f32 %v2822, %v2913
      %2915 = vmatmul.bf16.gmra.mxu0 %v723
      %v2916 = vpop.f32.mrf.mxu0
      %v2917 = vadd.f32 %v2825, %v2916
      %v2918 = vpop.f32.mrf.mxu0
      %v2919 = vadd.f32 %v2827, %v2918
      %2920 = vmatmul.bf16.gmra.mxu0 %v726
      %v2921 = vpop.f32.mrf.mxu0
      %v2922 = vadd.f32 %v2830, %v2921
      %v2923 = vpop.f32.mrf.mxu0
      %v2924 = vadd.f32 %v2832, %v2923
      %2925 = vmatmul.bf16.gmra.mxu0 %v729
      %v2926 = vpop.f32.mrf.mxu0
      %v2927 = vadd.f32 %v2835, %v2926
      %v2928 = vpop.f32.mrf.mxu0
      %v2929 = vadd.f32 %v2837, %v2928
      %2930 = vmatmul.bf16.gmra.mxu0 %v732
      %v2931 = vpop.f32.mrf.mxu0
      %v2932 = vadd.f32 %v2840, %v2931
      %v2933 = vpop.f32.mrf.mxu0
      %v2934 = vadd.f32 %v2842, %v2933
      %2935 = vmatmul.bf16.gmra.mxu0 %v735
      %v2936 = vpop.f32.mrf.mxu0
      %v2937 = vadd.f32 %v2845, %v2936
      %v2938 = vpop.f32.mrf.mxu0
      %v2939 = vadd.f32 %v2847, %v2938
      %2940 = vmatmul.bf16.gmra.mxu0 %v738
      %v2941 = vpop.f32.mrf.mxu0
      %v2942 = vadd.f32 %v2850, %v2941
      %v2943 = vpop.f32.mrf.mxu0
      %v2944 = vadd.f32 %v2852, %v2943
      %2945 = vmatmul.bf16.gmra.mxu0 %v741
      %v2946 = vpop.f32.mrf.mxu0
      %v2947 = vadd.f32 %v2855, %v2946
      %v2948 = vpop.f32.mrf.mxu0
      %v2949 = vadd.f32 %v2857, %v2948
      %2950 = vmatmul.bf16.gmra.mxu0 %v744
      %v2951 = vpop.f32.mrf.mxu0
      %v2952 = vadd.f32 %v2860, %v2951
      %v2953 = vpop.f32.mrf.mxu0
      %v2954 = vadd.f32 %v2862, %v2953
      %2955 = vmatmul.bf16.gmra.mxu0 %v747
      %v2956 = vpop.f32.mrf.mxu0
      %v2957 = vadd.f32 %v2865, %v2956
      %v2958 = vpop.f32.mrf.mxu0
      %v2959 = vadd.f32 %v2867, %v2958
      %2960 = vmatmul.bf16.gmra.mxu0 %v750
      %v2961 = vpop.f32.mrf.mxu0
      %v2962 = vadd.f32 %v2870, %v2961
      %v2963 = vpop.f32.mrf.mxu0
      %v2964 = vadd.f32 %v2872, %v2963
      %2965 = vmatmul.bf16.gmra.mxu0 %v753
      %v2966 = vpop.f32.mrf.mxu0
      %v2967 = vadd.f32 %v2875, %v2966
      %v2968 = vpop.f32.mrf.mxu0
      %v2969 = vadd.f32 %v2877, %v2968
      %2970 = vmatmul.bf16.gmra.mxu0 %v1228
      %v2971 = vpop.f32.mrf.mxu0
      %v2972 = vadd.f32 %v2880, %v2971
      %v2973 = vpop.f32.mrf.mxu0
      %v2974 = vadd.f32 %v2882, %v2973
      %2975 = vdwg.mxu0
      %v2977 = vsel %vm755, %v267, 0
      %2979 = vmatpush.bf16.msra.mxu0 0
      %2980 = vmatpush.bf16.msra.mxu0 0
      %2981 = vmatpush.bf16.msra.mxu0 0
      %2982 = vmatpush.bf16.msra.mxu0 0
      %2983 = vmatpush.bf16.msra.mxu0 0
      %2984 = vmatpush.bf16.msra.mxu0 0
      %2985 = vmatpush.bf16.msra.mxu0 0
      %2986 = vmatpush.bf16.msra.mxu0 %v2977
      %2987 = vmatmul.bf16.gmra.mxu0 %v714
      %v2988 = vpop.f32.mrf.mxu0
      %v2989 = vadd.f32 0.0, %v2988
      %v2990 = vpop.f32.mrf.mxu0
      %v2991 = vadd.f32 0.0, %v2990
      %2992 = vmatmul.bf16.gmra.mxu0 %v717
      %v2993 = vpop.f32.mrf.mxu0
      %v2994 = vadd.f32 0.0, %v2993
      %v2995 = vpop.f32.mrf.mxu0
      %v2996 = vadd.f32 0.0, %v2995
      %2997 = vmatmul.bf16.gmra.mxu0 %v720
      %v2998 = vpop.f32.mrf.mxu0
      %v2999 = vadd.f32 0.0, %v2998
      %v3000 = vpop.f32.mrf.mxu0
      %v3001 = vadd.f32 0.0, %v3000
      %3002 = vmatmul.bf16.gmra.mxu0 %v723
      %v3003 = vpop.f32.mrf.mxu0
      %v3004 = vadd.f32 0.0, %v3003
      %v3005 = vpop.f32.mrf.mxu0
      %v3006 = vadd.f32 0.0, %v3005
      %3007 = vmatmul.bf16.gmra.mxu0 %v726
      %v3008 = vpop.f32.mrf.mxu0
      %v3009 = vadd.f32 0.0, %v3008
      %v3010 = vpop.f32.mrf.mxu0
      %v3011 = vadd.f32 0.0, %v3010
      %3012 = vmatmul.bf16.gmra.mxu0 %v729
      %v3013 = vpop.f32.mrf.mxu0
      %v3014 = vadd.f32 0.0, %v3013
      %v3015 = vpop.f32.mrf.mxu0
      %v3016 = vadd.f32 0.0, %v3015
      %3017 = vmatmul.bf16.gmra.mxu0 %v732
      %v3018 = vpop.f32.mrf.mxu0
      %v3019 = vadd.f32 0.0, %v3018
      %v3020 = vpop.f32.mrf.mxu0
      %v3021 = vadd.f32 0.0, %v3020
      %3022 = vmatmul.bf16.gmra.mxu0 %v735
      %v3023 = vpop.f32.mrf.mxu0
      %v3024 = vadd.f32 0.0, %v3023
      %v3025 = vpop.f32.mrf.mxu0
      %v3026 = vadd.f32 0.0, %v3025
      %3027 = vmatmul.bf16.gmra.mxu0 %v738
      %v3028 = vpop.f32.mrf.mxu0
      %v3029 = vadd.f32 0.0, %v3028
      %v3030 = vpop.f32.mrf.mxu0
      %v3031 = vadd.f32 0.0, %v3030
      %3032 = vmatmul.bf16.gmra.mxu0 %v741
      %v3033 = vpop.f32.mrf.mxu0
      %v3034 = vadd.f32 0.0, %v3033
      %v3035 = vpop.f32.mrf.mxu0
      %v3036 = vadd.f32 0.0, %v3035
      %3037 = vmatmul.bf16.gmra.mxu0 %v744
      %v3038 = vpop.f32.mrf.mxu0
      %v3039 = vadd.f32 0.0, %v3038
      %v3040 = vpop.f32.mrf.mxu0
      %v3041 = vadd.f32 0.0, %v3040
      %3042 = vmatmul.bf16.gmra.mxu0 %v747
      %v3043 = vpop.f32.mrf.mxu0
      %v3044 = vadd.f32 0.0, %v3043
      %v3045 = vpop.f32.mrf.mxu0
      %v3046 = vadd.f32 0.0, %v3045
      %3047 = vmatmul.bf16.gmra.mxu0 %v750
      %v3048 = vpop.f32.mrf.mxu0
      %v3049 = vadd.f32 0.0, %v3048
      %v3050 = vpop.f32.mrf.mxu0
      %v3051 = vadd.f32 0.0, %v3050
      %3052 = vmatmul.bf16.gmra.mxu0 %v753
      %v3053 = vpop.f32.mrf.mxu0
      %v3054 = vadd.f32 0.0, %v3053
      %v3055 = vpop.f32.mrf.mxu0
      %v3056 = vadd.f32 0.0, %v3055
      %3057 = vmatmul.bf16.gmra.mxu0 %v1228
      %v3058 = vpop.f32.mrf.mxu0
      %v3059 = vadd.f32 0.0, %v3058
      %v3060 = vpop.f32.mrf.mxu0
      %v3061 = vadd.f32 0.0, %v3060
      %3062 = vmatmul.bf16.gmra.mxu0 %v2569
      %v3063 = vpop.f32.mrf.mxu0
      %v3064 = vadd.f32 0.0, %v3063
      %v3065 = vpop.f32.mrf.mxu0
      %v3066 = vadd.f32 0.0, %v3065
      %3067 = vdwg.mxu0
      %v3068 = vadd.f32 %v2897, %v2989
      %v3069 = vadd.f32 %v2899, %v2991
      %v3070 = vadd.f32 %v2902, %v2994
      %v3071 = vadd.f32 %v2904, %v2996
      %v3072 = vadd.f32 %v2907, %v2999
      %v3073 = vadd.f32 %v2909, %v3001
      %v3074 = vadd.f32 %v2912, %v3004
      %v3075 = vadd.f32 %v2914, %v3006
      %v3076 = vadd.f32 %v2917, %v3009
      %v3077 = vadd.f32 %v2919, %v3011
      %v3078 = vadd.f32 %v2922, %v3014
      %v3079 = vadd.f32 %v2924, %v3016
      %v3080 = vadd.f32 %v2927, %v3019
      %v3081 = vadd.f32 %v2929, %v3021
      %v3082 = vadd.f32 %v2932, %v3024
      %v3083 = vadd.f32 %v2934, %v3026
      %v3084 = vadd.f32 %v2937, %v3029
      %v3085 = vadd.f32 %v2939, %v3031
      %v3086 = vadd.f32 %v2942, %v3034
      %v3087 = vadd.f32 %v2944, %v3036
      %v3088 = vadd.f32 %v2947, %v3039
      %v3089 = vadd.f32 %v2949, %v3041
      %v3090 = vadd.f32 %v2952, %v3044
      %v3091 = vadd.f32 %v2954, %v3046
      %v3092 = vadd.f32 %v2957, %v3049
      %v3093 = vadd.f32 %v2959, %v3051
      %v3094 = vadd.f32 %v2962, %v3054
      %v3095 = vadd.f32 %v2964, %v3056
      %v3096 = vadd.f32 %v2967, %v3059
      %v3097 = vadd.f32 %v2969, %v3061
      %v3098 = vadd.f32 %v2972, %v3064
      %v3099 = vadd.f32 %v2974, %v3066
      %v3101 = vrot.slane %v250, 5
      %v3102 = vrot.slane %v3101, 4
      %v3103 = vrot.slane %v251, 5
      %v3104 = vsel %vm1474, %v3102, %v3103
      %v3105 = vrot.slane %v3103, 4
      %v3106 = vrot.slane %v252, 5
      %v3107 = vsel %vm1474, %v3105, %v3106
      %v3108 = vunpack.c.l.b16 %v3104
      %v3109 = vunpack.c.l.b16 %v3107
      %v3110 = vpack.c.b16 %v3109, %v3108
      %v3112 = vsel %vm706, %v3110, 0
      %v3115 = vsel %vm755, %v268, 0
      %3117 = vmatpush.bf16.msra.mxu0 0
      %3118 = vmatpush.bf16.msra.mxu0 0
      %3119 = vmatpush.bf16.msra.mxu0 0
      %3120 = vmatpush.bf16.msra.mxu0 0
      %3121 = vmatpush.bf16.msra.mxu0 0
      %3122 = vmatpush.bf16.msra.mxu0 0
      %3123 = vmatpush.bf16.msra.mxu0 0
      %3124 = vmatpush.bf16.msra.mxu0 %v3115
      %3125 = vmatmul.bf16.gmra.mxu0 %v1642
      %v3126 = vpop.f32.mrf.mxu0
      %v3127 = vadd.f32 0.0, %v3126
      %v3128 = vpop.f32.mrf.mxu0
      %v3129 = vadd.f32 0.0, %v3128
      %3130 = vmatmul.bf16.gmra.mxu0 %v1645
      %v3131 = vpop.f32.mrf.mxu0
      %v3132 = vadd.f32 0.0, %v3131
      %v3133 = vpop.f32.mrf.mxu0
      %v3134 = vadd.f32 0.0, %v3133
      %3135 = vmatmul.bf16.gmra.mxu0 %v1648
      %v3136 = vpop.f32.mrf.mxu0
      %v3137 = vadd.f32 0.0, %v3136
      %v3138 = vpop.f32.mrf.mxu0
      %v3139 = vadd.f32 0.0, %v3138
      %3140 = vmatmul.bf16.gmra.mxu0 %v1651
      %v3141 = vpop.f32.mrf.mxu0
      %v3142 = vadd.f32 0.0, %v3141
      %v3143 = vpop.f32.mrf.mxu0
      %v3144 = vadd.f32 0.0, %v3143
      %3145 = vmatmul.bf16.gmra.mxu0 %v1654
      %v3146 = vpop.f32.mrf.mxu0
      %v3147 = vadd.f32 0.0, %v3146
      %v3148 = vpop.f32.mrf.mxu0
      %v3149 = vadd.f32 0.0, %v3148
      %3150 = vmatmul.bf16.gmra.mxu0 %v1657
      %v3151 = vpop.f32.mrf.mxu0
      %v3152 = vadd.f32 0.0, %v3151
      %v3153 = vpop.f32.mrf.mxu0
      %v3154 = vadd.f32 0.0, %v3153
      %3155 = vmatmul.bf16.gmra.mxu0 %v1660
      %v3156 = vpop.f32.mrf.mxu0
      %v3157 = vadd.f32 0.0, %v3156
      %v3158 = vpop.f32.mrf.mxu0
      %v3159 = vadd.f32 0.0, %v3158
      %3160 = vmatmul.bf16.gmra.mxu0 %v1663
      %v3161 = vpop.f32.mrf.mxu0
      %v3162 = vadd.f32 0.0, %v3161
      %v3163 = vpop.f32.mrf.mxu0
      %v3164 = vadd.f32 0.0, %v3163
      %3165 = vmatmul.bf16.gmra.mxu0 %v1666
      %v3166 = vpop.f32.mrf.mxu0
      %v3167 = vadd.f32 0.0, %v3166
      %v3168 = vpop.f32.mrf.mxu0
      %v3169 = vadd.f32 0.0, %v3168
      %3170 = vmatmul.bf16.gmra.mxu0 %v1669
      %v3171 = vpop.f32.mrf.mxu0
      %v3172 = vadd.f32 0.0, %v3171
      %v3173 = vpop.f32.mrf.mxu0
      %v3174 = vadd.f32 0.0, %v3173
      %3175 = vmatmul.bf16.gmra.mxu0 %v1672
      %v3176 = vpop.f32.mrf.mxu0
      %v3177 = vadd.f32 0.0, %v3176
      %v3178 = vpop.f32.mrf.mxu0
      %v3179 = vadd.f32 0.0, %v3178
      %3180 = vmatmul.bf16.gmra.mxu0 %v1675
      %v3181 = vpop.f32.mrf.mxu0
      %v3182 = vadd.f32 0.0, %v3181
      %v3183 = vpop.f32.mrf.mxu0
      %v3184 = vadd.f32 0.0, %v3183
      %3185 = vmatmul.bf16.gmra.mxu0 %v1678
      %v3186 = vpop.f32.mrf.mxu0
      %v3187 = vadd.f32 0.0, %v3186
      %v3188 = vpop.f32.mrf.mxu0
      %v3189 = vadd.f32 0.0, %v3188
      %3190 = vmatmul.bf16.gmra.mxu0 %v1681
      %v3191 = vpop.f32.mrf.mxu0
      %v3192 = vadd.f32 0.0, %v3191
      %v3193 = vpop.f32.mrf.mxu0
      %v3194 = vadd.f32 0.0, %v3193
      %3195 = vmatmul.bf16.gmra.mxu0 %v2003
      %v3196 = vpop.f32.mrf.mxu0
      %v3197 = vadd.f32 0.0, %v3196
      %v3198 = vpop.f32.mrf.mxu0
      %v3199 = vadd.f32 0.0, %v3198
      %3200 = vmatmul.bf16.gmra.mxu0 %v3112
      %v3201 = vpop.f32.mrf.mxu0
      %v3202 = vadd.f32 0.0, %v3201
      %v3203 = vpop.f32.mrf.mxu0
      %v3204 = vadd.f32 0.0, %v3203
      %3205 = vdwg.mxu0
      %v3206 = vadd.f32 %v3068, %v3127
      %v3207 = vadd.f32 %v3069, %v3129
      %v3208 = vadd.f32 %v3070, %v3132
      %v3209 = vadd.f32 %v3071, %v3134
      %v3210 = vadd.f32 %v3072, %v3137
      %v3211 = vadd.f32 %v3073, %v3139
      %v3212 = vadd.f32 %v3074, %v3142
      %v3213 = vadd.f32 %v3075, %v3144
      %v3214 = vadd.f32 %v3076, %v3147
      %v3215 = vadd.f32 %v3077, %v3149
      %v3216 = vadd.f32 %v3078, %v3152
      %v3217 = vadd.f32 %v3079, %v3154
      %v3218 = vadd.f32 %v3080, %v3157
      %v3219 = vadd.f32 %v3081, %v3159
      %v3220 = vadd.f32 %v3082, %v3162
      %v3221 = vadd.f32 %v3083, %v3164
      %v3222 = vadd.f32 %v3084, %v3167
      %v3223 = vadd.f32 %v3085, %v3169
      %v3224 = vadd.f32 %v3086, %v3172
      %v3225 = vadd.f32 %v3087, %v3174
      %v3226 = vadd.f32 %v3088, %v3177
      %v3227 = vadd.f32 %v3089, %v3179
      %v3228 = vadd.f32 %v3090, %v3182
      %v3229 = vadd.f32 %v3091, %v3184
      %v3230 = vadd.f32 %v3092, %v3187
      %v3231 = vadd.f32 %v3093, %v3189
      %v3232 = vadd.f32 %v3094, %v3192
      %v3233 = vadd.f32 %v3095, %v3194
      %v3234 = vadd.f32 %v3096, %v3197
      %v3235 = vadd.f32 %v3097, %v3199
      %v3236 = vadd.f32 %v3098, %v3202
      %v3237 = vadd.f32 %v3099, %v3204
      %v3238 = vmul.f32 %v3206, %v1355
      %v3239 = vmul.f32 %v3207, %v1355
      %v3240 = vmul.f32 %v3208, %v1355
      %v3241 = vmul.f32 %v3209, %v1355
      %v3242 = vmul.f32 %v3210, %v1355
      %v3243 = vmul.f32 %v3211, %v1355
      %v3244 = vmul.f32 %v3212, %v1355
      %v3245 = vmul.f32 %v3213, %v1355
      %v3246 = vmul.f32 %v3214, %v1355
      %v3247 = vmul.f32 %v3215, %v1355
      %v3248 = vmul.f32 %v3216, %v1355
      %v3249 = vmul.f32 %v3217, %v1355
      %v3250 = vmul.f32 %v3218, %v1355
      %v3251 = vmul.f32 %v3219, %v1355
      %v3252 = vmul.f32 %v3220, %v1355
      %v3253 = vmul.f32 %v3221, %v1355
      %v3254 = vmul.f32 %v3222, %v1355
      %v3255 = vmul.f32 %v3223, %v1355
      %v3256 = vmul.f32 %v3224, %v1355
      %v3257 = vmul.f32 %v3225, %v1355
      %v3258 = vmul.f32 %v3226, %v1355
      %v3259 = vmul.f32 %v3227, %v1355
      %v3260 = vmul.f32 %v3228, %v1355
      %v3261 = vmul.f32 %v3229, %v1355
      %v3262 = vmul.f32 %v3230, %v1355
      %v3263 = vmul.f32 %v3231, %v1355
      %v3264 = vmul.f32 %v3232, %v1355
      %v3265 = vmul.f32 %v3233, %v1355
      %v3266 = vmul.f32 %v3234, %v1355
      %v3267 = vmul.f32 %v3235, %v1355
      %v3268 = vmul.f32 %v3236, %v1355
      %v3269 = vmul.f32 %v3237, %v1355
      %v3270 = vadd.f32 %v3238, %v1390
      %v3271 = vadd.f32 %v3239, %v1390
      %v3272 = vadd.f32 %v3240, %v1390
      %v3273 = vadd.f32 %v3241, %v1390
      %v3274 = vadd.f32 %v3242, %v1390
      %v3275 = vadd.f32 %v3243, %v1390
      %v3276 = vadd.f32 %v3244, %v1390
      %v3277 = vadd.f32 %v3245, %v1390
      %v3278 = vadd.f32 %v3246, %v1390
      %v3279 = vadd.f32 %v3247, %v1390
      %v3280 = vadd.f32 %v3248, %v1390
      %v3281 = vadd.f32 %v3249, %v1390
      %v3282 = vadd.f32 %v3250, %v1390
      %v3283 = vadd.f32 %v3251, %v1390
      %v3284 = vadd.f32 %v3252, %v1390
      %v3285 = vadd.f32 %v3253, %v1390
      %v3286 = vadd.f32 %v3254, %v1390
      %v3287 = vadd.f32 %v3255, %v1390
      %v3288 = vadd.f32 %v3256, %v1390
      %v3289 = vadd.f32 %v3257, %v1390
      %v3290 = vadd.f32 %v3258, %v1390
      %v3291 = vadd.f32 %v3259, %v1390
      %v3292 = vadd.f32 %v3260, %v1390
      %v3293 = vadd.f32 %v3261, %v1390
      %v3294 = vadd.f32 %v3262, %v1390
      %v3295 = vadd.f32 %v3263, %v1390
      %v3296 = vadd.f32 %v3264, %v1390
      %v3297 = vadd.f32 %v3265, %v1390
      %v3298 = vadd.f32 %v3266, %v1390
      %v3299 = vadd.f32 %v3267, %v1390
      %v3300 = vadd.f32 %v3268, %v1390
      %v3301 = vadd.f32 %v3269, %v1390
      %3302 = vst [vmem:[%s2759 + $0x8] sm:$0xff] %v3270
      %3303 = vst [vmem:[%s2759 + $0x18] sm:$0xff] %v3271
      %3304 = vst [vmem:[%s2759 + $0x48] sm:$0xff] %v3272
      %3305 = vst [vmem:[%s2759 + $0x58] sm:$0xff] %v3273
      %3306 = vst [vmem:[%s2759 + $0x88] sm:$0xff] %v3274
      %3307 = vst [vmem:[%s2759 + $0x98] sm:$0xff] %v3275
      %3308 = vst [vmem:[%s2759 + $0xc8] sm:$0xff] %v3276
      %3309 = vst [vmem:[%s2759 + $0xd8] sm:$0xff] %v3277
      %3310 = vst [vmem:[%s2759 + $0x108] sm:$0xff] %v3278
      %3311 = vst [vmem:[%s2759 + $0x118] sm:$0xff] %v3279
      %3312 = vst [vmem:[%s2759 + $0x148] sm:$0xff] %v3280
      %3313 = vst [vmem:[%s2759 + $0x158] sm:$0xff] %v3281
      %3314 = vst [vmem:[%s2759 + $0x188] sm:$0xff] %v3282
      %3315 = vst [vmem:[%s2759 + $0x198] sm:$0xff] %v3283
      %3316 = vst [vmem:[%s2759 + $0x1c8] sm:$0xff] %v3284
      %3317 = vst [vmem:[%s2759 + $0x1d8] sm:$0xff] %v3285
      %3318 = vst [vmem:[%s2759 + $0x208] sm:$0xff] %v3286
      %3319 = vst [vmem:[%s2759 + $0x218] sm:$0xff] %v3287
      %3320 = vst [vmem:[%s2759 + $0x248] sm:$0xff] %v3288
      %3321 = vst [vmem:[%s2759 + $0x258] sm:$0xff] %v3289
      %3322 = vst [vmem:[%s2759 + $0x288] sm:$0xff] %v3290
      %3323 = vst [vmem:[%s2759 + $0x298] sm:$0xff] %v3291
      %3324 = vst [vmem:[%s2759 + $0x2c8] sm:$0xff] %v3292
      %3325 = vst [vmem:[%s2759 + $0x2d8] sm:$0xff] %v3293
      %3326 = vst [vmem:[%s2759 + $0x308] sm:$0xff] %v3294
      %3327 = vst [vmem:[%s2759 + $0x318] sm:$0xff] %v3295
      %3328 = vst [vmem:[%s2759 + $0x348] sm:$0xff] %v3296
      %3329 = vst [vmem:[%s2759 + $0x358] sm:$0xff] %v3297
      %3330 = vst [vmem:[%s2759 + $0x388] sm:$0xff] %v3298
      %3331 = vst [vmem:[%s2759 + $0x398] sm:$0xff] %v3299
      %3332 = vst [vmem:[%s2759 + $0x3c8] sm:$0xff] %v3300
      %3333 = vst [vmem:[%s2759 + $0x3d8] sm:$0xff] %v3301
      %p3334 = scmp.lt.s32.totalorder %s15, 1
      %s3335 = scalar_select %p3334, %s15, 1
      %s3336 = smul.addr %s3335, 128
      %s3337 = smul.addr %s3336, 8
      %s3338 = scalar_lea.vmem %s4, %s3337
      // Predicated region
      $region37: #{conv_t_batch_forward.3} parent=35 // pred_check
        %p3339 = pneg %p122
      $region38: #{conv_t_batch_forward.3} parent=35 // pred_check_branch
        %3341 = sbr.rel (%p3339) target = $region40
      $region39: #{conv_t_batch_forward.3} parent=35 // pred_region
        _
      $region40: #{conv_t_batch_forward.3} parent=35 // pred_fallthru
        _
    $region36: #{conv_t_batch_forward.3} parent=5 // pred_fallthru
      _
    %p3342 = scmp.le.s32.totalorder 2, %s10
    // Predicated region
    $region41: #{conv_t_batch_forward.3} parent=5 // pred_check
      %p3343 = pneg %p3342
    $region42: #{conv_t_batch_forward.3} parent=5 // pred_check_branch
      %3345 = sbr.rel (%p3343) target = $region44
    $region43: #{conv_t_batch_forward.3} parent=5 // pred_region
      %s3346 = ssub.s32 %s10, 2
      // Predicated region
      $region45: #{conv_t_batch_forward.3} parent=43 // pred_check
        %p3347 = pneg %p128
      $region46: #{conv_t_batch_forward.3} parent=43 // pred_check_branch
        %3349 = sbr.rel (%p3347) target = $region48
      $region47: #{conv_t_batch_forward.3} parent=43 // pred_region
        %p3350 = scmp.lt.s32.totalorder %s16, 1
        %s3351 = scalar_select %p3350, %s16, 1
        %s3352 = smul.addr %s3351, 128
        %s3353 = smul.addr %s3352, 8
        %s3354 = scalar_lea.vmem %s4, %s3353
      $region48: #{conv_t_batch_forward.3} parent=43 // pred_fallthru
        _
    $region44: #{conv_t_batch_forward.3} parent=5 // pred_fallthru
      _
  $region6: #{conv_t_batch_forward.3} parent=0 // loop_footer
    %s14 = sadd.s32 1, %s10
  $region7: #{conv_t_batch_forward.3} parent=0 // loop_footer_branch
    %9 = sbr.rel target = $region3
  $region8: #{conv_t_batch_forward.3} parent=0 // loop_exit
    _

</llo_original>
